<compile_context>
chip_gen: v6e
topology: v6e:2x2x1
jax: 0.10.0
libtpu: 0.0.40
codegen_flags: <defaults>
</compile_context>

<pallas_src>
import functools

import numpy as np
import jax
import jax.numpy as jnp
from jax import lax
from jax.experimental import pallas as pl
from jax.experimental.pallas import tpu as pltpu


def _round_up(v, m):
    return (v + m - 1) // m * m


def _silu(y):
    return y * jax.nn.sigmoid(y)


def _fold_bn(gamma, beta, mean, var, eps=1e-5):
    scale = gamma / jnp.sqrt(var + eps)
    return scale, beta - mean * scale


def _vmem_limit_bytes():
    # ~70% of physical VMEM (v5e/v6e: 128 MiB, v7x: 64 MiB), capped at 100 MiB.
    try:
        cap = pltpu.get_tpu_info().vmem_capacity_bytes
        return int(min(100 * 1024 * 1024, int(cap * 0.7)))
    except Exception:
        return 32 * 1024 * 1024


def _pick_row_tile(H, W, Wpad, W1c, Wo, c1, cm, c2, n_batch, comp_bytes,
                   vmem_limit, row_tile):
    """Largest TH dividing H that keeps the output store lane-dense
    (TH == H or (TH % 8 == 0 and (TH*W) % 128 == 0)) and fits a VMEM budget."""

    def ok(d):
        return H % d == 0 and (d == H or (d % 8 == 0 and (d * W) % 128 == 0))

    if row_tile is not None:
        th = min(int(row_tile), H)
        if not ok(th):
            raise ValueError(f"row_tile={row_tile} incompatible with H={H}, W={W}")
        return th

    def step_bytes(d):
        r1 = d + 2
        return (2 * (H + 4) * Wpad * c1 * comp_bytes          # resident image (x2 buffers)
                + 2 * 9 * (c1 * cm + cm * c2) * comp_bytes    # weights (x2 buffers)
                + (d + 4) * W1c * 3 * c1 * comp_bytes         # cv1 im2col operand
                + r1 * W1c * cm * (8 + comp_bytes)            # cv1 acc + epilogue + y1
                + r1 * Wo * 3 * cm * comp_bytes               # cv2 im2col operand
                + d * Wo * c2 * 8                             # cv2 acc + epilogue
                + 2 * d * W * c2 * 4)                         # output block (x2 buffers)

    cands = sorted((d for d in range(1, H + 1) if ok(d)), reverse=True)
    budget = max(vmem_limit // 2, 4 * 1024 * 1024)
    fitting = [d for d in cands if step_bytes(d) <= budget]
    if n_batch == 1:
        # keep >= 2 grid steps so both v7x TensorCores get work
        fitting = [d for d in fitting if H // d >= 2] or fitting
    # TODO(synk): if even the smallest legal tile misses the budget (very large early-YOLO
    # maps on v7x), replace the whole-image input block by a manually DMA'd (TH+4)-row
    # window (P4 double buffering) instead of relying on BlockSpec.
    return fitting[0] if fitting else cands[-1]


# -----------------------------------------------------------------------------
# Fused kernel: cv1(3x3 conv+BN+SiLU) -> cv2(3x3 conv+BN+SiLU) [-> + residual]
# -----------------------------------------------------------------------------
def _bottleneck_kernel(x_ref, w1_ref, w2_ref, b1_ref, b2_ref, o_ref, *,
                       TH, W, Wo, W1c, add, nchw_out):
    # x_ref : (1, H+4, Wpad, C1)  zero-padded NHWC image (2-halo), compute dtype
    # w1_ref: (3, 3*C1, Cm)       per-kh weights (kw folded into contraction), BN scale folded
    # w2_ref: (3, 3*Cm, C2)
    # b*_ref: (1, C)              folded BatchNorm bias (f32)
    # o_ref : (1, C2, TH*W) NCHW-flat   or   (1, TH, W, C2) NHWC (fallback)
    h = pl.program_id(1)
    n_h = pl.num_programs(1)
    C1 = x_ref.shape[3]
    Cm = w1_ref.shape[2]
    C2 = w2_ref.shape[2]
    cdtype = x_ref.dtype

    # Input rows needed by this output tile: TH + 4 (2-row halo on each side).
    row0 = pl.multiple_of(h * TH, TH)
    xw = x_ref[0, pl.ds(row0, TH + 4), :, :]                  # (TH+4, Wpad, C1)

    # ---------------- cv1: 3x3 conv (scale pre-folded) + bias + SiLU ----------
    # Fold the 3 kw taps into the contraction dim: operand (rows, W1c, 3*C1).
    xcol = jnp.concatenate(
        [xw[:, 0:W1c, :], xw[:, 1:W1c + 1, :], xw[:, 2:W1c + 2, :]], axis=-1)
    R1 = TH + 2                                               # cv1 rows (1-halo)
    op = xcol[0:R1].reshape(R1 * W1c, 3 * C1)
    acc1 = jnp.dot(op, w1_ref[0], preferred_element_type=jnp.float32)
    for kh in (1, 2):                                         # static -> unrolled
        op = xcol[kh:kh + R1].reshape(R1 * W1c, 3 * C1)
        acc1 = acc1 + jnp.dot(op, w1_ref[kh], preferred_element_type=jnp.float32)
    y1 = _silu(acc1 + b1_ref[0, :]).reshape(R1, W1c, Cm)

    # Zero everything that corresponds to cv2's zero padding of cv1's output:
    # left/right columns always, top/bottom rows only at the image border.
    rr = lax.broadcasted_iota(jnp.int32, (R1, W1c, 1), 0)
    cc = lax.broadcasted_iota(jnp.int32, (R1, W1c, 1), 1)
    valid = (cc >= 1) & (cc <= W)
    valid &= (rr >= 1) | (h > 0)
    valid &= (rr <= TH) | (h < n_h - 1)
    y1 = jnp.where(valid, y1, 0.0).astype(cdtype)

    # ---------------- cv2: 3x3 conv (scale pre-folded) + bias + SiLU ----------
    ycol = jnp.concatenate(
        [y1[:, 0:Wo, :], y1[:, 1:Wo + 1, :], y1[:, 2:Wo + 2, :]], axis=-1)
    op = ycol[0:TH].reshape(TH * Wo, 3 * Cm)
    acc2 = jnp.dot(op, w2_ref[0], preferred_element_type=jnp.float32)
    for kh in (1, 2):
        op = ycol[kh:kh + TH].reshape(TH * Wo, 3 * Cm)
        acc2 = acc2 + jnp.dot(op, w2_ref[kh], preferred_element_type=jnp.float32)
    y2 = _silu(acc2 + b2_ref[0, :]).reshape(TH, Wo, C2)[:, 0:W, :]

    if add:   # residual: real x tile sits at offset (+2, +2) in the padded block
        y2 = y2 + xw[2:2 + TH, 2:2 + W, :].astype(jnp.float32)

    if nchw_out:
        # Lane-dense NCHW store: 2-D XLU transpose (TH*W, C2) -> (C2, TH*W).
        o_ref[0] = jnp.transpose(y2.reshape(TH * W, C2)).astype(o_ref.dtype)
    else:
        o_ref[0] = y2.astype(o_ref.dtype)


# -----------------------------------------------------------------------------
# Wrapper (NCHW in / NCHW out, like the PyTorch module)
# -----------------------------------------------------------------------------
def bottleneck_c2f_forward(x_nchw, params, *, shortcut=True, g=1, k=(3, 3),
                           e=0.5, row_tile=None, compute_dtype=jnp.bfloat16,
                           nchw_out=True):
    # TODO(synk): only g == 1 and k == (3, 3) (the module defaults) are implemented.
    assert g == 1 and tuple(k) == (3, 3)
    del e  # c_ is taken from the weight shapes
    N, c1, H, W = x_nchw.shape
    w1 = params["w1"]                        # (c_, c1, 3, 3)  torch OIHW
    w2 = params["w2"]                        # (c2, c_, 3, 3)
    c_mid, c2 = w1.shape[0], w2.shape[0]
    s1, b1 = _fold_bn(*params["bn1"])
    s2, b2 = _fold_bn(*params["bn2"])
    add = bool(shortcut) and (c1 == c2)

    # Kernel-internal widths rounded to sublane multiples so every
    # (rows, width, C) -> (rows*width, C) collapse before a matmul is a layout no-op.
    # TODO(synk): small-channel configs (C << 128) still waste lanes; packing channels
    # to 128 outside the kernel is a larger restructure left undone.
    Wo = _round_up(W, 8)            # cv2 compute width
    W1c = _round_up(Wo + 2, 8)      # cv1 compute width (covers cv2's 1-col halo)
    Wpad = W1c + 2                  # padded input width (cv1's 1-col halo)

    comp_bytes = np.dtype(compute_dtype).itemsize
    vmem_limit = _vmem_limit_bytes()
    TH = _pick_row_tile(H, W, Wpad, W1c, Wo, c1, c_mid, c2, N, comp_bytes,
                        vmem_limit, row_tile)
    HT = H // TH

    # NCHW -> NHWC + compute-dtype cast + spatial zero halo: one fused XLA copy pass.
    x_nhwc = jnp.transpose(x_nchw, (0, 2, 3, 1)).astype(compute_dtype)
    x_hal = jnp.pad(x_nhwc, ((0, 0), (2, 2), (2, Wpad - W - 2), (0, 0)))

    # Weight layout (kh, kw*cin, cout) with the BatchNorm scale folded in (f32 fold,
    # then cast); MXU sees compute-dtype operands, accumulation stays f32.
    w1_r = (jnp.transpose(w1, (2, 3, 1, 0)) * s1).reshape(3, 3 * c1, c_mid)
    w2_r = (jnp.transpose(w2, (2, 3, 1, 0)) * s2).reshape(3, 3 * c_mid, c2)
    w1_r = w1_r.astype(compute_dtype)
    w2_r = w2_r.astype(compute_dtype)
    b1 = b1.reshape(1, c_mid).astype(jnp.float32)
    b2 = b2.reshape(1, c2).astype(jnp.float32)

    kernel = functools.partial(_bottleneck_kernel, TH=TH, W=W, Wo=Wo, W1c=W1c,
                               add=add, nchw_out=nchw_out)
    const2 = lambda n, h: (0, 0)
    const3 = lambda n, h: (0, 0, 0)
    in_specs = [
        # Full padded image per batch element; constant over the h axis so Pallas
        # only re-DMAs it when n changes.
        pl.BlockSpec((1, H + 4, Wpad, c1), lambda n, h: (n, 0, 0, 0)),
        pl.BlockSpec((3, 3 * c1, c_mid), const3),
        pl.BlockSpec((3, 3 * c_mid, c2), const3),
        pl.BlockSpec((1, c_mid), const2),
        pl.BlockSpec((1, c2), const2),
    ]
    if nchw_out:
        # Flattened spatial axis so the (C2, TH*W) slab lands directly in NCHW
        # order; the wrapper reshape below is a free metadata op.
        out_shape = jax.ShapeDtypeStruct((N, c2, H * W), x_nchw.dtype)
        out_specs = pl.BlockSpec((1, c2, TH * W), lambda n, h: (n, 0, h))
    else:
        out_shape = jax.ShapeDtypeStruct((N, H, W, c2), x_nchw.dtype)
        out_specs = pl.BlockSpec((1, TH, W, c2), lambda n, h: (n, h, 0, 0))

    flops = 2 * N * H * W * 9 * (c1 * c_mid + c_mid * c2)
    transcendentals = N * H * W * (c_mid + c2)            # two SiLU sigmoids
    bytes_accessed = int(x_hal.size * comp_bytes
                         + (w1_r.size + w2_r.size) * comp_bytes
                         + (b1.size + b2.size) * 4
                         + N * H * W * c2 * np.dtype(x_nchw.dtype).itemsize)

    out = pl.pallas_call(
        kernel,
        out_shape=out_shape,
        grid=(N, HT),
        in_specs=in_specs,
        out_specs=out_specs,
        compiler_params=pltpu.CompilerParams(
            dimension_semantics=("parallel", "parallel"),
            vmem_limit_bytes=vmem_limit),
        cost_estimate=pl.CostEstimate(flops=flops,
                                      transcendentals=transcendentals,
                                      bytes_accessed=bytes_accessed),
    )(x_hal, w1_r, w2_r, b1, b2)

    if nchw_out:
        return out.reshape(N, c2, H, W)      # pure metadata reshape (row-major)
    return jnp.transpose(out, (0, 3, 1, 2))


# -----------------------------------------------------------------------------
# Pure-JAX reference (lax.conv) for correctness check
# -----------------------------------------------------------------------------
def _ref_conv_bn_silu(x, w, bn):
    y = lax.conv_general_dilated(
        x, w, window_strides=(1, 1), padding=((1, 1), (1, 1)),
        dimension_numbers=("NCHW", "OIHW", "NCHW"))
    scale, bias = _fold_bn(*bn)
    y = y * scale[None, :, None, None] + bias[None, :, None, None]
    return y * jax.nn.sigmoid(y)


def bottleneck_c2f_reference(x, params, *, shortcut=True):
    y = _ref_conv_bn_silu(x, params["w1"], params["bn1"])
    y = _ref_conv_bn_silu(y, params["w2"], params["bn2"])
    if shortcut and x.shape[1] == y.shape[1]:
        y = x + y
    return y


# -----------------------------------------------------------------------------
def make_params(key, c1, c2, k=3, e=0.5):
    c_ = int(c2 * e)
    ks = jax.random.split(key, 10)

    def bn(ka, kb, kc, kd, c):
        gamma = jax.random.uniform(ka, (c,), jnp.float32, 0.5, 1.5)
        beta = 0.1 * jax.random.normal(kb, (c,), jnp.float32)
        mean = 0.1 * jax.random.normal(kc, (c,), jnp.float32)
        var = jax.random.uniform(kd, (c,), jnp.float32, 0.5, 1.5)
        return (gamma, beta, mean, var)

    return {
        "w1": 0.1 * jax.random.normal(ks[0], (c_, c1, k, k), jnp.float32),
        "w2": 0.1 * jax.random.normal(ks[1], (c2, c_, k, k), jnp.float32),
        "bn1": bn(ks[2], ks[3], ks[4], ks[5], c_),
        "bn2": bn(ks[6], ks[7], ks[8], ks[9], c2),
    }


if __name__ == "__main__":
    key = jax.random.PRNGKey(0)
    kx, kp = jax.random.split(key)

    N, C1, H, W = 2, 4, 16, 16
    C2 = 4                                   # c1 == c2 -> residual path active
    x = jax.random.normal(kx, (N, C1, H, W), jnp.float32)
    params = make_params(kp, C1, C2, k=3, e=0.5)
    ref = bottleneck_c2f_reference(x, params, shortcut=True)

    def run_and_check(nchw_out, compute_dtype, atol, rtol):
        fwd = jax.jit(functools.partial(
            bottleneck_c2f_forward, shortcut=True, g=1, k=(3, 3),
            compute_dtype=compute_dtype, nchw_out=nchw_out))
        out = jax.block_until_ready(fwd(x, params))
        assert out.shape == (N, C2, H, W)
        assert jnp.allclose(out, ref, atol=atol, rtol=rtol), "mismatch vs reference"
        return out

    try:
        run_and_check(True, jnp.bfloat16, 5e-2, 5e-2)   # default fast path (bf16 MXU)
        run_and_check(True, jnp.float32, 1e-4, 1e-4)    # exactness check (f32 compute)
    except AssertionError:
        raise
    except Exception:
        # TODO(synk): NCHW-direct store relies on the in-kernel 2-D result transpose;
        # fall back to the previously validated NHWC store + XLA output transpose.
        run_and_check(False, jnp.bfloat16, 5e-2, 5e-2)
        run_and_check(False, jnp.float32, 1e-4, 1e-4)

    print("KERNEL_OK")
</pallas_src>

<mosaic_0001>
module attributes {stable_mosaic.version = 11 : i64} {
  func.func @_bottleneck_kernel(%arg0: i32, %arg1: i32, %arg2: memref<1x20x26x4xbf16, #tpu.memory_space<vmem>>, %arg3: memref<3x12x2xbf16, #tpu.memory_space<vmem>>, %arg4: memref<3x6x4xbf16, #tpu.memory_space<vmem>>, %arg5: memref<1x2xf32, #tpu.memory_space<vmem>>, %arg6: memref<1x4xf32, #tpu.memory_space<vmem>>, %arg7: memref<1x4x256xf32, #tpu.memory_space<vmem>>) attributes {dimension_semantics = [#tpu.dimension_semantics<parallel>, #tpu.dimension_semantics<parallel>], iteration_bounds = array<i64: 2, 1>, scalar_prefetch = 0 : i64, scratch_operands = 0 : i64, tpu.core_type = #tpu.core_type<tc>, window_params = [{transform_indices = @transform_0, window_bounds = array<i64: 1, 20, 26, 4>}, {pipeline_mode = #tpu.pipeline_mode<synchronous>, transform_indices = @transform_1, window_bounds = array<i64: 3, 12, 2>}, {pipeline_mode = #tpu.pipeline_mode<synchronous>, transform_indices = @transform_2, window_bounds = array<i64: 3, 6, 4>}, {pipeline_mode = #tpu.pipeline_mode<synchronous>, transform_indices = @transform_3, window_bounds = array<i64: 1, 2>}, {pipeline_mode = #tpu.pipeline_mode<synchronous>, transform_indices = @transform_4, window_bounds = array<i64: 1, 4>}, {transform_indices = @transform_5, window_bounds = array<i64: 1, 4, 256>}]} {
    %c16_i32 = arith.constant 16 : i32
    %0 = arith.muli %arg1, %c16_i32 : i32
    %1 = tpu.assume_multiple %0, 16 : i32
    %c0 = arith.constant 0 : index
    %2 = arith.index_cast %1 : i32 to index
    %c0_0 = arith.constant 0 : index
    %c0_1 = arith.constant 0 : index
    %3 = vector.load %arg2[%c0, %2, %c0_0, %c0_1] : memref<1x20x26x4xbf16, #tpu.memory_space<vmem>>, vector<1x20x26x4xbf16>
    %4 = vector.shape_cast %3 : vector<1x20x26x4xbf16> to vector<20x26x4xbf16>
    %5 = vector.extract_strided_slice %4 {offsets = [0, 0, 0], sizes = [20, 24, 4], strides = [1, 1, 1]} : vector<20x26x4xbf16> to vector<20x24x4xbf16>
    %6 = vector.extract_strided_slice %4 {offsets = [0, 1, 0], sizes = [20, 24, 4], strides = [1, 1, 1]} : vector<20x26x4xbf16> to vector<20x24x4xbf16>
    %7 = vector.extract_strided_slice %4 {offsets = [0, 2, 0], sizes = [20, 24, 4], strides = [1, 1, 1]} : vector<20x26x4xbf16> to vector<20x24x4xbf16>
    %8 = tpu.concatenate %5, %6, %7 in 2 : vector<20x24x4xbf16>, vector<20x24x4xbf16>, vector<20x24x4xbf16> -> vector<20x24x12xbf16>
    %9 = vector.extract_strided_slice %8 {offsets = [0, 0, 0], sizes = [18, 24, 12], strides = [1, 1, 1]} : vector<20x24x12xbf16> to vector<18x24x12xbf16>
    %10 = vector.shape_cast %9 : vector<18x24x12xbf16> to vector<432x12xbf16>
    %c0_2 = arith.constant 0 : index
    %c0_3 = arith.constant 0 : index
    %c0_4 = arith.constant 0 : index
    %11 = vector.load %arg3[%c0_2, %c0_3, %c0_4] : memref<3x12x2xbf16, #tpu.memory_space<vmem>>, vector<1x12x2xbf16>
    %12 = vector.shape_cast %11 : vector<1x12x2xbf16> to vector<12x2xbf16>
    %cst = arith.constant dense<0.000000e+00> : vector<432x2xf32>
    %13 = tpu.matmul %10, %12, %cst {dimension_numbers = #tpu.dot_dimension_numbers<[1], [0], [0], [1], [0, 0, 1, 1], [], []>} : vector<432x12xbf16>, vector<12x2xbf16>, vector<432x2xf32> -> vector<432x2xf32>
    %14 = vector.extract_strided_slice %8 {offsets = [1, 0, 0], sizes = [18, 24, 12], strides = [1, 1, 1]} : vector<20x24x12xbf16> to vector<18x24x12xbf16>
    %15 = vector.shape_cast %14 : vector<18x24x12xbf16> to vector<432x12xbf16>
    %c1 = arith.constant 1 : index
    %c0_5 = arith.constant 0 : index
    %c0_6 = arith.constant 0 : index
    %16 = vector.load %arg3[%c1, %c0_5, %c0_6] : memref<3x12x2xbf16, #tpu.memory_space<vmem>>, vector<1x12x2xbf16>
    %17 = vector.shape_cast %16 : vector<1x12x2xbf16> to vector<12x2xbf16>
    %cst_7 = arith.constant dense<0.000000e+00> : vector<432x2xf32>
    %18 = tpu.matmul %15, %17, %cst_7 {dimension_numbers = #tpu.dot_dimension_numbers<[1], [0], [0], [1], [0, 0, 1, 1], [], []>} : vector<432x12xbf16>, vector<12x2xbf16>, vector<432x2xf32> -> vector<432x2xf32>
    %19 = arith.addf %13, %18 : vector<432x2xf32>
    %20 = vector.extract_strided_slice %8 {offsets = [2, 0, 0], sizes = [18, 24, 12], strides = [1, 1, 1]} : vector<20x24x12xbf16> to vector<18x24x12xbf16>
    %21 = vector.shape_cast %20 : vector<18x24x12xbf16> to vector<432x12xbf16>
    %c2 = arith.constant 2 : index
    %c0_8 = arith.constant 0 : index
    %c0_9 = arith.constant 0 : index
    %22 = vector.load %arg3[%c2, %c0_8, %c0_9] : memref<3x12x2xbf16, #tpu.memory_space<vmem>>, vector<1x12x2xbf16>
    %23 = vector.shape_cast %22 : vector<1x12x2xbf16> to vector<12x2xbf16>
    %cst_10 = arith.constant dense<0.000000e+00> : vector<432x2xf32>
    %24 = tpu.matmul %21, %23, %cst_10 {dimension_numbers = #tpu.dot_dimension_numbers<[1], [0], [0], [1], [0, 0, 1, 1], [], []>} : vector<432x12xbf16>, vector<12x2xbf16>, vector<432x2xf32> -> vector<432x2xf32>
    %25 = arith.addf %19, %24 : vector<432x2xf32>
    %c0_11 = arith.constant 0 : index
    %c0_12 = arith.constant 0 : index
    %26 = vector.load %arg5[%c0_11, %c0_12] : memref<1x2xf32, #tpu.memory_space<vmem>>, vector<1x2xf32>
    %27 = vector.shape_cast %26 : vector<1x2xf32> to vector<2xf32>
    %28 = vector.shape_cast %27 : vector<2xf32> to vector<1x2xf32>
    %29 = vector.broadcast %28 : vector<1x2xf32> to vector<432x2xf32>
    %30 = arith.addf %25, %29 : vector<432x2xf32>
    %31 = arith.negf %30 : vector<432x2xf32>
    %32 = math.exp %31 : vector<432x2xf32>
    %cst_13 = arith.constant 1.000000e+00 : f32
    %33 = vector.broadcast %cst_13 : f32 to vector<432x2xf32>
    %34 = arith.addf %33, %32 : vector<432x2xf32>
    %35 = arith.divf %33, %34 : vector<432x2xf32>
    %36 = arith.mulf %30, %35 : vector<432x2xf32>
    %37 = vector.shape_cast %36 : vector<432x2xf32> to vector<18x24x2xf32>
    %38 = tpu.iota {dimensions = array<i32: 0>} : vector<18x24x1xi32>
    %39 = tpu.iota {dimensions = array<i32: 1>} : vector<18x24x1xi32>
    %c1_i32 = arith.constant 1 : i32
    %40 = vector.broadcast %c1_i32 : i32 to vector<18x24x1xi32>
    %41 = arith.cmpi sge, %39, %40 : vector<18x24x1xi32>
    %c16_i32_14 = arith.constant 16 : i32
    %42 = vector.broadcast %c16_i32_14 : i32 to vector<18x24x1xi32>
    %43 = arith.cmpi sle, %39, %42 : vector<18x24x1xi32>
    %44 = arith.andi %41, %43 : vector<18x24x1xi1>
    %c1_i32_15 = arith.constant 1 : i32
    %45 = vector.broadcast %c1_i32_15 : i32 to vector<18x24x1xi32>
    %46 = arith.cmpi sge, %38, %45 : vector<18x24x1xi32>
    %c0_i32 = arith.constant 0 : i32
    %47 = arith.cmpi sgt, %arg1, %c0_i32 : i32
    %48 = vector.broadcast %47 : i1 to vector<18x24x1xi1>
    %49 = arith.ori %46, %48 : vector<18x24x1xi1>
    %50 = arith.andi %44, %49 : vector<18x24x1xi1>
    %c16_i32_16 = arith.constant 16 : i32
    %51 = vector.broadcast %c16_i32_16 : i32 to vector<18x24x1xi32>
    %52 = arith.cmpi sle, %38, %51 : vector<18x24x1xi32>
    %c0_i32_17 = arith.constant 0 : i32
    %53 = arith.cmpi slt, %arg1, %c0_i32_17 : i32
    %54 = vector.broadcast %53 : i1 to vector<18x24x1xi1>
    %55 = arith.ori %52, %54 : vector<18x24x1xi1>
    %56 = arith.andi %50, %55 : vector<18x24x1xi1>
    %cst_18 = arith.constant 0.000000e+00 : f32
    %57 = vector.shape_cast %56 : vector<18x24x1xi1> to vector<18x24x1xi1>
    %58 = vector.broadcast %57 : vector<18x24x1xi1> to vector<18x24x2xi1>
    %59 = vector.broadcast %cst_18 : f32 to vector<18x24x2xf32>
    %60 = arith.select %58, %37, %59 : vector<18x24x2xi1>, vector<18x24x2xf32>
    %61 = arith.truncf %60 : vector<18x24x2xf32> to vector<18x24x2xbf16>
    %62 = vector.extract_strided_slice %61 {offsets = [0, 0, 0], sizes = [18, 16, 2], strides = [1, 1, 1]} : vector<18x24x2xbf16> to vector<18x16x2xbf16>
    %63 = vector.extract_strided_slice %61 {offsets = [0, 1, 0], sizes = [18, 16, 2], strides = [1, 1, 1]} : vector<18x24x2xbf16> to vector<18x16x2xbf16>
    %64 = vector.extract_strided_slice %61 {offsets = [0, 2, 0], sizes = [18, 16, 2], strides = [1, 1, 1]} : vector<18x24x2xbf16> to vector<18x16x2xbf16>
    %65 = tpu.concatenate %62, %63, %64 in 2 : vector<18x16x2xbf16>, vector<18x16x2xbf16>, vector<18x16x2xbf16> -> vector<18x16x6xbf16>
    %66 = vector.extract_strided_slice %65 {offsets = [0, 0, 0], sizes = [16, 16, 6], strides = [1, 1, 1]} : vector<18x16x6xbf16> to vector<16x16x6xbf16>
    %67 = vector.shape_cast %66 : vector<16x16x6xbf16> to vector<256x6xbf16>
    %c0_19 = arith.constant 0 : index
    %c0_20 = arith.constant 0 : index
    %c0_21 = arith.constant 0 : index
    %68 = vector.load %arg4[%c0_19, %c0_20, %c0_21] : memref<3x6x4xbf16, #tpu.memory_space<vmem>>, vector<1x6x4xbf16>
    %69 = vector.shape_cast %68 : vector<1x6x4xbf16> to vector<6x4xbf16>
    %cst_22 = arith.constant dense<0.000000e+00> : vector<256x4xf32>
    %70 = tpu.matmul %67, %69, %cst_22 {dimension_numbers = #tpu.dot_dimension_numbers<[1], [0], [0], [1], [0, 0, 1, 1], [], []>} : vector<256x6xbf16>, vector<6x4xbf16>, vector<256x4xf32> -> vector<256x4xf32>
    %71 = vector.extract_strided_slice %65 {offsets = [1, 0, 0], sizes = [16, 16, 6], strides = [1, 1, 1]} : vector<18x16x6xbf16> to vector<16x16x6xbf16>
    %72 = vector.shape_cast %71 : vector<16x16x6xbf16> to vector<256x6xbf16>
    %c1_23 = arith.constant 1 : index
    %c0_24 = arith.constant 0 : index
    %c0_25 = arith.constant 0 : index
    %73 = vector.load %arg4[%c1_23, %c0_24, %c0_25] : memref<3x6x4xbf16, #tpu.memory_space<vmem>>, vector<1x6x4xbf16>
    %74 = vector.shape_cast %73 : vector<1x6x4xbf16> to vector<6x4xbf16>
    %cst_26 = arith.constant dense<0.000000e+00> : vector<256x4xf32>
    %75 = tpu.matmul %72, %74, %cst_26 {dimension_numbers = #tpu.dot_dimension_numbers<[1], [0], [0], [1], [0, 0, 1, 1], [], []>} : vector<256x6xbf16>, vector<6x4xbf16>, vector<256x4xf32> -> vector<256x4xf32>
    %76 = arith.addf %70, %75 : vector<256x4xf32>
    %77 = vector.extract_strided_slice %65 {offsets = [2, 0, 0], sizes = [16, 16, 6], strides = [1, 1, 1]} : vector<18x16x6xbf16> to vector<16x16x6xbf16>
    %78 = vector.shape_cast %77 : vector<16x16x6xbf16> to vector<256x6xbf16>
    %c2_27 = arith.constant 2 : index
    %c0_28 = arith.constant 0 : index
    %c0_29 = arith.constant 0 : index
    %79 = vector.load %arg4[%c2_27, %c0_28, %c0_29] : memref<3x6x4xbf16, #tpu.memory_space<vmem>>, vector<1x6x4xbf16>
    %80 = vector.shape_cast %79 : vector<1x6x4xbf16> to vector<6x4xbf16>
    %cst_30 = arith.constant dense<0.000000e+00> : vector<256x4xf32>
    %81 = tpu.matmul %78, %80, %cst_30 {dimension_numbers = #tpu.dot_dimension_numbers<[1], [0], [0], [1], [0, 0, 1, 1], [], []>} : vector<256x6xbf16>, vector<6x4xbf16>, vector<256x4xf32> -> vector<256x4xf32>
    %82 = arith.addf %76, %81 : vector<256x4xf32>
    %c0_31 = arith.constant 0 : index
    %c0_32 = arith.constant 0 : index
    %83 = vector.load %arg6[%c0_31, %c0_32] : memref<1x4xf32, #tpu.memory_space<vmem>>, vector<1x4xf32>
    %84 = vector.shape_cast %83 : vector<1x4xf32> to vector<4xf32>
    %85 = vector.shape_cast %84 : vector<4xf32> to vector<1x4xf32>
    %86 = vector.broadcast %85 : vector<1x4xf32> to vector<256x4xf32>
    %87 = arith.addf %82, %86 : vector<256x4xf32>
    %88 = arith.negf %87 : vector<256x4xf32>
    %89 = math.exp %88 : vector<256x4xf32>
    %cst_33 = arith.constant 1.000000e+00 : f32
    %90 = vector.broadcast %cst_33 : f32 to vector<256x4xf32>
    %91 = arith.addf %90, %89 : vector<256x4xf32>
    %92 = arith.divf %90, %91 : vector<256x4xf32>
    %93 = arith.mulf %87, %92 : vector<256x4xf32>
    %94 = vector.shape_cast %93 : vector<256x4xf32> to vector<16x16x4xf32>
    %95 = vector.extract_strided_slice %4 {offsets = [2, 2, 0], sizes = [16, 16, 4], strides = [1, 1, 1]} : vector<20x26x4xbf16> to vector<16x16x4xbf16>
    %96 = arith.extf %95 : vector<16x16x4xbf16> to vector<16x16x4xf32>
    %97 = arith.addf %94, %96 : vector<16x16x4xf32>
    %98 = vector.shape_cast %97 : vector<16x16x4xf32> to vector<256x4xf32>
    %99 = tpu.transpose %98, [1, 0] : vector<256x4xf32> -> vector<4x256xf32>
    %c0_34 = arith.constant 0 : index
    %c0_35 = arith.constant 0 : index
    %c0_36 = arith.constant 0 : index
    %100 = vector.load %arg7[%c0_34, %c0_35, %c0_36] : memref<1x4x256xf32, #tpu.memory_space<vmem>>, vector<1x4x256xf32>
    %101 = vector.shape_cast %100 : vector<1x4x256xf32> to vector<4x256xf32>
    %102 = vector.shape_cast %99 : vector<4x256xf32> to vector<1x4x256xf32>
    tpu.vector_store %arg7[%c0_34, %c0_35, %c0_36], %102 {strides = array<i32>} : memref<1x4x256xf32, #tpu.memory_space<vmem>>, vector<1x4x256xf32>,
    return
  }
  func.func @transform_0(%arg0: i32, %arg1: i32) -> (i32, i32, i32, i32) {
    %c0_i32 = arith.constant 0 : i32
    %c0_i32_0 = arith.constant 0 : i32
    %c0_i32_1 = arith.constant 0 : i32
    %c0_i32_2 = arith.constant 0 : i32
    return %arg0, %c0_i32, %c0_i32_0, %c0_i32_1 : i32, i32, i32, i32
  }
  func.func @transform_1(%arg0: i32, %arg1: i32) -> (i32, i32, i32) {
    %c0_i32 = arith.constant 0 : i32
    %c0_i32_0 = arith.constant 0 : i32
    %c0_i32_1 = arith.constant 0 : i32
    %c0_i32_2 = arith.constant 0 : i32
    return %c0_i32, %c0_i32_0, %c0_i32_1 : i32, i32, i32
  }
  func.func @transform_2(%arg0: i32, %arg1: i32) -> (i32, i32, i32) {
    %c0_i32 = arith.constant 0 : i32
    %c0_i32_0 = arith.constant 0 : i32
    %c0_i32_1 = arith.constant 0 : i32
    %c0_i32_2 = arith.constant 0 : i32
    return %c0_i32, %c0_i32_0, %c0_i32_1 : i32, i32, i32
  }
  func.func @transform_3(%arg0: i32, %arg1: i32) -> (i32, i32) {
    %c0_i32 = arith.constant 0 : i32
    %c0_i32_0 = arith.constant 0 : i32
    %c0_i32_1 = arith.constant 0 : i32
    return %c0_i32, %c0_i32_0 : i32, i32
  }
  func.func @transform_4(%arg0: i32, %arg1: i32) -> (i32, i32) {
    %c0_i32 = arith.constant 0 : i32
    %c0_i32_0 = arith.constant 0 : i32
    %c0_i32_1 = arith.constant 0 : i32
    return %c0_i32, %c0_i32_0 : i32, i32
  }
  func.func @transform_5(%arg0: i32, %arg1: i32) -> (i32, i32, i32) {
    %c0_i32 = arith.constant 0 : i32
    %c0_i32_0 = arith.constant 0 : i32
    return %arg0, %c0_i32, %arg1 : i32, i32, i32
  }
}

module attributes {stable_mosaic.version = 11 : i64} {
  func.func @_bottleneck_kernel(%arg0: i32, %arg1: i32, %arg2: memref<1x20x26x4xbf16, #tpu.memory_space<vmem>>, %arg3: memref<3x12x2xbf16, #tpu.memory_space<vmem>>, %arg4: memref<3x6x4xbf16, #tpu.memory_space<vmem>>, %arg5: memref<1x2xf32, #tpu.memory_space<vmem>>, %arg6: memref<1x4xf32, #tpu.memory_space<vmem>>, %arg7: memref<1x16x16x4xf32, #tpu.memory_space<vmem>>) attributes {dimension_semantics = [#tpu.dimension_semantics<parallel>, #tpu.dimension_semantics<parallel>], iteration_bounds = array<i64: 2, 1>, scalar_prefetch = 0 : i64, scratch_operands = 0 : i64, tpu.core_type = #tpu.core_type<tc>, window_params = [{transform_indices = @transform_0, window_bounds = array<i64: 1, 20, 26, 4>}, {pipeline_mode = #tpu.pipeline_mode<synchronous>, transform_indices = @transform_1, window_bounds = array<i64: 3, 12, 2>}, {pipeline_mode = #tpu.pipeline_mode<synchronous>, transform_indices = @transform_2, window_bounds = array<i64: 3, 6, 4>}, {pipeline_mode = #tpu.pipeline_mode<synchronous>, transform_indices = @transform_3, window_bounds = array<i64: 1, 2>}, {pipeline_mode = #tpu.pipeline_mode<synchronous>, transform_indices = @transform_4, window_bounds = array<i64: 1, 4>}, {transform_indices = @transform_5, window_bounds = array<i64: 1, 16, 16, 4>}]} {
    %c16_i32 = arith.constant 16 : i32
    %0 = arith.muli %arg1, %c16_i32 : i32
    %1 = tpu.assume_multiple %0, 16 : i32
    %c0 = arith.constant 0 : index
    %2 = arith.index_cast %1 : i32 to index
    %c0_0 = arith.constant 0 : index
    %c0_1 = arith.constant 0 : index
    %3 = vector.load %arg2[%c0, %2, %c0_0, %c0_1] : memref<1x20x26x4xbf16, #tpu.memory_space<vmem>>, vector<1x20x26x4xbf16>
    %4 = vector.shape_cast %3 : vector<1x20x26x4xbf16> to vector<20x26x4xbf16>
    %5 = vector.extract_strided_slice %4 {offsets = [0, 0, 0], sizes = [20, 24, 4], strides = [1, 1, 1]} : vector<20x26x4xbf16> to vector<20x24x4xbf16>
    %6 = vector.extract_strided_slice %4 {offsets = [0, 1, 0], sizes = [20, 24, 4], strides = [1, 1, 1]} : vector<20x26x4xbf16> to vector<20x24x4xbf16>
    %7 = vector.extract_strided_slice %4 {offsets = [0, 2, 0], sizes = [20, 24, 4], strides = [1, 1, 1]} : vector<20x26x4xbf16> to vector<20x24x4xbf16>
    %8 = tpu.concatenate %5, %6, %7 in 2 : vector<20x24x4xbf16>, vector<20x24x4xbf16>, vector<20x24x4xbf16> -> vector<20x24x12xbf16>
    %9 = vector.extract_strided_slice %8 {offsets = [0, 0, 0], sizes = [18, 24, 12], strides = [1, 1, 1]} : vector<20x24x12xbf16> to vector<18x24x12xbf16>
    %10 = vector.shape_cast %9 : vector<18x24x12xbf16> to vector<432x12xbf16>
    %c0_2 = arith.constant 0 : index
    %c0_3 = arith.constant 0 : index
    %c0_4 = arith.constant 0 : index
    %11 = vector.load %arg3[%c0_2, %c0_3, %c0_4] : memref<3x12x2xbf16, #tpu.memory_space<vmem>>, vector<1x12x2xbf16>
    %12 = vector.shape_cast %11 : vector<1x12x2xbf16> to vector<12x2xbf16>
    %cst = arith.constant dense<0.000000e+00> : vector<432x2xf32>
    %13 = tpu.matmul %10, %12, %cst {dimension_numbers = #tpu.dot_dimension_numbers<[1], [0], [0], [1], [0, 0, 1, 1], [], []>} : vector<432x12xbf16>, vector<12x2xbf16>, vector<432x2xf32> -> vector<432x2xf32>
    %14 = vector.extract_strided_slice %8 {offsets = [1, 0, 0], sizes = [18, 24, 12], strides = [1, 1, 1]} : vector<20x24x12xbf16> to vector<18x24x12xbf16>
    %15 = vector.shape_cast %14 : vector<18x24x12xbf16> to vector<432x12xbf16>
    %c1 = arith.constant 1 : index
    %c0_5 = arith.constant 0 : index
    %c0_6 = arith.constant 0 : index
    %16 = vector.load %arg3[%c1, %c0_5, %c0_6] : memref<3x12x2xbf16, #tpu.memory_space<vmem>>, vector<1x12x2xbf16>
    %17 = vector.shape_cast %16 : vector<1x12x2xbf16> to vector<12x2xbf16>
    %cst_7 = arith.constant dense<0.000000e+00> : vector<432x2xf32>
    %18 = tpu.matmul %15, %17, %cst_7 {dimension_numbers = #tpu.dot_dimension_numbers<[1], [0], [0], [1], [0, 0, 1, 1], [], []>} : vector<432x12xbf16>, vector<12x2xbf16>, vector<432x2xf32> -> vector<432x2xf32>
    %19 = arith.addf %13, %18 : vector<432x2xf32>
    %20 = vector.extract_strided_slice %8 {offsets = [2, 0, 0], sizes = [18, 24, 12], strides = [1, 1, 1]} : vector<20x24x12xbf16> to vector<18x24x12xbf16>
    %21 = vector.shape_cast %20 : vector<18x24x12xbf16> to vector<432x12xbf16>
    %c2 = arith.constant 2 : index
    %c0_8 = arith.constant 0 : index
    %c0_9 = arith.constant 0 : index
    %22 = vector.load %arg3[%c2, %c0_8, %c0_9] : memref<3x12x2xbf16, #tpu.memory_space<vmem>>, vector<1x12x2xbf16>
    %23 = vector.shape_cast %22 : vector<1x12x2xbf16> to vector<12x2xbf16>
    %cst_10 = arith.constant dense<0.000000e+00> : vector<432x2xf32>
    %24 = tpu.matmul %21, %23, %cst_10 {dimension_numbers = #tpu.dot_dimension_numbers<[1], [0], [0], [1], [0, 0, 1, 1], [], []>} : vector<432x12xbf16>, vector<12x2xbf16>, vector<432x2xf32> -> vector<432x2xf32>
    %25 = arith.addf %19, %24 : vector<432x2xf32>
    %c0_11 = arith.constant 0 : index
    %c0_12 = arith.constant 0 : index
    %26 = vector.load %arg5[%c0_11, %c0_12] : memref<1x2xf32, #tpu.memory_space<vmem>>, vector<1x2xf32>
    %27 = vector.shape_cast %26 : vector<1x2xf32> to vector<2xf32>
    %28 = vector.shape_cast %27 : vector<2xf32> to vector<1x2xf32>
    %29 = vector.broadcast %28 : vector<1x2xf32> to vector<432x2xf32>
    %30 = arith.addf %25, %29 : vector<432x2xf32>
    %31 = arith.negf %30 : vector<432x2xf32>
    %32 = math.exp %31 : vector<432x2xf32>
    %cst_13 = arith.constant 1.000000e+00 : f32
    %33 = vector.broadcast %cst_13 : f32 to vector<432x2xf32>
    %34 = arith.addf %33, %32 : vector<432x2xf32>
    %35 = arith.divf %33, %34 : vector<432x2xf32>
    %36 = arith.mulf %30, %35 : vector<432x2xf32>
    %37 = vector.shape_cast %36 : vector<432x2xf32> to vector<18x24x2xf32>
    %38 = tpu.iota {dimensions = array<i32: 0>} : vector<18x24x1xi32>
    %39 = tpu.iota {dimensions = array<i32: 1>} : vector<18x24x1xi32>
    %c1_i32 = arith.constant 1 : i32
    %40 = vector.broadcast %c1_i32 : i32 to vector<18x24x1xi32>
    %41 = arith.cmpi sge, %39, %40 : vector<18x24x1xi32>
    %c16_i32_14 = arith.constant 16 : i32
    %42 = vector.broadcast %c16_i32_14 : i32 to vector<18x24x1xi32>
    %43 = arith.cmpi sle, %39, %42 : vector<18x24x1xi32>
    %44 = arith.andi %41, %43 : vector<18x24x1xi1>
    %c1_i32_15 = arith.constant 1 : i32
    %45 = vector.broadcast %c1_i32_15 : i32 to vector<18x24x1xi32>
    %46 = arith.cmpi sge, %38, %45 : vector<18x24x1xi32>
    %c0_i32 = arith.constant 0 : i32
    %47 = arith.cmpi sgt, %arg1, %c0_i32 : i32
    %48 = vector.broadcast %47 : i1 to vector<18x24x1xi1>
    %49 = arith.ori %46, %48 : vector<18x24x1xi1>
    %50 = arith.andi %44, %49 : vector<18x24x1xi1>
    %c16_i32_16 = arith.constant 16 : i32
    %51 = vector.broadcast %c16_i32_16 : i32 to vector<18x24x1xi32>
    %52 = arith.cmpi sle, %38, %51 : vector<18x24x1xi32>
    %c0_i32_17 = arith.constant 0 : i32
    %53 = arith.cmpi slt, %arg1, %c0_i32_17 : i32
    %54 = vector.broadcast %53 : i1 to vector<18x24x1xi1>
    %55 = arith.ori %52, %54 : vector<18x24x1xi1>
    %56 = arith.andi %50, %55 : vector<18x24x1xi1>
    %cst_18 = arith.constant 0.000000e+00 : f32
    %57 = vector.shape_cast %56 : vector<18x24x1xi1> to vector<18x24x1xi1>
    %58 = vector.broadcast %57 : vector<18x24x1xi1> to vector<18x24x2xi1>
    %59 = vector.broadcast %cst_18 : f32 to vector<18x24x2xf32>
    %60 = arith.select %58, %37, %59 : vector<18x24x2xi1>, vector<18x24x2xf32>
    %61 = arith.truncf %60 : vector<18x24x2xf32> to vector<18x24x2xbf16>
    %62 = vector.extract_strided_slice %61 {offsets = [0, 0, 0], sizes = [18, 16, 2], strides = [1, 1, 1]} : vector<18x24x2xbf16> to vector<18x16x2xbf16>
    %63 = vector.extract_strided_slice %61 {offsets = [0, 1, 0], sizes = [18, 16, 2], strides = [1, 1, 1]} : vector<18x24x2xbf16> to vector<18x16x2xbf16>
    %64 = vector.extract_strided_slice %61 {offsets = [0, 2, 0], sizes = [18, 16, 2], strides = [1, 1, 1]} : vector<18x24x2xbf16> to vector<18x16x2xbf16>
    %65 = tpu.concatenate %62, %63, %64 in 2 : vector<18x16x2xbf16>, vector<18x16x2xbf16>, vector<18x16x2xbf16> -> vector<18x16x6xbf16>
    %66 = vector.extract_strided_slice %65 {offsets = [0, 0, 0], sizes = [16, 16, 6], strides = [1, 1, 1]} : vector<18x16x6xbf16> to vector<16x16x6xbf16>
    %67 = vector.shape_cast %66 : vector<16x16x6xbf16> to vector<256x6xbf16>
    %c0_19 = arith.constant 0 : index
    %c0_20 = arith.constant 0 : index
    %c0_21 = arith.constant 0 : index
    %68 = vector.load %arg4[%c0_19, %c0_20, %c0_21] : memref<3x6x4xbf16, #tpu.memory_space<vmem>>, vector<1x6x4xbf16>
    %69 = vector.shape_cast %68 : vector<1x6x4xbf16> to vector<6x4xbf16>
    %cst_22 = arith.constant dense<0.000000e+00> : vector<256x4xf32>
    %70 = tpu.matmul %67, %69, %cst_22 {dimension_numbers = #tpu.dot_dimension_numbers<[1], [0], [0], [1], [0, 0, 1, 1], [], []>} : vector<256x6xbf16>, vector<6x4xbf16>, vector<256x4xf32> -> vector<256x4xf32>
    %71 = vector.extract_strided_slice %65 {offsets = [1, 0, 0], sizes = [16, 16, 6], strides = [1, 1, 1]} : vector<18x16x6xbf16> to vector<16x16x6xbf16>
    %72 = vector.shape_cast %71 : vector<16x16x6xbf16> to vector<256x6xbf16>
    %c1_23 = arith.constant 1 : index
    %c0_24 = arith.constant 0 : index
    %c0_25 = arith.constant 0 : index
    %73 = vector.load %arg4[%c1_23, %c0_24, %c0_25] : memref<3x6x4xbf16, #tpu.memory_space<vmem>>, vector<1x6x4xbf16>
    %74 = vector.shape_cast %73 : vector<1x6x4xbf16> to vector<6x4xbf16>
    %cst_26 = arith.constant dense<0.000000e+00> : vector<256x4xf32>
    %75 = tpu.matmul %72, %74, %cst_26 {dimension_numbers = #tpu.dot_dimension_numbers<[1], [0], [0], [1], [0, 0, 1, 1], [], []>} : vector<256x6xbf16>, vector<6x4xbf16>, vector<256x4xf32> -> vector<256x4xf32>
    %76 = arith.addf %70, %75 : vector<256x4xf32>
    %77 = vector.extract_strided_slice %65 {offsets = [2, 0, 0], sizes = [16, 16, 6], strides = [1, 1, 1]} : vector<18x16x6xbf16> to vector<16x16x6xbf16>
    %78 = vector.shape_cast %77 : vector<16x16x6xbf16> to vector<256x6xbf16>
    %c2_27 = arith.constant 2 : index
    %c0_28 = arith.constant 0 : index
    %c0_29 = arith.constant 0 : index
    %79 = vector.load %arg4[%c2_27, %c0_28, %c0_29] : memref<3x6x4xbf16, #tpu.memory_space<vmem>>, vector<1x6x4xbf16>
    %80 = vector.shape_cast %79 : vector<1x6x4xbf16> to vector<6x4xbf16>
    %cst_30 = arith.constant dense<0.000000e+00> : vector<256x4xf32>
    %81 = tpu.matmul %78, %80, %cst_30 {dimension_numbers = #tpu.dot_dimension_numbers<[1], [0], [0], [1], [0, 0, 1, 1], [], []>} : vector<256x6xbf16>, vector<6x4xbf16>, vector<256x4xf32> -> vector<256x4xf32>
    %82 = arith.addf %76, %81 : vector<256x4xf32>
    %c0_31 = arith.constant 0 : index
    %c0_32 = arith.constant 0 : index
    %83 = vector.load %arg6[%c0_31, %c0_32] : memref<1x4xf32, #tpu.memory_space<vmem>>, vector<1x4xf32>
    %84 = vector.shape_cast %83 : vector<1x4xf32> to vector<4xf32>
    %85 = vector.shape_cast %84 : vector<4xf32> to vector<1x4xf32>
    %86 = vector.broadcast %85 : vector<1x4xf32> to vector<256x4xf32>
    %87 = arith.addf %82, %86 : vector<256x4xf32>
    %88 = arith.negf %87 : vector<256x4xf32>
    %89 = math.exp %88 : vector<256x4xf32>
    %cst_33 = arith.constant 1.000000e+00 : f32
    %90 = vector.broadcast %cst_33 : f32 to vector<256x4xf32>
    %91 = arith.addf %90, %89 : vector<256x4xf32>
    %92 = arith.divf %90, %91 : vector<256x4xf32>
    %93 = arith.mulf %87, %92 : vector<256x4xf32>
    %94 = vector.shape_cast %93 : vector<256x4xf32> to vector<16x16x4xf32>
    %95 = vector.extract_strided_slice %4 {offsets = [2, 2, 0], sizes = [16, 16, 4], strides = [1, 1, 1]} : vector<20x26x4xbf16> to vector<16x16x4xbf16>
    %96 = arith.extf %95 : vector<16x16x4xbf16> to vector<16x16x4xf32>
    %97 = arith.addf %94, %96 : vector<16x16x4xf32>
    %c0_34 = arith.constant 0 : index
    %c0_35 = arith.constant 0 : index
    %c0_36 = arith.constant 0 : index
    %c0_37 = arith.constant 0 : index
    %98 = vector.load %arg7[%c0_34, %c0_35, %c0_36, %c0_37] : memref<1x16x16x4xf32, #tpu.memory_space<vmem>>, vector<1x16x16x4xf32>
    %99 = vector.shape_cast %98 : vector<1x16x16x4xf32> to vector<16x16x4xf32>
    %100 = vector.shape_cast %97 : vector<16x16x4xf32> to vector<1x16x16x4xf32>
    tpu.vector_store %arg7[%c0_34, %c0_35, %c0_36, %c0_37], %100 {strides = array<i32>} : memref<1x16x16x4xf32, #tpu.memory_space<vmem>>, vector<1x16x16x4xf32>,
    return
  }
  func.func @transform_0(%arg0: i32, %arg1: i32) -> (i32, i32, i32, i32) {
    %c0_i32 = arith.constant 0 : i32
    %c0_i32_0 = arith.constant 0 : i32
    %c0_i32_1 = arith.constant 0 : i32
    %c0_i32_2 = arith.constant 0 : i32
    return %arg0, %c0_i32, %c0_i32_0, %c0_i32_1 : i32, i32, i32, i32
  }
  func.func @transform_1(%arg0: i32, %arg1: i32) -> (i32, i32, i32) {
    %c0_i32 = arith.constant 0 : i32
    %c0_i32_0 = arith.constant 0 : i32
    %c0_i32_1 = arith.constant 0 : i32
    %c0_i32_2 = arith.constant 0 : i32
    return %c0_i32, %c0_i32_0, %c0_i32_1 : i32, i32, i32
  }
  func.func @transform_2(%arg0: i32, %arg1: i32) -> (i32, i32, i32) {
    %c0_i32 = arith.constant 0 : i32
    %c0_i32_0 = arith.constant 0 : i32
    %c0_i32_1 = arith.constant 0 : i32
    %c0_i32_2 = arith.constant 0 : i32
    return %c0_i32, %c0_i32_0, %c0_i32_1 : i32, i32, i32
  }
  func.func @transform_3(%arg0: i32, %arg1: i32) -> (i32, i32) {
    %c0_i32 = arith.constant 0 : i32
    %c0_i32_0 = arith.constant 0 : i32
    %c0_i32_1 = arith.constant 0 : i32
    return %c0_i32, %c0_i32_0 : i32, i32
  }
  func.func @transform_4(%arg0: i32, %arg1: i32) -> (i32, i32) {
    %c0_i32 = arith.constant 0 : i32
    %c0_i32_0 = arith.constant 0 : i32
    %c0_i32_1 = arith.constant 0 : i32
    return %c0_i32, %c0_i32_0 : i32, i32
  }
  func.func @transform_5(%arg0: i32, %arg1: i32) -> (i32, i32, i32, i32) {
    %c0_i32 = arith.constant 0 : i32
    %c0_i32_0 = arith.constant 0 : i32
    %c0_i32_1 = arith.constant 0 : i32
    return %arg0, %arg1, %c0_i32, %c0_i32_0 : i32, i32, i32, i32
  }
}

</mosaic_0001>

<llo_original>
// kernel: bottleneck_c2f_forward.1
$region0: #{bottleneck_c2f_forward.1}
  #allocation0 [shape = 'u32[]', space=smem, size = 0x4, offset = 0x4, fixed_abs, tag = 'smem constant byte address 0x4 - core index']
  #allocation1 [shape = 'u32[144,128]{1,0:T(1,128)}', space=vmem, size = 0x12000, scoped, tag = 'internal scratch']
  %s0 = inlined_call_operand.vmem [shape: bf16[2,20,26,4], index: 0, kind: input, shape index: {}]
  %s1 = inlined_call_operand.vmem [shape: bf16[3,12,2], index: 1, kind: input, shape index: {}]
  %s2 = inlined_call_operand.vmem [shape: bf16[3,6,4], index: 2, kind: input, shape index: {}]
  %s3 = inlined_call_operand.vmem [shape: f32[1,2], index: 3, kind: input, shape index: {}]
  %s4 = inlined_call_operand.vmem [shape: f32[1,4], index: 4, kind: input, shape index: {}]
  %s5 = inlined_call_operand.vmem [shape: f32[2,4,256], index: 5, kind: output, shape index: {}]
  %s6 = sld [smem:[#allocation0]]
  $region53: #{bottleneck_c2f_forward.1} parent=0
    _
  %s8 = ssub.s32 1, %s6
  %s9 = scalar_select 0, %s8, %s6
  loop: start=0, step=1, limit=4
  $region2: #{bottleneck_c2f_forward.1} parent=0 // loop_pre_header
    _
  $region3: #{bottleneck_c2f_forward.1} parent=0 // loop_header
    %s11 = sphi 0, %s15
    %p12 = scmp.ge.s32.totalorder %s11, 4
    %s18 = sphi 0, %s30
    %s19 = sphi 0, %s26
    %s20 = sphi 0, %s18
    %s21 = sphi 0, %s19
    %s22 = sphi 0, %s20
    %s23 = sphi 0, %s21
    %s33 = sphi 0, %s35
    %s36 = sphi 0, %s33
    %s37 = sphi 0, %s36
    %s53 = sphi 0, %s37
    %s57 = sphi 0, %s57
    %s59 = sphi 0, %s57
    %s60 = sphi 0, %s59
    %s74 = sphi 0, %s60
    %s78 = sphi 0, %s78
    %s80 = sphi 0, %s78
    %s81 = sphi 0, %s80
    %s95 = sphi 0, %s81
    %s99 = sphi 0, %s99
    %s101 = sphi 0, %s99
    %s102 = sphi 0, %s101
    %s116 = sphi 0, %s102
    %s120 = sphi 0, %s120
    %s122 = sphi 0, %s120
    %s123 = sphi 0, %s122
    %s137 = sphi 0, %s123
    %s145 = sphi 0, %s147
    %s148 = sphi 0, %s145
    %s149 = sphi 0, %s148
    %s165 = sphi 0, %s149
  $region4: #{bottleneck_c2f_forward.1} parent=0 // loop_header_branch
    %14 = sbr.rel (%p12) target = $region8
  $region5: #{bottleneck_c2f_forward.1} parent=0 // loop_body
    %s16 = ssub.s32 %s11, 1
    %s17 = ssub.s32 %s11, 2
    %s24 = sadd.s32 1, %s19
    %p25 = scmp.ge.s32.totalorder %s24, 1
    %s26 = scalar_select %p25, 0, %s24
    %s27 = sadd.s32 1, %s18
    %s28 = scalar_select %p25, %s27, %s18
    %p29 = scmp.ge.s32.totalorder %s28, 2
    %s30 = scalar_select %p29, 0, %s28
    %s31 = ssub.s32 %s18, %s30
    %p32 = scmp.eq.s32.totalorder %s31, 0
    %s34 = sadd.s32 %s33, 1
    %s35 = scalar_select %p32, %s33, %s34
    %p38 = pneg %p32
    %p39 = scmp.eq.s32.totalorder %s11, 1
    %p40 = por %p38, %p39
    %p41 = scmp.ne.s32.totalorder %s33, %s36
    %p42 = scmp.eq.s32.totalorder %s11, 0
    %p43 = por %p41, %p42
    %p44 = scmp.ne.s32.totalorder %s33, %s36
    %p45 = scmp.eq.s32.totalorder %s16, 1
    %p46 = por %p44, %p45
    %p47 = scmp.ne.s32.totalorder %s36, %s37
    %p48 = scmp.eq.s32.totalorder %s16, 0
    %p49 = por %p47, %p48
    %p50 = scmp.ne.s32.totalorder %s36, %s37
    %p51 = scmp.eq.s32.totalorder %s17, 1
    %p52 = por %p50, %p51
    %p54 = scmp.ne.s32.totalorder %s37, %s53
    %p55 = scmp.eq.s32.totalorder %s17, 0
    %p56 = por %p54, %p55
    %s58 = sadd.s32 %s57, 1
    %p61 = scmp.eq.s32.totalorder %s11, 1
    %p62 = scmp.ne.s32.totalorder %s57, %s59
    %p63 = scmp.eq.s32.totalorder %s11, 0
    %p64 = por %p62, %p63
    %p65 = scmp.ne.s32.totalorder %s57, %s59
    %p66 = scmp.eq.s32.totalorder %s16, 1
    %p67 = por %p65, %p66
    %p68 = scmp.ne.s32.totalorder %s59, %s60
    %p69 = scmp.eq.s32.totalorder %s16, 0
    %p70 = por %p68, %p69
    %p71 = scmp.ne.s32.totalorder %s59, %s60
    %p72 = scmp.eq.s32.totalorder %s17, 1
    %p73 = por %p71, %p72
    %p75 = scmp.ne.s32.totalorder %s60, %s74
    %p76 = scmp.eq.s32.totalorder %s17, 0
    %p77 = por %p75, %p76
    %s79 = sadd.s32 %s78, 1
    %p82 = scmp.eq.s32.totalorder %s11, 1
    %p83 = scmp.ne.s32.totalorder %s78, %s80
    %p84 = scmp.eq.s32.totalorder %s11, 0
    %p85 = por %p83, %p84
    %p86 = scmp.ne.s32.totalorder %s78, %s80
    %p87 = scmp.eq.s32.totalorder %s16, 1
    %p88 = por %p86, %p87
    %p89 = scmp.ne.s32.totalorder %s80, %s81
    %p90 = scmp.eq.s32.totalorder %s16, 0
    %p91 = por %p89, %p90
    %p92 = scmp.ne.s32.totalorder %s80, %s81
    %p93 = scmp.eq.s32.totalorder %s17, 1
    %p94 = por %p92, %p93
    %p96 = scmp.ne.s32.totalorder %s81, %s95
    %p97 = scmp.eq.s32.totalorder %s17, 0
    %p98 = por %p96, %p97
    %s100 = sadd.s32 %s99, 1
    %p103 = scmp.eq.s32.totalorder %s11, 1
    %p104 = scmp.ne.s32.totalorder %s99, %s101
    %p105 = scmp.eq.s32.totalorder %s11, 0
    %p106 = por %p104, %p105
    %p107 = scmp.ne.s32.totalorder %s99, %s101
    %p108 = scmp.eq.s32.totalorder %s16, 1
    %p109 = por %p107, %p108
    %p110 = scmp.ne.s32.totalorder %s101, %s102
    %p111 = scmp.eq.s32.totalorder %s16, 0
    %p112 = por %p110, %p111
    %p113 = scmp.ne.s32.totalorder %s101, %s102
    %p114 = scmp.eq.s32.totalorder %s17, 1
    %p115 = por %p113, %p114
    %p117 = scmp.ne.s32.totalorder %s102, %s116
    %p118 = scmp.eq.s32.totalorder %s17, 0
    %p119 = por %p117, %p118
    %s121 = sadd.s32 %s120, 1
    %p124 = scmp.eq.s32.totalorder %s11, 1
    %p125 = scmp.ne.s32.totalorder %s120, %s122
    %p126 = scmp.eq.s32.totalorder %s11, 0
    %p127 = por %p125, %p126
    %p128 = scmp.ne.s32.totalorder %s120, %s122
    %p129 = scmp.eq.s32.totalorder %s16, 1
    %p130 = por %p128, %p129
    %p131 = scmp.ne.s32.totalorder %s122, %s123
    %p132 = scmp.eq.s32.totalorder %s16, 0
    %p133 = por %p131, %p132
    %p134 = scmp.ne.s32.totalorder %s122, %s123
    %p135 = scmp.eq.s32.totalorder %s17, 1
    %p136 = por %p134, %p135
    %p138 = scmp.ne.s32.totalorder %s123, %s137
    %p139 = scmp.eq.s32.totalorder %s17, 0
    %p140 = por %p138, %p139
    %s141 = ssub.s32 %s18, %s30
    %s142 = ssub.s32 %s19, %s26
    %s143 = sor.u32 %s141, %s142
    %p144 = scmp.eq.s32.totalorder %s143, 0
    %s146 = sadd.s32 %s145, 1
    %s147 = scalar_select %p144, %s145, %s146
    %p150 = pneg %p144
    %p151 = scmp.eq.s32.totalorder %s11, 1
    %p152 = por %p150, %p151
    %p153 = scmp.ne.s32.totalorder %s145, %s148
    %p154 = scmp.eq.s32.totalorder %s11, 0
    %p155 = por %p153, %p154
    %p156 = scmp.ne.s32.totalorder %s145, %s148
    %p157 = scmp.eq.s32.totalorder %s16, 1
    %p158 = por %p156, %p157
    %p159 = scmp.ne.s32.totalorder %s148, %s149
    %p160 = scmp.eq.s32.totalorder %s16, 0
    %p161 = por %p159, %p160
    %p162 = scmp.ne.s32.totalorder %s148, %s149
    %p163 = scmp.eq.s32.totalorder %s17, 1
    %p164 = por %p162, %p163
    %p166 = scmp.ne.s32.totalorder %s149, %s165
    %p167 = scmp.eq.s32.totalorder %s17, 0
    %p168 = por %p166, %p167
    %p169 = scmp.le.s32.totalorder 1, %s11
    %p170 = scmp.lt.s32.totalorder %s11, 3
    %p171 = pnand %p169, %p170
    %p172 = pneg %p171
    // Predicated region
    $region9: #{bottleneck_c2f_forward.1} parent=5 // pred_check
      _
    $region10: #{bottleneck_c2f_forward.1} parent=5 // pred_check_branch
      %174 = sbr.rel (%p171) target = $region12
    $region11: #{bottleneck_c2f_forward.1} parent=5 // pred_region
      %s175 = ssub.s32 %s11, 1
      // Predicated region
      $region13: #{bottleneck_c2f_forward.1} parent=11 // pred_check
        %p176 = pneg %p70
      $region14: #{bottleneck_c2f_forward.1} parent=11 // pred_check_branch
        %178 = sbr.rel (%p176) target = $region16
      $region15: #{bottleneck_c2f_forward.1} parent=11 // pred_region
        _
      $region16: #{bottleneck_c2f_forward.1} parent=11 // pred_fallthru
        _
      // Predicated region
      $region17: #{bottleneck_c2f_forward.1} parent=11 // pred_check
        %p179 = pneg %p91
      $region18: #{bottleneck_c2f_forward.1} parent=11 // pred_check_branch
        %181 = sbr.rel (%p179) target = $region20
      $region19: #{bottleneck_c2f_forward.1} parent=11 // pred_region
        _
      $region20: #{bottleneck_c2f_forward.1} parent=11 // pred_fallthru
        _
      // Predicated region
      $region21: #{bottleneck_c2f_forward.1} parent=11 // pred_check
        %p182 = pneg %p112
      $region22: #{bottleneck_c2f_forward.1} parent=11 // pred_check_branch
        %184 = sbr.rel (%p182) target = $region24
      $region23: #{bottleneck_c2f_forward.1} parent=11 // pred_region
        _
      $region24: #{bottleneck_c2f_forward.1} parent=11 // pred_fallthru
        _
      // Predicated region
      $region25: #{bottleneck_c2f_forward.1} parent=11 // pred_check
        %p185 = pneg %p133
      $region26: #{bottleneck_c2f_forward.1} parent=11 // pred_check_branch
        %187 = sbr.rel (%p185) target = $region28
      $region27: #{bottleneck_c2f_forward.1} parent=11 // pred_region
        _
      $region28: #{bottleneck_c2f_forward.1} parent=11 // pred_fallthru
        _
    $region12: #{bottleneck_c2f_forward.1} parent=5 // pred_fallthru
      _
    %p188 = scmp.lt.s32.totalorder %s11, 2
    // Predicated region
    $region29: #{bottleneck_c2f_forward.1} parent=5 // pred_check
      %p189 = pneg %p188
    $region30: #{bottleneck_c2f_forward.1} parent=5 // pred_check_branch
      %191 = sbr.rel (%p189) target = $region32
    $region31: #{bottleneck_c2f_forward.1} parent=5 // pred_region
      // Predicated region
      $region33: #{bottleneck_c2f_forward.1} parent=31 // pred_check
        %p192 = pneg %p43
      $region34: #{bottleneck_c2f_forward.1} parent=31 // pred_check_branch
        %194 = sbr.rel (%p192) target = $region36
      $region35: #{bottleneck_c2f_forward.1} parent=31 // pred_region
        %p195 = scmp.lt.s32.totalorder %s18, 1
        %s196 = scalar_select %p195, %s18, 1
        %s197 = smul.addr %s196, 80
        %s198 = smul.addr %s197, 4
        %s199 = scalar_lea.vmem %s0, %s198
      $region36: #{bottleneck_c2f_forward.1} parent=31 // pred_fallthru
        _
    $region32: #{bottleneck_c2f_forward.1} parent=5 // pred_fallthru
      _
    %p200 = scmp.le.s32.totalorder 1, %s11
    %p201 = scmp.lt.s32.totalorder %s11, 3
    %p202 = pnand %p200, %p201
    %p203 = pneg %p202
    // Predicated region
    $region37: #{bottleneck_c2f_forward.1} parent=5 // pred_check
      _
    $region38: #{bottleneck_c2f_forward.1} parent=5 // pred_check_branch
      %205 = sbr.rel (%p202) target = $region40
    $region39: #{bottleneck_c2f_forward.1} parent=5 // pred_region
      %s206 = ssub.s32 %s11, 1
      %p207 = scmp.lt.s32.totalorder %s20, 1
      %s208 = scalar_select %p207, %s20, 1
      %s209 = smul.addr %s208, 80
      %s210 = smul.addr %s209, 4
      %s211 = scalar_lea.vmem %s0, %s210
      %p212 = pneg %p49
      %p213 = pneg %p46
      %p214 = pneg %p70
      %p215 = pneg %p67
      %p216 = pneg %p91
      %p217 = pneg %p88
      %p218 = pneg %p112
      %p219 = pneg %p109
      %p220 = pneg %p133
      %p221 = pneg %p130
      %p222 = pneg %p161
      %p223 = pneg %p158
      %s224 = smul.u32 2, %s21
      %p225 = scmp.lt.s32.totalorder %s20, 1
      %s226 = scalar_select %p225, %s20, 1
      %p227 = scmp.lt.s32.totalorder %s224, 1
      %s228 = scalar_select %p227, %s224, 1
      %s229 = smul.addr %s226, 2
      %s230 = sadd.s32 %s228, %s229
      %s231 = smul.addr %s230, 4
      %s232 = scalar_lea.vmem %s5, %s231
      %p233 = scmp.lt.s32.totalorder %s20, 1
      %s234 = scalar_select %p233, %s20, 1
      %s235 = smul.addr %s234, 80
      %s236 = smul.addr %s235, 4
      %s237 = scalar_lea.vmem %s0, %s236
      %s238 = smul.u32 2, %s21
      %p239 = scmp.lt.s32.totalorder %s20, 1
      %s240 = scalar_select %p239, %s20, 1
      %p241 = scmp.lt.s32.totalorder %s238, 1
      %s242 = scalar_select %p241, %s238, 1
      %s243 = smul.addr %s240, 2
      %s244 = sadd.s32 %s242, %s243
      %s245 = smul.addr %s244, 4
      %s246 = scalar_lea.vmem %s5, %s245
      %s247 = smul.u32 2, %s21
      %s249 = smul.u32 %s21, 16
      %s250 = smul.u32 %s249, 4
      %s251 = smul.addr %s250, 4
      %s252 = scalar_lea.vmem %s237, %s251
      %v253 = vld [vmem:[%s252] sm:$0xf]
      %v254 = vld [vmem:[%s252 + $0x4] sm:$0xf]
      %v255 = vld [vmem:[%s252 + $0x8] sm:$0xf]
      %v256 = vld [vmem:[%s252 + $0xc] sm:$0x1]
      %v257 = vld [vmem:[%s252 + $0x10] sm:$0xf]
      %v258 = vld [vmem:[%s252 + $0x14] sm:$0xf]
      %v259 = vld [vmem:[%s252 + $0x18] sm:$0xf]
      %v260 = vld [vmem:[%s252 + $0x1c] sm:$0x1]
      %v261 = vld [vmem:[%s252 + $0x20] sm:$0xf]
      %v262 = vld [vmem:[%s252 + $0x24] sm:$0xf]
      %v263 = vld [vmem:[%s252 + $0x28] sm:$0xf]
      %v264 = vld [vmem:[%s252 + $0x2c] sm:$0x1]
      %v265 = vld [vmem:[%s252 + $0x30] sm:$0xf]
      %v266 = vld [vmem:[%s252 + $0x34] sm:$0xf]
      %v267 = vld [vmem:[%s252 + $0x38] sm:$0xf]
      %v268 = vld [vmem:[%s252 + $0x3c] sm:$0x1]
      %v269 = vld [vmem:[%s252 + $0x40] sm:$0xf]
      %v270 = vld [vmem:[%s252 + $0x44] sm:$0xf]
      %v271 = vld [vmem:[%s252 + $0x48] sm:$0xf]
      %v272 = vld [vmem:[%s252 + $0x4c] sm:$0x1]
      %v273 = vld [vmem:[%s252 + $0x50] sm:$0xf]
      %v274 = vld [vmem:[%s252 + $0x54] sm:$0xf]
      %v275 = vld [vmem:[%s252 + $0x58] sm:$0xf]
      %v276 = vld [vmem:[%s252 + $0x5c] sm:$0x1]
      %v277 = vld [vmem:[%s252 + $0x60] sm:$0xf]
      %v278 = vld [vmem:[%s252 + $0x64] sm:$0xf]
      %v279 = vld [vmem:[%s252 + $0x68] sm:$0xf]
      %v280 = vld [vmem:[%s252 + $0x6c] sm:$0x1]
      %v281 = vld [vmem:[%s252 + $0x70] sm:$0xf]
      %v282 = vld [vmem:[%s252 + $0x74] sm:$0xf]
      %v283 = vld [vmem:[%s252 + $0x78] sm:$0xf]
      %v284 = vld [vmem:[%s252 + $0x7c] sm:$0x1]
      %v285 = vld [vmem:[%s252 + $0x80] sm:$0xf]
      %v286 = vld [vmem:[%s252 + $0x84] sm:$0xf]
      %v287 = vld [vmem:[%s252 + $0x88] sm:$0xf]
      %v288 = vld [vmem:[%s252 + $0x8c] sm:$0x1]
      %v289 = vld [vmem:[%s252 + $0x90] sm:$0xf]
      %v290 = vld [vmem:[%s252 + $0x94] sm:$0xf]
      %v291 = vld [vmem:[%s252 + $0x98] sm:$0xf]
      %v292 = vld [vmem:[%s252 + $0x9c] sm:$0x1]
      %v293 = vld [vmem:[%s252 + $0xa0] sm:$0xf]
      %v294 = vld [vmem:[%s252 + $0xa4] sm:$0xf]
      %v295 = vld [vmem:[%s252 + $0xa8] sm:$0xf]
      %v296 = vld [vmem:[%s252 + $0xac] sm:$0x1]
      %v297 = vld [vmem:[%s252 + $0xb0] sm:$0xf]
      %v298 = vld [vmem:[%s252 + $0xb4] sm:$0xf]
      %v299 = vld [vmem:[%s252 + $0xb8] sm:$0xf]
      %v300 = vld [vmem:[%s252 + $0xbc] sm:$0x1]
      %v301 = vld [vmem:[%s252 + $0xc0] sm:$0xf]
      %v302 = vld [vmem:[%s252 + $0xc4] sm:$0xf]
      %v303 = vld [vmem:[%s252 + $0xc8] sm:$0xf]
      %v304 = vld [vmem:[%s252 + $0xcc] sm:$0x1]
      %v305 = vld [vmem:[%s252 + $0xd0] sm:$0xf]
      %v306 = vld [vmem:[%s252 + $0xd4] sm:$0xf]
      %v307 = vld [vmem:[%s252 + $0xd8] sm:$0xf]
      %v308 = vld [vmem:[%s252 + $0xdc] sm:$0x1]
      %v309 = vld [vmem:[%s252 + $0xe0] sm:$0xf]
      %v310 = vld [vmem:[%s252 + $0xe4] sm:$0xf]
      %v311 = vld [vmem:[%s252 + $0xe8] sm:$0xf]
      %v312 = vld [vmem:[%s252 + $0xec] sm:$0x1]
      %v313 = vld [vmem:[%s252 + $0xf0] sm:$0xf]
      %v314 = vld [vmem:[%s252 + $0xf4] sm:$0xf]
      %v315 = vld [vmem:[%s252 + $0xf8] sm:$0xf]
      %v316 = vld [vmem:[%s252 + $0xfc] sm:$0x1]
      %v317 = vld [vmem:[%s252 + $0x100] sm:$0xf]
      %v318 = vld [vmem:[%s252 + $0x104] sm:$0xf]
      %v319 = vld [vmem:[%s252 + $0x108] sm:$0xf]
      %v320 = vld [vmem:[%s252 + $0x10c] sm:$0x1]
      %v321 = vld [vmem:[%s252 + $0x110] sm:$0xf]
      %v322 = vld [vmem:[%s252 + $0x114] sm:$0xf]
      %v323 = vld [vmem:[%s252 + $0x118] sm:$0xf]
      %v324 = vld [vmem:[%s252 + $0x11c] sm:$0x1]
      %v325 = vld [vmem:[%s252 + $0x120] sm:$0xf]
      %v326 = vld [vmem:[%s252 + $0x124] sm:$0xf]
      %v327 = vld [vmem:[%s252 + $0x128] sm:$0xf]
      %v328 = vld [vmem:[%s252 + $0x12c] sm:$0x1]
      %v329 = vld [vmem:[%s252 + $0x130] sm:$0xf]
      %v330 = vld [vmem:[%s252 + $0x134] sm:$0xf]
      %v331 = vld [vmem:[%s252 + $0x138] sm:$0xf]
      %v332 = vld [vmem:[%s252 + $0x13c] sm:$0x1]
      %v393 = vunpack.c.l.b16 %v253
      %v394 = vunpack.c.l.b16 %v254
      %v395 = vunpack.c.l.b16 %v255
      %v396 = vunpack.c.l.b16 %v257
      %v397 = vunpack.c.l.b16 %v258
      %v398 = vunpack.c.l.b16 %v259
      %v399 = vunpack.c.l.b16 %v261
      %v400 = vunpack.c.l.b16 %v262
      %v401 = vunpack.c.l.b16 %v263
      %v402 = vunpack.c.l.b16 %v265
      %v403 = vunpack.c.l.b16 %v266
      %v404 = vunpack.c.l.b16 %v267
      %v405 = vunpack.c.l.b16 %v269
      %v406 = vunpack.c.l.b16 %v270
      %v407 = vunpack.c.l.b16 %v271
      %v408 = vunpack.c.l.b16 %v273
      %v409 = vunpack.c.l.b16 %v274
      %v410 = vunpack.c.l.b16 %v275
      %v411 = vunpack.c.l.b16 %v277
      %v412 = vunpack.c.l.b16 %v278
      %v413 = vunpack.c.l.b16 %v279
      %v414 = vunpack.c.l.b16 %v281
      %v415 = vunpack.c.l.b16 %v282
      %v416 = vunpack.c.l.b16 %v283
      %v417 = vunpack.c.l.b16 %v285
      %v418 = vunpack.c.l.b16 %v286
      %v419 = vunpack.c.l.b16 %v287
      %v420 = vunpack.c.l.b16 %v289
      %v421 = vunpack.c.l.b16 %v290
      %v422 = vunpack.c.l.b16 %v291
      %v423 = vunpack.c.l.b16 %v293
      %v424 = vunpack.c.l.b16 %v294
      %v425 = vunpack.c.l.b16 %v295
      %v426 = vunpack.c.l.b16 %v297
      %v427 = vunpack.c.l.b16 %v298
      %v428 = vunpack.c.l.b16 %v299
      %v429 = vunpack.c.l.b16 %v301
      %v430 = vunpack.c.l.b16 %v302
      %v431 = vunpack.c.l.b16 %v303
      %v432 = vunpack.c.l.b16 %v305
      %v433 = vunpack.c.l.b16 %v306
      %v434 = vunpack.c.l.b16 %v307
      %v435 = vunpack.c.l.b16 %v309
      %v436 = vunpack.c.l.b16 %v310
      %v437 = vunpack.c.l.b16 %v311
      %v438 = vunpack.c.l.b16 %v313
      %v439 = vunpack.c.l.b16 %v314
      %v440 = vunpack.c.l.b16 %v315
      %v441 = vunpack.c.l.b16 %v317
      %v442 = vunpack.c.l.b16 %v318
      %v443 = vunpack.c.l.b16 %v319
      %v444 = vunpack.c.l.b16 %v321
      %v445 = vunpack.c.l.b16 %v322
      %v446 = vunpack.c.l.b16 %v323
      %v447 = vunpack.c.l.b16 %v325
      %v448 = vunpack.c.l.b16 %v326
      %v449 = vunpack.c.l.b16 %v327
      %v450 = vunpack.c.l.b16 %v329
      %v451 = vunpack.c.l.b16 %v330
      %v452 = vunpack.c.l.b16 %v331
      %v453 = vpack.c.b16 %v394, %v393
      %v454 = vpack.c.b16 %v395, %v395
      %v455 = vpack.c.b16 %v397, %v396
      %v456 = vpack.c.b16 %v398, %v398
      %v457 = vpack.c.b16 %v400, %v399
      %v458 = vpack.c.b16 %v401, %v401
      %v459 = vpack.c.b16 %v403, %v402
      %v460 = vpack.c.b16 %v404, %v404
      %v461 = vpack.c.b16 %v406, %v405
      %v462 = vpack.c.b16 %v407, %v407
      %v463 = vpack.c.b16 %v409, %v408
      %v464 = vpack.c.b16 %v410, %v410
      %v465 = vpack.c.b16 %v412, %v411
      %v466 = vpack.c.b16 %v413, %v413
      %v467 = vpack.c.b16 %v415, %v414
      %v468 = vpack.c.b16 %v416, %v416
      %v469 = vpack.c.b16 %v418, %v417
      %v470 = vpack.c.b16 %v419, %v419
      %v471 = vpack.c.b16 %v421, %v420
      %v472 = vpack.c.b16 %v422, %v422
      %v473 = vpack.c.b16 %v424, %v423
      %v474 = vpack.c.b16 %v425, %v425
      %v475 = vpack.c.b16 %v427, %v426
      %v476 = vpack.c.b16 %v428, %v428
      %v477 = vpack.c.b16 %v430, %v429
      %v478 = vpack.c.b16 %v431, %v431
      %v479 = vpack.c.b16 %v433, %v432
      %v480 = vpack.c.b16 %v434, %v434
      %v481 = vpack.c.b16 %v436, %v435
      %v482 = vpack.c.b16 %v437, %v437
      %v483 = vpack.c.b16 %v439, %v438
      %v484 = vpack.c.b16 %v440, %v440
      %v485 = vpack.c.b16 %v442, %v441
      %v486 = vpack.c.b16 %v443, %v443
      %v487 = vpack.c.b16 %v445, %v444
      %v488 = vpack.c.b16 %v446, %v446
      %v489 = vpack.c.b16 %v448, %v447
      %v490 = vpack.c.b16 %v449, %v449
      %v491 = vpack.c.b16 %v451, %v450
      %v492 = vpack.c.b16 %v452, %v452
      %v513 = vunpack.c.l.b16 %v256
      %v514 = vunpack.c.l.b16 %v260
      %v515 = vunpack.c.l.b16 %v264
      %v516 = vunpack.c.l.b16 %v268
      %v517 = vunpack.c.l.b16 %v272
      %v518 = vunpack.c.l.b16 %v276
      %v519 = vunpack.c.l.b16 %v280
      %v520 = vunpack.c.l.b16 %v284
      %v521 = vunpack.c.l.b16 %v288
      %v522 = vunpack.c.l.b16 %v292
      %v523 = vunpack.c.l.b16 %v296
      %v524 = vunpack.c.l.b16 %v300
      %v525 = vunpack.c.l.b16 %v304
      %v526 = vunpack.c.l.b16 %v308
      %v527 = vunpack.c.l.b16 %v312
      %v528 = vunpack.c.l.b16 %v316
      %v529 = vunpack.c.l.b16 %v320
      %v530 = vunpack.c.l.b16 %v324
      %v531 = vunpack.c.l.b16 %v328
      %v532 = vunpack.c.l.b16 %v332
      %v533 = vpack.c.b16 %v513, %v395
      %v534 = vpack.c.b16 %v514, %v398
      %v535 = vpack.c.b16 %v515, %v401
      %v536 = vpack.c.b16 %v516, %v404
      %v537 = vpack.c.b16 %v517, %v407
      %v538 = vpack.c.b16 %v518, %v410
      %v539 = vpack.c.b16 %v519, %v413
      %v540 = vpack.c.b16 %v520, %v416
      %v541 = vpack.c.b16 %v521, %v419
      %v542 = vpack.c.b16 %v522, %v422
      %v543 = vpack.c.b16 %v523, %v425
      %v544 = vpack.c.b16 %v524, %v428
      %v545 = vpack.c.b16 %v525, %v431
      %v546 = vpack.c.b16 %v526, %v434
      %v547 = vpack.c.b16 %v527, %v437
      %v548 = vpack.c.b16 %v528, %v440
      %v549 = vpack.c.b16 %v529, %v443
      %v550 = vpack.c.b16 %v530, %v446
      %v551 = vpack.c.b16 %v531, %v449
      %v552 = vpack.c.b16 %v532, %v452
      %vm553 = vsmask.f32 7424
      %v555 = vshrl.u32 %v453, 16
      %v557 = vshll.u32 %v453, 16
      %v559 = vrot.slane %v557, 1
      %v560 = vor.u32 %v555, %v559
      %v562 = vshll.u32 %v533, 16
      %v564 = vrot.slane %v562, 1
      %v565 = vsel %vm553, %v560, %v564
      %v566 = vshrl.u32 %v533, 16
      %v568 = vor.u32 %v566, %v564
      %v570 = vshrl.u32 %v455, 16
      %v572 = vshll.u32 %v455, 16
      %v574 = vrot.slane %v572, 1
      %v575 = vor.u32 %v570, %v574
      %v577 = vshll.u32 %v534, 16
      %v579 = vrot.slane %v577, 1
      %v580 = vsel %vm553, %v575, %v579
      %v581 = vshrl.u32 %v534, 16
      %v583 = vor.u32 %v581, %v579
      %v585 = vshrl.u32 %v457, 16
      %v587 = vshll.u32 %v457, 16
      %v589 = vrot.slane %v587, 1
      %v590 = vor.u32 %v585, %v589
      %v592 = vshll.u32 %v535, 16
      %v594 = vrot.slane %v592, 1
      %v595 = vsel %vm553, %v590, %v594
      %v596 = vshrl.u32 %v535, 16
      %v598 = vor.u32 %v596, %v594
      %v600 = vshrl.u32 %v459, 16
      %v602 = vshll.u32 %v459, 16
      %v604 = vrot.slane %v602, 1
      %v605 = vor.u32 %v600, %v604
      %v607 = vshll.u32 %v536, 16
      %v609 = vrot.slane %v607, 1
      %v610 = vsel %vm553, %v605, %v609
      %v611 = vshrl.u32 %v536, 16
      %v613 = vor.u32 %v611, %v609
      %v615 = vshrl.u32 %v461, 16
      %v617 = vshll.u32 %v461, 16
      %v619 = vrot.slane %v617, 1
      %v620 = vor.u32 %v615, %v619
      %v622 = vshll.u32 %v537, 16
      %v624 = vrot.slane %v622, 1
      %v625 = vsel %vm553, %v620, %v624
      %v626 = vshrl.u32 %v537, 16
      %v628 = vor.u32 %v626, %v624
      %v630 = vshrl.u32 %v463, 16
      %v632 = vshll.u32 %v463, 16
      %v634 = vrot.slane %v632, 1
      %v635 = vor.u32 %v630, %v634
      %v637 = vshll.u32 %v538, 16
      %v639 = vrot.slane %v637, 1
      %v640 = vsel %vm553, %v635, %v639
      %v641 = vshrl.u32 %v538, 16
      %v643 = vor.u32 %v641, %v639
      %v645 = vshrl.u32 %v465, 16
      %v647 = vshll.u32 %v465, 16
      %v649 = vrot.slane %v647, 1
      %v650 = vor.u32 %v645, %v649
      %v652 = vshll.u32 %v539, 16
      %v654 = vrot.slane %v652, 1
      %v655 = vsel %vm553, %v650, %v654
      %v656 = vshrl.u32 %v539, 16
      %v658 = vor.u32 %v656, %v654
      %v660 = vshrl.u32 %v467, 16
      %v662 = vshll.u32 %v467, 16
      %v664 = vrot.slane %v662, 1
      %v665 = vor.u32 %v660, %v664
      %v667 = vshll.u32 %v540, 16
      %v669 = vrot.slane %v667, 1
      %v670 = vsel %vm553, %v665, %v669
      %v671 = vshrl.u32 %v540, 16
      %v673 = vor.u32 %v671, %v669
      %v675 = vshrl.u32 %v469, 16
      %v677 = vshll.u32 %v469, 16
      %v679 = vrot.slane %v677, 1
      %v680 = vor.u32 %v675, %v679
      %v682 = vshll.u32 %v541, 16
      %v684 = vrot.slane %v682, 1
      %v685 = vsel %vm553, %v680, %v684
      %v686 = vshrl.u32 %v541, 16
      %v688 = vor.u32 %v686, %v684
      %v690 = vshrl.u32 %v471, 16
      %v692 = vshll.u32 %v471, 16
      %v694 = vrot.slane %v692, 1
      %v695 = vor.u32 %v690, %v694
      %v697 = vshll.u32 %v542, 16
      %v699 = vrot.slane %v697, 1
      %v700 = vsel %vm553, %v695, %v699
      %v701 = vshrl.u32 %v542, 16
      %v703 = vor.u32 %v701, %v699
      %v705 = vshrl.u32 %v473, 16
      %v707 = vshll.u32 %v473, 16
      %v709 = vrot.slane %v707, 1
      %v710 = vor.u32 %v705, %v709
      %v712 = vshll.u32 %v543, 16
      %v714 = vrot.slane %v712, 1
      %v715 = vsel %vm553, %v710, %v714
      %v716 = vshrl.u32 %v543, 16
      %v718 = vor.u32 %v716, %v714
      %v720 = vshrl.u32 %v475, 16
      %v722 = vshll.u32 %v475, 16
      %v724 = vrot.slane %v722, 1
      %v725 = vor.u32 %v720, %v724
      %v727 = vshll.u32 %v544, 16
      %v729 = vrot.slane %v727, 1
      %v730 = vsel %vm553, %v725, %v729
      %v731 = vshrl.u32 %v544, 16
      %v733 = vor.u32 %v731, %v729
      %v735 = vshrl.u32 %v477, 16
      %v737 = vshll.u32 %v477, 16
      %v739 = vrot.slane %v737, 1
      %v740 = vor.u32 %v735, %v739
      %v742 = vshll.u32 %v545, 16
      %v744 = vrot.slane %v742, 1
      %v745 = vsel %vm553, %v740, %v744
      %v746 = vshrl.u32 %v545, 16
      %v748 = vor.u32 %v746, %v744
      %v750 = vshrl.u32 %v479, 16
      %v752 = vshll.u32 %v479, 16
      %v754 = vrot.slane %v752, 1
      %v755 = vor.u32 %v750, %v754
      %v757 = vshll.u32 %v546, 16
      %v759 = vrot.slane %v757, 1
      %v760 = vsel %vm553, %v755, %v759
      %v761 = vshrl.u32 %v546, 16
      %v763 = vor.u32 %v761, %v759
      %v765 = vshrl.u32 %v481, 16
      %v767 = vshll.u32 %v481, 16
      %v769 = vrot.slane %v767, 1
      %v770 = vor.u32 %v765, %v769
      %v772 = vshll.u32 %v547, 16
      %v774 = vrot.slane %v772, 1
      %v775 = vsel %vm553, %v770, %v774
      %v776 = vshrl.u32 %v547, 16
      %v778 = vor.u32 %v776, %v774
      %v780 = vshrl.u32 %v483, 16
      %v782 = vshll.u32 %v483, 16
      %v784 = vrot.slane %v782, 1
      %v785 = vor.u32 %v780, %v784
      %v787 = vshll.u32 %v548, 16
      %v789 = vrot.slane %v787, 1
      %v790 = vsel %vm553, %v785, %v789
      %v791 = vshrl.u32 %v548, 16
      %v793 = vor.u32 %v791, %v789
      %v795 = vshrl.u32 %v485, 16
      %v797 = vshll.u32 %v485, 16
      %v799 = vrot.slane %v797, 1
      %v800 = vor.u32 %v795, %v799
      %v802 = vshll.u32 %v549, 16
      %v804 = vrot.slane %v802, 1
      %v805 = vsel %vm553, %v800, %v804
      %v806 = vshrl.u32 %v549, 16
      %v808 = vor.u32 %v806, %v804
      %v810 = vshrl.u32 %v487, 16
      %v812 = vshll.u32 %v487, 16
      %v814 = vrot.slane %v812, 1
      %v815 = vor.u32 %v810, %v814
      %v817 = vshll.u32 %v550, 16
      %v819 = vrot.slane %v817, 1
      %v820 = vsel %vm553, %v815, %v819
      %v821 = vshrl.u32 %v550, 16
      %v823 = vor.u32 %v821, %v819
      %v825 = vshrl.u32 %v489, 16
      %v827 = vshll.u32 %v489, 16
      %v829 = vrot.slane %v827, 1
      %v830 = vor.u32 %v825, %v829
      %v832 = vshll.u32 %v551, 16
      %v834 = vrot.slane %v832, 1
      %v835 = vsel %vm553, %v830, %v834
      %v836 = vshrl.u32 %v551, 16
      %v838 = vor.u32 %v836, %v834
      %v840 = vshrl.u32 %v491, 16
      %v842 = vshll.u32 %v491, 16
      %v844 = vrot.slane %v842, 1
      %v845 = vor.u32 %v840, %v844
      %v847 = vshll.u32 %v552, 16
      %v849 = vrot.slane %v847, 1
      %v850 = vsel %vm553, %v845, %v849
      %v851 = vshrl.u32 %v552, 16
      %v853 = vor.u32 %v851, %v849
      %854 = vrot.lane.b32.xlu0 %v565, 4
      %v855 = vpop.permute.xlu0 %854
      %856 = vrot.lane.b32.xlu0 %v568, 4
      %v857 = vpop.permute.xlu0 %856
      %858 = vrot.lane.b32.xlu0 %v580, 4
      %v859 = vpop.permute.xlu0 %858
      %860 = vrot.lane.b32.xlu0 %v583, 4
      %v861 = vpop.permute.xlu0 %860
      %862 = vrot.lane.b32.xlu0 %v595, 4
      %v863 = vpop.permute.xlu0 %862
      %864 = vrot.lane.b32.xlu0 %v598, 4
      %v865 = vpop.permute.xlu0 %864
      %866 = vrot.lane.b32.xlu0 %v610, 4
      %v867 = vpop.permute.xlu0 %866
      %868 = vrot.lane.b32.xlu0 %v613, 4
      %v869 = vpop.permute.xlu0 %868
      %870 = vrot.lane.b32.xlu0 %v625, 4
      %v871 = vpop.permute.xlu0 %870
      %872 = vrot.lane.b32.xlu0 %v628, 4
      %v873 = vpop.permute.xlu0 %872
      %874 = vrot.lane.b32.xlu0 %v640, 4
      %v875 = vpop.permute.xlu0 %874
      %876 = vrot.lane.b32.xlu0 %v643, 4
      %v877 = vpop.permute.xlu0 %876
      %878 = vrot.lane.b32.xlu0 %v655, 4
      %v879 = vpop.permute.xlu0 %878
      %880 = vrot.lane.b32.xlu0 %v658, 4
      %v881 = vpop.permute.xlu0 %880
      %882 = vrot.lane.b32.xlu0 %v670, 4
      %v883 = vpop.permute.xlu0 %882
      %884 = vrot.lane.b32.xlu0 %v673, 4
      %v885 = vpop.permute.xlu0 %884
      %886 = vrot.lane.b32.xlu0 %v685, 4
      %v887 = vpop.permute.xlu0 %886
      %888 = vrot.lane.b32.xlu0 %v688, 4
      %v889 = vpop.permute.xlu0 %888
      %890 = vrot.lane.b32.xlu0 %v700, 4
      %v891 = vpop.permute.xlu0 %890
      %892 = vrot.lane.b32.xlu0 %v703, 4
      %v893 = vpop.permute.xlu0 %892
      %894 = vrot.lane.b32.xlu0 %v715, 4
      %v895 = vpop.permute.xlu0 %894
      %896 = vrot.lane.b32.xlu0 %v718, 4
      %v897 = vpop.permute.xlu0 %896
      %898 = vrot.lane.b32.xlu0 %v730, 4
      %v899 = vpop.permute.xlu0 %898
      %900 = vrot.lane.b32.xlu0 %v733, 4
      %v901 = vpop.permute.xlu0 %900
      %902 = vrot.lane.b32.xlu0 %v745, 4
      %v903 = vpop.permute.xlu0 %902
      %904 = vrot.lane.b32.xlu0 %v748, 4
      %v905 = vpop.permute.xlu0 %904
      %906 = vrot.lane.b32.xlu0 %v760, 4
      %v907 = vpop.permute.xlu0 %906
      %908 = vrot.lane.b32.xlu0 %v763, 4
      %v909 = vpop.permute.xlu0 %908
      %910 = vrot.lane.b32.xlu0 %v775, 4
      %v911 = vpop.permute.xlu0 %910
      %912 = vrot.lane.b32.xlu0 %v778, 4
      %v913 = vpop.permute.xlu0 %912
      %914 = vrot.lane.b32.xlu0 %v790, 4
      %v915 = vpop.permute.xlu0 %914
      %916 = vrot.lane.b32.xlu0 %v793, 4
      %v917 = vpop.permute.xlu0 %916
      %918 = vrot.lane.b32.xlu0 %v805, 4
      %v919 = vpop.permute.xlu0 %918
      %920 = vrot.lane.b32.xlu0 %v808, 4
      %v921 = vpop.permute.xlu0 %920
      %922 = vrot.lane.b32.xlu0 %v820, 4
      %v923 = vpop.permute.xlu0 %922
      %924 = vrot.lane.b32.xlu0 %v823, 4
      %v925 = vpop.permute.xlu0 %924
      %926 = vrot.lane.b32.xlu0 %v835, 4
      %v927 = vpop.permute.xlu0 %926
      %928 = vrot.lane.b32.xlu0 %v838, 4
      %v929 = vpop.permute.xlu0 %928
      %930 = vrot.lane.b32.xlu0 %v850, 4
      %v931 = vpop.permute.xlu0 %930
      %932 = vrot.lane.b32.xlu0 %v853, 4
      %v933 = vpop.permute.xlu0 %932
      %vm934 = vcmask 1046528
      %v935 = vrot.slane %v453, 1
      %v936 = vrot.slane %v533, 1
      %v937 = vsel %vm934, %v935, %v936
      %v938 = vrot.slane %v455, 1
      %v939 = vrot.slane %v534, 1
      %v940 = vsel %vm934, %v938, %v939
      %v941 = vrot.slane %v457, 1
      %v942 = vrot.slane %v535, 1
      %v943 = vsel %vm934, %v941, %v942
      %v944 = vrot.slane %v459, 1
      %v945 = vrot.slane %v536, 1
      %v946 = vsel %vm934, %v944, %v945
      %v947 = vrot.slane %v461, 1
      %v948 = vrot.slane %v537, 1
      %v949 = vsel %vm934, %v947, %v948
      %v950 = vrot.slane %v463, 1
      %v951 = vrot.slane %v538, 1
      %v952 = vsel %vm934, %v950, %v951
      %v953 = vrot.slane %v465, 1
      %v954 = vrot.slane %v539, 1
      %v955 = vsel %vm934, %v953, %v954
      %v956 = vrot.slane %v467, 1
      %v957 = vrot.slane %v540, 1
      %v958 = vsel %vm934, %v956, %v957
      %v959 = vrot.slane %v469, 1
      %v960 = vrot.slane %v541, 1
      %v961 = vsel %vm934, %v959, %v960
      %v962 = vrot.slane %v471, 1
      %v963 = vrot.slane %v542, 1
      %v964 = vsel %vm934, %v962, %v963
      %v965 = vrot.slane %v473, 1
      %v966 = vrot.slane %v543, 1
      %v967 = vsel %vm934, %v965, %v966
      %v968 = vrot.slane %v475, 1
      %v969 = vrot.slane %v544, 1
      %v970 = vsel %vm934, %v968, %v969
      %v971 = vrot.slane %v477, 1
      %v972 = vrot.slane %v545, 1
      %v973 = vsel %vm934, %v971, %v972
      %v974 = vrot.slane %v479, 1
      %v975 = vrot.slane %v546, 1
      %v976 = vsel %vm934, %v974, %v975
      %v977 = vrot.slane %v481, 1
      %v978 = vrot.slane %v547, 1
      %v979 = vsel %vm934, %v977, %v978
      %v980 = vrot.slane %v483, 1
      %v981 = vrot.slane %v548, 1
      %v982 = vsel %vm934, %v980, %v981
      %v983 = vrot.slane %v485, 1
      %v984 = vrot.slane %v549, 1
      %v985 = vsel %vm934, %v983, %v984
      %v986 = vrot.slane %v487, 1
      %v987 = vrot.slane %v550, 1
      %v988 = vsel %vm934, %v986, %v987
      %v989 = vrot.slane %v489, 1
      %v990 = vrot.slane %v551, 1
      %v991 = vsel %vm934, %v989, %v990
      %v992 = vrot.slane %v491, 1
      %v993 = vrot.slane %v552, 1
      %v994 = vsel %vm934, %v992, %v993
      %995 = vrot.lane.b32.xlu0 %v937, 8
      %v996 = vpop.permute.xlu0 %995
      %997 = vrot.lane.b32.xlu0 %v936, 8
      %v998 = vpop.permute.xlu0 %997
      %999 = vrot.lane.b32.xlu0 %v940, 8
      %v1000 = vpop.permute.xlu0 %999
      %1001 = vrot.lane.b32.xlu0 %v939, 8
      %v1002 = vpop.permute.xlu0 %1001
      %1003 = vrot.lane.b32.xlu0 %v943, 8
      %v1004 = vpop.permute.xlu0 %1003
      %1005 = vrot.lane.b32.xlu0 %v942, 8
      %v1006 = vpop.permute.xlu0 %1005
      %1007 = vrot.lane.b32.xlu0 %v946, 8
      %v1008 = vpop.permute.xlu0 %1007
      %1009 = vrot.lane.b32.xlu0 %v945, 8
      %v1010 = vpop.permute.xlu0 %1009
      %1011 = vrot.lane.b32.xlu0 %v949, 8
      %v1012 = vpop.permute.xlu0 %1011
      %1013 = vrot.lane.b32.xlu0 %v948, 8
      %v1014 = vpop.permute.xlu0 %1013
      %1015 = vrot.lane.b32.xlu0 %v952, 8
      %v1016 = vpop.permute.xlu0 %1015
      %1017 = vrot.lane.b32.xlu0 %v951, 8
      %v1018 = vpop.permute.xlu0 %1017
      %1019 = vrot.lane.b32.xlu0 %v955, 8
      %v1020 = vpop.permute.xlu0 %1019
      %1021 = vrot.lane.b32.xlu0 %v954, 8
      %v1022 = vpop.permute.xlu0 %1021
      %1023 = vrot.lane.b32.xlu0 %v958, 8
      %v1024 = vpop.permute.xlu0 %1023
      %1025 = vrot.lane.b32.xlu0 %v957, 8
      %v1026 = vpop.permute.xlu0 %1025
      %1027 = vrot.lane.b32.xlu0 %v961, 8
      %v1028 = vpop.permute.xlu0 %1027
      %1029 = vrot.lane.b32.xlu0 %v960, 8
      %v1030 = vpop.permute.xlu0 %1029
      %1031 = vrot.lane.b32.xlu0 %v964, 8
      %v1032 = vpop.permute.xlu0 %1031
      %1033 = vrot.lane.b32.xlu0 %v963, 8
      %v1034 = vpop.permute.xlu0 %1033
      %1035 = vrot.lane.b32.xlu0 %v967, 8
      %v1036 = vpop.permute.xlu0 %1035
      %1037 = vrot.lane.b32.xlu0 %v966, 8
      %v1038 = vpop.permute.xlu0 %1037
      %1039 = vrot.lane.b32.xlu0 %v970, 8
      %v1040 = vpop.permute.xlu0 %1039
      %1041 = vrot.lane.b32.xlu0 %v969, 8
      %v1042 = vpop.permute.xlu0 %1041
      %1043 = vrot.lane.b32.xlu0 %v973, 8
      %v1044 = vpop.permute.xlu0 %1043
      %1045 = vrot.lane.b32.xlu0 %v972, 8
      %v1046 = vpop.permute.xlu0 %1045
      %1047 = vrot.lane.b32.xlu0 %v976, 8
      %v1048 = vpop.permute.xlu0 %1047
      %1049 = vrot.lane.b32.xlu0 %v975, 8
      %v1050 = vpop.permute.xlu0 %1049
      %1051 = vrot.lane.b32.xlu0 %v979, 8
      %v1052 = vpop.permute.xlu0 %1051
      %1053 = vrot.lane.b32.xlu0 %v978, 8
      %v1054 = vpop.permute.xlu0 %1053
      %1055 = vrot.lane.b32.xlu0 %v982, 8
      %v1056 = vpop.permute.xlu0 %1055
      %1057 = vrot.lane.b32.xlu0 %v981, 8
      %v1058 = vpop.permute.xlu0 %1057
      %1059 = vrot.lane.b32.xlu0 %v985, 8
      %v1060 = vpop.permute.xlu0 %1059
      %1061 = vrot.lane.b32.xlu0 %v984, 8
      %v1062 = vpop.permute.xlu0 %1061
      %1063 = vrot.lane.b32.xlu0 %v988, 8
      %v1064 = vpop.permute.xlu0 %1063
      %1065 = vrot.lane.b32.xlu0 %v987, 8
      %v1066 = vpop.permute.xlu0 %1065
      %1067 = vrot.lane.b32.xlu0 %v991, 8
      %v1068 = vpop.permute.xlu0 %1067
      %1069 = vrot.lane.b32.xlu0 %v990, 8
      %v1070 = vpop.permute.xlu0 %1069
      %1071 = vrot.lane.b32.xlu0 %v994, 8
      %v1072 = vpop.permute.xlu0 %1071
      %1073 = vrot.lane.b32.xlu0 %v993, 8
      %v1074 = vpop.permute.xlu0 %1073
      %vm1075 = vcmask 31744
      %v1077 = vsel %vm1075, %v453, %v855
      %v1080 = vsel %vm1075, %v454, %v857
      %v1082 = vsel %vm1075, %v455, %v859
      %v1085 = vsel %vm1075, %v456, %v861
      %v1087 = vsel %vm1075, %v457, %v863
      %v1090 = vsel %vm1075, %v458, %v865
      %v1092 = vsel %vm1075, %v459, %v867
      %v1095 = vsel %vm1075, %v460, %v869
      %v1097 = vsel %vm1075, %v461, %v871
      %v1100 = vsel %vm1075, %v462, %v873
      %v1102 = vsel %vm1075, %v463, %v875
      %v1105 = vsel %vm1075, %v464, %v877
      %v1107 = vsel %vm1075, %v465, %v879
      %v1110 = vsel %vm1075, %v466, %v881
      %v1112 = vsel %vm1075, %v467, %v883
      %v1115 = vsel %vm1075, %v468, %v885
      %v1117 = vsel %vm1075, %v469, %v887
      %v1120 = vsel %vm1075, %v470, %v889
      %v1122 = vsel %vm1075, %v471, %v891
      %v1125 = vsel %vm1075, %v472, %v893
      %v1127 = vsel %vm1075, %v473, %v895
      %v1130 = vsel %vm1075, %v474, %v897
      %v1132 = vsel %vm1075, %v475, %v899
      %v1135 = vsel %vm1075, %v476, %v901
      %v1137 = vsel %vm1075, %v477, %v903
      %v1140 = vsel %vm1075, %v478, %v905
      %v1142 = vsel %vm1075, %v479, %v907
      %v1145 = vsel %vm1075, %v480, %v909
      %v1147 = vsel %vm1075, %v481, %v911
      %v1150 = vsel %vm1075, %v482, %v913
      %v1152 = vsel %vm1075, %v483, %v915
      %v1155 = vsel %vm1075, %v484, %v917
      %v1157 = vsel %vm1075, %v485, %v919
      %v1160 = vsel %vm1075, %v486, %v921
      %v1162 = vsel %vm1075, %v487, %v923
      %v1165 = vsel %vm1075, %v488, %v925
      %v1167 = vsel %vm1075, %v489, %v927
      %v1170 = vsel %vm1075, %v490, %v929
      %v1172 = vsel %vm1075, %v491, %v931
      %v1175 = vsel %vm1075, %v492, %v933
      %vm1176 = vcmask 64512
      %v1178 = vsel %vm1176, %v1077, %v996
      %v1180 = vsel %vm1176, %v1080, %v998
      %v1182 = vsel %vm1176, %v1082, %v1000
      %v1184 = vsel %vm1176, %v1085, %v1002
      %v1186 = vsel %vm1176, %v1087, %v1004
      %v1188 = vsel %vm1176, %v1090, %v1006
      %v1190 = vsel %vm1176, %v1092, %v1008
      %v1192 = vsel %vm1176, %v1095, %v1010
      %v1194 = vsel %vm1176, %v1097, %v1012
      %v1196 = vsel %vm1176, %v1100, %v1014
      %v1198 = vsel %vm1176, %v1102, %v1016
      %v1200 = vsel %vm1176, %v1105, %v1018
      %v1202 = vsel %vm1176, %v1107, %v1020
      %v1204 = vsel %vm1176, %v1110, %v1022
      %v1206 = vsel %vm1176, %v1112, %v1024
      %v1208 = vsel %vm1176, %v1115, %v1026
      %v1210 = vsel %vm1176, %v1117, %v1028
      %v1212 = vsel %vm1176, %v1120, %v1030
      %v1214 = vsel %vm1176, %v1122, %v1032
      %v1216 = vsel %vm1176, %v1125, %v1034
      %v1218 = vsel %vm1176, %v1127, %v1036
      %v1220 = vsel %vm1176, %v1130, %v1038
      %v1222 = vsel %vm1176, %v1132, %v1040
      %v1224 = vsel %vm1176, %v1135, %v1042
      %v1226 = vsel %vm1176, %v1137, %v1044
      %v1228 = vsel %vm1176, %v1140, %v1046
      %v1230 = vsel %vm1176, %v1142, %v1048
      %v1232 = vsel %vm1176, %v1145, %v1050
      %v1234 = vsel %vm1176, %v1147, %v1052
      %v1236 = vsel %vm1176, %v1150, %v1054
      %v1238 = vsel %vm1176, %v1152, %v1056
      %v1240 = vsel %vm1176, %v1155, %v1058
      %v1242 = vsel %vm1176, %v1157, %v1060
      %v1244 = vsel %vm1176, %v1160, %v1062
      %v1246 = vsel %vm1176, %v1162, %v1064
      %v1248 = vsel %vm1176, %v1165, %v1066
      %v1250 = vsel %vm1176, %v1167, %v1068
      %v1252 = vsel %vm1176, %v1170, %v1070
      %v1254 = vsel %vm1176, %v1172, %v1072
      %v1256 = vsel %vm1176, %v1175, %v1074
      %v1293 = vunpack.c.l.b16 %v1178
      %v1294 = vunpack.c.h.b16 %v1178
      %v1295 = vunpack.c.l.b16 %v1180
      %v1296 = vunpack.c.l.b16 %v1182
      %v1297 = vunpack.c.h.b16 %v1182
      %v1298 = vunpack.c.l.b16 %v1184
      %v1299 = vunpack.c.l.b16 %v1186
      %v1300 = vunpack.c.h.b16 %v1186
      %v1301 = vunpack.c.l.b16 %v1188
      %v1302 = vunpack.c.l.b16 %v1190
      %v1303 = vunpack.c.h.b16 %v1190
      %v1304 = vunpack.c.l.b16 %v1192
      %v1305 = vunpack.c.l.b16 %v1194
      %v1306 = vunpack.c.h.b16 %v1194
      %v1307 = vunpack.c.l.b16 %v1196
      %v1308 = vunpack.c.l.b16 %v1198
      %v1309 = vunpack.c.h.b16 %v1198
      %v1310 = vunpack.c.l.b16 %v1200
      %v1311 = vunpack.c.l.b16 %v1202
      %v1312 = vunpack.c.h.b16 %v1202
      %v1313 = vunpack.c.l.b16 %v1204
      %v1314 = vunpack.c.l.b16 %v1206
      %v1315 = vunpack.c.h.b16 %v1206
      %v1316 = vunpack.c.l.b16 %v1208
      %v1317 = vunpack.c.l.b16 %v1210
      %v1318 = vunpack.c.h.b16 %v1210
      %v1319 = vunpack.c.l.b16 %v1212
      %v1320 = vunpack.c.l.b16 %v1214
      %v1321 = vunpack.c.h.b16 %v1214
      %v1322 = vunpack.c.l.b16 %v1216
      %v1323 = vunpack.c.l.b16 %v1218
      %v1324 = vunpack.c.h.b16 %v1218
      %v1325 = vunpack.c.l.b16 %v1220
      %v1326 = vunpack.c.l.b16 %v1222
      %v1327 = vunpack.c.h.b16 %v1222
      %v1328 = vunpack.c.l.b16 %v1224
      %v1329 = vunpack.c.l.b16 %v1226
      %v1330 = vunpack.c.h.b16 %v1226
      %v1331 = vunpack.c.l.b16 %v1228
      %v1332 = vunpack.c.l.b16 %v1230
      %v1333 = vunpack.c.h.b16 %v1230
      %v1334 = vunpack.c.l.b16 %v1232
      %v1335 = vunpack.c.l.b16 %v1234
      %v1336 = vunpack.c.h.b16 %v1234
      %v1337 = vunpack.c.l.b16 %v1236
      %v1338 = vunpack.c.l.b16 %v1238
      %v1339 = vunpack.c.h.b16 %v1238
      %v1340 = vunpack.c.l.b16 %v1240
      %v1341 = vunpack.c.l.b16 %v1242
      %v1342 = vunpack.c.h.b16 %v1242
      %v1343 = vunpack.c.l.b16 %v1244
      %v1344 = vunpack.c.l.b16 %v1246
      %v1345 = vunpack.c.h.b16 %v1246
      %v1346 = vunpack.c.l.b16 %v1248
      %v1347 = vld [vmem:[%s1] sm:$0xf]
      %v1348 = vld [vmem:[%s1 + $0x4] sm:$0x3]
      %v1351 = vunpack.c.l.b16 %v1250
      %v1352 = vunpack.c.h.b16 %v1250
      %v1353 = vunpack.c.l.b16 %v1252
      %s1354 = scalar_lea.vmem %s1, 8
      %v1355 = vld [vmem:[%s1354] sm:$0xf]
      %v1356 = vld [vmem:[%s1354 + $0x4] sm:$0x3]
      %v1357 = vpack.c.b16 %v1297, %v1296
      %v1358 = vpack.c.b16 %v1299, %v1298
      %v1359 = vpack.c.b16 %v1301, %v1300
      %v1360 = vpack.c.b16 %v1303, %v1302
      %v1361 = vpack.c.b16 %v1305, %v1304
      %v1362 = vpack.c.b16 %v1307, %v1306
      %v1363 = vpack.c.b16 %v1309, %v1308
      %v1364 = vpack.c.b16 %v1311, %v1310
      %v1365 = vpack.c.b16 %v1313, %v1312
      %v1366 = vpack.c.b16 %v1315, %v1314
      %v1367 = vpack.c.b16 %v1317, %v1316
      %v1368 = vpack.c.b16 %v1319, %v1318
      %v1369 = vpack.c.b16 %v1321, %v1320
      %v1370 = vpack.c.b16 %v1323, %v1322
      %v1371 = vpack.c.b16 %v1325, %v1324
      %v1372 = vpack.c.b16 %v1327, %v1326
      %v1373 = vpack.c.b16 %v1329, %v1328
      %v1374 = vpack.c.b16 %v1331, %v1330
      %v1375 = vpack.c.b16 %v1333, %v1332
      %v1376 = vpack.c.b16 %v1335, %v1334
      %v1377 = vpack.c.b16 %v1337, %v1336
      %v1378 = vpack.c.b16 %v1339, %v1338
      %v1379 = vpack.c.b16 %v1341, %v1340
      %v1380 = vpack.c.b16 %v1343, %v1342
      %v1381 = vpack.c.b16 %v1345, %v1344
      %v1382 = vpack.c.b16 %v1351, %v1346
      %v1383 = vpack.c.b16 %v1353, %v1352
      %v1386 = vunpack.c.l.b16 %v1355
      %v1387 = vunpack.c.l.b16 %v1356
      %v1388 = vpack.c.b16 %v1387, %v1386
      %vm1389 = vcmask 97280
      %v1391 = vsel %vm1389, %v1357, 0
      %v1394 = vsel %vm1389, %v1358, 0
      %v1397 = vsel %vm1389, %v1359, 0
      %v1400 = vsel %vm1389, %v1360, 0
      %v1403 = vsel %vm1389, %v1361, 0
      %v1406 = vsel %vm1389, %v1362, 0
      %v1409 = vsel %vm1389, %v1363, 0
      %v1412 = vsel %vm1389, %v1364, 0
      %v1415 = vsel %vm1389, %v1365, 0
      %v1418 = vsel %vm1389, %v1366, 0
      %v1421 = vsel %vm1389, %v1367, 0
      %v1424 = vsel %vm1389, %v1368, 0
      %v1427 = vsel %vm1389, %v1369, 0
      %v1430 = vsel %vm1389, %v1370, 0
      %v1433 = vsel %vm1389, %v1371, 0
      %v1436 = vsel %vm1389, %v1372, 0
      %v1439 = vsel %vm1389, %v1373, 0
      %v1442 = vsel %vm1389, %v1374, 0
      %v1445 = vsel %vm1389, %v1375, 0
      %v1448 = vsel %vm1389, %v1376, 0
      %v1451 = vsel %vm1389, %v1377, 0
      %v1454 = vsel %vm1389, %v1378, 0
      %v1457 = vsel %vm1389, %v1379, 0
      %v1460 = vsel %vm1389, %v1380, 0
      %v1463 = vsel %vm1389, %v1381, 0
      %v1466 = vsel %vm1389, %v1382, 0
      %v1469 = vsel %vm1389, %v1383, 0
      %vm1471 = vcmask 1045504
      %v1473 = vsel %vm1471, %v1388, 0
      %1475 = vmatprep.subr.bf16.mxu0 0
      %1476 = vmatpush1.bf16.msra.mxu0 0
      %1477 = vmatprep.subr.bf16.mxu0 0
      %1478 = vmatpush1.bf16.msra.mxu0 0
      %1479 = vmatprep.subr.bf16.mxu0 0
      %1480 = vmatpush1.bf16.msra.mxu0 0
      %1481 = vmatprep.subr.bf16.mxu0 0
      %1482 = vmatpush1.bf16.msra.mxu0 0
      %1483 = vmatprep.subr.bf16.mxu0 0
      %1484 = vmatpush1.bf16.msra.mxu0 0
      %1485 = vmatprep.subr.bf16.mxu0 0
      %1486 = vmatpush1.bf16.msra.mxu0 0
      %1487 = vmatprep.subr.bf16.mxu0 0
      %1488 = vmatpush1.bf16.msra.mxu0 0
      %1489 = vmatprep.subr.bf16.mxu0 0
      %1490 = vmatpush1.bf16.msra.mxu0 %v1473
      %1491 = vmatprep.subr.bf16.mxu0 0
      %1492 = vmatpush2.bf16.msra.mxu0 0
      %1493 = vmatprep.subr.bf16.mxu0 0
      %1494 = vmatpush2.bf16.msra.mxu0 0
      %1495 = vmatprep.subr.bf16.mxu0 0
      %1496 = vmatpush2.bf16.msra.mxu0 0
      %1497 = vmatprep.subr.bf16.mxu0 0
      %1498 = vmatpush2.bf16.msra.mxu0 0
      %1499 = vmatprep.subr.bf16.mxu0 0
      %1500 = vmatpush2.bf16.msra.mxu0 0
      %1501 = vmatprep.subr.bf16.mxu0 0
      %1502 = vmatpush2.bf16.msra.mxu0 0
      %1503 = vmatprep.subr.bf16.mxu0 0
      %1504 = vmatpush2.bf16.msra.mxu0 0
      %1505 = vmatprep.subr.bf16.mxu0 0
      %1506 = vmatpush2.bf16.msra.mxu0 0
      %1507 = vmatprep.mubr.bf16.mxu0 0
      %1508 = vmatmul.mubr.bf16.gmra.mxu0 %v1391
      %v1509 = vpop.f32.mrf.mxu0
      %v1510 = vadd.f32 0.0, %v1509
      %v1511 = vpop.f32.mrf.mxu0
      %v1512 = vpop.f32.mrf.mxu0
      %v1513 = vadd.f32 0.0, %v1512
      %v1514 = vpop.f32.mrf.mxu0
      %1515 = vmatprep.mubr.bf16.mxu0 0
      %1516 = vmatmul.mubr.bf16.gmra.mxu0 %v1394
      %v1517 = vpop.f32.mrf.mxu0
      %v1518 = vadd.f32 0.0, %v1517
      %v1519 = vpop.f32.mrf.mxu0
      %v1520 = vpop.f32.mrf.mxu0
      %v1521 = vadd.f32 0.0, %v1520
      %v1522 = vpop.f32.mrf.mxu0
      %1523 = vmatprep.mubr.bf16.mxu0 0
      %1524 = vmatmul.mubr.bf16.gmra.mxu0 %v1397
      %v1525 = vpop.f32.mrf.mxu0
      %v1526 = vadd.f32 0.0, %v1525
      %v1527 = vpop.f32.mrf.mxu0
      %v1528 = vpop.f32.mrf.mxu0
      %v1529 = vadd.f32 0.0, %v1528
      %v1530 = vpop.f32.mrf.mxu0
      %1531 = vmatprep.mubr.bf16.mxu0 0
      %1532 = vmatmul.mubr.bf16.gmra.mxu0 %v1400
      %v1533 = vpop.f32.mrf.mxu0
      %v1534 = vadd.f32 0.0, %v1533
      %v1535 = vpop.f32.mrf.mxu0
      %v1536 = vpop.f32.mrf.mxu0
      %v1537 = vadd.f32 0.0, %v1536
      %v1538 = vpop.f32.mrf.mxu0
      %1539 = vmatprep.mubr.bf16.mxu0 0
      %1540 = vmatmul.mubr.bf16.gmra.mxu0 %v1403
      %v1541 = vpop.f32.mrf.mxu0
      %v1542 = vadd.f32 0.0, %v1541
      %v1543 = vpop.f32.mrf.mxu0
      %v1544 = vpop.f32.mrf.mxu0
      %v1545 = vadd.f32 0.0, %v1544
      %v1546 = vpop.f32.mrf.mxu0
      %1547 = vmatprep.mubr.bf16.mxu0 0
      %1548 = vmatmul.mubr.bf16.gmra.mxu0 %v1406
      %v1549 = vpop.f32.mrf.mxu0
      %v1550 = vadd.f32 0.0, %v1549
      %v1551 = vpop.f32.mrf.mxu0
      %v1552 = vpop.f32.mrf.mxu0
      %v1553 = vadd.f32 0.0, %v1552
      %v1554 = vpop.f32.mrf.mxu0
      %1555 = vmatprep.mubr.bf16.mxu0 0
      %1556 = vmatmul.mubr.bf16.gmra.mxu0 %v1409
      %v1557 = vpop.f32.mrf.mxu0
      %v1558 = vadd.f32 0.0, %v1557
      %v1559 = vpop.f32.mrf.mxu0
      %v1560 = vpop.f32.mrf.mxu0
      %v1561 = vadd.f32 0.0, %v1560
      %v1562 = vpop.f32.mrf.mxu0
      %1563 = vmatprep.mubr.bf16.mxu0 0
      %1564 = vmatmul.mubr.bf16.gmra.mxu0 %v1412
      %v1565 = vpop.f32.mrf.mxu0
      %v1566 = vadd.f32 0.0, %v1565
      %v1567 = vpop.f32.mrf.mxu0
      %v1568 = vpop.f32.mrf.mxu0
      %v1569 = vadd.f32 0.0, %v1568
      %v1570 = vpop.f32.mrf.mxu0
      %1571 = vmatprep.mubr.bf16.mxu0 0
      %1572 = vmatmul.mubr.bf16.gmra.mxu0 %v1415
      %v1573 = vpop.f32.mrf.mxu0
      %v1574 = vadd.f32 0.0, %v1573
      %v1575 = vpop.f32.mrf.mxu0
      %v1576 = vpop.f32.mrf.mxu0
      %v1577 = vadd.f32 0.0, %v1576
      %v1578 = vpop.f32.mrf.mxu0
      %1579 = vmatprep.mubr.bf16.mxu0 0
      %1580 = vmatmul.mubr.bf16.gmra.mxu0 %v1418
      %v1581 = vpop.f32.mrf.mxu0
      %v1582 = vadd.f32 0.0, %v1581
      %v1583 = vpop.f32.mrf.mxu0
      %v1584 = vpop.f32.mrf.mxu0
      %v1585 = vadd.f32 0.0, %v1584
      %v1586 = vpop.f32.mrf.mxu0
      %1587 = vmatprep.mubr.bf16.mxu0 0
      %1588 = vmatmul.mubr.bf16.gmra.mxu0 %v1421
      %v1589 = vpop.f32.mrf.mxu0
      %v1590 = vadd.f32 0.0, %v1589
      %v1591 = vpop.f32.mrf.mxu0
      %v1592 = vpop.f32.mrf.mxu0
      %v1593 = vadd.f32 0.0, %v1592
      %v1594 = vpop.f32.mrf.mxu0
      %1595 = vmatprep.mubr.bf16.mxu0 0
      %1596 = vmatmul.mubr.bf16.gmra.mxu0 %v1424
      %v1597 = vpop.f32.mrf.mxu0
      %v1598 = vadd.f32 0.0, %v1597
      %v1599 = vpop.f32.mrf.mxu0
      %v1600 = vpop.f32.mrf.mxu0
      %v1601 = vadd.f32 0.0, %v1600
      %v1602 = vpop.f32.mrf.mxu0
      %1603 = vmatprep.mubr.bf16.mxu0 0
      %1604 = vmatmul.mubr.bf16.gmra.mxu0 %v1427
      %v1605 = vpop.f32.mrf.mxu0
      %v1606 = vadd.f32 0.0, %v1605
      %v1607 = vpop.f32.mrf.mxu0
      %v1608 = vpop.f32.mrf.mxu0
      %v1609 = vadd.f32 0.0, %v1608
      %v1610 = vpop.f32.mrf.mxu0
      %1611 = vmatprep.mubr.bf16.mxu0 0
      %1612 = vmatmul.mubr.bf16.gmra.mxu0 %v1430
      %v1613 = vpop.f32.mrf.mxu0
      %v1614 = vadd.f32 0.0, %v1613
      %v1615 = vpop.f32.mrf.mxu0
      %v1616 = vpop.f32.mrf.mxu0
      %v1617 = vadd.f32 0.0, %v1616
      %v1618 = vpop.f32.mrf.mxu0
      %1619 = vmatprep.mubr.bf16.mxu0 0
      %1620 = vmatmul.mubr.bf16.gmra.mxu0 %v1433
      %v1621 = vpop.f32.mrf.mxu0
      %v1622 = vadd.f32 0.0, %v1621
      %v1623 = vpop.f32.mrf.mxu0
      %v1624 = vpop.f32.mrf.mxu0
      %v1625 = vadd.f32 0.0, %v1624
      %v1626 = vpop.f32.mrf.mxu0
      %1627 = vmatprep.mubr.bf16.mxu0 0
      %1628 = vmatmul.mubr.bf16.gmra.mxu0 %v1436
      %v1629 = vpop.f32.mrf.mxu0
      %v1630 = vadd.f32 0.0, %v1629
      %v1631 = vpop.f32.mrf.mxu0
      %v1632 = vpop.f32.mrf.mxu0
      %v1633 = vadd.f32 0.0, %v1632
      %v1634 = vpop.f32.mrf.mxu0
      %1635 = vmatprep.mubr.bf16.mxu0 0
      %1636 = vmatmul.mubr.bf16.gmra.mxu0 %v1439
      %v1637 = vpop.f32.mrf.mxu0
      %v1638 = vadd.f32 0.0, %v1637
      %v1639 = vpop.f32.mrf.mxu0
      %v1640 = vpop.f32.mrf.mxu0
      %v1641 = vadd.f32 0.0, %v1640
      %v1642 = vpop.f32.mrf.mxu0
      %1643 = vmatprep.mubr.bf16.mxu0 0
      %1644 = vmatmul.mubr.bf16.gmra.mxu0 %v1442
      %v1645 = vpop.f32.mrf.mxu0
      %v1646 = vadd.f32 0.0, %v1645
      %v1647 = vpop.f32.mrf.mxu0
      %v1648 = vpop.f32.mrf.mxu0
      %v1649 = vadd.f32 0.0, %v1648
      %v1650 = vpop.f32.mrf.mxu0
      %1651 = vmatprep.mubr.bf16.mxu0 0
      %1652 = vmatmul.mubr.bf16.gmra.mxu0 %v1445
      %v1653 = vpop.f32.mrf.mxu0
      %v1654 = vadd.f32 0.0, %v1653
      %v1655 = vpop.f32.mrf.mxu0
      %v1656 = vpop.f32.mrf.mxu0
      %v1657 = vadd.f32 0.0, %v1656
      %v1658 = vpop.f32.mrf.mxu0
      %1659 = vmatprep.mubr.bf16.mxu0 0
      %1660 = vmatmul.mubr.bf16.gmra.mxu0 %v1448
      %v1661 = vpop.f32.mrf.mxu0
      %v1662 = vadd.f32 0.0, %v1661
      %v1663 = vpop.f32.mrf.mxu0
      %v1664 = vpop.f32.mrf.mxu0
      %v1665 = vadd.f32 0.0, %v1664
      %v1666 = vpop.f32.mrf.mxu0
      %1667 = vmatprep.mubr.bf16.mxu0 0
      %1668 = vmatmul.mubr.bf16.gmra.mxu0 %v1451
      %v1669 = vpop.f32.mrf.mxu0
      %v1670 = vadd.f32 0.0, %v1669
      %v1671 = vpop.f32.mrf.mxu0
      %v1672 = vpop.f32.mrf.mxu0
      %v1673 = vadd.f32 0.0, %v1672
      %v1674 = vpop.f32.mrf.mxu0
      %1675 = vmatprep.mubr.bf16.mxu0 0
      %1676 = vmatmul.mubr.bf16.gmra.mxu0 %v1454
      %v1677 = vpop.f32.mrf.mxu0
      %v1678 = vadd.f32 0.0, %v1677
      %v1679 = vpop.f32.mrf.mxu0
      %v1680 = vpop.f32.mrf.mxu0
      %v1681 = vadd.f32 0.0, %v1680
      %v1682 = vpop.f32.mrf.mxu0
      %1683 = vmatprep.mubr.bf16.mxu0 0
      %1684 = vmatmul.mubr.bf16.gmra.mxu0 %v1457
      %v1685 = vpop.f32.mrf.mxu0
      %v1686 = vadd.f32 0.0, %v1685
      %v1687 = vpop.f32.mrf.mxu0
      %v1688 = vpop.f32.mrf.mxu0
      %v1689 = vadd.f32 0.0, %v1688
      %v1690 = vpop.f32.mrf.mxu0
      %1691 = vmatprep.mubr.bf16.mxu0 0
      %1692 = vmatmul.mubr.bf16.gmra.mxu0 %v1460
      %v1693 = vpop.f32.mrf.mxu0
      %v1694 = vadd.f32 0.0, %v1693
      %v1695 = vpop.f32.mrf.mxu0
      %v1696 = vpop.f32.mrf.mxu0
      %v1697 = vadd.f32 0.0, %v1696
      %v1698 = vpop.f32.mrf.mxu0
      %1699 = vmatprep.mubr.bf16.mxu0 0
      %1700 = vmatmul.mubr.bf16.gmra.mxu0 %v1463
      %v1701 = vpop.f32.mrf.mxu0
      %v1702 = vadd.f32 0.0, %v1701
      %v1703 = vpop.f32.mrf.mxu0
      %v1704 = vpop.f32.mrf.mxu0
      %v1705 = vadd.f32 0.0, %v1704
      %v1706 = vpop.f32.mrf.mxu0
      %1707 = vmatprep.mubr.bf16.mxu0 0
      %1708 = vmatmul.mubr.bf16.gmra.mxu0 %v1466
      %v1709 = vpop.f32.mrf.mxu0
      %v1710 = vadd.f32 0.0, %v1709
      %v1711 = vpop.f32.mrf.mxu0
      %v1712 = vpop.f32.mrf.mxu0
      %v1713 = vadd.f32 0.0, %v1712
      %v1714 = vpop.f32.mrf.mxu0
      %1715 = vmatprep.mubr.bf16.mxu0 0
      %1716 = vmatmul.mubr.bf16.gmra.mxu0 %v1469
      %v1717 = vpop.f32.mrf.mxu0
      %v1718 = vadd.f32 0.0, %v1717
      %v1719 = vpop.f32.mrf.mxu0
      %v1720 = vpop.f32.mrf.mxu0
      %v1721 = vadd.f32 0.0, %v1720
      %v1722 = vpop.f32.mrf.mxu0
      %1723 = vdwg.mxu0
      %v1724 = vpack.c.b16 %v1294, %v1293
      %v1725 = vpack.c.b16 %v1296, %v1295
      %v1726 = vpack.c.b16 %v1298, %v1297
      %v1727 = vpack.c.b16 %v1300, %v1299
      %v1728 = vpack.c.b16 %v1302, %v1301
      %v1729 = vpack.c.b16 %v1304, %v1303
      %v1730 = vpack.c.b16 %v1306, %v1305
      %v1731 = vpack.c.b16 %v1308, %v1307
      %v1732 = vpack.c.b16 %v1310, %v1309
      %v1733 = vpack.c.b16 %v1312, %v1311
      %v1734 = vpack.c.b16 %v1314, %v1313
      %v1735 = vpack.c.b16 %v1316, %v1315
      %v1736 = vpack.c.b16 %v1318, %v1317
      %v1737 = vpack.c.b16 %v1320, %v1319
      %v1738 = vpack.c.b16 %v1322, %v1321
      %v1739 = vpack.c.b16 %v1324, %v1323
      %v1740 = vpack.c.b16 %v1326, %v1325
      %v1741 = vpack.c.b16 %v1328, %v1327
      %v1742 = vpack.c.b16 %v1330, %v1329
      %v1743 = vpack.c.b16 %v1332, %v1331
      %v1744 = vpack.c.b16 %v1334, %v1333
      %v1745 = vpack.c.b16 %v1336, %v1335
      %v1746 = vpack.c.b16 %v1338, %v1337
      %v1747 = vpack.c.b16 %v1340, %v1339
      %v1748 = vpack.c.b16 %v1342, %v1341
      %v1749 = vpack.c.b16 %v1344, %v1343
      %v1750 = vpack.c.b16 %v1346, %v1345
      %v1753 = vunpack.c.l.b16 %v1347
      %v1754 = vunpack.c.l.b16 %v1348
      %v1755 = vpack.c.b16 %v1754, %v1753
      %v1757 = vsel %vm1389, %v1724, 0
      %v1760 = vsel %vm1389, %v1725, 0
      %v1763 = vsel %vm1389, %v1726, 0
      %v1766 = vsel %vm1389, %v1727, 0
      %v1769 = vsel %vm1389, %v1728, 0
      %v1772 = vsel %vm1389, %v1729, 0
      %v1775 = vsel %vm1389, %v1730, 0
      %v1778 = vsel %vm1389, %v1731, 0
      %v1781 = vsel %vm1389, %v1732, 0
      %v1784 = vsel %vm1389, %v1733, 0
      %v1787 = vsel %vm1389, %v1734, 0
      %v1790 = vsel %vm1389, %v1735, 0
      %v1793 = vsel %vm1389, %v1736, 0
      %v1796 = vsel %vm1389, %v1737, 0
      %v1799 = vsel %vm1389, %v1738, 0
      %v1802 = vsel %vm1389, %v1739, 0
      %v1805 = vsel %vm1389, %v1740, 0
      %v1808 = vsel %vm1389, %v1741, 0
      %v1811 = vsel %vm1389, %v1742, 0
      %v1814 = vsel %vm1389, %v1743, 0
      %v1817 = vsel %vm1389, %v1744, 0
      %v1820 = vsel %vm1389, %v1745, 0
      %v1823 = vsel %vm1389, %v1746, 0
      %v1826 = vsel %vm1389, %v1747, 0
      %v1829 = vsel %vm1389, %v1748, 0
      %v1832 = vsel %vm1389, %v1749, 0
      %v1835 = vsel %vm1389, %v1750, 0
      %v1838 = vsel %vm1471, %v1755, 0
      %1840 = vmatprep.subr.bf16.mxu0 0
      %1841 = vmatpush1.bf16.msra.mxu0 0
      %1842 = vmatprep.subr.bf16.mxu0 0
      %1843 = vmatpush1.bf16.msra.mxu0 0
      %1844 = vmatprep.subr.bf16.mxu0 0
      %1845 = vmatpush1.bf16.msra.mxu0 0
      %1846 = vmatprep.subr.bf16.mxu0 0
      %1847 = vmatpush1.bf16.msra.mxu0 0
      %1848 = vmatprep.subr.bf16.mxu0 0
      %1849 = vmatpush1.bf16.msra.mxu0 0
      %1850 = vmatprep.subr.bf16.mxu0 0
      %1851 = vmatpush1.bf16.msra.mxu0 0
      %1852 = vmatprep.subr.bf16.mxu0 0
      %1853 = vmatpush1.bf16.msra.mxu0 0
      %1854 = vmatprep.subr.bf16.mxu0 0
      %1855 = vmatpush1.bf16.msra.mxu0 %v1838
      %1856 = vmatprep.subr.bf16.mxu0 0
      %1857 = vmatpush2.bf16.msra.mxu0 0
      %1858 = vmatprep.subr.bf16.mxu0 0
      %1859 = vmatpush2.bf16.msra.mxu0 0
      %1860 = vmatprep.subr.bf16.mxu0 0
      %1861 = vmatpush2.bf16.msra.mxu0 0
      %1862 = vmatprep.subr.bf16.mxu0 0
      %1863 = vmatpush2.bf16.msra.mxu0 0
      %1864 = vmatprep.subr.bf16.mxu0 0
      %1865 = vmatpush2.bf16.msra.mxu0 0
      %1866 = vmatprep.subr.bf16.mxu0 0
      %1867 = vmatpush2.bf16.msra.mxu0 0
      %1868 = vmatprep.subr.bf16.mxu0 0
      %1869 = vmatpush2.bf16.msra.mxu0 0
      %1870 = vmatprep.subr.bf16.mxu0 0
      %1871 = vmatpush2.bf16.msra.mxu0 0
      %1872 = vmatprep.mubr.bf16.mxu0 0
      %1873 = vmatmul.mubr.bf16.gmra.mxu0 %v1757
      %v1874 = vpop.f32.mrf.mxu0
      %v1875 = vadd.f32 %v1510, %v1874
      %v1876 = vpop.f32.mrf.mxu0
      %v1877 = vpop.f32.mrf.mxu0
      %v1878 = vadd.f32 %v1513, %v1877
      %v1879 = vpop.f32.mrf.mxu0
      %1880 = vmatprep.mubr.bf16.mxu0 0
      %1881 = vmatmul.mubr.bf16.gmra.mxu0 %v1760
      %v1882 = vpop.f32.mrf.mxu0
      %v1883 = vadd.f32 %v1518, %v1882
      %v1884 = vpop.f32.mrf.mxu0
      %v1885 = vpop.f32.mrf.mxu0
      %v1886 = vadd.f32 %v1521, %v1885
      %v1887 = vpop.f32.mrf.mxu0
      %1888 = vmatprep.mubr.bf16.mxu0 0
      %1889 = vmatmul.mubr.bf16.gmra.mxu0 %v1763
      %v1890 = vpop.f32.mrf.mxu0
      %v1891 = vadd.f32 %v1526, %v1890
      %v1892 = vpop.f32.mrf.mxu0
      %v1893 = vpop.f32.mrf.mxu0
      %v1894 = vadd.f32 %v1529, %v1893
      %v1895 = vpop.f32.mrf.mxu0
      %1896 = vmatprep.mubr.bf16.mxu0 0
      %1897 = vmatmul.mubr.bf16.gmra.mxu0 %v1766
      %v1898 = vpop.f32.mrf.mxu0
      %v1899 = vadd.f32 %v1534, %v1898
      %v1900 = vpop.f32.mrf.mxu0
      %v1901 = vpop.f32.mrf.mxu0
      %v1902 = vadd.f32 %v1537, %v1901
      %v1903 = vpop.f32.mrf.mxu0
      %1904 = vmatprep.mubr.bf16.mxu0 0
      %1905 = vmatmul.mubr.bf16.gmra.mxu0 %v1769
      %v1906 = vpop.f32.mrf.mxu0
      %v1907 = vadd.f32 %v1542, %v1906
      %v1908 = vpop.f32.mrf.mxu0
      %v1909 = vpop.f32.mrf.mxu0
      %v1910 = vadd.f32 %v1545, %v1909
      %v1911 = vpop.f32.mrf.mxu0
      %1912 = vmatprep.mubr.bf16.mxu0 0
      %1913 = vmatmul.mubr.bf16.gmra.mxu0 %v1772
      %v1914 = vpop.f32.mrf.mxu0
      %v1915 = vadd.f32 %v1550, %v1914
      %v1916 = vpop.f32.mrf.mxu0
      %v1917 = vpop.f32.mrf.mxu0
      %v1918 = vadd.f32 %v1553, %v1917
      %v1919 = vpop.f32.mrf.mxu0
      %1920 = vmatprep.mubr.bf16.mxu0 0
      %1921 = vmatmul.mubr.bf16.gmra.mxu0 %v1775
      %v1922 = vpop.f32.mrf.mxu0
      %v1923 = vadd.f32 %v1558, %v1922
      %v1924 = vpop.f32.mrf.mxu0
      %v1925 = vpop.f32.mrf.mxu0
      %v1926 = vadd.f32 %v1561, %v1925
      %v1927 = vpop.f32.mrf.mxu0
      %1928 = vmatprep.mubr.bf16.mxu0 0
      %1929 = vmatmul.mubr.bf16.gmra.mxu0 %v1778
      %v1930 = vpop.f32.mrf.mxu0
      %v1931 = vadd.f32 %v1566, %v1930
      %v1932 = vpop.f32.mrf.mxu0
      %v1933 = vpop.f32.mrf.mxu0
      %v1934 = vadd.f32 %v1569, %v1933
      %v1935 = vpop.f32.mrf.mxu0
      %1936 = vmatprep.mubr.bf16.mxu0 0
      %1937 = vmatmul.mubr.bf16.gmra.mxu0 %v1781
      %v1938 = vpop.f32.mrf.mxu0
      %v1939 = vadd.f32 %v1574, %v1938
      %v1940 = vpop.f32.mrf.mxu0
      %v1941 = vpop.f32.mrf.mxu0
      %v1942 = vadd.f32 %v1577, %v1941
      %v1943 = vpop.f32.mrf.mxu0
      %1944 = vmatprep.mubr.bf16.mxu0 0
      %1945 = vmatmul.mubr.bf16.gmra.mxu0 %v1784
      %v1946 = vpop.f32.mrf.mxu0
      %v1947 = vadd.f32 %v1582, %v1946
      %v1948 = vpop.f32.mrf.mxu0
      %v1949 = vpop.f32.mrf.mxu0
      %v1950 = vadd.f32 %v1585, %v1949
      %v1951 = vpop.f32.mrf.mxu0
      %1952 = vmatprep.mubr.bf16.mxu0 0
      %1953 = vmatmul.mubr.bf16.gmra.mxu0 %v1787
      %v1954 = vpop.f32.mrf.mxu0
      %v1955 = vadd.f32 %v1590, %v1954
      %v1956 = vpop.f32.mrf.mxu0
      %v1957 = vpop.f32.mrf.mxu0
      %v1958 = vadd.f32 %v1593, %v1957
      %v1959 = vpop.f32.mrf.mxu0
      %1960 = vmatprep.mubr.bf16.mxu0 0
      %1961 = vmatmul.mubr.bf16.gmra.mxu0 %v1790
      %v1962 = vpop.f32.mrf.mxu0
      %v1963 = vadd.f32 %v1598, %v1962
      %v1964 = vpop.f32.mrf.mxu0
      %v1965 = vpop.f32.mrf.mxu0
      %v1966 = vadd.f32 %v1601, %v1965
      %v1967 = vpop.f32.mrf.mxu0
      %1968 = vmatprep.mubr.bf16.mxu0 0
      %1969 = vmatmul.mubr.bf16.gmra.mxu0 %v1793
      %v1970 = vpop.f32.mrf.mxu0
      %v1971 = vadd.f32 %v1606, %v1970
      %v1972 = vpop.f32.mrf.mxu0
      %v1973 = vpop.f32.mrf.mxu0
      %v1974 = vadd.f32 %v1609, %v1973
      %v1975 = vpop.f32.mrf.mxu0
      %1976 = vmatprep.mubr.bf16.mxu0 0
      %1977 = vmatmul.mubr.bf16.gmra.mxu0 %v1796
      %v1978 = vpop.f32.mrf.mxu0
      %v1979 = vadd.f32 %v1614, %v1978
      %v1980 = vpop.f32.mrf.mxu0
      %v1981 = vpop.f32.mrf.mxu0
      %v1982 = vadd.f32 %v1617, %v1981
      %v1983 = vpop.f32.mrf.mxu0
      %1984 = vmatprep.mubr.bf16.mxu0 0
      %1985 = vmatmul.mubr.bf16.gmra.mxu0 %v1799
      %v1986 = vpop.f32.mrf.mxu0
      %v1987 = vadd.f32 %v1622, %v1986
      %v1988 = vpop.f32.mrf.mxu0
      %v1989 = vpop.f32.mrf.mxu0
      %v1990 = vadd.f32 %v1625, %v1989
      %v1991 = vpop.f32.mrf.mxu0
      %1992 = vmatprep.mubr.bf16.mxu0 0
      %1993 = vmatmul.mubr.bf16.gmra.mxu0 %v1802
      %v1994 = vpop.f32.mrf.mxu0
      %v1995 = vadd.f32 %v1630, %v1994
      %v1996 = vpop.f32.mrf.mxu0
      %v1997 = vpop.f32.mrf.mxu0
      %v1998 = vadd.f32 %v1633, %v1997
      %v1999 = vpop.f32.mrf.mxu0
      %2000 = vmatprep.mubr.bf16.mxu0 0
      %2001 = vmatmul.mubr.bf16.gmra.mxu0 %v1805
      %v2002 = vpop.f32.mrf.mxu0
      %v2003 = vadd.f32 %v1638, %v2002
      %v2004 = vpop.f32.mrf.mxu0
      %v2005 = vpop.f32.mrf.mxu0
      %v2006 = vadd.f32 %v1641, %v2005
      %v2007 = vpop.f32.mrf.mxu0
      %2008 = vmatprep.mubr.bf16.mxu0 0
      %2009 = vmatmul.mubr.bf16.gmra.mxu0 %v1808
      %v2010 = vpop.f32.mrf.mxu0
      %v2011 = vadd.f32 %v1646, %v2010
      %v2012 = vpop.f32.mrf.mxu0
      %v2013 = vpop.f32.mrf.mxu0
      %v2014 = vadd.f32 %v1649, %v2013
      %v2015 = vpop.f32.mrf.mxu0
      %2016 = vmatprep.mubr.bf16.mxu0 0
      %2017 = vmatmul.mubr.bf16.gmra.mxu0 %v1811
      %v2018 = vpop.f32.mrf.mxu0
      %v2019 = vadd.f32 %v1654, %v2018
      %v2020 = vpop.f32.mrf.mxu0
      %v2021 = vpop.f32.mrf.mxu0
      %v2022 = vadd.f32 %v1657, %v2021
      %v2023 = vpop.f32.mrf.mxu0
      %2024 = vmatprep.mubr.bf16.mxu0 0
      %2025 = vmatmul.mubr.bf16.gmra.mxu0 %v1814
      %v2026 = vpop.f32.mrf.mxu0
      %v2027 = vadd.f32 %v1662, %v2026
      %v2028 = vpop.f32.mrf.mxu0
      %v2029 = vpop.f32.mrf.mxu0
      %v2030 = vadd.f32 %v1665, %v2029
      %v2031 = vpop.f32.mrf.mxu0
      %2032 = vmatprep.mubr.bf16.mxu0 0
      %2033 = vmatmul.mubr.bf16.gmra.mxu0 %v1817
      %v2034 = vpop.f32.mrf.mxu0
      %v2035 = vadd.f32 %v1670, %v2034
      %v2036 = vpop.f32.mrf.mxu0
      %v2037 = vpop.f32.mrf.mxu0
      %v2038 = vadd.f32 %v1673, %v2037
      %v2039 = vpop.f32.mrf.mxu0
      %2040 = vmatprep.mubr.bf16.mxu0 0
      %2041 = vmatmul.mubr.bf16.gmra.mxu0 %v1820
      %v2042 = vpop.f32.mrf.mxu0
      %v2043 = vadd.f32 %v1678, %v2042
      %v2044 = vpop.f32.mrf.mxu0
      %v2045 = vpop.f32.mrf.mxu0
      %v2046 = vadd.f32 %v1681, %v2045
      %v2047 = vpop.f32.mrf.mxu0
      %2048 = vmatprep.mubr.bf16.mxu0 0
      %2049 = vmatmul.mubr.bf16.gmra.mxu0 %v1823
      %v2050 = vpop.f32.mrf.mxu0
      %v2051 = vadd.f32 %v1686, %v2050
      %v2052 = vpop.f32.mrf.mxu0
      %v2053 = vpop.f32.mrf.mxu0
      %v2054 = vadd.f32 %v1689, %v2053
      %v2055 = vpop.f32.mrf.mxu0
      %2056 = vmatprep.mubr.bf16.mxu0 0
      %2057 = vmatmul.mubr.bf16.gmra.mxu0 %v1826
      %v2058 = vpop.f32.mrf.mxu0
      %v2059 = vadd.f32 %v1694, %v2058
      %v2060 = vpop.f32.mrf.mxu0
      %v2061 = vpop.f32.mrf.mxu0
      %v2062 = vadd.f32 %v1697, %v2061
      %v2063 = vpop.f32.mrf.mxu0
      %2064 = vmatprep.mubr.bf16.mxu0 0
      %2065 = vmatmul.mubr.bf16.gmra.mxu0 %v1829
      %v2066 = vpop.f32.mrf.mxu0
      %v2067 = vadd.f32 %v1702, %v2066
      %v2068 = vpop.f32.mrf.mxu0
      %v2069 = vpop.f32.mrf.mxu0
      %v2070 = vadd.f32 %v1705, %v2069
      %v2071 = vpop.f32.mrf.mxu0
      %2072 = vmatprep.mubr.bf16.mxu0 0
      %2073 = vmatmul.mubr.bf16.gmra.mxu0 %v1832
      %v2074 = vpop.f32.mrf.mxu0
      %v2075 = vadd.f32 %v1710, %v2074
      %v2076 = vpop.f32.mrf.mxu0
      %v2077 = vpop.f32.mrf.mxu0
      %v2078 = vadd.f32 %v1713, %v2077
      %v2079 = vpop.f32.mrf.mxu0
      %2080 = vmatprep.mubr.bf16.mxu0 0
      %2081 = vmatmul.mubr.bf16.gmra.mxu0 %v1835
      %v2082 = vpop.f32.mrf.mxu0
      %v2083 = vadd.f32 %v1718, %v2082
      %v2084 = vpop.f32.mrf.mxu0
      %v2085 = vpop.f32.mrf.mxu0
      %v2086 = vadd.f32 %v1721, %v2085
      %v2087 = vpop.f32.mrf.mxu0
      %2088 = vdwg.mxu0
      %v2091 = vunpack.c.l.b16 %v1254
      %v2092 = vunpack.c.h.b16 %v1254
      %v2093 = vunpack.c.l.b16 %v1256
      %s2094 = scalar_lea.vmem %s1, 16
      %v2095 = vld [vmem:[%s2094] sm:$0xf]
      %v2096 = vld [vmem:[%s2094 + $0x4] sm:$0x3]
      %v2097 = vpack.c.b16 %v1352, %v1351
      %v2098 = vpack.c.b16 %v2091, %v1353
      %v2099 = vpack.c.b16 %v2093, %v2092
      %v2102 = vunpack.c.l.b16 %v2095
      %v2103 = vunpack.c.l.b16 %v2096
      %v2104 = vpack.c.b16 %v2103, %v2102
      %v2106 = vsel %vm1389, %v2097, 0
      %v2109 = vsel %vm1389, %v2098, 0
      %v2112 = vsel %vm1389, %v2099, 0
      %v2115 = vsel %vm1471, %v2104, 0
      %2117 = vmatprep.subr.bf16.mxu0 0
      %2118 = vmatpush1.bf16.msra.mxu0 0
      %2119 = vmatprep.subr.bf16.mxu0 0
      %2120 = vmatpush1.bf16.msra.mxu0 0
      %2121 = vmatprep.subr.bf16.mxu0 0
      %2122 = vmatpush1.bf16.msra.mxu0 0
      %2123 = vmatprep.subr.bf16.mxu0 0
      %2124 = vmatpush1.bf16.msra.mxu0 0
      %2125 = vmatprep.subr.bf16.mxu0 0
      %2126 = vmatpush1.bf16.msra.mxu0 0
      %2127 = vmatprep.subr.bf16.mxu0 0
      %2128 = vmatpush1.bf16.msra.mxu0 0
      %2129 = vmatprep.subr.bf16.mxu0 0
      %2130 = vmatpush1.bf16.msra.mxu0 0
      %2131 = vmatprep.subr.bf16.mxu0 0
      %2132 = vmatpush1.bf16.msra.mxu0 %v2115
      %2133 = vmatprep.subr.bf16.mxu0 0
      %2134 = vmatpush2.bf16.msra.mxu0 0
      %2135 = vmatprep.subr.bf16.mxu0 0
      %2136 = vmatpush2.bf16.msra.mxu0 0
      %2137 = vmatprep.subr.bf16.mxu0 0
      %2138 = vmatpush2.bf16.msra.mxu0 0
      %2139 = vmatprep.subr.bf16.mxu0 0
      %2140 = vmatpush2.bf16.msra.mxu0 0
      %2141 = vmatprep.subr.bf16.mxu0 0
      %2142 = vmatpush2.bf16.msra.mxu0 0
      %2143 = vmatprep.subr.bf16.mxu0 0
      %2144 = vmatpush2.bf16.msra.mxu0 0
      %2145 = vmatprep.subr.bf16.mxu0 0
      %2146 = vmatpush2.bf16.msra.mxu0 0
      %2147 = vmatprep.subr.bf16.mxu0 0
      %2148 = vmatpush2.bf16.msra.mxu0 0
      %2149 = vmatprep.mubr.bf16.mxu0 0
      %2150 = vmatmul.mubr.bf16.gmra.mxu0 %v1766
      %v2151 = vpop.f32.mrf.mxu0
      %v2152 = vadd.f32 0.0, %v2151
      %v2153 = vpop.f32.mrf.mxu0
      %v2154 = vpop.f32.mrf.mxu0
      %v2155 = vadd.f32 0.0, %v2154
      %v2156 = vpop.f32.mrf.mxu0
      %2157 = vmatprep.mubr.bf16.mxu0 0
      %2158 = vmatmul.mubr.bf16.gmra.mxu0 %v1769
      %v2159 = vpop.f32.mrf.mxu0
      %v2160 = vadd.f32 0.0, %v2159
      %v2161 = vpop.f32.mrf.mxu0
      %v2162 = vpop.f32.mrf.mxu0
      %v2163 = vadd.f32 0.0, %v2162
      %v2164 = vpop.f32.mrf.mxu0
      %2165 = vmatprep.mubr.bf16.mxu0 0
      %2166 = vmatmul.mubr.bf16.gmra.mxu0 %v1772
      %v2167 = vpop.f32.mrf.mxu0
      %v2168 = vadd.f32 0.0, %v2167
      %v2169 = vpop.f32.mrf.mxu0
      %v2170 = vpop.f32.mrf.mxu0
      %v2171 = vadd.f32 0.0, %v2170
      %v2172 = vpop.f32.mrf.mxu0
      %2173 = vmatprep.mubr.bf16.mxu0 0
      %2174 = vmatmul.mubr.bf16.gmra.mxu0 %v1775
      %v2175 = vpop.f32.mrf.mxu0
      %v2176 = vadd.f32 0.0, %v2175
      %v2177 = vpop.f32.mrf.mxu0
      %v2178 = vpop.f32.mrf.mxu0
      %v2179 = vadd.f32 0.0, %v2178
      %v2180 = vpop.f32.mrf.mxu0
      %2181 = vmatprep.mubr.bf16.mxu0 0
      %2182 = vmatmul.mubr.bf16.gmra.mxu0 %v1778
      %v2183 = vpop.f32.mrf.mxu0
      %v2184 = vadd.f32 0.0, %v2183
      %v2185 = vpop.f32.mrf.mxu0
      %v2186 = vpop.f32.mrf.mxu0
      %v2187 = vadd.f32 0.0, %v2186
      %v2188 = vpop.f32.mrf.mxu0
      %2189 = vmatprep.mubr.bf16.mxu0 0
      %2190 = vmatmul.mubr.bf16.gmra.mxu0 %v1781
      %v2191 = vpop.f32.mrf.mxu0
      %v2192 = vadd.f32 0.0, %v2191
      %v2193 = vpop.f32.mrf.mxu0
      %v2194 = vpop.f32.mrf.mxu0
      %v2195 = vadd.f32 0.0, %v2194
      %v2196 = vpop.f32.mrf.mxu0
      %2197 = vmatprep.mubr.bf16.mxu0 0
      %2198 = vmatmul.mubr.bf16.gmra.mxu0 %v1784
      %v2199 = vpop.f32.mrf.mxu0
      %v2200 = vadd.f32 0.0, %v2199
      %v2201 = vpop.f32.mrf.mxu0
      %v2202 = vpop.f32.mrf.mxu0
      %v2203 = vadd.f32 0.0, %v2202
      %v2204 = vpop.f32.mrf.mxu0
      %2205 = vmatprep.mubr.bf16.mxu0 0
      %2206 = vmatmul.mubr.bf16.gmra.mxu0 %v1787
      %v2207 = vpop.f32.mrf.mxu0
      %v2208 = vadd.f32 0.0, %v2207
      %v2209 = vpop.f32.mrf.mxu0
      %v2210 = vpop.f32.mrf.mxu0
      %v2211 = vadd.f32 0.0, %v2210
      %v2212 = vpop.f32.mrf.mxu0
      %2213 = vmatprep.mubr.bf16.mxu0 0
      %2214 = vmatmul.mubr.bf16.gmra.mxu0 %v1790
      %v2215 = vpop.f32.mrf.mxu0
      %v2216 = vadd.f32 0.0, %v2215
      %v2217 = vpop.f32.mrf.mxu0
      %v2218 = vpop.f32.mrf.mxu0
      %v2219 = vadd.f32 0.0, %v2218
      %v2220 = vpop.f32.mrf.mxu0
      %2221 = vmatprep.mubr.bf16.mxu0 0
      %2222 = vmatmul.mubr.bf16.gmra.mxu0 %v1793
      %v2223 = vpop.f32.mrf.mxu0
      %v2224 = vadd.f32 0.0, %v2223
      %v2225 = vpop.f32.mrf.mxu0
      %v2226 = vpop.f32.mrf.mxu0
      %v2227 = vadd.f32 0.0, %v2226
      %v2228 = vpop.f32.mrf.mxu0
      %2229 = vmatprep.mubr.bf16.mxu0 0
      %2230 = vmatmul.mubr.bf16.gmra.mxu0 %v1796
      %v2231 = vpop.f32.mrf.mxu0
      %v2232 = vadd.f32 0.0, %v2231
      %v2233 = vpop.f32.mrf.mxu0
      %v2234 = vpop.f32.mrf.mxu0
      %v2235 = vadd.f32 0.0, %v2234
      %v2236 = vpop.f32.mrf.mxu0
      %2237 = vmatprep.mubr.bf16.mxu0 0
      %2238 = vmatmul.mubr.bf16.gmra.mxu0 %v1799
      %v2239 = vpop.f32.mrf.mxu0
      %v2240 = vadd.f32 0.0, %v2239
      %v2241 = vpop.f32.mrf.mxu0
      %v2242 = vpop.f32.mrf.mxu0
      %v2243 = vadd.f32 0.0, %v2242
      %v2244 = vpop.f32.mrf.mxu0
      %2245 = vmatprep.mubr.bf16.mxu0 0
      %2246 = vmatmul.mubr.bf16.gmra.mxu0 %v1802
      %v2247 = vpop.f32.mrf.mxu0
      %v2248 = vadd.f32 0.0, %v2247
      %v2249 = vpop.f32.mrf.mxu0
      %v2250 = vpop.f32.mrf.mxu0
      %v2251 = vadd.f32 0.0, %v2250
      %v2252 = vpop.f32.mrf.mxu0
      %2253 = vmatprep.mubr.bf16.mxu0 0
      %2254 = vmatmul.mubr.bf16.gmra.mxu0 %v1805
      %v2255 = vpop.f32.mrf.mxu0
      %v2256 = vadd.f32 0.0, %v2255
      %v2257 = vpop.f32.mrf.mxu0
      %v2258 = vpop.f32.mrf.mxu0
      %v2259 = vadd.f32 0.0, %v2258
      %v2260 = vpop.f32.mrf.mxu0
      %2261 = vmatprep.mubr.bf16.mxu0 0
      %2262 = vmatmul.mubr.bf16.gmra.mxu0 %v1808
      %v2263 = vpop.f32.mrf.mxu0
      %v2264 = vadd.f32 0.0, %v2263
      %v2265 = vpop.f32.mrf.mxu0
      %v2266 = vpop.f32.mrf.mxu0
      %v2267 = vadd.f32 0.0, %v2266
      %v2268 = vpop.f32.mrf.mxu0
      %2269 = vmatprep.mubr.bf16.mxu0 0
      %2270 = vmatmul.mubr.bf16.gmra.mxu0 %v1811
      %v2271 = vpop.f32.mrf.mxu0
      %v2272 = vadd.f32 0.0, %v2271
      %v2273 = vpop.f32.mrf.mxu0
      %v2274 = vpop.f32.mrf.mxu0
      %v2275 = vadd.f32 0.0, %v2274
      %v2276 = vpop.f32.mrf.mxu0
      %2277 = vmatprep.mubr.bf16.mxu0 0
      %2278 = vmatmul.mubr.bf16.gmra.mxu0 %v1814
      %v2279 = vpop.f32.mrf.mxu0
      %v2280 = vadd.f32 0.0, %v2279
      %v2281 = vpop.f32.mrf.mxu0
      %v2282 = vpop.f32.mrf.mxu0
      %v2283 = vadd.f32 0.0, %v2282
      %v2284 = vpop.f32.mrf.mxu0
      %2285 = vmatprep.mubr.bf16.mxu0 0
      %2286 = vmatmul.mubr.bf16.gmra.mxu0 %v1817
      %v2287 = vpop.f32.mrf.mxu0
      %v2288 = vadd.f32 0.0, %v2287
      %v2289 = vpop.f32.mrf.mxu0
      %v2290 = vpop.f32.mrf.mxu0
      %v2291 = vadd.f32 0.0, %v2290
      %v2292 = vpop.f32.mrf.mxu0
      %2293 = vmatprep.mubr.bf16.mxu0 0
      %2294 = vmatmul.mubr.bf16.gmra.mxu0 %v1820
      %v2295 = vpop.f32.mrf.mxu0
      %v2296 = vadd.f32 0.0, %v2295
      %v2297 = vpop.f32.mrf.mxu0
      %v2298 = vpop.f32.mrf.mxu0
      %v2299 = vadd.f32 0.0, %v2298
      %v2300 = vpop.f32.mrf.mxu0
      %2301 = vmatprep.mubr.bf16.mxu0 0
      %2302 = vmatmul.mubr.bf16.gmra.mxu0 %v1823
      %v2303 = vpop.f32.mrf.mxu0
      %v2304 = vadd.f32 0.0, %v2303
      %v2305 = vpop.f32.mrf.mxu0
      %v2306 = vpop.f32.mrf.mxu0
      %v2307 = vadd.f32 0.0, %v2306
      %v2308 = vpop.f32.mrf.mxu0
      %2309 = vmatprep.mubr.bf16.mxu0 0
      %2310 = vmatmul.mubr.bf16.gmra.mxu0 %v1826
      %v2311 = vpop.f32.mrf.mxu0
      %v2312 = vadd.f32 0.0, %v2311
      %v2313 = vpop.f32.mrf.mxu0
      %v2314 = vpop.f32.mrf.mxu0
      %v2315 = vadd.f32 0.0, %v2314
      %v2316 = vpop.f32.mrf.mxu0
      %2317 = vmatprep.mubr.bf16.mxu0 0
      %2318 = vmatmul.mubr.bf16.gmra.mxu0 %v1829
      %v2319 = vpop.f32.mrf.mxu0
      %v2320 = vadd.f32 0.0, %v2319
      %v2321 = vpop.f32.mrf.mxu0
      %v2322 = vpop.f32.mrf.mxu0
      %v2323 = vadd.f32 0.0, %v2322
      %v2324 = vpop.f32.mrf.mxu0
      %2325 = vmatprep.mubr.bf16.mxu0 0
      %2326 = vmatmul.mubr.bf16.gmra.mxu0 %v1832
      %v2327 = vpop.f32.mrf.mxu0
      %v2328 = vadd.f32 0.0, %v2327
      %v2329 = vpop.f32.mrf.mxu0
      %v2330 = vpop.f32.mrf.mxu0
      %v2331 = vadd.f32 0.0, %v2330
      %v2332 = vpop.f32.mrf.mxu0
      %2333 = vmatprep.mubr.bf16.mxu0 0
      %2334 = vmatmul.mubr.bf16.gmra.mxu0 %v1835
      %v2335 = vpop.f32.mrf.mxu0
      %v2336 = vadd.f32 0.0, %v2335
      %v2337 = vpop.f32.mrf.mxu0
      %v2338 = vpop.f32.mrf.mxu0
      %v2339 = vadd.f32 0.0, %v2338
      %v2340 = vpop.f32.mrf.mxu0
      %2341 = vmatprep.mubr.bf16.mxu0 0
      %2342 = vmatmul.mubr.bf16.gmra.mxu0 %v2106
      %v2343 = vpop.f32.mrf.mxu0
      %v2344 = vadd.f32 0.0, %v2343
      %v2345 = vpop.f32.mrf.mxu0
      %v2346 = vpop.f32.mrf.mxu0
      %v2347 = vadd.f32 0.0, %v2346
      %v2348 = vpop.f32.mrf.mxu0
      %2349 = vmatprep.mubr.bf16.mxu0 0
      %2350 = vmatmul.mubr.bf16.gmra.mxu0 %v2109
      %v2351 = vpop.f32.mrf.mxu0
      %v2352 = vadd.f32 0.0, %v2351
      %v2353 = vpop.f32.mrf.mxu0
      %v2354 = vpop.f32.mrf.mxu0
      %v2355 = vadd.f32 0.0, %v2354
      %v2356 = vpop.f32.mrf.mxu0
      %2357 = vmatprep.mubr.bf16.mxu0 0
      %2358 = vmatmul.mubr.bf16.gmra.mxu0 %v2112
      %v2359 = vpop.f32.mrf.mxu0
      %v2360 = vadd.f32 0.0, %v2359
      %v2361 = vpop.f32.mrf.mxu0
      %v2362 = vpop.f32.mrf.mxu0
      %v2363 = vadd.f32 0.0, %v2362
      %v2364 = vpop.f32.mrf.mxu0
      %2365 = vdwg.mxu0
      %v2366 = vadd.f32 %v1875, %v2152
      %v2367 = vadd.f32 %v1878, %v2155
      %v2368 = vadd.f32 %v1883, %v2160
      %v2369 = vadd.f32 %v1886, %v2163
      %v2370 = vadd.f32 %v1891, %v2168
      %v2371 = vadd.f32 %v1894, %v2171
      %v2372 = vadd.f32 %v1899, %v2176
      %v2373 = vadd.f32 %v1902, %v2179
      %v2374 = vadd.f32 %v1907, %v2184
      %v2375 = vadd.f32 %v1910, %v2187
      %v2376 = vadd.f32 %v1915, %v2192
      %v2377 = vadd.f32 %v1918, %v2195
      %v2378 = vadd.f32 %v1923, %v2200
      %v2379 = vadd.f32 %v1926, %v2203
      %v2380 = vadd.f32 %v1931, %v2208
      %v2381 = vadd.f32 %v1934, %v2211
      %v2382 = vadd.f32 %v1939, %v2216
      %v2383 = vadd.f32 %v1942, %v2219
      %v2384 = vadd.f32 %v1947, %v2224
      %v2385 = vadd.f32 %v1950, %v2227
      %v2386 = vadd.f32 %v1955, %v2232
      %v2387 = vadd.f32 %v1958, %v2235
      %v2388 = vadd.f32 %v1963, %v2240
      %v2389 = vadd.f32 %v1966, %v2243
      %v2390 = vadd.f32 %v1971, %v2248
      %v2391 = vadd.f32 %v1974, %v2251
      %v2392 = vadd.f32 %v1979, %v2256
      %v2393 = vadd.f32 %v1982, %v2259
      %v2394 = vadd.f32 %v1987, %v2264
      %v2395 = vadd.f32 %v1990, %v2267
      %v2396 = vadd.f32 %v1995, %v2272
      %v2397 = vadd.f32 %v1998, %v2275
      %v2398 = vadd.f32 %v2003, %v2280
      %v2399 = vadd.f32 %v2006, %v2283
      %v2400 = vadd.f32 %v2011, %v2288
      %v2401 = vadd.f32 %v2014, %v2291
      %v2402 = vadd.f32 %v2019, %v2296
      %v2403 = vadd.f32 %v2022, %v2299
      %v2404 = vadd.f32 %v2027, %v2304
      %v2405 = vadd.f32 %v2030, %v2307
      %v2406 = vadd.f32 %v2035, %v2312
      %v2407 = vadd.f32 %v2038, %v2315
      %v2408 = vadd.f32 %v2043, %v2320
      %v2409 = vadd.f32 %v2046, %v2323
      %v2410 = vadd.f32 %v2051, %v2328
      %v2411 = vadd.f32 %v2054, %v2331
      %v2412 = vadd.f32 %v2059, %v2336
      %v2413 = vadd.f32 %v2062, %v2339
      %v2414 = vadd.f32 %v2067, %v2344
      %v2415 = vadd.f32 %v2070, %v2347
      %v2416 = vadd.f32 %v2075, %v2352
      %v2417 = vadd.f32 %v2078, %v2355
      %v2418 = vadd.f32 %v2083, %v2360
      %v2419 = vadd.f32 %v2086, %v2363
      %v2420 = vld [vmem:[%s3] sm:$0x1]
      %v2422 = vlaneseq
      %v2423 = vshrl.u32 %v2422, 7
      %v2424 = vsub.s32 0, %v2423
      %v2425 = vrot.slane %v2420, %v2424
      %v2427 = vadd.f32 %v2366, %v2425
      %v2428 = vadd.f32 %v2367, %v2425
      %v2429 = vadd.f32 %v2368, %v2425
      %v2430 = vadd.f32 %v2369, %v2425
      %v2431 = vadd.f32 %v2370, %v2425
      %v2432 = vadd.f32 %v2371, %v2425
      %v2433 = vadd.f32 %v2372, %v2425
      %v2434 = vadd.f32 %v2373, %v2425
      %v2435 = vadd.f32 %v2374, %v2425
      %v2436 = vadd.f32 %v2375, %v2425
      %v2437 = vadd.f32 %v2376, %v2425
      %v2438 = vadd.f32 %v2377, %v2425
      %v2439 = vadd.f32 %v2378, %v2425
      %v2440 = vadd.f32 %v2379, %v2425
      %v2441 = vadd.f32 %v2380, %v2425
      %v2442 = vadd.f32 %v2381, %v2425
      %v2443 = vadd.f32 %v2382, %v2425
      %v2444 = vadd.f32 %v2383, %v2425
      %v2445 = vadd.f32 %v2384, %v2425
      %v2446 = vadd.f32 %v2385, %v2425
      %v2447 = vadd.f32 %v2386, %v2425
      %v2448 = vadd.f32 %v2387, %v2425
      %v2449 = vadd.f32 %v2388, %v2425
      %v2450 = vadd.f32 %v2389, %v2425
      %v2451 = vadd.f32 %v2390, %v2425
      %v2452 = vadd.f32 %v2391, %v2425
      %v2453 = vadd.f32 %v2392, %v2425
      %v2454 = vadd.f32 %v2393, %v2425
      %v2455 = vadd.f32 %v2394, %v2425
      %v2456 = vadd.f32 %v2395, %v2425
      %v2457 = vadd.f32 %v2396, %v2425
      %v2458 = vadd.f32 %v2397, %v2425
      %v2459 = vadd.f32 %v2398, %v2425
      %v2460 = vadd.f32 %v2399, %v2425
      %v2461 = vadd.f32 %v2400, %v2425
      %v2462 = vadd.f32 %v2401, %v2425
      %v2463 = vadd.f32 %v2402, %v2425
      %v2464 = vadd.f32 %v2403, %v2425
      %v2465 = vadd.f32 %v2404, %v2425
      %v2466 = vadd.f32 %v2405, %v2425
      %v2467 = vadd.f32 %v2406, %v2425
      %v2468 = vadd.f32 %v2407, %v2425
      %v2469 = vadd.f32 %v2408, %v2425
      %v2470 = vadd.f32 %v2409, %v2425
      %v2471 = vadd.f32 %v2410, %v2425
      %v2472 = vadd.f32 %v2411, %v2425
      %v2473 = vadd.f32 %v2412, %v2425
      %v2474 = vadd.f32 %v2413, %v2425
      %v2475 = vadd.f32 %v2414, %v2425
      %v2476 = vadd.f32 %v2415, %v2425
      %v2477 = vadd.f32 %v2416, %v2425
      %v2478 = vadd.f32 %v2417, %v2425
      %v2479 = vadd.f32 %v2418, %v2425
      %v2480 = vadd.f32 %v2419, %v2425
      %v2481 = vxor.u32 %v2427, 2147483648
      %v2482 = vxor.u32 %v2428, 2147483648
      %v2483 = vxor.u32 %v2429, 2147483648
      %v2484 = vxor.u32 %v2430, 2147483648
      %v2485 = vxor.u32 %v2431, 2147483648
      %v2486 = vxor.u32 %v2432, 2147483648
      %v2487 = vxor.u32 %v2433, 2147483648
      %v2488 = vxor.u32 %v2434, 2147483648
      %v2489 = vxor.u32 %v2435, 2147483648
      %v2490 = vxor.u32 %v2436, 2147483648
      %v2491 = vxor.u32 %v2437, 2147483648
      %v2492 = vxor.u32 %v2438, 2147483648
      %v2493 = vxor.u32 %v2439, 2147483648
      %v2494 = vxor.u32 %v2440, 2147483648
      %v2495 = vxor.u32 %v2441, 2147483648
      %v2496 = vxor.u32 %v2442, 2147483648
      %v2497 = vxor.u32 %v2443, 2147483648
      %v2498 = vxor.u32 %v2444, 2147483648
      %v2499 = vxor.u32 %v2445, 2147483648
      %v2500 = vxor.u32 %v2446, 2147483648
      %v2501 = vxor.u32 %v2447, 2147483648
      %v2502 = vxor.u32 %v2448, 2147483648
      %v2503 = vxor.u32 %v2449, 2147483648
      %v2504 = vxor.u32 %v2450, 2147483648
      %v2505 = vxor.u32 %v2451, 2147483648
      %v2506 = vxor.u32 %v2452, 2147483648
      %v2507 = vxor.u32 %v2453, 2147483648
      %v2508 = vxor.u32 %v2454, 2147483648
      %v2509 = vxor.u32 %v2455, 2147483648
      %v2510 = vxor.u32 %v2456, 2147483648
      %v2511 = vxor.u32 %v2457, 2147483648
      %v2512 = vxor.u32 %v2458, 2147483648
      %v2513 = vxor.u32 %v2459, 2147483648
      %v2514 = vxor.u32 %v2460, 2147483648
      %v2515 = vxor.u32 %v2461, 2147483648
      %v2516 = vxor.u32 %v2462, 2147483648
      %v2517 = vxor.u32 %v2463, 2147483648
      %v2518 = vxor.u32 %v2464, 2147483648
      %v2519 = vxor.u32 %v2465, 2147483648
      %v2520 = vxor.u32 %v2466, 2147483648
      %v2521 = vxor.u32 %v2467, 2147483648
      %v2522 = vxor.u32 %v2468, 2147483648
      %v2523 = vxor.u32 %v2469, 2147483648
      %v2524 = vxor.u32 %v2470, 2147483648
      %v2525 = vxor.u32 %v2471, 2147483648
      %v2526 = vxor.u32 %v2472, 2147483648
      %v2527 = vxor.u32 %v2473, 2147483648
      %v2528 = vxor.u32 %v2474, 2147483648
      %v2529 = vxor.u32 %v2475, 2147483648
      %v2530 = vxor.u32 %v2476, 2147483648
      %v2531 = vxor.u32 %v2477, 2147483648
      %v2532 = vxor.u32 %v2478, 2147483648
      %v2533 = vxor.u32 %v2479, 2147483648
      %v2534 = vxor.u32 %v2480, 2147483648
      %v2535 = vmul.f32 %v2481, 1.442695
      %v2536 = vpow.pop %v2535
      %v2537 = vmul.f32 %v2482, 1.442695
      %v2538 = vpow.pop %v2537
      %v2539 = vmul.f32 %v2483, 1.442695
      %v2540 = vpow.pop %v2539
      %v2541 = vmul.f32 %v2484, 1.442695
      %v2542 = vpow.pop %v2541
      %v2543 = vmul.f32 %v2485, 1.442695
      %v2544 = vpow.pop %v2543
      %v2545 = vmul.f32 %v2486, 1.442695
      %v2546 = vpow.pop %v2545
      %v2547 = vmul.f32 %v2487, 1.442695
      %v2548 = vpow.pop %v2547
      %v2549 = vmul.f32 %v2488, 1.442695
      %v2550 = vpow.pop %v2549
      %v2551 = vmul.f32 %v2489, 1.442695
      %v2552 = vpow.pop %v2551
      %v2553 = vmul.f32 %v2490, 1.442695
      %v2554 = vpow.pop %v2553
      %v2555 = vmul.f32 %v2491, 1.442695
      %v2556 = vpow.pop %v2555
      %v2557 = vmul.f32 %v2492, 1.442695
      %v2558 = vpow.pop %v2557
      %v2559 = vmul.f32 %v2493, 1.442695
      %v2560 = vpow.pop %v2559
      %v2561 = vmul.f32 %v2494, 1.442695
      %v2562 = vpow.pop %v2561
      %v2563 = vmul.f32 %v2495, 1.442695
      %v2564 = vpow.pop %v2563
      %v2565 = vmul.f32 %v2496, 1.442695
      %v2566 = vpow.pop %v2565
      %v2567 = vmul.f32 %v2497, 1.442695
      %v2568 = vpow.pop %v2567
      %v2569 = vmul.f32 %v2498, 1.442695
      %v2570 = vpow.pop %v2569
      %v2571 = vmul.f32 %v2499, 1.442695
      %v2572 = vpow.pop %v2571
      %v2573 = vmul.f32 %v2500, 1.442695
      %v2574 = vpow.pop %v2573
      %v2575 = vmul.f32 %v2501, 1.442695
      %v2576 = vpow.pop %v2575
      %v2577 = vmul.f32 %v2502, 1.442695
      %v2578 = vpow.pop %v2577
      %v2579 = vmul.f32 %v2503, 1.442695
      %v2580 = vpow.pop %v2579
      %v2581 = vmul.f32 %v2504, 1.442695
      %v2582 = vpow.pop %v2581
      %v2583 = vmul.f32 %v2505, 1.442695
      %v2584 = vpow.pop %v2583
      %v2585 = vmul.f32 %v2506, 1.442695
      %v2586 = vpow.pop %v2585
      %v2587 = vmul.f32 %v2507, 1.442695
      %v2588 = vpow.pop %v2587
      %v2589 = vmul.f32 %v2508, 1.442695
      %v2590 = vpow.pop %v2589
      %v2591 = vmul.f32 %v2509, 1.442695
      %v2592 = vpow.pop %v2591
      %v2593 = vmul.f32 %v2510, 1.442695
      %v2594 = vpow.pop %v2593
      %v2595 = vmul.f32 %v2511, 1.442695
      %v2596 = vpow.pop %v2595
      %v2597 = vmul.f32 %v2512, 1.442695
      %v2598 = vpow.pop %v2597
      %v2599 = vmul.f32 %v2513, 1.442695
      %v2600 = vpow.pop %v2599
      %v2601 = vmul.f32 %v2514, 1.442695
      %v2602 = vpow.pop %v2601
      %v2603 = vmul.f32 %v2515, 1.442695
      %v2604 = vpow.pop %v2603
      %v2605 = vmul.f32 %v2516, 1.442695
      %v2606 = vpow.pop %v2605
      %v2607 = vmul.f32 %v2517, 1.442695
      %v2608 = vpow.pop %v2607
      %v2609 = vmul.f32 %v2518, 1.442695
      %v2610 = vpow.pop %v2609
      %v2611 = vmul.f32 %v2519, 1.442695
      %v2612 = vpow.pop %v2611
      %v2613 = vmul.f32 %v2520, 1.442695
      %v2614 = vpow.pop %v2613
      %v2615 = vmul.f32 %v2521, 1.442695
      %v2616 = vpow.pop %v2615
      %v2617 = vmul.f32 %v2522, 1.442695
      %v2618 = vpow.pop %v2617
      %v2619 = vmul.f32 %v2523, 1.442695
      %v2620 = vpow.pop %v2619
      %v2621 = vmul.f32 %v2524, 1.442695
      %v2622 = vpow.pop %v2621
      %v2623 = vmul.f32 %v2525, 1.442695
      %v2624 = vpow.pop %v2623
      %v2625 = vmul.f32 %v2526, 1.442695
      %v2626 = vpow.pop %v2625
      %v2627 = vmul.f32 %v2527, 1.442695
      %v2628 = vpow.pop %v2627
      %v2629 = vmul.f32 %v2528, 1.442695
      %v2630 = vpow.pop %v2629
      %v2631 = vmul.f32 %v2529, 1.442695
      %v2632 = vpow.pop %v2631
      %v2633 = vmul.f32 %v2530, 1.442695
      %v2634 = vpow.pop %v2633
      %v2635 = vmul.f32 %v2531, 1.442695
      %v2636 = vpow.pop %v2635
      %v2637 = vmul.f32 %v2532, 1.442695
      %v2638 = vpow.pop %v2637
      %v2639 = vmul.f32 %v2533, 1.442695
      %v2640 = vpow.pop %v2639
      %v2641 = vmul.f32 %v2534, 1.442695
      %v2642 = vpow.pop %v2641
      %v2643 = vadd.f32 %v2536, 1.0
      %v2644 = vadd.f32 %v2538, 1.0
      %v2645 = vadd.f32 %v2540, 1.0
      %v2646 = vadd.f32 %v2542, 1.0
      %v2647 = vadd.f32 %v2544, 1.0
      %v2648 = vadd.f32 %v2546, 1.0
      %v2649 = vadd.f32 %v2548, 1.0
      %v2650 = vadd.f32 %v2550, 1.0
      %v2651 = vadd.f32 %v2552, 1.0
      %v2652 = vadd.f32 %v2554, 1.0
      %v2653 = vadd.f32 %v2556, 1.0
      %v2654 = vadd.f32 %v2558, 1.0
      %v2655 = vadd.f32 %v2560, 1.0
      %v2656 = vadd.f32 %v2562, 1.0
      %v2657 = vadd.f32 %v2564, 1.0
      %v2658 = vadd.f32 %v2566, 1.0
      %v2659 = vadd.f32 %v2568, 1.0
      %v2660 = vadd.f32 %v2570, 1.0
      %v2661 = vadd.f32 %v2572, 1.0
      %v2662 = vadd.f32 %v2574, 1.0
      %v2663 = vadd.f32 %v2576, 1.0
      %v2664 = vadd.f32 %v2578, 1.0
      %v2665 = vadd.f32 %v2580, 1.0
      %v2666 = vadd.f32 %v2582, 1.0
      %v2667 = vadd.f32 %v2584, 1.0
      %v2668 = vadd.f32 %v2586, 1.0
      %v2669 = vadd.f32 %v2588, 1.0
      %v2670 = vadd.f32 %v2590, 1.0
      %v2671 = vadd.f32 %v2592, 1.0
      %v2672 = vadd.f32 %v2594, 1.0
      %v2673 = vadd.f32 %v2596, 1.0
      %v2674 = vadd.f32 %v2598, 1.0
      %v2675 = vadd.f32 %v2600, 1.0
      %v2676 = vadd.f32 %v2602, 1.0
      %v2677 = vadd.f32 %v2604, 1.0
      %v2678 = vadd.f32 %v2606, 1.0
      %v2679 = vadd.f32 %v2608, 1.0
      %v2680 = vadd.f32 %v2610, 1.0
      %v2681 = vadd.f32 %v2612, 1.0
      %v2682 = vadd.f32 %v2614, 1.0
      %v2683 = vadd.f32 %v2616, 1.0
      %v2684 = vadd.f32 %v2618, 1.0
      %v2685 = vadd.f32 %v2620, 1.0
      %v2686 = vadd.f32 %v2622, 1.0
      %v2687 = vadd.f32 %v2624, 1.0
      %v2688 = vadd.f32 %v2626, 1.0
      %v2689 = vadd.f32 %v2628, 1.0
      %v2690 = vadd.f32 %v2630, 1.0
      %v2691 = vadd.f32 %v2632, 1.0
      %v2692 = vadd.f32 %v2634, 1.0
      %v2693 = vadd.f32 %v2636, 1.0
      %v2694 = vadd.f32 %v2638, 1.0
      %v2695 = vadd.f32 %v2640, 1.0
      %v2696 = vadd.f32 %v2642, 1.0
      %v2697 = vrcp.pop %v2643
      %v2698 = vmul.f32 1.0, %v2697
      %v2699 = vrcp.pop %v2644
      %v2700 = vmul.f32 1.0, %v2699
      %v2701 = vrcp.pop %v2645
      %v2702 = vmul.f32 1.0, %v2701
      %v2703 = vrcp.pop %v2646
      %v2704 = vmul.f32 1.0, %v2703
      %v2705 = vrcp.pop %v2647
      %v2706 = vmul.f32 1.0, %v2705
      %v2707 = vrcp.pop %v2648
      %v2708 = vmul.f32 1.0, %v2707
      %v2709 = vrcp.pop %v2649
      %v2710 = vmul.f32 1.0, %v2709
      %v2711 = vrcp.pop %v2650
      %v2712 = vmul.f32 1.0, %v2711
      %v2713 = vrcp.pop %v2651
      %v2714 = vmul.f32 1.0, %v2713
      %v2715 = vrcp.pop %v2652
      %v2716 = vmul.f32 1.0, %v2715
      %v2717 = vrcp.pop %v2653
      %v2718 = vmul.f32 1.0, %v2717
      %v2719 = vrcp.pop %v2654
      %v2720 = vmul.f32 1.0, %v2719
      %v2721 = vrcp.pop %v2655
      %v2722 = vmul.f32 1.0, %v2721
      %v2723 = vrcp.pop %v2656
      %v2724 = vmul.f32 1.0, %v2723
      %v2725 = vrcp.pop %v2657
      %v2726 = vmul.f32 1.0, %v2725
      %v2727 = vrcp.pop %v2658
      %v2728 = vmul.f32 1.0, %v2727
      %v2729 = vrcp.pop %v2659
      %v2730 = vmul.f32 1.0, %v2729
      %v2731 = vrcp.pop %v2660
      %v2732 = vmul.f32 1.0, %v2731
      %v2733 = vrcp.pop %v2661
      %v2734 = vmul.f32 1.0, %v2733
      %v2735 = vrcp.pop %v2662
      %v2736 = vmul.f32 1.0, %v2735
      %v2737 = vrcp.pop %v2663
      %v2738 = vmul.f32 1.0, %v2737
      %v2739 = vrcp.pop %v2664
      %v2740 = vmul.f32 1.0, %v2739
      %v2741 = vrcp.pop %v2665
      %v2742 = vmul.f32 1.0, %v2741
      %v2743 = vrcp.pop %v2666
      %v2744 = vmul.f32 1.0, %v2743
      %v2745 = vrcp.pop %v2667
      %v2746 = vmul.f32 1.0, %v2745
      %v2747 = vrcp.pop %v2668
      %v2748 = vmul.f32 1.0, %v2747
      %v2749 = vrcp.pop %v2669
      %v2750 = vmul.f32 1.0, %v2749
      %v2751 = vrcp.pop %v2670
      %v2752 = vmul.f32 1.0, %v2751
      %v2753 = vrcp.pop %v2671
      %v2754 = vmul.f32 1.0, %v2753
      %v2755 = vrcp.pop %v2672
      %v2756 = vmul.f32 1.0, %v2755
      %v2757 = vrcp.pop %v2673
      %v2758 = vmul.f32 1.0, %v2757
      %v2759 = vrcp.pop %v2674
      %v2760 = vmul.f32 1.0, %v2759
      %v2761 = vrcp.pop %v2675
      %v2762 = vmul.f32 1.0, %v2761
      %v2763 = vrcp.pop %v2676
      %v2764 = vmul.f32 1.0, %v2763
      %v2765 = vrcp.pop %v2677
      %v2766 = vmul.f32 1.0, %v2765
      %v2767 = vrcp.pop %v2678
      %v2768 = vmul.f32 1.0, %v2767
      %v2769 = vrcp.pop %v2679
      %v2770 = vmul.f32 1.0, %v2769
      %v2771 = vrcp.pop %v2680
      %v2772 = vmul.f32 1.0, %v2771
      %v2773 = vrcp.pop %v2681
      %v2774 = vmul.f32 1.0, %v2773
      %v2775 = vrcp.pop %v2682
      %v2776 = vmul.f32 1.0, %v2775
      %v2777 = vrcp.pop %v2683
      %v2778 = vmul.f32 1.0, %v2777
      %v2779 = vrcp.pop %v2684
      %v2780 = vmul.f32 1.0, %v2779
      %v2781 = vrcp.pop %v2685
      %v2782 = vmul.f32 1.0, %v2781
      %v2783 = vrcp.pop %v2686
      %v2784 = vmul.f32 1.0, %v2783
      %v2785 = vrcp.pop %v2687
      %v2786 = vmul.f32 1.0, %v2785
      %v2787 = vrcp.pop %v2688
      %v2788 = vmul.f32 1.0, %v2787
      %v2789 = vrcp.pop %v2689
      %v2790 = vmul.f32 1.0, %v2789
      %v2791 = vrcp.pop %v2690
      %v2792 = vmul.f32 1.0, %v2791
      %v2793 = vrcp.pop %v2691
      %v2794 = vmul.f32 1.0, %v2793
      %v2795 = vrcp.pop %v2692
      %v2796 = vmul.f32 1.0, %v2795
      %v2797 = vrcp.pop %v2693
      %v2798 = vmul.f32 1.0, %v2797
      %v2799 = vrcp.pop %v2694
      %v2800 = vmul.f32 1.0, %v2799
      %v2801 = vrcp.pop %v2695
      %v2802 = vmul.f32 1.0, %v2801
      %v2803 = vrcp.pop %v2696
      %v2804 = vmul.f32 1.0, %v2803
      %v2805 = vmul.f32 %v2427, %v2698
      %v2806 = vmul.f32 %v2428, %v2700
      %v2807 = vmul.f32 %v2429, %v2702
      %v2808 = vmul.f32 %v2430, %v2704
      %v2809 = vmul.f32 %v2431, %v2706
      %v2810 = vmul.f32 %v2432, %v2708
      %v2811 = vmul.f32 %v2433, %v2710
      %v2812 = vmul.f32 %v2434, %v2712
      %v2813 = vmul.f32 %v2435, %v2714
      %v2814 = vmul.f32 %v2436, %v2716
      %v2815 = vmul.f32 %v2437, %v2718
      %v2816 = vmul.f32 %v2438, %v2720
      %v2817 = vmul.f32 %v2439, %v2722
      %v2818 = vmul.f32 %v2440, %v2724
      %v2819 = vmul.f32 %v2441, %v2726
      %v2820 = vmul.f32 %v2442, %v2728
      %v2821 = vmul.f32 %v2443, %v2730
      %v2822 = vmul.f32 %v2444, %v2732
      %v2823 = vmul.f32 %v2445, %v2734
      %v2824 = vmul.f32 %v2446, %v2736
      %v2825 = vmul.f32 %v2447, %v2738
      %v2826 = vmul.f32 %v2448, %v2740
      %v2827 = vmul.f32 %v2449, %v2742
      %v2828 = vmul.f32 %v2450, %v2744
      %v2829 = vmul.f32 %v2451, %v2746
      %v2830 = vmul.f32 %v2452, %v2748
      %v2831 = vmul.f32 %v2453, %v2750
      %v2832 = vmul.f32 %v2454, %v2752
      %v2833 = vmul.f32 %v2455, %v2754
      %v2834 = vmul.f32 %v2456, %v2756
      %v2835 = vmul.f32 %v2457, %v2758
      %v2836 = vmul.f32 %v2458, %v2760
      %v2837 = vmul.f32 %v2459, %v2762
      %v2838 = vmul.f32 %v2460, %v2764
      %v2839 = vmul.f32 %v2461, %v2766
      %v2840 = vmul.f32 %v2462, %v2768
      %v2841 = vmul.f32 %v2463, %v2770
      %v2842 = vmul.f32 %v2464, %v2772
      %v2843 = vmul.f32 %v2465, %v2774
      %v2844 = vmul.f32 %v2466, %v2776
      %v2845 = vmul.f32 %v2467, %v2778
      %v2846 = vmul.f32 %v2468, %v2780
      %v2847 = vmul.f32 %v2469, %v2782
      %v2848 = vmul.f32 %v2470, %v2784
      %v2849 = vmul.f32 %v2471, %v2786
      %v2850 = vmul.f32 %v2472, %v2788
      %v2851 = vmul.f32 %v2473, %v2790
      %v2852 = vmul.f32 %v2474, %v2792
      %v2853 = vmul.f32 %v2475, %v2794
      %v2854 = vmul.f32 %v2476, %v2796
      %v2855 = vmul.f32 %v2477, %v2798
      %v2856 = vmul.f32 %v2478, %v2800
      %v2857 = vmul.f32 %v2479, %v2802
      %v2858 = vmul.f32 %v2480, %v2804
      %v2859 = vlaneseq
      %v2860 = vshrl.u32 %v2859, 7
      %v2861 = vadd.s32 %v2860, 8
      %v2862 = vadd.s32 %v2860, 16
      %vm2863 = vcmp.ge.s32.totalorder %v2860, 1
      %vm2864 = vcmp.ge.s32.totalorder %v2861, 1
      %vm2865 = vcmp.ge.s32.totalorder %v2862, 1
      %vm2866 = vcmp.le.s32.totalorder %v2860, 16
      %vm2867 = vcmp.le.s32.totalorder %v2861, 16
      %vm2868 = vcmp.le.s32.totalorder %v2862, 16
      %vm2869 = vmand %vm2863, %vm2866
      %vm2870 = vmand %vm2864, %vm2867
      %vm2871 = vmand %vm2865, %vm2868
      %p2872 = scmp.gt.s32.totalorder %s21, 0
      %s2873 = scalar_select %p2872, 1, 0
      %v2874 = vstv %s2873
      %vm2875 = vcmp.eq.s32.totalorder %v2874, 1
      %vm2876 = vmand %vm2869, %vm2875
      %vm2877 = vmand %vm2870, %vm2875
      %vm2878 = vmand %vm2871, %vm2875
      %vm2879 = vmand %vm2869, 1
      %vm2880 = vmand %vm2870, 1
      %vm2881 = vmand %vm2871, 1
      %p2882 = scmp.lt.s32.totalorder %s21, 0
      %s2883 = scalar_select %p2882, 1, 0
      %v2884 = vstv %s2883
      %vm2885 = vcmp.eq.s32.totalorder %v2884, 1
      %vm2886 = vmand %vm2876, 1
      %vm2887 = vmand %vm2877, 1
      %vm2888 = vmand %vm2878, 1
      %vm2889 = vmand %vm2879, %vm2885
      %vm2890 = vmand %vm2880, %vm2885
      %vm2891 = vmand %vm2881, %vm2885
      %v2892 = vsel %vm2886, 1, 0
      %v2893 = vsel %vm2887, 1, 0
      %v2894 = vsel %vm2888, 1, 0
      %v2895 = vsel %vm2879, 1, 0
      %v2896 = vsel %vm2880, 1, 0
      %v2897 = vsel %vm2881, 1, 0
      %v2898 = vsel %vm2889, 1, 0
      %v2899 = vsel %vm2890, 1, 0
      %v2900 = vsel %vm2891, 1, 0
      %vm2901 = vcmp.eq.s32.totalorder %v2892, 1
      %vm2902 = vcmp.eq.s32.totalorder %v2893, 1
      %vm2903 = vcmp.eq.s32.totalorder %v2894, 1
      %vm2904 = vcmp.eq.s32.totalorder %v2895, 1
      %vm2905 = vcmp.eq.s32.totalorder %v2896, 1
      %vm2906 = vcmp.eq.s32.totalorder %v2897, 1
      %vm2907 = vcmp.eq.s32.totalorder %v2898, 1
      %vm2908 = vcmp.eq.s32.totalorder %v2899, 1
      %vm2909 = vcmp.eq.s32.totalorder %v2900, 1
      %v2910 = vsel %vm2901, %v2805, 0.0
      %v2911 = vsel %vm2902, %v2806, 0.0
      %v2912 = vsel %vm2903, %v2807, 0.0
      %v2913 = vsel %vm2904, %v2808, 0.0
      %v2914 = vsel %vm2905, %v2809, 0.0
      %v2915 = vsel %vm2906, %v2810, 0.0
      %v2916 = vsel %vm2904, %v2811, 0.0
      %v2917 = vsel %vm2905, %v2812, 0.0
      %v2918 = vsel %vm2906, %v2813, 0.0
      %v2919 = vsel %vm2904, %v2814, 0.0
      %v2920 = vsel %vm2905, %v2815, 0.0
      %v2921 = vsel %vm2906, %v2816, 0.0
      %v2922 = vsel %vm2904, %v2817, 0.0
      %v2923 = vsel %vm2905, %v2818, 0.0
      %v2924 = vsel %vm2906, %v2819, 0.0
      %v2925 = vsel %vm2904, %v2820, 0.0
      %v2926 = vsel %vm2905, %v2821, 0.0
      %v2927 = vsel %vm2906, %v2822, 0.0
      %v2928 = vsel %vm2904, %v2823, 0.0
      %v2929 = vsel %vm2905, %v2824, 0.0
      %v2930 = vsel %vm2906, %v2825, 0.0
      %v2931 = vsel %vm2904, %v2826, 0.0
      %v2932 = vsel %vm2905, %v2827, 0.0
      %v2933 = vsel %vm2906, %v2828, 0.0
      %v2934 = vsel %vm2904, %v2829, 0.0
      %v2935 = vsel %vm2905, %v2830, 0.0
      %v2936 = vsel %vm2906, %v2831, 0.0
      %v2937 = vsel %vm2904, %v2832, 0.0
      %v2938 = vsel %vm2905, %v2833, 0.0
      %v2939 = vsel %vm2906, %v2834, 0.0
      %v2940 = vsel %vm2904, %v2835, 0.0
      %v2941 = vsel %vm2905, %v2836, 0.0
      %v2942 = vsel %vm2906, %v2837, 0.0
      %v2943 = vsel %vm2904, %v2838, 0.0
      %v2944 = vsel %vm2905, %v2839, 0.0
      %v2945 = vsel %vm2906, %v2840, 0.0
      %v2946 = vsel %vm2904, %v2841, 0.0
      %v2947 = vsel %vm2905, %v2842, 0.0
      %v2948 = vsel %vm2906, %v2843, 0.0
      %v2949 = vsel %vm2904, %v2844, 0.0
      %v2950 = vsel %vm2905, %v2845, 0.0
      %v2951 = vsel %vm2906, %v2846, 0.0
      %v2952 = vsel %vm2904, %v2847, 0.0
      %v2953 = vsel %vm2905, %v2848, 0.0
      %v2954 = vsel %vm2906, %v2849, 0.0
      %v2955 = vsel %vm2904, %v2850, 0.0
      %v2956 = vsel %vm2905, %v2851, 0.0
      %v2957 = vsel %vm2906, %v2852, 0.0
      %v2958 = vsel %vm2904, %v2853, 0.0
      %v2959 = vsel %vm2905, %v2854, 0.0
      %v2960 = vsel %vm2906, %v2855, 0.0
      %v2961 = vsel %vm2907, %v2856, 0.0
      %v2962 = vsel %vm2908, %v2857, 0.0
      %v2963 = vsel %vm2909, %v2858, 0.0
      %v2964 = vpack.c.bf16 %v2911, %v2910
      %v2965 = vpack.c.bf16 %v2912, %v2912
      %v2966 = vpack.c.bf16 %v2914, %v2913
      %v2967 = vpack.c.bf16 %v2915, %v2915
      %v2968 = vpack.c.bf16 %v2917, %v2916
      %v2969 = vpack.c.bf16 %v2918, %v2918
      %v2970 = vpack.c.bf16 %v2920, %v2919
      %v2971 = vpack.c.bf16 %v2921, %v2921
      %v2972 = vpack.c.bf16 %v2923, %v2922
      %v2973 = vpack.c.bf16 %v2924, %v2924
      %v2974 = vpack.c.bf16 %v2926, %v2925
      %v2975 = vpack.c.bf16 %v2927, %v2927
      %v2976 = vpack.c.bf16 %v2929, %v2928
      %v2977 = vpack.c.bf16 %v2930, %v2930
      %v2978 = vpack.c.bf16 %v2932, %v2931
      %v2979 = vpack.c.bf16 %v2933, %v2933
      %v2980 = vpack.c.bf16 %v2935, %v2934
      %v2981 = vpack.c.bf16 %v2936, %v2936
      %v2982 = vpack.c.bf16 %v2938, %v2937
      %v2983 = vpack.c.bf16 %v2939, %v2939
      %v2984 = vpack.c.bf16 %v2941, %v2940
      %v2985 = vpack.c.bf16 %v2942, %v2942
      %v2986 = vpack.c.bf16 %v2944, %v2943
      %v2987 = vpack.c.bf16 %v2945, %v2945
      %v2988 = vpack.c.bf16 %v2947, %v2946
      %v2989 = vpack.c.bf16 %v2948, %v2948
      %v2990 = vpack.c.bf16 %v2950, %v2949
      %v2991 = vpack.c.bf16 %v2951, %v2951
      %v2992 = vpack.c.bf16 %v2953, %v2952
      %v2993 = vpack.c.bf16 %v2954, %v2954
      %v2994 = vpack.c.bf16 %v2956, %v2955
      %v2995 = vpack.c.bf16 %v2957, %v2957
      %v2996 = vpack.c.bf16 %v2959, %v2958
      %v2997 = vpack.c.bf16 %v2960, %v2960
      %v2998 = vpack.c.bf16 %v2962, %v2961
      %v2999 = vpack.c.bf16 %v2963, %v2963
      %v3001 = vshrl.u32 %v2964, 16
      %v3003 = vshll.u32 %v2964, 16
      %v3005 = vrot.slane %v3003, 1
      %v3006 = vor.u32 %v3001, %v3005
      %v3008 = vshll.u32 %v2965, 16
      %v3010 = vrot.slane %v3008, 1
      %v3011 = vsel %vm553, %v3006, %v3010
      %v3013 = vshrl.u32 %v2966, 16
      %v3015 = vshll.u32 %v2966, 16
      %v3017 = vrot.slane %v3015, 1
      %v3018 = vor.u32 %v3013, %v3017
      %v3020 = vshll.u32 %v2967, 16
      %v3022 = vrot.slane %v3020, 1
      %v3023 = vsel %vm553, %v3018, %v3022
      %v3025 = vshrl.u32 %v2968, 16
      %v3027 = vshll.u32 %v2968, 16
      %v3029 = vrot.slane %v3027, 1
      %v3030 = vor.u32 %v3025, %v3029
      %v3032 = vshll.u32 %v2969, 16
      %v3034 = vrot.slane %v3032, 1
      %v3035 = vsel %vm553, %v3030, %v3034
      %v3037 = vshrl.u32 %v2970, 16
      %v3039 = vshll.u32 %v2970, 16
      %v3041 = vrot.slane %v3039, 1
      %v3042 = vor.u32 %v3037, %v3041
      %v3044 = vshll.u32 %v2971, 16
      %v3046 = vrot.slane %v3044, 1
      %v3047 = vsel %vm553, %v3042, %v3046
      %v3049 = vshrl.u32 %v2972, 16
      %v3051 = vshll.u32 %v2972, 16
      %v3053 = vrot.slane %v3051, 1
      %v3054 = vor.u32 %v3049, %v3053
      %v3056 = vshll.u32 %v2973, 16
      %v3058 = vrot.slane %v3056, 1
      %v3059 = vsel %vm553, %v3054, %v3058
      %v3061 = vshrl.u32 %v2974, 16
      %v3063 = vshll.u32 %v2974, 16
      %v3065 = vrot.slane %v3063, 1
      %v3066 = vor.u32 %v3061, %v3065
      %v3068 = vshll.u32 %v2975, 16
      %v3070 = vrot.slane %v3068, 1
      %v3071 = vsel %vm553, %v3066, %v3070
      %v3073 = vshrl.u32 %v2976, 16
      %v3075 = vshll.u32 %v2976, 16
      %v3077 = vrot.slane %v3075, 1
      %v3078 = vor.u32 %v3073, %v3077
      %v3080 = vshll.u32 %v2977, 16
      %v3082 = vrot.slane %v3080, 1
      %v3083 = vsel %vm553, %v3078, %v3082
      %v3085 = vshrl.u32 %v2978, 16
      %v3087 = vshll.u32 %v2978, 16
      %v3089 = vrot.slane %v3087, 1
      %v3090 = vor.u32 %v3085, %v3089
      %v3092 = vshll.u32 %v2979, 16
      %v3094 = vrot.slane %v3092, 1
      %v3095 = vsel %vm553, %v3090, %v3094
      %v3097 = vshrl.u32 %v2980, 16
      %v3099 = vshll.u32 %v2980, 16
      %v3101 = vrot.slane %v3099, 1
      %v3102 = vor.u32 %v3097, %v3101
      %v3104 = vshll.u32 %v2981, 16
      %v3106 = vrot.slane %v3104, 1
      %v3107 = vsel %vm553, %v3102, %v3106
      %v3109 = vshrl.u32 %v2982, 16
      %v3111 = vshll.u32 %v2982, 16
      %v3113 = vrot.slane %v3111, 1
      %v3114 = vor.u32 %v3109, %v3113
      %v3116 = vshll.u32 %v2983, 16
      %v3118 = vrot.slane %v3116, 1
      %v3119 = vsel %vm553, %v3114, %v3118
      %v3121 = vshrl.u32 %v2984, 16
      %v3123 = vshll.u32 %v2984, 16
      %v3125 = vrot.slane %v3123, 1
      %v3126 = vor.u32 %v3121, %v3125
      %v3128 = vshll.u32 %v2985, 16
      %v3130 = vrot.slane %v3128, 1
      %v3131 = vsel %vm553, %v3126, %v3130
      %v3133 = vshrl.u32 %v2986, 16
      %v3135 = vshll.u32 %v2986, 16
      %v3137 = vrot.slane %v3135, 1
      %v3138 = vor.u32 %v3133, %v3137
      %v3140 = vshll.u32 %v2987, 16
      %v3142 = vrot.slane %v3140, 1
      %v3143 = vsel %vm553, %v3138, %v3142
      %v3145 = vshrl.u32 %v2988, 16
      %v3147 = vshll.u32 %v2988, 16
      %v3149 = vrot.slane %v3147, 1
      %v3150 = vor.u32 %v3145, %v3149
      %v3152 = vshll.u32 %v2989, 16
      %v3154 = vrot.slane %v3152, 1
      %v3155 = vsel %vm553, %v3150, %v3154
      %v3157 = vshrl.u32 %v2990, 16
      %v3159 = vshll.u32 %v2990, 16
      %v3161 = vrot.slane %v3159, 1
      %v3162 = vor.u32 %v3157, %v3161
      %v3164 = vshll.u32 %v2991, 16
      %v3166 = vrot.slane %v3164, 1
      %v3167 = vsel %vm553, %v3162, %v3166
      %v3169 = vshrl.u32 %v2992, 16
      %v3171 = vshll.u32 %v2992, 16
      %v3173 = vrot.slane %v3171, 1
      %v3174 = vor.u32 %v3169, %v3173
      %v3176 = vshll.u32 %v2993, 16
      %v3178 = vrot.slane %v3176, 1
      %v3179 = vsel %vm553, %v3174, %v3178
      %v3181 = vshrl.u32 %v2994, 16
      %v3183 = vshll.u32 %v2994, 16
      %v3185 = vrot.slane %v3183, 1
      %v3186 = vor.u32 %v3181, %v3185
      %v3188 = vshll.u32 %v2995, 16
      %v3190 = vrot.slane %v3188, 1
      %v3191 = vsel %vm553, %v3186, %v3190
      %v3193 = vshrl.u32 %v2996, 16
      %v3195 = vshll.u32 %v2996, 16
      %v3197 = vrot.slane %v3195, 1
      %v3198 = vor.u32 %v3193, %v3197
      %v3200 = vshll.u32 %v2997, 16
      %v3202 = vrot.slane %v3200, 1
      %v3203 = vsel %vm553, %v3198, %v3202
      %v3205 = vshrl.u32 %v2998, 16
      %v3207 = vshll.u32 %v2998, 16
      %v3209 = vrot.slane %v3207, 1
      %v3210 = vor.u32 %v3205, %v3209
      %v3212 = vshll.u32 %v2999, 16
      %v3214 = vrot.slane %v3212, 1
      %v3215 = vsel %vm553, %v3210, %v3214
      %3216 = vrot.lane.b32.xlu0 %v3011, 2
      %v3217 = vpop.permute.xlu0 %3216
      %3218 = vrot.lane.b32.xlu0 %v3023, 2
      %v3219 = vpop.permute.xlu0 %3218
      %3220 = vrot.lane.b32.xlu0 %v3035, 2
      %v3221 = vpop.permute.xlu0 %3220
      %3222 = vrot.lane.b32.xlu0 %v3047, 2
      %v3223 = vpop.permute.xlu0 %3222
      %3224 = vrot.lane.b32.xlu0 %v3059, 2
      %v3225 = vpop.permute.xlu0 %3224
      %3226 = vrot.lane.b32.xlu0 %v3071, 2
      %v3227 = vpop.permute.xlu0 %3226
      %3228 = vrot.lane.b32.xlu0 %v3083, 2
      %v3229 = vpop.permute.xlu0 %3228
      %3230 = vrot.lane.b32.xlu0 %v3095, 2
      %v3231 = vpop.permute.xlu0 %3230
      %3232 = vrot.lane.b32.xlu0 %v3107, 2
      %v3233 = vpop.permute.xlu0 %3232
      %3234 = vrot.lane.b32.xlu0 %v3119, 2
      %v3235 = vpop.permute.xlu0 %3234
      %3236 = vrot.lane.b32.xlu0 %v3131, 2
      %v3237 = vpop.permute.xlu0 %3236
      %3238 = vrot.lane.b32.xlu0 %v3143, 2
      %v3239 = vpop.permute.xlu0 %3238
      %3240 = vrot.lane.b32.xlu0 %v3155, 2
      %v3241 = vpop.permute.xlu0 %3240
      %3242 = vrot.lane.b32.xlu0 %v3167, 2
      %v3243 = vpop.permute.xlu0 %3242
      %3244 = vrot.lane.b32.xlu0 %v3179, 2
      %v3245 = vpop.permute.xlu0 %3244
      %3246 = vrot.lane.b32.xlu0 %v3191, 2
      %v3247 = vpop.permute.xlu0 %3246
      %3248 = vrot.lane.b32.xlu0 %v3203, 2
      %v3249 = vpop.permute.xlu0 %3248
      %3250 = vrot.lane.b32.xlu0 %v3215, 2
      %v3251 = vpop.permute.xlu0 %3250
      %v3288 = vrot.slane %v2964, 1
      %v3289 = vrot.slane %v2965, 1
      %v3290 = vsel %vm934, %v3288, %v3289
      %v3291 = vrot.slane %v2966, 1
      %v3292 = vrot.slane %v2967, 1
      %v3293 = vsel %vm934, %v3291, %v3292
      %v3294 = vrot.slane %v2968, 1
      %v3295 = vrot.slane %v2969, 1
      %v3296 = vsel %vm934, %v3294, %v3295
      %v3297 = vrot.slane %v2970, 1
      %v3298 = vrot.slane %v2971, 1
      %v3299 = vsel %vm934, %v3297, %v3298
      %v3300 = vrot.slane %v2972, 1
      %v3301 = vrot.slane %v2973, 1
      %v3302 = vsel %vm934, %v3300, %v3301
      %v3303 = vrot.slane %v2974, 1
      %v3304 = vrot.slane %v2975, 1
      %v3305 = vsel %vm934, %v3303, %v3304
      %v3306 = vrot.slane %v2976, 1
      %v3307 = vrot.slane %v2977, 1
      %v3308 = vsel %vm934, %v3306, %v3307
      %v3309 = vrot.slane %v2978, 1
      %v3310 = vrot.slane %v2979, 1
      %v3311 = vsel %vm934, %v3309, %v3310
      %v3312 = vrot.slane %v2980, 1
      %v3313 = vrot.slane %v2981, 1
      %v3314 = vsel %vm934, %v3312, %v3313
      %v3315 = vrot.slane %v2982, 1
      %v3316 = vrot.slane %v2983, 1
      %v3317 = vsel %vm934, %v3315, %v3316
      %v3318 = vrot.slane %v2984, 1
      %v3319 = vrot.slane %v2985, 1
      %v3320 = vsel %vm934, %v3318, %v3319
      %v3321 = vrot.slane %v2986, 1
      %v3322 = vrot.slane %v2987, 1
      %v3323 = vsel %vm934, %v3321, %v3322
      %v3324 = vrot.slane %v2988, 1
      %v3325 = vrot.slane %v2989, 1
      %v3326 = vsel %vm934, %v3324, %v3325
      %v3327 = vrot.slane %v2990, 1
      %v3328 = vrot.slane %v2991, 1
      %v3329 = vsel %vm934, %v3327, %v3328
      %v3330 = vrot.slane %v2992, 1
      %v3331 = vrot.slane %v2993, 1
      %v3332 = vsel %vm934, %v3330, %v3331
      %v3333 = vrot.slane %v2994, 1
      %v3334 = vrot.slane %v2995, 1
      %v3335 = vsel %vm934, %v3333, %v3334
      %v3336 = vrot.slane %v2996, 1
      %v3337 = vrot.slane %v2997, 1
      %v3338 = vsel %vm934, %v3336, %v3337
      %v3339 = vrot.slane %v2998, 1
      %v3340 = vrot.slane %v2999, 1
      %v3341 = vsel %vm934, %v3339, %v3340
      %3342 = vrot.lane.b32.xlu0 %v3290, 4
      %v3343 = vpop.permute.xlu0 %3342
      %3344 = vrot.lane.b32.xlu0 %v3293, 4
      %v3345 = vpop.permute.xlu0 %3344
      %3346 = vrot.lane.b32.xlu0 %v3296, 4
      %v3347 = vpop.permute.xlu0 %3346
      %3348 = vrot.lane.b32.xlu0 %v3299, 4
      %v3349 = vpop.permute.xlu0 %3348
      %3350 = vrot.lane.b32.xlu0 %v3302, 4
      %v3351 = vpop.permute.xlu0 %3350
      %3352 = vrot.lane.b32.xlu0 %v3305, 4
      %v3353 = vpop.permute.xlu0 %3352
      %3354 = vrot.lane.b32.xlu0 %v3308, 4
      %v3355 = vpop.permute.xlu0 %3354
      %3356 = vrot.lane.b32.xlu0 %v3311, 4
      %v3357 = vpop.permute.xlu0 %3356
      %3358 = vrot.lane.b32.xlu0 %v3314, 4
      %v3359 = vpop.permute.xlu0 %3358
      %3360 = vrot.lane.b32.xlu0 %v3317, 4
      %v3361 = vpop.permute.xlu0 %3360
      %3362 = vrot.lane.b32.xlu0 %v3320, 4
      %v3363 = vpop.permute.xlu0 %3362
      %3364 = vrot.lane.b32.xlu0 %v3323, 4
      %v3365 = vpop.permute.xlu0 %3364
      %3366 = vrot.lane.b32.xlu0 %v3326, 4
      %v3367 = vpop.permute.xlu0 %3366
      %3368 = vrot.lane.b32.xlu0 %v3329, 4
      %v3369 = vpop.permute.xlu0 %3368
      %3370 = vrot.lane.b32.xlu0 %v3332, 4
      %v3371 = vpop.permute.xlu0 %3370
      %3372 = vrot.lane.b32.xlu0 %v3335, 4
      %v3373 = vpop.permute.xlu0 %3372
      %3374 = vrot.lane.b32.xlu0 %v3338, 4
      %v3375 = vpop.permute.xlu0 %3374
      %3376 = vrot.lane.b32.xlu0 %v3341, 4
      %v3377 = vpop.permute.xlu0 %3376
      %vm3378 = vcmask 15360
      %v3380 = vsel %vm3378, %v2964, %v3217
      %v3382 = vsel %vm3378, %v2966, %v3219
      %v3384 = vsel %vm3378, %v2968, %v3221
      %v3386 = vsel %vm3378, %v2970, %v3223
      %v3388 = vsel %vm3378, %v2972, %v3225
      %v3390 = vsel %vm3378, %v2974, %v3227
      %v3392 = vsel %vm3378, %v2976, %v3229
      %v3394 = vsel %vm3378, %v2978, %v3231
      %v3396 = vsel %vm3378, %v2980, %v3233
      %v3398 = vsel %vm3378, %v2982, %v3235
      %v3400 = vsel %vm3378, %v2984, %v3237
      %v3402 = vsel %vm3378, %v2986, %v3239
      %v3404 = vsel %vm3378, %v2988, %v3241
      %v3406 = vsel %vm3378, %v2990, %v3243
      %v3408 = vsel %vm3378, %v2992, %v3245
      %v3410 = vsel %vm3378, %v2994, %v3247
      %v3412 = vsel %vm3378, %v2996, %v3249
      %v3414 = vsel %vm3378, %v2998, %v3251
      %v3416 = vsel %vm1075, %v3380, %v3343
      %v3418 = vsel %vm1075, %v3382, %v3345
      %v3420 = vsel %vm1075, %v3384, %v3347
      %v3422 = vsel %vm1075, %v3386, %v3349
      %v3424 = vsel %vm1075, %v3388, %v3351
      %v3426 = vsel %vm1075, %v3390, %v3353
      %v3428 = vsel %vm1075, %v3392, %v3355
      %v3430 = vsel %vm1075, %v3394, %v3357
      %v3432 = vsel %vm1075, %v3396, %v3359
      %v3434 = vsel %vm1075, %v3398, %v3361
      %v3436 = vsel %vm1075, %v3400, %v3363
      %v3438 = vsel %vm1075, %v3402, %v3365
      %v3440 = vsel %vm1075, %v3404, %v3367
      %v3442 = vsel %vm1075, %v3406, %v3369
      %v3444 = vsel %vm1075, %v3408, %v3371
      %v3446 = vsel %vm1075, %v3410, %v3373
      %v3448 = vsel %vm1075, %v3412, %v3375
      %v3450 = vsel %vm1075, %v3414, %v3377
      %v3451 = vld [vmem:[%s2] sm:$0x7]
      %s3452 = scalar_lea.vmem %s2, 4
      %v3453 = vld [vmem:[%s3452] sm:$0x7]
      %vm3454 = vcmask 48128
      %v3455 = vsel %vm3454, %v3418, 0
      %v3457 = vsel %vm3454, %v3420, 0
      %v3459 = vsel %vm3454, %v3422, 0
      %v3461 = vsel %vm3454, %v3424, 0
      %v3463 = vsel %vm3454, %v3426, 0
      %v3465 = vsel %vm3454, %v3428, 0
      %v3467 = vsel %vm3454, %v3430, 0
      %v3469 = vsel %vm3454, %v3432, 0
      %v3471 = vsel %vm3454, %v3434, 0
      %v3473 = vsel %vm3454, %v3436, 0
      %v3475 = vsel %vm3454, %v3438, 0
      %v3477 = vsel %vm3454, %v3440, 0
      %v3479 = vsel %vm3454, %v3442, 0
      %v3481 = vsel %vm3454, %v3444, 0
      %v3483 = vsel %vm3454, %v3446, 0
      %v3485 = vsel %vm3454, %v3448, 0
      %vm3487 = vcmask 1042432
      %v3489 = vsel %vm3487, %v3453, 0
      %3491 = vmatprep.subr.bf16.mxu0 0
      %3492 = vmatpush1.bf16.msra.mxu0 0
      %3493 = vmatprep.subr.bf16.mxu0 0
      %3494 = vmatpush1.bf16.msra.mxu0 0
      %3495 = vmatprep.subr.bf16.mxu0 0
      %3496 = vmatpush1.bf16.msra.mxu0 0
      %3497 = vmatprep.subr.bf16.mxu0 0
      %3498 = vmatpush1.bf16.msra.mxu0 0
      %3499 = vmatprep.subr.bf16.mxu0 0
      %3500 = vmatpush1.bf16.msra.mxu0 0
      %3501 = vmatprep.subr.bf16.mxu0 0
      %3502 = vmatpush1.bf16.msra.mxu0 0
      %3503 = vmatprep.subr.bf16.mxu0 0
      %3504 = vmatpush1.bf16.msra.mxu0 0
      %3505 = vmatprep.subr.bf16.mxu0 0
      %3506 = vmatpush1.bf16.msra.mxu0 %v3489
      %3507 = vmatprep.subr.bf16.mxu0 0
      %3508 = vmatpush2.bf16.msra.mxu0 0
      %3509 = vmatprep.subr.bf16.mxu0 0
      %3510 = vmatpush2.bf16.msra.mxu0 0
      %3511 = vmatprep.subr.bf16.mxu0 0
      %3512 = vmatpush2.bf16.msra.mxu0 0
      %3513 = vmatprep.subr.bf16.mxu0 0
      %3514 = vmatpush2.bf16.msra.mxu0 0
      %3515 = vmatprep.subr.bf16.mxu0 0
      %3516 = vmatpush2.bf16.msra.mxu0 0
      %3517 = vmatprep.subr.bf16.mxu0 0
      %3518 = vmatpush2.bf16.msra.mxu0 0
      %3519 = vmatprep.subr.bf16.mxu0 0
      %3520 = vmatpush2.bf16.msra.mxu0 0
      %3521 = vmatprep.subr.bf16.mxu0 0
      %3522 = vmatpush2.bf16.msra.mxu0 0
      %3523 = vmatprep.mubr.bf16.mxu0 0
      %3524 = vmatmul.mubr.bf16.gmra.mxu0 %v3455
      %v3525 = vpop.f32.mrf.mxu0
      %v3526 = vadd.f32 0.0, %v3525
      %v3527 = vpop.f32.mrf.mxu0
      %v3528 = vpop.f32.mrf.mxu0
      %v3529 = vadd.f32 0.0, %v3528
      %v3530 = vpop.f32.mrf.mxu0
      %3531 = vmatprep.mubr.bf16.mxu0 0
      %3532 = vmatmul.mubr.bf16.gmra.mxu0 %v3457
      %v3533 = vpop.f32.mrf.mxu0
      %v3534 = vadd.f32 0.0, %v3533
      %v3535 = vpop.f32.mrf.mxu0
      %v3536 = vpop.f32.mrf.mxu0
      %v3537 = vadd.f32 0.0, %v3536
      %v3538 = vpop.f32.mrf.mxu0
      %3539 = vmatprep.mubr.bf16.mxu0 0
      %3540 = vmatmul.mubr.bf16.gmra.mxu0 %v3459
      %v3541 = vpop.f32.mrf.mxu0
      %v3542 = vadd.f32 0.0, %v3541
      %v3543 = vpop.f32.mrf.mxu0
      %v3544 = vpop.f32.mrf.mxu0
      %v3545 = vadd.f32 0.0, %v3544
      %v3546 = vpop.f32.mrf.mxu0
      %3547 = vmatprep.mubr.bf16.mxu0 0
      %3548 = vmatmul.mubr.bf16.gmra.mxu0 %v3461
      %v3549 = vpop.f32.mrf.mxu0
      %v3550 = vadd.f32 0.0, %v3549
      %v3551 = vpop.f32.mrf.mxu0
      %v3552 = vpop.f32.mrf.mxu0
      %v3553 = vadd.f32 0.0, %v3552
      %v3554 = vpop.f32.mrf.mxu0
      %3555 = vmatprep.mubr.bf16.mxu0 0
      %3556 = vmatmul.mubr.bf16.gmra.mxu0 %v3463
      %v3557 = vpop.f32.mrf.mxu0
      %v3558 = vadd.f32 0.0, %v3557
      %v3559 = vpop.f32.mrf.mxu0
      %v3560 = vpop.f32.mrf.mxu0
      %v3561 = vadd.f32 0.0, %v3560
      %v3562 = vpop.f32.mrf.mxu0
      %3563 = vmatprep.mubr.bf16.mxu0 0
      %3564 = vmatmul.mubr.bf16.gmra.mxu0 %v3465
      %v3565 = vpop.f32.mrf.mxu0
      %v3566 = vadd.f32 0.0, %v3565
      %v3567 = vpop.f32.mrf.mxu0
      %v3568 = vpop.f32.mrf.mxu0
      %v3569 = vadd.f32 0.0, %v3568
      %v3570 = vpop.f32.mrf.mxu0
      %3571 = vmatprep.mubr.bf16.mxu0 0
      %3572 = vmatmul.mubr.bf16.gmra.mxu0 %v3467
      %v3573 = vpop.f32.mrf.mxu0
      %v3574 = vadd.f32 0.0, %v3573
      %v3575 = vpop.f32.mrf.mxu0
      %v3576 = vpop.f32.mrf.mxu0
      %v3577 = vadd.f32 0.0, %v3576
      %v3578 = vpop.f32.mrf.mxu0
      %3579 = vmatprep.mubr.bf16.mxu0 0
      %3580 = vmatmul.mubr.bf16.gmra.mxu0 %v3469
      %v3581 = vpop.f32.mrf.mxu0
      %v3582 = vadd.f32 0.0, %v3581
      %v3583 = vpop.f32.mrf.mxu0
      %v3584 = vpop.f32.mrf.mxu0
      %v3585 = vadd.f32 0.0, %v3584
      %v3586 = vpop.f32.mrf.mxu0
      %3587 = vmatprep.mubr.bf16.mxu0 0
      %3588 = vmatmul.mubr.bf16.gmra.mxu0 %v3471
      %v3589 = vpop.f32.mrf.mxu0
      %v3590 = vadd.f32 0.0, %v3589
      %v3591 = vpop.f32.mrf.mxu0
      %v3592 = vpop.f32.mrf.mxu0
      %v3593 = vadd.f32 0.0, %v3592
      %v3594 = vpop.f32.mrf.mxu0
      %3595 = vmatprep.mubr.bf16.mxu0 0
      %3596 = vmatmul.mubr.bf16.gmra.mxu0 %v3473
      %v3597 = vpop.f32.mrf.mxu0
      %v3598 = vadd.f32 0.0, %v3597
      %v3599 = vpop.f32.mrf.mxu0
      %v3600 = vpop.f32.mrf.mxu0
      %v3601 = vadd.f32 0.0, %v3600
      %v3602 = vpop.f32.mrf.mxu0
      %3603 = vmatprep.mubr.bf16.mxu0 0
      %3604 = vmatmul.mubr.bf16.gmra.mxu0 %v3475
      %v3605 = vpop.f32.mrf.mxu0
      %v3606 = vadd.f32 0.0, %v3605
      %v3607 = vpop.f32.mrf.mxu0
      %v3608 = vpop.f32.mrf.mxu0
      %v3609 = vadd.f32 0.0, %v3608
      %v3610 = vpop.f32.mrf.mxu0
      %3611 = vmatprep.mubr.bf16.mxu0 0
      %3612 = vmatmul.mubr.bf16.gmra.mxu0 %v3477
      %v3613 = vpop.f32.mrf.mxu0
      %v3614 = vadd.f32 0.0, %v3613
      %v3615 = vpop.f32.mrf.mxu0
      %v3616 = vpop.f32.mrf.mxu0
      %v3617 = vadd.f32 0.0, %v3616
      %v3618 = vpop.f32.mrf.mxu0
      %3619 = vmatprep.mubr.bf16.mxu0 0
      %3620 = vmatmul.mubr.bf16.gmra.mxu0 %v3479
      %v3621 = vpop.f32.mrf.mxu0
      %v3622 = vadd.f32 0.0, %v3621
      %v3623 = vpop.f32.mrf.mxu0
      %v3624 = vpop.f32.mrf.mxu0
      %v3625 = vadd.f32 0.0, %v3624
      %v3626 = vpop.f32.mrf.mxu0
      %3627 = vmatprep.mubr.bf16.mxu0 0
      %3628 = vmatmul.mubr.bf16.gmra.mxu0 %v3481
      %v3629 = vpop.f32.mrf.mxu0
      %v3630 = vadd.f32 0.0, %v3629
      %v3631 = vpop.f32.mrf.mxu0
      %v3632 = vpop.f32.mrf.mxu0
      %v3633 = vadd.f32 0.0, %v3632
      %v3634 = vpop.f32.mrf.mxu0
      %3635 = vmatprep.mubr.bf16.mxu0 0
      %3636 = vmatmul.mubr.bf16.gmra.mxu0 %v3483
      %v3637 = vpop.f32.mrf.mxu0
      %v3638 = vadd.f32 0.0, %v3637
      %v3639 = vpop.f32.mrf.mxu0
      %v3640 = vpop.f32.mrf.mxu0
      %v3641 = vadd.f32 0.0, %v3640
      %v3642 = vpop.f32.mrf.mxu0
      %3643 = vmatprep.mubr.bf16.mxu0 0
      %3644 = vmatmul.mubr.bf16.gmra.mxu0 %v3485
      %v3645 = vpop.f32.mrf.mxu0
      %v3646 = vadd.f32 0.0, %v3645
      %v3647 = vpop.f32.mrf.mxu0
      %v3648 = vpop.f32.mrf.mxu0
      %v3649 = vadd.f32 0.0, %v3648
      %v3650 = vpop.f32.mrf.mxu0
      %3651 = vdwg.mxu0
      %v3652 = vsel %vm3454, %v3416, 0
      %v3655 = vsel %vm3487, %v3451, 0
      %3657 = vmatprep.subr.bf16.mxu0 0
      %3658 = vmatpush1.bf16.msra.mxu0 0
      %3659 = vmatprep.subr.bf16.mxu0 0
      %3660 = vmatpush1.bf16.msra.mxu0 0
      %3661 = vmatprep.subr.bf16.mxu0 0
      %3662 = vmatpush1.bf16.msra.mxu0 0
      %3663 = vmatprep.subr.bf16.mxu0 0
      %3664 = vmatpush1.bf16.msra.mxu0 0
      %3665 = vmatprep.subr.bf16.mxu0 0
      %3666 = vmatpush1.bf16.msra.mxu0 0
      %3667 = vmatprep.subr.bf16.mxu0 0
      %3668 = vmatpush1.bf16.msra.mxu0 0
      %3669 = vmatprep.subr.bf16.mxu0 0
      %3670 = vmatpush1.bf16.msra.mxu0 0
      %3671 = vmatprep.subr.bf16.mxu0 0
      %3672 = vmatpush1.bf16.msra.mxu0 %v3655
      %3673 = vmatprep.subr.bf16.mxu0 0
      %3674 = vmatpush2.bf16.msra.mxu0 0
      %3675 = vmatprep.subr.bf16.mxu0 0
      %3676 = vmatpush2.bf16.msra.mxu0 0
      %3677 = vmatprep.subr.bf16.mxu0 0
      %3678 = vmatpush2.bf16.msra.mxu0 0
      %3679 = vmatprep.subr.bf16.mxu0 0
      %3680 = vmatpush2.bf16.msra.mxu0 0
      %3681 = vmatprep.subr.bf16.mxu0 0
      %3682 = vmatpush2.bf16.msra.mxu0 0
      %3683 = vmatprep.subr.bf16.mxu0 0
      %3684 = vmatpush2.bf16.msra.mxu0 0
      %3685 = vmatprep.subr.bf16.mxu0 0
      %3686 = vmatpush2.bf16.msra.mxu0 0
      %3687 = vmatprep.subr.bf16.mxu0 0
      %3688 = vmatpush2.bf16.msra.mxu0 0
      %3689 = vmatprep.mubr.bf16.mxu0 0
      %3690 = vmatmul.mubr.bf16.gmra.mxu0 %v3652
      %v3691 = vpop.f32.mrf.mxu0
      %v3692 = vadd.f32 %v3526, %v3691
      %v3693 = vpop.f32.mrf.mxu0
      %v3694 = vpop.f32.mrf.mxu0
      %v3695 = vadd.f32 %v3529, %v3694
      %v3696 = vpop.f32.mrf.mxu0
      %3697 = vmatprep.mubr.bf16.mxu0 0
      %3698 = vmatmul.mubr.bf16.gmra.mxu0 %v3455
      %v3699 = vpop.f32.mrf.mxu0
      %v3700 = vadd.f32 %v3534, %v3699
      %v3701 = vpop.f32.mrf.mxu0
      %v3702 = vpop.f32.mrf.mxu0
      %v3703 = vadd.f32 %v3537, %v3702
      %v3704 = vpop.f32.mrf.mxu0
      %3705 = vmatprep.mubr.bf16.mxu0 0
      %3706 = vmatmul.mubr.bf16.gmra.mxu0 %v3457
      %v3707 = vpop.f32.mrf.mxu0
      %v3708 = vadd.f32 %v3542, %v3707
      %v3709 = vpop.f32.mrf.mxu0
      %v3710 = vpop.f32.mrf.mxu0
      %v3711 = vadd.f32 %v3545, %v3710
      %v3712 = vpop.f32.mrf.mxu0
      %3713 = vmatprep.mubr.bf16.mxu0 0
      %3714 = vmatmul.mubr.bf16.gmra.mxu0 %v3459
      %v3715 = vpop.f32.mrf.mxu0
      %v3716 = vadd.f32 %v3550, %v3715
      %v3717 = vpop.f32.mrf.mxu0
      %v3718 = vpop.f32.mrf.mxu0
      %v3719 = vadd.f32 %v3553, %v3718
      %v3720 = vpop.f32.mrf.mxu0
      %3721 = vmatprep.mubr.bf16.mxu0 0
      %3722 = vmatmul.mubr.bf16.gmra.mxu0 %v3461
      %v3723 = vpop.f32.mrf.mxu0
      %v3724 = vadd.f32 %v3558, %v3723
      %v3725 = vpop.f32.mrf.mxu0
      %v3726 = vpop.f32.mrf.mxu0
      %v3727 = vadd.f32 %v3561, %v3726
      %v3728 = vpop.f32.mrf.mxu0
      %3729 = vmatprep.mubr.bf16.mxu0 0
      %3730 = vmatmul.mubr.bf16.gmra.mxu0 %v3463
      %v3731 = vpop.f32.mrf.mxu0
      %v3732 = vadd.f32 %v3566, %v3731
      %v3733 = vpop.f32.mrf.mxu0
      %v3734 = vpop.f32.mrf.mxu0
      %v3735 = vadd.f32 %v3569, %v3734
      %v3736 = vpop.f32.mrf.mxu0
      %3737 = vmatprep.mubr.bf16.mxu0 0
      %3738 = vmatmul.mubr.bf16.gmra.mxu0 %v3465
      %v3739 = vpop.f32.mrf.mxu0
      %v3740 = vadd.f32 %v3574, %v3739
      %v3741 = vpop.f32.mrf.mxu0
      %v3742 = vpop.f32.mrf.mxu0
      %v3743 = vadd.f32 %v3577, %v3742
      %v3744 = vpop.f32.mrf.mxu0
      %3745 = vmatprep.mubr.bf16.mxu0 0
      %3746 = vmatmul.mubr.bf16.gmra.mxu0 %v3467
      %v3747 = vpop.f32.mrf.mxu0
      %v3748 = vadd.f32 %v3582, %v3747
      %v3749 = vpop.f32.mrf.mxu0
      %v3750 = vpop.f32.mrf.mxu0
      %v3751 = vadd.f32 %v3585, %v3750
      %v3752 = vpop.f32.mrf.mxu0
      %3753 = vmatprep.mubr.bf16.mxu0 0
      %3754 = vmatmul.mubr.bf16.gmra.mxu0 %v3469
      %v3755 = vpop.f32.mrf.mxu0
      %v3756 = vadd.f32 %v3590, %v3755
      %v3757 = vpop.f32.mrf.mxu0
      %v3758 = vpop.f32.mrf.mxu0
      %v3759 = vadd.f32 %v3593, %v3758
      %v3760 = vpop.f32.mrf.mxu0
      %3761 = vmatprep.mubr.bf16.mxu0 0
      %3762 = vmatmul.mubr.bf16.gmra.mxu0 %v3471
      %v3763 = vpop.f32.mrf.mxu0
      %v3764 = vadd.f32 %v3598, %v3763
      %v3765 = vpop.f32.mrf.mxu0
      %v3766 = vpop.f32.mrf.mxu0
      %v3767 = vadd.f32 %v3601, %v3766
      %v3768 = vpop.f32.mrf.mxu0
      %3769 = vmatprep.mubr.bf16.mxu0 0
      %3770 = vmatmul.mubr.bf16.gmra.mxu0 %v3473
      %v3771 = vpop.f32.mrf.mxu0
      %v3772 = vadd.f32 %v3606, %v3771
      %v3773 = vpop.f32.mrf.mxu0
      %v3774 = vpop.f32.mrf.mxu0
      %v3775 = vadd.f32 %v3609, %v3774
      %v3776 = vpop.f32.mrf.mxu0
      %3777 = vmatprep.mubr.bf16.mxu0 0
      %3778 = vmatmul.mubr.bf16.gmra.mxu0 %v3475
      %v3779 = vpop.f32.mrf.mxu0
      %v3780 = vadd.f32 %v3614, %v3779
      %v3781 = vpop.f32.mrf.mxu0
      %v3782 = vpop.f32.mrf.mxu0
      %v3783 = vadd.f32 %v3617, %v3782
      %v3784 = vpop.f32.mrf.mxu0
      %3785 = vmatprep.mubr.bf16.mxu0 0
      %3786 = vmatmul.mubr.bf16.gmra.mxu0 %v3477
      %v3787 = vpop.f32.mrf.mxu0
      %v3788 = vadd.f32 %v3622, %v3787
      %v3789 = vpop.f32.mrf.mxu0
      %v3790 = vpop.f32.mrf.mxu0
      %v3791 = vadd.f32 %v3625, %v3790
      %v3792 = vpop.f32.mrf.mxu0
      %3793 = vmatprep.mubr.bf16.mxu0 0
      %3794 = vmatmul.mubr.bf16.gmra.mxu0 %v3479
      %v3795 = vpop.f32.mrf.mxu0
      %v3796 = vadd.f32 %v3630, %v3795
      %v3797 = vpop.f32.mrf.mxu0
      %v3798 = vpop.f32.mrf.mxu0
      %v3799 = vadd.f32 %v3633, %v3798
      %v3800 = vpop.f32.mrf.mxu0
      %3801 = vmatprep.mubr.bf16.mxu0 0
      %3802 = vmatmul.mubr.bf16.gmra.mxu0 %v3481
      %v3803 = vpop.f32.mrf.mxu0
      %v3804 = vadd.f32 %v3638, %v3803
      %v3805 = vpop.f32.mrf.mxu0
      %v3806 = vpop.f32.mrf.mxu0
      %v3807 = vadd.f32 %v3641, %v3806
      %v3808 = vpop.f32.mrf.mxu0
      %3809 = vmatprep.mubr.bf16.mxu0 0
      %3810 = vmatmul.mubr.bf16.gmra.mxu0 %v3483
      %v3811 = vpop.f32.mrf.mxu0
      %v3812 = vadd.f32 %v3646, %v3811
      %v3813 = vpop.f32.mrf.mxu0
      %v3814 = vpop.f32.mrf.mxu0
      %v3815 = vadd.f32 %v3649, %v3814
      %v3816 = vpop.f32.mrf.mxu0
      %3817 = vdwg.mxu0
      %s3818 = scalar_lea.vmem %s2, 8
      %v3819 = vld [vmem:[%s3818] sm:$0x7]
      %v3820 = vsel %vm3454, %v3450, 0
      %v3823 = vsel %vm3487, %v3819, 0
      %3825 = vmatprep.subr.bf16.mxu0 0
      %3826 = vmatpush1.bf16.msra.mxu0 0
      %3827 = vmatprep.subr.bf16.mxu0 0
      %3828 = vmatpush1.bf16.msra.mxu0 0
      %3829 = vmatprep.subr.bf16.mxu0 0
      %3830 = vmatpush1.bf16.msra.mxu0 0
      %3831 = vmatprep.subr.bf16.mxu0 0
      %3832 = vmatpush1.bf16.msra.mxu0 0
      %3833 = vmatprep.subr.bf16.mxu0 0
      %3834 = vmatpush1.bf16.msra.mxu0 0
      %3835 = vmatprep.subr.bf16.mxu0 0
      %3836 = vmatpush1.bf16.msra.mxu0 0
      %3837 = vmatprep.subr.bf16.mxu0 0
      %3838 = vmatpush1.bf16.msra.mxu0 0
      %3839 = vmatprep.subr.bf16.mxu0 0
      %3840 = vmatpush1.bf16.msra.mxu0 %v3823
      %3841 = vmatprep.subr.bf16.mxu0 0
      %3842 = vmatpush2.bf16.msra.mxu0 0
      %3843 = vmatprep.subr.bf16.mxu0 0
      %3844 = vmatpush2.bf16.msra.mxu0 0
      %3845 = vmatprep.subr.bf16.mxu0 0
      %3846 = vmatpush2.bf16.msra.mxu0 0
      %3847 = vmatprep.subr.bf16.mxu0 0
      %3848 = vmatpush2.bf16.msra.mxu0 0
      %3849 = vmatprep.subr.bf16.mxu0 0
      %3850 = vmatpush2.bf16.msra.mxu0 0
      %3851 = vmatprep.subr.bf16.mxu0 0
      %3852 = vmatpush2.bf16.msra.mxu0 0
      %3853 = vmatprep.subr.bf16.mxu0 0
      %3854 = vmatpush2.bf16.msra.mxu0 0
      %3855 = vmatprep.subr.bf16.mxu0 0
      %3856 = vmatpush2.bf16.msra.mxu0 0
      %3857 = vmatprep.mubr.bf16.mxu0 0
      %3858 = vmatmul.mubr.bf16.gmra.mxu0 %v3457
      %v3859 = vpop.f32.mrf.mxu0
      %v3860 = vadd.f32 0.0, %v3859
      %v3861 = vpop.f32.mrf.mxu0
      %v3862 = vpop.f32.mrf.mxu0
      %v3863 = vadd.f32 0.0, %v3862
      %v3864 = vpop.f32.mrf.mxu0
      %3865 = vmatprep.mubr.bf16.mxu0 0
      %3866 = vmatmul.mubr.bf16.gmra.mxu0 %v3459
      %v3867 = vpop.f32.mrf.mxu0
      %v3868 = vadd.f32 0.0, %v3867
      %v3869 = vpop.f32.mrf.mxu0
      %v3870 = vpop.f32.mrf.mxu0
      %v3871 = vadd.f32 0.0, %v3870
      %v3872 = vpop.f32.mrf.mxu0
      %3873 = vmatprep.mubr.bf16.mxu0 0
      %3874 = vmatmul.mubr.bf16.gmra.mxu0 %v3461
      %v3875 = vpop.f32.mrf.mxu0
      %v3876 = vadd.f32 0.0, %v3875
      %v3877 = vpop.f32.mrf.mxu0
      %v3878 = vpop.f32.mrf.mxu0
      %v3879 = vadd.f32 0.0, %v3878
      %v3880 = vpop.f32.mrf.mxu0
      %3881 = vmatprep.mubr.bf16.mxu0 0
      %3882 = vmatmul.mubr.bf16.gmra.mxu0 %v3463
      %v3883 = vpop.f32.mrf.mxu0
      %v3884 = vadd.f32 0.0, %v3883
      %v3885 = vpop.f32.mrf.mxu0
      %v3886 = vpop.f32.mrf.mxu0
      %v3887 = vadd.f32 0.0, %v3886
      %v3888 = vpop.f32.mrf.mxu0
      %3889 = vmatprep.mubr.bf16.mxu0 0
      %3890 = vmatmul.mubr.bf16.gmra.mxu0 %v3465
      %v3891 = vpop.f32.mrf.mxu0
      %v3892 = vadd.f32 0.0, %v3891
      %v3893 = vpop.f32.mrf.mxu0
      %v3894 = vpop.f32.mrf.mxu0
      %v3895 = vadd.f32 0.0, %v3894
      %v3896 = vpop.f32.mrf.mxu0
      %3897 = vmatprep.mubr.bf16.mxu0 0
      %3898 = vmatmul.mubr.bf16.gmra.mxu0 %v3467
      %v3899 = vpop.f32.mrf.mxu0
      %v3900 = vadd.f32 0.0, %v3899
      %v3901 = vpop.f32.mrf.mxu0
      %v3902 = vpop.f32.mrf.mxu0
      %v3903 = vadd.f32 0.0, %v3902
      %v3904 = vpop.f32.mrf.mxu0
      %3905 = vmatprep.mubr.bf16.mxu0 0
      %3906 = vmatmul.mubr.bf16.gmra.mxu0 %v3469
      %v3907 = vpop.f32.mrf.mxu0
      %v3908 = vadd.f32 0.0, %v3907
      %v3909 = vpop.f32.mrf.mxu0
      %v3910 = vpop.f32.mrf.mxu0
      %v3911 = vadd.f32 0.0, %v3910
      %v3912 = vpop.f32.mrf.mxu0
      %3913 = vmatprep.mubr.bf16.mxu0 0
      %3914 = vmatmul.mubr.bf16.gmra.mxu0 %v3471
      %v3915 = vpop.f32.mrf.mxu0
      %v3916 = vadd.f32 0.0, %v3915
      %v3917 = vpop.f32.mrf.mxu0
      %v3918 = vpop.f32.mrf.mxu0
      %v3919 = vadd.f32 0.0, %v3918
      %v3920 = vpop.f32.mrf.mxu0
      %3921 = vmatprep.mubr.bf16.mxu0 0
      %3922 = vmatmul.mubr.bf16.gmra.mxu0 %v3473
      %v3923 = vpop.f32.mrf.mxu0
      %v3924 = vadd.f32 0.0, %v3923
      %v3925 = vpop.f32.mrf.mxu0
      %v3926 = vpop.f32.mrf.mxu0
      %v3927 = vadd.f32 0.0, %v3926
      %v3928 = vpop.f32.mrf.mxu0
      %3929 = vmatprep.mubr.bf16.mxu0 0
      %3930 = vmatmul.mubr.bf16.gmra.mxu0 %v3475
      %v3931 = vpop.f32.mrf.mxu0
      %v3932 = vadd.f32 0.0, %v3931
      %v3933 = vpop.f32.mrf.mxu0
      %v3934 = vpop.f32.mrf.mxu0
      %v3935 = vadd.f32 0.0, %v3934
      %v3936 = vpop.f32.mrf.mxu0
      %3937 = vmatprep.mubr.bf16.mxu0 0
      %3938 = vmatmul.mubr.bf16.gmra.mxu0 %v3477
      %v3939 = vpop.f32.mrf.mxu0
      %v3940 = vadd.f32 0.0, %v3939
      %v3941 = vpop.f32.mrf.mxu0
      %v3942 = vpop.f32.mrf.mxu0
      %v3943 = vadd.f32 0.0, %v3942
      %v3944 = vpop.f32.mrf.mxu0
      %3945 = vmatprep.mubr.bf16.mxu0 0
      %3946 = vmatmul.mubr.bf16.gmra.mxu0 %v3479
      %v3947 = vpop.f32.mrf.mxu0
      %v3948 = vadd.f32 0.0, %v3947
      %v3949 = vpop.f32.mrf.mxu0
      %v3950 = vpop.f32.mrf.mxu0
      %v3951 = vadd.f32 0.0, %v3950
      %v3952 = vpop.f32.mrf.mxu0
      %3953 = vmatprep.mubr.bf16.mxu0 0
      %3954 = vmatmul.mubr.bf16.gmra.mxu0 %v3481
      %v3955 = vpop.f32.mrf.mxu0
      %v3956 = vadd.f32 0.0, %v3955
      %v3957 = vpop.f32.mrf.mxu0
      %v3958 = vpop.f32.mrf.mxu0
      %v3959 = vadd.f32 0.0, %v3958
      %v3960 = vpop.f32.mrf.mxu0
      %3961 = vmatprep.mubr.bf16.mxu0 0
      %3962 = vmatmul.mubr.bf16.gmra.mxu0 %v3483
      %v3963 = vpop.f32.mrf.mxu0
      %v3964 = vadd.f32 0.0, %v3963
      %v3965 = vpop.f32.mrf.mxu0
      %v3966 = vpop.f32.mrf.mxu0
      %v3967 = vadd.f32 0.0, %v3966
      %v3968 = vpop.f32.mrf.mxu0
      %3969 = vmatprep.mubr.bf16.mxu0 0
      %3970 = vmatmul.mubr.bf16.gmra.mxu0 %v3485
      %v3971 = vpop.f32.mrf.mxu0
      %v3972 = vadd.f32 0.0, %v3971
      %v3973 = vpop.f32.mrf.mxu0
      %v3974 = vpop.f32.mrf.mxu0
      %v3975 = vadd.f32 0.0, %v3974
      %v3976 = vpop.f32.mrf.mxu0
      %3977 = vmatprep.mubr.bf16.mxu0 0
      %3978 = vmatmul.mubr.bf16.gmra.mxu0 %v3820
      %v3979 = vpop.f32.mrf.mxu0
      %v3980 = vadd.f32 0.0, %v3979
      %v3981 = vpop.f32.mrf.mxu0
      %v3982 = vpop.f32.mrf.mxu0
      %v3983 = vadd.f32 0.0, %v3982
      %v3984 = vpop.f32.mrf.mxu0
      %3985 = vdwg.mxu0
      %v3986 = vadd.f32 %v3692, %v3860
      %v3987 = vadd.f32 %v3695, %v3863
      %v3988 = vadd.f32 %v3700, %v3868
      %v3989 = vadd.f32 %v3703, %v3871
      %v3990 = vadd.f32 %v3708, %v3876
      %v3991 = vadd.f32 %v3711, %v3879
      %v3992 = vadd.f32 %v3716, %v3884
      %v3993 = vadd.f32 %v3719, %v3887
      %v3994 = vadd.f32 %v3724, %v3892
      %v3995 = vadd.f32 %v3727, %v3895
      %v3996 = vadd.f32 %v3732, %v3900
      %v3997 = vadd.f32 %v3735, %v3903
      %v3998 = vadd.f32 %v3740, %v3908
      %v3999 = vadd.f32 %v3743, %v3911
      %v4000 = vadd.f32 %v3748, %v3916
      %v4001 = vadd.f32 %v3751, %v3919
      %v4002 = vadd.f32 %v3756, %v3924
      %v4003 = vadd.f32 %v3759, %v3927
      %v4004 = vadd.f32 %v3764, %v3932
      %v4005 = vadd.f32 %v3767, %v3935
      %v4006 = vadd.f32 %v3772, %v3940
      %v4007 = vadd.f32 %v3775, %v3943
      %v4008 = vadd.f32 %v3780, %v3948
      %v4009 = vadd.f32 %v3783, %v3951
      %v4010 = vadd.f32 %v3788, %v3956
      %v4011 = vadd.f32 %v3791, %v3959
      %v4012 = vadd.f32 %v3796, %v3964
      %v4013 = vadd.f32 %v3799, %v3967
      %v4014 = vadd.f32 %v3804, %v3972
      %v4015 = vadd.f32 %v3807, %v3975
      %v4016 = vadd.f32 %v3812, %v3980
      %v4017 = vadd.f32 %v3815, %v3983
      %v4018 = vld [vmem:[%s4] sm:$0x1]
      %v4020 = vlaneseq
      %v4021 = vshrl.u32 %v4020, 7
      %v4022 = vsub.s32 0, %v4021
      %v4023 = vrot.slane %v4018, %v4022
      %v4025 = vadd.f32 %v3986, %v4023
      %v4026 = vadd.f32 %v3987, %v4023
      %v4027 = vadd.f32 %v3988, %v4023
      %v4028 = vadd.f32 %v3989, %v4023
      %v4029 = vadd.f32 %v3990, %v4023
      %v4030 = vadd.f32 %v3991, %v4023
      %v4031 = vadd.f32 %v3992, %v4023
      %v4032 = vadd.f32 %v3993, %v4023
      %v4033 = vadd.f32 %v3994, %v4023
      %v4034 = vadd.f32 %v3995, %v4023
      %v4035 = vadd.f32 %v3996, %v4023
      %v4036 = vadd.f32 %v3997, %v4023
      %v4037 = vadd.f32 %v3998, %v4023
      %v4038 = vadd.f32 %v3999, %v4023
      %v4039 = vadd.f32 %v4000, %v4023
      %v4040 = vadd.f32 %v4001, %v4023
      %v4041 = vadd.f32 %v4002, %v4023
      %v4042 = vadd.f32 %v4003, %v4023
      %v4043 = vadd.f32 %v4004, %v4023
      %v4044 = vadd.f32 %v4005, %v4023
      %v4045 = vadd.f32 %v4006, %v4023
      %v4046 = vadd.f32 %v4007, %v4023
      %v4047 = vadd.f32 %v4008, %v4023
      %v4048 = vadd.f32 %v4009, %v4023
      %v4049 = vadd.f32 %v4010, %v4023
      %v4050 = vadd.f32 %v4011, %v4023
      %v4051 = vadd.f32 %v4012, %v4023
      %v4052 = vadd.f32 %v4013, %v4023
      %v4053 = vadd.f32 %v4014, %v4023
      %v4054 = vadd.f32 %v4015, %v4023
      %v4055 = vadd.f32 %v4016, %v4023
      %v4056 = vadd.f32 %v4017, %v4023
      %v4057 = vxor.u32 %v4025, 2147483648
      %v4058 = vxor.u32 %v4026, 2147483648
      %v4059 = vxor.u32 %v4027, 2147483648
      %v4060 = vxor.u32 %v4028, 2147483648
      %v4061 = vxor.u32 %v4029, 2147483648
      %v4062 = vxor.u32 %v4030, 2147483648
      %v4063 = vxor.u32 %v4031, 2147483648
      %v4064 = vxor.u32 %v4032, 2147483648
      %v4065 = vxor.u32 %v4033, 2147483648
      %v4066 = vxor.u32 %v4034, 2147483648
      %v4067 = vxor.u32 %v4035, 2147483648
      %v4068 = vxor.u32 %v4036, 2147483648
      %v4069 = vxor.u32 %v4037, 2147483648
      %v4070 = vxor.u32 %v4038, 2147483648
      %v4071 = vxor.u32 %v4039, 2147483648
      %v4072 = vxor.u32 %v4040, 2147483648
      %v4073 = vxor.u32 %v4041, 2147483648
      %v4074 = vxor.u32 %v4042, 2147483648
      %v4075 = vxor.u32 %v4043, 2147483648
      %v4076 = vxor.u32 %v4044, 2147483648
      %v4077 = vxor.u32 %v4045, 2147483648
      %v4078 = vxor.u32 %v4046, 2147483648
      %v4079 = vxor.u32 %v4047, 2147483648
      %v4080 = vxor.u32 %v4048, 2147483648
      %v4081 = vxor.u32 %v4049, 2147483648
      %v4082 = vxor.u32 %v4050, 2147483648
      %v4083 = vxor.u32 %v4051, 2147483648
      %v4084 = vxor.u32 %v4052, 2147483648
      %v4085 = vxor.u32 %v4053, 2147483648
      %v4086 = vxor.u32 %v4054, 2147483648
      %v4087 = vxor.u32 %v4055, 2147483648
      %v4088 = vxor.u32 %v4056, 2147483648
      %v4089 = vmul.f32 %v4057, 1.442695
      %v4090 = vpow.pop %v4089
      %v4091 = vmul.f32 %v4058, 1.442695
      %v4092 = vpow.pop %v4091
      %v4093 = vmul.f32 %v4059, 1.442695
      %v4094 = vpow.pop %v4093
      %v4095 = vmul.f32 %v4060, 1.442695
      %v4096 = vpow.pop %v4095
      %v4097 = vmul.f32 %v4061, 1.442695
      %v4098 = vpow.pop %v4097
      %v4099 = vmul.f32 %v4062, 1.442695
      %v4100 = vpow.pop %v4099
      %v4101 = vmul.f32 %v4063, 1.442695
      %v4102 = vpow.pop %v4101
      %v4103 = vmul.f32 %v4064, 1.442695
      %v4104 = vpow.pop %v4103
      %v4105 = vmul.f32 %v4065, 1.442695
      %v4106 = vpow.pop %v4105
      %v4107 = vmul.f32 %v4066, 1.442695
      %v4108 = vpow.pop %v4107
      %v4109 = vmul.f32 %v4067, 1.442695
      %v4110 = vpow.pop %v4109
      %v4111 = vmul.f32 %v4068, 1.442695
      %v4112 = vpow.pop %v4111
      %v4113 = vmul.f32 %v4069, 1.442695
      %v4114 = vpow.pop %v4113
      %v4115 = vmul.f32 %v4070, 1.442695
      %v4116 = vpow.pop %v4115
      %v4117 = vmul.f32 %v4071, 1.442695
      %v4118 = vpow.pop %v4117
      %v4119 = vmul.f32 %v4072, 1.442695
      %v4120 = vpow.pop %v4119
      %v4121 = vmul.f32 %v4073, 1.442695
      %v4122 = vpow.pop %v4121
      %v4123 = vmul.f32 %v4074, 1.442695
      %v4124 = vpow.pop %v4123
      %v4125 = vmul.f32 %v4075, 1.442695
      %v4126 = vpow.pop %v4125
      %v4127 = vmul.f32 %v4076, 1.442695
      %v4128 = vpow.pop %v4127
      %v4129 = vmul.f32 %v4077, 1.442695
      %v4130 = vpow.pop %v4129
      %v4131 = vmul.f32 %v4078, 1.442695
      %v4132 = vpow.pop %v4131
      %v4133 = vmul.f32 %v4079, 1.442695
      %v4134 = vpow.pop %v4133
      %v4135 = vmul.f32 %v4080, 1.442695
      %v4136 = vpow.pop %v4135
      %v4137 = vmul.f32 %v4081, 1.442695
      %v4138 = vpow.pop %v4137
      %v4139 = vmul.f32 %v4082, 1.442695
      %v4140 = vpow.pop %v4139
      %v4141 = vmul.f32 %v4083, 1.442695
      %v4142 = vpow.pop %v4141
      %v4143 = vmul.f32 %v4084, 1.442695
      %v4144 = vpow.pop %v4143
      %v4145 = vmul.f32 %v4085, 1.442695
      %v4146 = vpow.pop %v4145
      %v4147 = vmul.f32 %v4086, 1.442695
      %v4148 = vpow.pop %v4147
      %v4149 = vmul.f32 %v4087, 1.442695
      %v4150 = vpow.pop %v4149
      %v4151 = vmul.f32 %v4088, 1.442695
      %v4152 = vpow.pop %v4151
      %v4153 = vadd.f32 %v4090, 1.0
      %v4154 = vadd.f32 %v4092, 1.0
      %v4155 = vadd.f32 %v4094, 1.0
      %v4156 = vadd.f32 %v4096, 1.0
      %v4157 = vadd.f32 %v4098, 1.0
      %v4158 = vadd.f32 %v4100, 1.0
      %v4159 = vadd.f32 %v4102, 1.0
      %v4160 = vadd.f32 %v4104, 1.0
      %v4161 = vadd.f32 %v4106, 1.0
      %v4162 = vadd.f32 %v4108, 1.0
      %v4163 = vadd.f32 %v4110, 1.0
      %v4164 = vadd.f32 %v4112, 1.0
      %v4165 = vadd.f32 %v4114, 1.0
      %v4166 = vadd.f32 %v4116, 1.0
      %v4167 = vadd.f32 %v4118, 1.0
      %v4168 = vadd.f32 %v4120, 1.0
      %v4169 = vadd.f32 %v4122, 1.0
      %v4170 = vadd.f32 %v4124, 1.0
      %v4171 = vadd.f32 %v4126, 1.0
      %v4172 = vadd.f32 %v4128, 1.0
      %v4173 = vadd.f32 %v4130, 1.0
      %v4174 = vadd.f32 %v4132, 1.0
      %v4175 = vadd.f32 %v4134, 1.0
      %v4176 = vadd.f32 %v4136, 1.0
      %v4177 = vadd.f32 %v4138, 1.0
      %v4178 = vadd.f32 %v4140, 1.0
      %v4179 = vadd.f32 %v4142, 1.0
      %v4180 = vadd.f32 %v4144, 1.0
      %v4181 = vadd.f32 %v4146, 1.0
      %v4182 = vadd.f32 %v4148, 1.0
      %v4183 = vadd.f32 %v4150, 1.0
      %v4184 = vadd.f32 %v4152, 1.0
      %v4185 = vrcp.pop %v4153
      %v4186 = vmul.f32 1.0, %v4185
      %v4187 = vrcp.pop %v4154
      %v4188 = vmul.f32 1.0, %v4187
      %v4189 = vrcp.pop %v4155
      %v4190 = vmul.f32 1.0, %v4189
      %v4191 = vrcp.pop %v4156
      %v4192 = vmul.f32 1.0, %v4191
      %v4193 = vrcp.pop %v4157
      %v4194 = vmul.f32 1.0, %v4193
      %v4195 = vrcp.pop %v4158
      %v4196 = vmul.f32 1.0, %v4195
      %v4197 = vrcp.pop %v4159
      %v4198 = vmul.f32 1.0, %v4197
      %v4199 = vrcp.pop %v4160
      %v4200 = vmul.f32 1.0, %v4199
      %v4201 = vrcp.pop %v4161
      %v4202 = vmul.f32 1.0, %v4201
      %v4203 = vrcp.pop %v4162
      %v4204 = vmul.f32 1.0, %v4203
      %v4205 = vrcp.pop %v4163
      %v4206 = vmul.f32 1.0, %v4205
      %v4207 = vrcp.pop %v4164
      %v4208 = vmul.f32 1.0, %v4207
      %v4209 = vrcp.pop %v4165
      %v4210 = vmul.f32 1.0, %v4209
      %v4211 = vrcp.pop %v4166
      %v4212 = vmul.f32 1.0, %v4211
      %v4213 = vrcp.pop %v4167
      %v4214 = vmul.f32 1.0, %v4213
      %v4215 = vrcp.pop %v4168
      %v4216 = vmul.f32 1.0, %v4215
      %v4217 = vrcp.pop %v4169
      %v4218 = vmul.f32 1.0, %v4217
      %v4219 = vrcp.pop %v4170
      %v4220 = vmul.f32 1.0, %v4219
      %v4221 = vrcp.pop %v4171
      %v4222 = vmul.f32 1.0, %v4221
      %v4223 = vrcp.pop %v4172
      %v4224 = vmul.f32 1.0, %v4223
      %v4225 = vrcp.pop %v4173
      %v4226 = vmul.f32 1.0, %v4225
      %v4227 = vrcp.pop %v4174
      %v4228 = vmul.f32 1.0, %v4227
      %v4229 = vrcp.pop %v4175
      %v4230 = vmul.f32 1.0, %v4229
      %v4231 = vrcp.pop %v4176
      %v4232 = vmul.f32 1.0, %v4231
      %v4233 = vrcp.pop %v4177
      %v4234 = vmul.f32 1.0, %v4233
      %v4235 = vrcp.pop %v4178
      %v4236 = vmul.f32 1.0, %v4235
      %v4237 = vrcp.pop %v4179
      %v4238 = vmul.f32 1.0, %v4237
      %v4239 = vrcp.pop %v4180
      %v4240 = vmul.f32 1.0, %v4239
      %v4241 = vrcp.pop %v4181
      %v4242 = vmul.f32 1.0, %v4241
      %v4243 = vrcp.pop %v4182
      %v4244 = vmul.f32 1.0, %v4243
      %v4245 = vrcp.pop %v4183
      %v4246 = vmul.f32 1.0, %v4245
      %v4247 = vrcp.pop %v4184
      %v4248 = vmul.f32 1.0, %v4247
      %v4249 = vmul.f32 %v4025, %v4186
      %v4250 = vmul.f32 %v4026, %v4188
      %v4251 = vmul.f32 %v4027, %v4190
      %v4252 = vmul.f32 %v4028, %v4192
      %v4253 = vmul.f32 %v4029, %v4194
      %v4254 = vmul.f32 %v4030, %v4196
      %v4255 = vmul.f32 %v4031, %v4198
      %v4256 = vmul.f32 %v4032, %v4200
      %v4257 = vmul.f32 %v4033, %v4202
      %v4258 = vmul.f32 %v4034, %v4204
      %v4259 = vmul.f32 %v4035, %v4206
      %v4260 = vmul.f32 %v4036, %v4208
      %v4261 = vmul.f32 %v4037, %v4210
      %v4262 = vmul.f32 %v4038, %v4212
      %v4263 = vmul.f32 %v4039, %v4214
      %v4264 = vmul.f32 %v4040, %v4216
      %v4265 = vmul.f32 %v4041, %v4218
      %v4266 = vmul.f32 %v4042, %v4220
      %v4267 = vmul.f32 %v4043, %v4222
      %v4268 = vmul.f32 %v4044, %v4224
      %v4269 = vmul.f32 %v4045, %v4226
      %v4270 = vmul.f32 %v4046, %v4228
      %v4271 = vmul.f32 %v4047, %v4230
      %v4272 = vmul.f32 %v4048, %v4232
      %v4273 = vmul.f32 %v4049, %v4234
      %v4274 = vmul.f32 %v4050, %v4236
      %v4275 = vmul.f32 %v4051, %v4238
      %v4276 = vmul.f32 %v4052, %v4240
      %v4277 = vmul.f32 %v4053, %v4242
      %v4278 = vmul.f32 %v4054, %v4244
      %v4279 = vmul.f32 %v4055, %v4246
      %v4280 = vmul.f32 %v4056, %v4248
      %v4281 = vunpack.c.l.bf16 %v261
      %v4282 = vunpack.c.l.bf16 %v262
      %v4283 = vunpack.c.l.bf16 %v263
      %v4284 = vunpack.c.l.bf16 %v265
      %v4285 = vunpack.c.l.bf16 %v266
      %v4286 = vunpack.c.l.bf16 %v267
      %v4287 = vunpack.c.l.bf16 %v269
      %v4288 = vunpack.c.l.bf16 %v270
      %v4289 = vunpack.c.l.bf16 %v271
      %v4290 = vunpack.c.l.bf16 %v273
      %v4291 = vunpack.c.l.bf16 %v274
      %v4292 = vunpack.c.l.bf16 %v275
      %v4293 = vunpack.c.l.bf16 %v277
      %v4294 = vunpack.c.l.bf16 %v278
      %v4295 = vunpack.c.l.bf16 %v279
      %v4296 = vunpack.c.l.bf16 %v281
      %v4297 = vunpack.c.l.bf16 %v282
      %v4298 = vunpack.c.l.bf16 %v283
      %v4299 = vunpack.c.l.bf16 %v285
      %v4300 = vunpack.c.l.bf16 %v286
      %v4301 = vunpack.c.l.bf16 %v287
      %v4302 = vunpack.c.l.bf16 %v289
      %v4303 = vunpack.c.l.bf16 %v290
      %v4304 = vunpack.c.l.bf16 %v291
      %v4305 = vunpack.c.l.bf16 %v293
      %v4306 = vunpack.c.l.bf16 %v294
      %v4307 = vunpack.c.l.bf16 %v295
      %v4308 = vunpack.c.l.bf16 %v297
      %v4309 = vunpack.c.l.bf16 %v298
      %v4310 = vunpack.c.l.bf16 %v299
      %v4311 = vunpack.c.l.bf16 %v301
      %v4312 = vunpack.c.l.bf16 %v302
      %v4313 = vunpack.c.l.bf16 %v303
      %v4314 = vunpack.c.l.bf16 %v305
      %v4315 = vunpack.c.l.bf16 %v306
      %v4316 = vunpack.c.l.bf16 %v307
      %v4317 = vunpack.c.l.bf16 %v309
      %v4318 = vunpack.c.l.bf16 %v310
      %v4319 = vunpack.c.l.bf16 %v311
      %v4320 = vunpack.c.l.bf16 %v313
      %v4321 = vunpack.c.l.bf16 %v314
      %v4322 = vunpack.c.l.bf16 %v315
      %v4323 = vunpack.c.l.bf16 %v317
      %v4324 = vunpack.c.l.bf16 %v318
      %v4325 = vunpack.c.l.bf16 %v319
      %v4326 = vunpack.c.l.bf16 %v321
      %v4327 = vunpack.c.l.bf16 %v322
      %v4328 = vunpack.c.l.bf16 %v323
      %v4377 = vrot.slane %v4281, 2
      %v4378 = vrot.slane %v4282, 2
      %v4379 = vsel %vm1471, %v4377, %v4378
      %v4380 = vrot.slane %v4283, 2
      %v4381 = vsel %vm1471, %v4378, %v4380
      %v4382 = vrot.slane %v4284, 2
      %v4383 = vrot.slane %v4285, 2
      %v4384 = vsel %vm1471, %v4382, %v4383
      %v4385 = vrot.slane %v4286, 2
      %v4386 = vsel %vm1471, %v4383, %v4385
      %v4387 = vrot.slane %v4287, 2
      %v4388 = vrot.slane %v4288, 2
      %v4389 = vsel %vm1471, %v4387, %v4388
      %v4390 = vrot.slane %v4289, 2
      %v4391 = vsel %vm1471, %v4388, %v4390
      %v4392 = vrot.slane %v4290, 2
      %v4393 = vrot.slane %v4291, 2
      %v4394 = vsel %vm1471, %v4392, %v4393
      %v4395 = vrot.slane %v4292, 2
      %v4396 = vsel %vm1471, %v4393, %v4395
      %v4397 = vrot.slane %v4293, 2
      %v4398 = vrot.slane %v4294, 2
      %v4399 = vsel %vm1471, %v4397, %v4398
      %v4400 = vrot.slane %v4295, 2
      %v4401 = vsel %vm1471, %v4398, %v4400
      %v4402 = vrot.slane %v4296, 2
      %v4403 = vrot.slane %v4297, 2
      %v4404 = vsel %vm1471, %v4402, %v4403
      %v4405 = vrot.slane %v4298, 2
      %v4406 = vsel %vm1471, %v4403, %v4405
      %v4407 = vrot.slane %v4299, 2
      %v4408 = vrot.slane %v4300, 2
      %v4409 = vsel %vm1471, %v4407, %v4408
      %v4410 = vrot.slane %v4301, 2
      %v4411 = vsel %vm1471, %v4408, %v4410
      %v4412 = vrot.slane %v4302, 2
      %v4413 = vrot.slane %v4303, 2
      %v4414 = vsel %vm1471, %v4412, %v4413
      %v4415 = vrot.slane %v4304, 2
      %v4416 = vsel %vm1471, %v4413, %v4415
      %v4417 = vrot.slane %v4305, 2
      %v4418 = vrot.slane %v4306, 2
      %v4419 = vsel %vm1471, %v4417, %v4418
      %v4420 = vrot.slane %v4307, 2
      %v4421 = vsel %vm1471, %v4418, %v4420
      %v4422 = vrot.slane %v4308, 2
      %v4423 = vrot.slane %v4309, 2
      %v4424 = vsel %vm1471, %v4422, %v4423
      %v4425 = vrot.slane %v4310, 2
      %v4426 = vsel %vm1471, %v4423, %v4425
      %v4427 = vrot.slane %v4311, 2
      %v4428 = vrot.slane %v4312, 2
      %v4429 = vsel %vm1471, %v4427, %v4428
      %v4430 = vrot.slane %v4313, 2
      %v4431 = vsel %vm1471, %v4428, %v4430
      %v4432 = vrot.slane %v4314, 2
      %v4433 = vrot.slane %v4315, 2
      %v4434 = vsel %vm1471, %v4432, %v4433
      %v4435 = vrot.slane %v4316, 2
      %v4436 = vsel %vm1471, %v4433, %v4435
      %v4437 = vrot.slane %v4317, 2
      %v4438 = vrot.slane %v4318, 2
      %v4439 = vsel %vm1471, %v4437, %v4438
      %v4440 = vrot.slane %v4319, 2
      %v4441 = vsel %vm1471, %v4438, %v4440
      %v4442 = vrot.slane %v4320, 2
      %v4443 = vrot.slane %v4321, 2
      %v4444 = vsel %vm1471, %v4442, %v4443
      %v4445 = vrot.slane %v4322, 2
      %v4446 = vsel %vm1471, %v4443, %v4445
      %v4447 = vrot.slane %v4323, 2
      %v4448 = vrot.slane %v4324, 2
      %v4449 = vsel %vm1471, %v4447, %v4448
      %v4450 = vrot.slane %v4325, 2
      %v4451 = vsel %vm1471, %v4448, %v4450
      %v4452 = vrot.slane %v4326, 2
      %v4453 = vrot.slane %v4327, 2
      %v4454 = vsel %vm1471, %v4452, %v4453
      %v4455 = vrot.slane %v4328, 2
      %v4456 = vsel %vm1471, %v4453, %v4455
      %v4489 = vadd.f32 %v4249, %v4379
      %v4490 = vadd.f32 %v4250, %v4381
      %v4491 = vadd.f32 %v4251, %v4384
      %v4492 = vadd.f32 %v4252, %v4386
      %v4493 = vadd.f32 %v4253, %v4389
      %v4494 = vadd.f32 %v4254, %v4391
      %v4495 = vadd.f32 %v4255, %v4394
      %v4496 = vadd.f32 %v4256, %v4396
      %v4497 = vadd.f32 %v4257, %v4399
      %v4498 = vadd.f32 %v4258, %v4401
      %v4499 = vadd.f32 %v4259, %v4404
      %v4500 = vadd.f32 %v4260, %v4406
      %v4501 = vadd.f32 %v4261, %v4409
      %v4502 = vadd.f32 %v4262, %v4411
      %v4503 = vadd.f32 %v4263, %v4414
      %v4504 = vadd.f32 %v4264, %v4416
      %v4505 = vadd.f32 %v4265, %v4419
      %v4506 = vadd.f32 %v4266, %v4421
      %v4507 = vadd.f32 %v4267, %v4424
      %v4508 = vadd.f32 %v4268, %v4426
      %v4509 = vadd.f32 %v4269, %v4429
      %v4510 = vadd.f32 %v4270, %v4431
      %v4511 = vadd.f32 %v4271, %v4434
      %v4512 = vadd.f32 %v4272, %v4436
      %v4513 = vadd.f32 %v4273, %v4439
      %v4514 = vadd.f32 %v4274, %v4441
      %v4515 = vadd.f32 %v4275, %v4444
      %v4516 = vadd.f32 %v4276, %v4446
      %v4517 = vadd.f32 %v4277, %v4449
      %v4518 = vadd.f32 %v4278, %v4451
      %v4519 = vadd.f32 %v4279, %v4454
      %v4520 = vadd.f32 %v4280, %v4456
      %4521 = vxpose.xlu0.b32.start [1/16] %v4489, 128
      %4522 = vxpose.xlu0.b32.cont [2/16] %v4490, 128
      %4523 = vxpose.xlu0.b32.cont [3/16] %v4491, 128
      %4524 = vxpose.xlu0.b32.cont [4/16] %v4492, 128
      %4525 = vxpose.xlu0.b32.cont [5/16] %v4493, 128
      %4526 = vxpose.xlu0.b32.cont [6/16] %v4494, 128
      %4527 = vxpose.xlu0.b32.cont [7/16] %v4495, 128
      %4528 = vxpose.xlu0.b32.cont [8/16] %v4496, 128
      %4529 = vxpose.xlu0.b32.cont [9/16] %v4497, 128
      %4530 = vxpose.xlu0.b32.cont [10/16] %v4498, 128
      %4531 = vxpose.xlu0.b32.cont [11/16] %v4499, 128
      %4532 = vxpose.xlu0.b32.cont [12/16] %v4500, 128
      %4533 = vxpose.xlu0.b32.cont [13/16] %v4501, 128
      %4534 = vxpose.xlu0.b32.cont [14/16] %v4502, 128
      %4535 = vxpose.xlu0.b32.cont [15/16] %v4503, 128
      %4536 = vxpose.xlu0.b32.end [16/16] %v4504, 128
      %v4537 = vpop.trf.xlu0
      %v4538 = vpop.trf.xlu0
      %v4539 = vpop.trf.xlu0
      %v4540 = vpop.trf.xlu0
      %v4541 = vpop.trf.xlu0
      %v4542 = vpop.trf.xlu0
      %v4543 = vpop.trf.xlu0
      %v4544 = vpop.trf.xlu0
      %v4545 = vpop.trf.xlu0
      %v4546 = vpop.trf.xlu0
      %v4547 = vpop.trf.xlu0
      %v4548 = vpop.trf.xlu0
      %v4549 = vpop.trf.xlu0
      %v4550 = vpop.trf.xlu0
      %v4551 = vpop.trf.xlu0
      %v4552 = vpop.trf.xlu0
      %4553 = vxpose.xlu0.b32.start [1/16] %v4505, 128
      %4554 = vxpose.xlu0.b32.cont [2/16] %v4506, 128
      %4555 = vxpose.xlu0.b32.cont [3/16] %v4507, 128
      %4556 = vxpose.xlu0.b32.cont [4/16] %v4508, 128
      %4557 = vxpose.xlu0.b32.cont [5/16] %v4509, 128
      %4558 = vxpose.xlu0.b32.cont [6/16] %v4510, 128
      %4559 = vxpose.xlu0.b32.cont [7/16] %v4511, 128
      %4560 = vxpose.xlu0.b32.cont [8/16] %v4512, 128
      %4561 = vxpose.xlu0.b32.cont [9/16] %v4513, 128
      %4562 = vxpose.xlu0.b32.cont [10/16] %v4514, 128
      %4563 = vxpose.xlu0.b32.cont [11/16] %v4515, 128
      %4564 = vxpose.xlu0.b32.cont [12/16] %v4516, 128
      %4565 = vxpose.xlu0.b32.cont [13/16] %v4517, 128
      %4566 = vxpose.xlu0.b32.cont [14/16] %v4518, 128
      %4567 = vxpose.xlu0.b32.cont [15/16] %v4519, 128
      %4568 = vxpose.xlu0.b32.end [16/16] %v4520, 128
      %v4569 = vpop.trf.xlu0
      %v4570 = vpop.trf.xlu0
      %v4571 = vpop.trf.xlu0
      %v4572 = vpop.trf.xlu0
      %v4573 = vpop.trf.xlu0
      %v4574 = vpop.trf.xlu0
      %v4575 = vpop.trf.xlu0
      %v4576 = vpop.trf.xlu0
      %v4577 = vpop.trf.xlu0
      %v4578 = vpop.trf.xlu0
      %v4579 = vpop.trf.xlu0
      %v4580 = vpop.trf.xlu0
      %v4581 = vpop.trf.xlu0
      %v4582 = vpop.trf.xlu0
      %v4583 = vpop.trf.xlu0
      %v4584 = vpop.trf.xlu0
      %v4587 = vcombine.low %v4537, %v4569
      %4589 = vst [vmem:[%s246] sm:$0xff] %v4587
      %s4590 = smul.u32 2, %s21
      %p4591 = scmp.lt.s32.totalorder %s20, 1
      %s4592 = scalar_select %p4591, %s20, 1
      %p4593 = scmp.lt.s32.totalorder %s4590, 1
      %s4594 = scalar_select %p4593, %s4590, 1
      %s4595 = smul.addr %s4592, 2
      %s4596 = sadd.s32 %s4594, %s4595
      %s4597 = smul.addr %s4596, 4
      %s4598 = scalar_lea.vmem %s5, %s4597
      // Predicated region
      $region41: #{bottleneck_c2f_forward.1} parent=39 // pred_check
        %p4599 = pneg %p158
      $region42: #{bottleneck_c2f_forward.1} parent=39 // pred_check_branch
        %4601 = sbr.rel (%p4599) target = $region44
      $region43: #{bottleneck_c2f_forward.1} parent=39 // pred_region
        %s4602 = smul.u32 2, %s21
      $region44: #{bottleneck_c2f_forward.1} parent=39 // pred_fallthru
        _
    $region40: #{bottleneck_c2f_forward.1} parent=5 // pred_fallthru
      _
    %p4603 = scmp.le.s32.totalorder 2, %s11
    // Predicated region
    $region45: #{bottleneck_c2f_forward.1} parent=5 // pred_check
      %p4604 = pneg %p4603
    $region46: #{bottleneck_c2f_forward.1} parent=5 // pred_check_branch
      %4606 = sbr.rel (%p4604) target = $region48
    $region47: #{bottleneck_c2f_forward.1} parent=5 // pred_region
      %s4607 = ssub.s32 %s11, 2
      // Predicated region
      $region49: #{bottleneck_c2f_forward.1} parent=47 // pred_check
        %p4608 = pneg %p164
      $region50: #{bottleneck_c2f_forward.1} parent=47 // pred_check_branch
        %4610 = sbr.rel (%p4608) target = $region52
      $region51: #{bottleneck_c2f_forward.1} parent=47 // pred_region
        %s4611 = smul.u32 2, %s23
        %p4612 = scmp.lt.s32.totalorder %s22, 1
        %s4613 = scalar_select %p4612, %s22, 1
        %p4614 = scmp.lt.s32.totalorder %s4611, 1
        %s4615 = scalar_select %p4614, %s4611, 1
        %s4616 = smul.addr %s4613, 2
        %s4617 = sadd.s32 %s4615, %s4616
        %s4618 = smul.addr %s4617, 4
        %s4619 = scalar_lea.vmem %s5, %s4618
      $region52: #{bottleneck_c2f_forward.1} parent=47 // pred_fallthru
        _
    $region48: #{bottleneck_c2f_forward.1} parent=5 // pred_fallthru
      _
  $region6: #{bottleneck_c2f_forward.1} parent=0 // loop_footer
    %s15 = sadd.s32 1, %s11
  $region7: #{bottleneck_c2f_forward.1} parent=0 // loop_footer_branch
    %10 = sbr.rel target = $region3
  $region8: #{bottleneck_c2f_forward.1} parent=0 // loop_exit
    _

// kernel: bottleneck_c2f_forward.1
$region0: #{bottleneck_c2f_forward.1}
  #allocation0 [shape = 'u32[]', space=smem, size = 0x4, offset = 0x4, fixed_abs, tag = 'smem constant byte address 0x4 - core index']
  #allocation1 [shape = 'u32[144,128]{1,0:T(1,128)}', space=vmem, size = 0x12000, scoped, tag = 'internal scratch']
  %s0 = inlined_call_operand.vmem [shape: bf16[2,20,26,4], index: 0, kind: input, shape index: {}]
  %s1 = inlined_call_operand.vmem [shape: bf16[3,12,2], index: 1, kind: input, shape index: {}]
  %s2 = inlined_call_operand.vmem [shape: bf16[3,6,4], index: 2, kind: input, shape index: {}]
  %s3 = inlined_call_operand.vmem [shape: f32[1,2], index: 3, kind: input, shape index: {}]
  %s4 = inlined_call_operand.vmem [shape: f32[1,4], index: 4, kind: input, shape index: {}]
  %s5 = inlined_call_operand.vmem [shape: f32[2,16,16,4], index: 5, kind: output, shape index: {}]
  %s6 = sld [smem:[#allocation0]]
  $region53: #{bottleneck_c2f_forward.1} parent=0
    _
  %s8 = ssub.s32 1, %s6
  %s9 = scalar_select 0, %s8, %s6
  loop: start=0, step=1, limit=4
  $region2: #{bottleneck_c2f_forward.1} parent=0 // loop_pre_header
    _
  $region3: #{bottleneck_c2f_forward.1} parent=0 // loop_header
    %s11 = sphi 0, %s15
    %p12 = scmp.ge.s32.totalorder %s11, 4
    %s18 = sphi 0, %s30
    %s19 = sphi 0, %s26
    %s20 = sphi 0, %s18
    %s21 = sphi 0, %s19
    %s22 = sphi 0, %s20
    %s23 = sphi 0, %s21
    %s33 = sphi 0, %s35
    %s36 = sphi 0, %s33
    %s37 = sphi 0, %s36
    %s53 = sphi 0, %s37
    %s57 = sphi 0, %s57
    %s59 = sphi 0, %s57
    %s60 = sphi 0, %s59
    %s74 = sphi 0, %s60
    %s78 = sphi 0, %s78
    %s80 = sphi 0, %s78
    %s81 = sphi 0, %s80
    %s95 = sphi 0, %s81
    %s99 = sphi 0, %s99
    %s101 = sphi 0, %s99
    %s102 = sphi 0, %s101
    %s116 = sphi 0, %s102
    %s120 = sphi 0, %s120
    %s122 = sphi 0, %s120
    %s123 = sphi 0, %s122
    %s137 = sphi 0, %s123
    %s145 = sphi 0, %s147
    %s148 = sphi 0, %s145
    %s149 = sphi 0, %s148
    %s165 = sphi 0, %s149
  $region4: #{bottleneck_c2f_forward.1} parent=0 // loop_header_branch
    %14 = sbr.rel (%p12) target = $region8
  $region5: #{bottleneck_c2f_forward.1} parent=0 // loop_body
    %s16 = ssub.s32 %s11, 1
    %s17 = ssub.s32 %s11, 2
    %s24 = sadd.s32 1, %s19
    %p25 = scmp.ge.s32.totalorder %s24, 1
    %s26 = scalar_select %p25, 0, %s24
    %s27 = sadd.s32 1, %s18
    %s28 = scalar_select %p25, %s27, %s18
    %p29 = scmp.ge.s32.totalorder %s28, 2
    %s30 = scalar_select %p29, 0, %s28
    %s31 = ssub.s32 %s18, %s30
    %p32 = scmp.eq.s32.totalorder %s31, 0
    %s34 = sadd.s32 %s33, 1
    %s35 = scalar_select %p32, %s33, %s34
    %p38 = pneg %p32
    %p39 = scmp.eq.s32.totalorder %s11, 1
    %p40 = por %p38, %p39
    %p41 = scmp.ne.s32.totalorder %s33, %s36
    %p42 = scmp.eq.s32.totalorder %s11, 0
    %p43 = por %p41, %p42
    %p44 = scmp.ne.s32.totalorder %s33, %s36
    %p45 = scmp.eq.s32.totalorder %s16, 1
    %p46 = por %p44, %p45
    %p47 = scmp.ne.s32.totalorder %s36, %s37
    %p48 = scmp.eq.s32.totalorder %s16, 0
    %p49 = por %p47, %p48
    %p50 = scmp.ne.s32.totalorder %s36, %s37
    %p51 = scmp.eq.s32.totalorder %s17, 1
    %p52 = por %p50, %p51
    %p54 = scmp.ne.s32.totalorder %s37, %s53
    %p55 = scmp.eq.s32.totalorder %s17, 0
    %p56 = por %p54, %p55
    %s58 = sadd.s32 %s57, 1
    %p61 = scmp.eq.s32.totalorder %s11, 1
    %p62 = scmp.ne.s32.totalorder %s57, %s59
    %p63 = scmp.eq.s32.totalorder %s11, 0
    %p64 = por %p62, %p63
    %p65 = scmp.ne.s32.totalorder %s57, %s59
    %p66 = scmp.eq.s32.totalorder %s16, 1
    %p67 = por %p65, %p66
    %p68 = scmp.ne.s32.totalorder %s59, %s60
    %p69 = scmp.eq.s32.totalorder %s16, 0
    %p70 = por %p68, %p69
    %p71 = scmp.ne.s32.totalorder %s59, %s60
    %p72 = scmp.eq.s32.totalorder %s17, 1
    %p73 = por %p71, %p72
    %p75 = scmp.ne.s32.totalorder %s60, %s74
    %p76 = scmp.eq.s32.totalorder %s17, 0
    %p77 = por %p75, %p76
    %s79 = sadd.s32 %s78, 1
    %p82 = scmp.eq.s32.totalorder %s11, 1
    %p83 = scmp.ne.s32.totalorder %s78, %s80
    %p84 = scmp.eq.s32.totalorder %s11, 0
    %p85 = por %p83, %p84
    %p86 = scmp.ne.s32.totalorder %s78, %s80
    %p87 = scmp.eq.s32.totalorder %s16, 1
    %p88 = por %p86, %p87
    %p89 = scmp.ne.s32.totalorder %s80, %s81
    %p90 = scmp.eq.s32.totalorder %s16, 0
    %p91 = por %p89, %p90
    %p92 = scmp.ne.s32.totalorder %s80, %s81
    %p93 = scmp.eq.s32.totalorder %s17, 1
    %p94 = por %p92, %p93
    %p96 = scmp.ne.s32.totalorder %s81, %s95
    %p97 = scmp.eq.s32.totalorder %s17, 0
    %p98 = por %p96, %p97
    %s100 = sadd.s32 %s99, 1
    %p103 = scmp.eq.s32.totalorder %s11, 1
    %p104 = scmp.ne.s32.totalorder %s99, %s101
    %p105 = scmp.eq.s32.totalorder %s11, 0
    %p106 = por %p104, %p105
    %p107 = scmp.ne.s32.totalorder %s99, %s101
    %p108 = scmp.eq.s32.totalorder %s16, 1
    %p109 = por %p107, %p108
    %p110 = scmp.ne.s32.totalorder %s101, %s102
    %p111 = scmp.eq.s32.totalorder %s16, 0
    %p112 = por %p110, %p111
    %p113 = scmp.ne.s32.totalorder %s101, %s102
    %p114 = scmp.eq.s32.totalorder %s17, 1
    %p115 = por %p113, %p114
    %p117 = scmp.ne.s32.totalorder %s102, %s116
    %p118 = scmp.eq.s32.totalorder %s17, 0
    %p119 = por %p117, %p118
    %s121 = sadd.s32 %s120, 1
    %p124 = scmp.eq.s32.totalorder %s11, 1
    %p125 = scmp.ne.s32.totalorder %s120, %s122
    %p126 = scmp.eq.s32.totalorder %s11, 0
    %p127 = por %p125, %p126
    %p128 = scmp.ne.s32.totalorder %s120, %s122
    %p129 = scmp.eq.s32.totalorder %s16, 1
    %p130 = por %p128, %p129
    %p131 = scmp.ne.s32.totalorder %s122, %s123
    %p132 = scmp.eq.s32.totalorder %s16, 0
    %p133 = por %p131, %p132
    %p134 = scmp.ne.s32.totalorder %s122, %s123
    %p135 = scmp.eq.s32.totalorder %s17, 1
    %p136 = por %p134, %p135
    %p138 = scmp.ne.s32.totalorder %s123, %s137
    %p139 = scmp.eq.s32.totalorder %s17, 0
    %p140 = por %p138, %p139
    %s141 = ssub.s32 %s18, %s30
    %s142 = ssub.s32 %s19, %s26
    %s143 = sor.u32 %s141, %s142
    %p144 = scmp.eq.s32.totalorder %s143, 0
    %s146 = sadd.s32 %s145, 1
    %s147 = scalar_select %p144, %s145, %s146
    %p150 = pneg %p144
    %p151 = scmp.eq.s32.totalorder %s11, 1
    %p152 = por %p150, %p151
    %p153 = scmp.ne.s32.totalorder %s145, %s148
    %p154 = scmp.eq.s32.totalorder %s11, 0
    %p155 = por %p153, %p154
    %p156 = scmp.ne.s32.totalorder %s145, %s148
    %p157 = scmp.eq.s32.totalorder %s16, 1
    %p158 = por %p156, %p157
    %p159 = scmp.ne.s32.totalorder %s148, %s149
    %p160 = scmp.eq.s32.totalorder %s16, 0
    %p161 = por %p159, %p160
    %p162 = scmp.ne.s32.totalorder %s148, %s149
    %p163 = scmp.eq.s32.totalorder %s17, 1
    %p164 = por %p162, %p163
    %p166 = scmp.ne.s32.totalorder %s149, %s165
    %p167 = scmp.eq.s32.totalorder %s17, 0
    %p168 = por %p166, %p167
    %p169 = scmp.le.s32.totalorder 1, %s11
    %p170 = scmp.lt.s32.totalorder %s11, 3
    %p171 = pnand %p169, %p170
    %p172 = pneg %p171
    // Predicated region
    $region9: #{bottleneck_c2f_forward.1} parent=5 // pred_check
      _
    $region10: #{bottleneck_c2f_forward.1} parent=5 // pred_check_branch
      %174 = sbr.rel (%p171) target = $region12
    $region11: #{bottleneck_c2f_forward.1} parent=5 // pred_region
      %s175 = ssub.s32 %s11, 1
      // Predicated region
      $region13: #{bottleneck_c2f_forward.1} parent=11 // pred_check
        %p176 = pneg %p70
      $region14: #{bottleneck_c2f_forward.1} parent=11 // pred_check_branch
        %178 = sbr.rel (%p176) target = $region16
      $region15: #{bottleneck_c2f_forward.1} parent=11 // pred_region
        _
      $region16: #{bottleneck_c2f_forward.1} parent=11 // pred_fallthru
        _
      // Predicated region
      $region17: #{bottleneck_c2f_forward.1} parent=11 // pred_check
        %p179 = pneg %p91
      $region18: #{bottleneck_c2f_forward.1} parent=11 // pred_check_branch
        %181 = sbr.rel (%p179) target = $region20
      $region19: #{bottleneck_c2f_forward.1} parent=11 // pred_region
        _
      $region20: #{bottleneck_c2f_forward.1} parent=11 // pred_fallthru
        _
      // Predicated region
      $region21: #{bottleneck_c2f_forward.1} parent=11 // pred_check
        %p182 = pneg %p112
      $region22: #{bottleneck_c2f_forward.1} parent=11 // pred_check_branch
        %184 = sbr.rel (%p182) target = $region24
      $region23: #{bottleneck_c2f_forward.1} parent=11 // pred_region
        _
      $region24: #{bottleneck_c2f_forward.1} parent=11 // pred_fallthru
        _
      // Predicated region
      $region25: #{bottleneck_c2f_forward.1} parent=11 // pred_check
        %p185 = pneg %p133
      $region26: #{bottleneck_c2f_forward.1} parent=11 // pred_check_branch
        %187 = sbr.rel (%p185) target = $region28
      $region27: #{bottleneck_c2f_forward.1} parent=11 // pred_region
        _
      $region28: #{bottleneck_c2f_forward.1} parent=11 // pred_fallthru
        _
    $region12: #{bottleneck_c2f_forward.1} parent=5 // pred_fallthru
      _
    %p188 = scmp.lt.s32.totalorder %s11, 2
    // Predicated region
    $region29: #{bottleneck_c2f_forward.1} parent=5 // pred_check
      %p189 = pneg %p188
    $region30: #{bottleneck_c2f_forward.1} parent=5 // pred_check_branch
      %191 = sbr.rel (%p189) target = $region32
    $region31: #{bottleneck_c2f_forward.1} parent=5 // pred_region
      // Predicated region
      $region33: #{bottleneck_c2f_forward.1} parent=31 // pred_check
        %p192 = pneg %p43
      $region34: #{bottleneck_c2f_forward.1} parent=31 // pred_check_branch
        %194 = sbr.rel (%p192) target = $region36
      $region35: #{bottleneck_c2f_forward.1} parent=31 // pred_region
        %p195 = scmp.lt.s32.totalorder %s18, 1
        %s196 = scalar_select %p195, %s18, 1
        %s197 = smul.addr %s196, 80
        %s198 = smul.addr %s197, 4
        %s199 = scalar_lea.vmem %s0, %s198
      $region36: #{bottleneck_c2f_forward.1} parent=31 // pred_fallthru
        _
    $region32: #{bottleneck_c2f_forward.1} parent=5 // pred_fallthru
      _
    %p200 = scmp.le.s32.totalorder 1, %s11
    %p201 = scmp.lt.s32.totalorder %s11, 3
    %p202 = pnand %p200, %p201
    %p203 = pneg %p202
    // Predicated region
    $region37: #{bottleneck_c2f_forward.1} parent=5 // pred_check
      _
    $region38: #{bottleneck_c2f_forward.1} parent=5 // pred_check_branch
      %205 = sbr.rel (%p202) target = $region40
    $region39: #{bottleneck_c2f_forward.1} parent=5 // pred_region
      %s206 = ssub.s32 %s11, 1
      %p207 = scmp.lt.s32.totalorder %s20, 1
      %s208 = scalar_select %p207, %s20, 1
      %s209 = smul.addr %s208, 80
      %s210 = smul.addr %s209, 4
      %s211 = scalar_lea.vmem %s0, %s210
      %p212 = pneg %p49
      %p213 = pneg %p46
      %p214 = pneg %p70
      %p215 = pneg %p67
      %p216 = pneg %p91
      %p217 = pneg %p88
      %p218 = pneg %p112
      %p219 = pneg %p109
      %p220 = pneg %p133
      %p221 = pneg %p130
      %p222 = pneg %p161
      %p223 = pneg %p158
      %s224 = smul.u32 16, %s21
      %p225 = scmp.lt.s32.totalorder %s20, 1
      %s226 = scalar_select %p225, %s20, 1
      %p227 = scmp.lt.s32.totalorder %s224, 15
      %s228 = scalar_select %p227, %s224, 15
      %s229 = smul.addr %s228, 2
      %s230 = smul.addr %s226, 32
      %s231 = sadd.s32 %s229, %s230
      %s232 = smul.addr %s231, 8
      %s233 = scalar_lea.vmem %s5, %s232
      %p234 = scmp.lt.s32.totalorder %s20, 1
      %s235 = scalar_select %p234, %s20, 1
      %s236 = smul.addr %s235, 80
      %s237 = smul.addr %s236, 4
      %s238 = scalar_lea.vmem %s0, %s237
      %s239 = smul.u32 16, %s21
      %p240 = scmp.lt.s32.totalorder %s20, 1
      %s241 = scalar_select %p240, %s20, 1
      %p242 = scmp.lt.s32.totalorder %s239, 15
      %s243 = scalar_select %p242, %s239, 15
      %s244 = smul.addr %s243, 2
      %s245 = smul.addr %s241, 32
      %s246 = sadd.s32 %s244, %s245
      %s247 = smul.addr %s246, 8
      %s248 = scalar_lea.vmem %s5, %s247
      %s249 = smul.u32 16, %s21
      %s251 = smul.u32 %s21, 16
      %s252 = smul.u32 %s251, 4
      %s253 = smul.addr %s252, 4
      %s254 = scalar_lea.vmem %s238, %s253
      %v255 = vld [vmem:[%s254] sm:$0xf]
      %v256 = vld [vmem:[%s254 + $0x4] sm:$0xf]
      %v257 = vld [vmem:[%s254 + $0x8] sm:$0xf]
      %v258 = vld [vmem:[%s254 + $0xc] sm:$0x1]
      %v259 = vld [vmem:[%s254 + $0x10] sm:$0xf]
      %v260 = vld [vmem:[%s254 + $0x14] sm:$0xf]
      %v261 = vld [vmem:[%s254 + $0x18] sm:$0xf]
      %v262 = vld [vmem:[%s254 + $0x1c] sm:$0x1]
      %v263 = vld [vmem:[%s254 + $0x20] sm:$0xf]
      %v264 = vld [vmem:[%s254 + $0x24] sm:$0xf]
      %v265 = vld [vmem:[%s254 + $0x28] sm:$0xf]
      %v266 = vld [vmem:[%s254 + $0x2c] sm:$0x1]
      %v267 = vld [vmem:[%s254 + $0x30] sm:$0xf]
      %v268 = vld [vmem:[%s254 + $0x34] sm:$0xf]
      %v269 = vld [vmem:[%s254 + $0x38] sm:$0xf]
      %v270 = vld [vmem:[%s254 + $0x3c] sm:$0x1]
      %v271 = vld [vmem:[%s254 + $0x40] sm:$0xf]
      %v272 = vld [vmem:[%s254 + $0x44] sm:$0xf]
      %v273 = vld [vmem:[%s254 + $0x48] sm:$0xf]
      %v274 = vld [vmem:[%s254 + $0x4c] sm:$0x1]
      %v275 = vld [vmem:[%s254 + $0x50] sm:$0xf]
      %v276 = vld [vmem:[%s254 + $0x54] sm:$0xf]
      %v277 = vld [vmem:[%s254 + $0x58] sm:$0xf]
      %v278 = vld [vmem:[%s254 + $0x5c] sm:$0x1]
      %v279 = vld [vmem:[%s254 + $0x60] sm:$0xf]
      %v280 = vld [vmem:[%s254 + $0x64] sm:$0xf]
      %v281 = vld [vmem:[%s254 + $0x68] sm:$0xf]
      %v282 = vld [vmem:[%s254 + $0x6c] sm:$0x1]
      %v283 = vld [vmem:[%s254 + $0x70] sm:$0xf]
      %v284 = vld [vmem:[%s254 + $0x74] sm:$0xf]
      %v285 = vld [vmem:[%s254 + $0x78] sm:$0xf]
      %v286 = vld [vmem:[%s254 + $0x7c] sm:$0x1]
      %v287 = vld [vmem:[%s254 + $0x80] sm:$0xf]
      %v288 = vld [vmem:[%s254 + $0x84] sm:$0xf]
      %v289 = vld [vmem:[%s254 + $0x88] sm:$0xf]
      %v290 = vld [vmem:[%s254 + $0x8c] sm:$0x1]
      %v291 = vld [vmem:[%s254 + $0x90] sm:$0xf]
      %v292 = vld [vmem:[%s254 + $0x94] sm:$0xf]
      %v293 = vld [vmem:[%s254 + $0x98] sm:$0xf]
      %v294 = vld [vmem:[%s254 + $0x9c] sm:$0x1]
      %v295 = vld [vmem:[%s254 + $0xa0] sm:$0xf]
      %v296 = vld [vmem:[%s254 + $0xa4] sm:$0xf]
      %v297 = vld [vmem:[%s254 + $0xa8] sm:$0xf]
      %v298 = vld [vmem:[%s254 + $0xac] sm:$0x1]
      %v299 = vld [vmem:[%s254 + $0xb0] sm:$0xf]
      %v300 = vld [vmem:[%s254 + $0xb4] sm:$0xf]
      %v301 = vld [vmem:[%s254 + $0xb8] sm:$0xf]
      %v302 = vld [vmem:[%s254 + $0xbc] sm:$0x1]
      %v303 = vld [vmem:[%s254 + $0xc0] sm:$0xf]
      %v304 = vld [vmem:[%s254 + $0xc4] sm:$0xf]
      %v305 = vld [vmem:[%s254 + $0xc8] sm:$0xf]
      %v306 = vld [vmem:[%s254 + $0xcc] sm:$0x1]
      %v307 = vld [vmem:[%s254 + $0xd0] sm:$0xf]
      %v308 = vld [vmem:[%s254 + $0xd4] sm:$0xf]
      %v309 = vld [vmem:[%s254 + $0xd8] sm:$0xf]
      %v310 = vld [vmem:[%s254 + $0xdc] sm:$0x1]
      %v311 = vld [vmem:[%s254 + $0xe0] sm:$0xf]
      %v312 = vld [vmem:[%s254 + $0xe4] sm:$0xf]
      %v313 = vld [vmem:[%s254 + $0xe8] sm:$0xf]
      %v314 = vld [vmem:[%s254 + $0xec] sm:$0x1]
      %v315 = vld [vmem:[%s254 + $0xf0] sm:$0xf]
      %v316 = vld [vmem:[%s254 + $0xf4] sm:$0xf]
      %v317 = vld [vmem:[%s254 + $0xf8] sm:$0xf]
      %v318 = vld [vmem:[%s254 + $0xfc] sm:$0x1]
      %v319 = vld [vmem:[%s254 + $0x100] sm:$0xf]
      %v320 = vld [vmem:[%s254 + $0x104] sm:$0xf]
      %v321 = vld [vmem:[%s254 + $0x108] sm:$0xf]
      %v322 = vld [vmem:[%s254 + $0x10c] sm:$0x1]
      %v323 = vld [vmem:[%s254 + $0x110] sm:$0xf]
      %v324 = vld [vmem:[%s254 + $0x114] sm:$0xf]
      %v325 = vld [vmem:[%s254 + $0x118] sm:$0xf]
      %v326 = vld [vmem:[%s254 + $0x11c] sm:$0x1]
      %v327 = vld [vmem:[%s254 + $0x120] sm:$0xf]
      %v328 = vld [vmem:[%s254 + $0x124] sm:$0xf]
      %v329 = vld [vmem:[%s254 + $0x128] sm:$0xf]
      %v330 = vld [vmem:[%s254 + $0x12c] sm:$0x1]
      %v331 = vld [vmem:[%s254 + $0x130] sm:$0xf]
      %v332 = vld [vmem:[%s254 + $0x134] sm:$0xf]
      %v333 = vld [vmem:[%s254 + $0x138] sm:$0xf]
      %v334 = vld [vmem:[%s254 + $0x13c] sm:$0x1]
      %v395 = vunpack.c.l.b16 %v255
      %v396 = vunpack.c.l.b16 %v256
      %v397 = vunpack.c.l.b16 %v257
      %v398 = vunpack.c.l.b16 %v259
      %v399 = vunpack.c.l.b16 %v260
      %v400 = vunpack.c.l.b16 %v261
      %v401 = vunpack.c.l.b16 %v263
      %v402 = vunpack.c.l.b16 %v264
      %v403 = vunpack.c.l.b16 %v265
      %v404 = vunpack.c.l.b16 %v267
      %v405 = vunpack.c.l.b16 %v268
      %v406 = vunpack.c.l.b16 %v269
      %v407 = vunpack.c.l.b16 %v271
      %v408 = vunpack.c.l.b16 %v272
      %v409 = vunpack.c.l.b16 %v273
      %v410 = vunpack.c.l.b16 %v275
      %v411 = vunpack.c.l.b16 %v276
      %v412 = vunpack.c.l.b16 %v277
      %v413 = vunpack.c.l.b16 %v279
      %v414 = vunpack.c.l.b16 %v280
      %v415 = vunpack.c.l.b16 %v281
      %v416 = vunpack.c.l.b16 %v283
      %v417 = vunpack.c.l.b16 %v284
      %v418 = vunpack.c.l.b16 %v285
      %v419 = vunpack.c.l.b16 %v287
      %v420 = vunpack.c.l.b16 %v288
      %v421 = vunpack.c.l.b16 %v289
      %v422 = vunpack.c.l.b16 %v291
      %v423 = vunpack.c.l.b16 %v292
      %v424 = vunpack.c.l.b16 %v293
      %v425 = vunpack.c.l.b16 %v295
      %v426 = vunpack.c.l.b16 %v296
      %v427 = vunpack.c.l.b16 %v297
      %v428 = vunpack.c.l.b16 %v299
      %v429 = vunpack.c.l.b16 %v300
      %v430 = vunpack.c.l.b16 %v301
      %v431 = vunpack.c.l.b16 %v303
      %v432 = vunpack.c.l.b16 %v304
      %v433 = vunpack.c.l.b16 %v305
      %v434 = vunpack.c.l.b16 %v307
      %v435 = vunpack.c.l.b16 %v308
      %v436 = vunpack.c.l.b16 %v309
      %v437 = vunpack.c.l.b16 %v311
      %v438 = vunpack.c.l.b16 %v312
      %v439 = vunpack.c.l.b16 %v313
      %v440 = vunpack.c.l.b16 %v315
      %v441 = vunpack.c.l.b16 %v316
      %v442 = vunpack.c.l.b16 %v317
      %v443 = vunpack.c.l.b16 %v319
      %v444 = vunpack.c.l.b16 %v320
      %v445 = vunpack.c.l.b16 %v321
      %v446 = vunpack.c.l.b16 %v323
      %v447 = vunpack.c.l.b16 %v324
      %v448 = vunpack.c.l.b16 %v325
      %v449 = vunpack.c.l.b16 %v327
      %v450 = vunpack.c.l.b16 %v328
      %v451 = vunpack.c.l.b16 %v329
      %v452 = vunpack.c.l.b16 %v331
      %v453 = vunpack.c.l.b16 %v332
      %v454 = vunpack.c.l.b16 %v333
      %v455 = vpack.c.b16 %v396, %v395
      %v456 = vpack.c.b16 %v397, %v397
      %v457 = vpack.c.b16 %v399, %v398
      %v458 = vpack.c.b16 %v400, %v400
      %v459 = vpack.c.b16 %v402, %v401
      %v460 = vpack.c.b16 %v403, %v403
      %v461 = vpack.c.b16 %v405, %v404
      %v462 = vpack.c.b16 %v406, %v406
      %v463 = vpack.c.b16 %v408, %v407
      %v464 = vpack.c.b16 %v409, %v409
      %v465 = vpack.c.b16 %v411, %v410
      %v466 = vpack.c.b16 %v412, %v412
      %v467 = vpack.c.b16 %v414, %v413
      %v468 = vpack.c.b16 %v415, %v415
      %v469 = vpack.c.b16 %v417, %v416
      %v470 = vpack.c.b16 %v418, %v418
      %v471 = vpack.c.b16 %v420, %v419
      %v472 = vpack.c.b16 %v421, %v421
      %v473 = vpack.c.b16 %v423, %v422
      %v474 = vpack.c.b16 %v424, %v424
      %v475 = vpack.c.b16 %v426, %v425
      %v476 = vpack.c.b16 %v427, %v427
      %v477 = vpack.c.b16 %v429, %v428
      %v478 = vpack.c.b16 %v430, %v430
      %v479 = vpack.c.b16 %v432, %v431
      %v480 = vpack.c.b16 %v433, %v433
      %v481 = vpack.c.b16 %v435, %v434
      %v482 = vpack.c.b16 %v436, %v436
      %v483 = vpack.c.b16 %v438, %v437
      %v484 = vpack.c.b16 %v439, %v439
      %v485 = vpack.c.b16 %v441, %v440
      %v486 = vpack.c.b16 %v442, %v442
      %v487 = vpack.c.b16 %v444, %v443
      %v488 = vpack.c.b16 %v445, %v445
      %v489 = vpack.c.b16 %v447, %v446
      %v490 = vpack.c.b16 %v448, %v448
      %v491 = vpack.c.b16 %v450, %v449
      %v492 = vpack.c.b16 %v451, %v451
      %v493 = vpack.c.b16 %v453, %v452
      %v494 = vpack.c.b16 %v454, %v454
      %v515 = vunpack.c.l.b16 %v258
      %v516 = vunpack.c.l.b16 %v262
      %v517 = vunpack.c.l.b16 %v266
      %v518 = vunpack.c.l.b16 %v270
      %v519 = vunpack.c.l.b16 %v274
      %v520 = vunpack.c.l.b16 %v278
      %v521 = vunpack.c.l.b16 %v282
      %v522 = vunpack.c.l.b16 %v286
      %v523 = vunpack.c.l.b16 %v290
      %v524 = vunpack.c.l.b16 %v294
      %v525 = vunpack.c.l.b16 %v298
      %v526 = vunpack.c.l.b16 %v302
      %v527 = vunpack.c.l.b16 %v306
      %v528 = vunpack.c.l.b16 %v310
      %v529 = vunpack.c.l.b16 %v314
      %v530 = vunpack.c.l.b16 %v318
      %v531 = vunpack.c.l.b16 %v322
      %v532 = vunpack.c.l.b16 %v326
      %v533 = vunpack.c.l.b16 %v330
      %v534 = vunpack.c.l.b16 %v334
      %v535 = vpack.c.b16 %v515, %v397
      %v536 = vpack.c.b16 %v516, %v400
      %v537 = vpack.c.b16 %v517, %v403
      %v538 = vpack.c.b16 %v518, %v406
      %v539 = vpack.c.b16 %v519, %v409
      %v540 = vpack.c.b16 %v520, %v412
      %v541 = vpack.c.b16 %v521, %v415
      %v542 = vpack.c.b16 %v522, %v418
      %v543 = vpack.c.b16 %v523, %v421
      %v544 = vpack.c.b16 %v524, %v424
      %v545 = vpack.c.b16 %v525, %v427
      %v546 = vpack.c.b16 %v526, %v430
      %v547 = vpack.c.b16 %v527, %v433
      %v548 = vpack.c.b16 %v528, %v436
      %v549 = vpack.c.b16 %v529, %v439
      %v550 = vpack.c.b16 %v530, %v442
      %v551 = vpack.c.b16 %v531, %v445
      %v552 = vpack.c.b16 %v532, %v448
      %v553 = vpack.c.b16 %v533, %v451
      %v554 = vpack.c.b16 %v534, %v454
      %vm555 = vsmask.f32 7424
      %v557 = vshrl.u32 %v455, 16
      %v559 = vshll.u32 %v455, 16
      %v561 = vrot.slane %v559, 1
      %v562 = vor.u32 %v557, %v561
      %v564 = vshll.u32 %v535, 16
      %v566 = vrot.slane %v564, 1
      %v567 = vsel %vm555, %v562, %v566
      %v568 = vshrl.u32 %v535, 16
      %v570 = vor.u32 %v568, %v566
      %v572 = vshrl.u32 %v457, 16
      %v574 = vshll.u32 %v457, 16
      %v576 = vrot.slane %v574, 1
      %v577 = vor.u32 %v572, %v576
      %v579 = vshll.u32 %v536, 16
      %v581 = vrot.slane %v579, 1
      %v582 = vsel %vm555, %v577, %v581
      %v583 = vshrl.u32 %v536, 16
      %v585 = vor.u32 %v583, %v581
      %v587 = vshrl.u32 %v459, 16
      %v589 = vshll.u32 %v459, 16
      %v591 = vrot.slane %v589, 1
      %v592 = vor.u32 %v587, %v591
      %v594 = vshll.u32 %v537, 16
      %v596 = vrot.slane %v594, 1
      %v597 = vsel %vm555, %v592, %v596
      %v598 = vshrl.u32 %v537, 16
      %v600 = vor.u32 %v598, %v596
      %v602 = vshrl.u32 %v461, 16
      %v604 = vshll.u32 %v461, 16
      %v606 = vrot.slane %v604, 1
      %v607 = vor.u32 %v602, %v606
      %v609 = vshll.u32 %v538, 16
      %v611 = vrot.slane %v609, 1
      %v612 = vsel %vm555, %v607, %v611
      %v613 = vshrl.u32 %v538, 16
      %v615 = vor.u32 %v613, %v611
      %v617 = vshrl.u32 %v463, 16
      %v619 = vshll.u32 %v463, 16
      %v621 = vrot.slane %v619, 1
      %v622 = vor.u32 %v617, %v621
      %v624 = vshll.u32 %v539, 16
      %v626 = vrot.slane %v624, 1
      %v627 = vsel %vm555, %v622, %v626
      %v628 = vshrl.u32 %v539, 16
      %v630 = vor.u32 %v628, %v626
      %v632 = vshrl.u32 %v465, 16
      %v634 = vshll.u32 %v465, 16
      %v636 = vrot.slane %v634, 1
      %v637 = vor.u32 %v632, %v636
      %v639 = vshll.u32 %v540, 16
      %v641 = vrot.slane %v639, 1
      %v642 = vsel %vm555, %v637, %v641
      %v643 = vshrl.u32 %v540, 16
      %v645 = vor.u32 %v643, %v641
      %v647 = vshrl.u32 %v467, 16
      %v649 = vshll.u32 %v467, 16
      %v651 = vrot.slane %v649, 1
      %v652 = vor.u32 %v647, %v651
      %v654 = vshll.u32 %v541, 16
      %v656 = vrot.slane %v654, 1
      %v657 = vsel %vm555, %v652, %v656
      %v658 = vshrl.u32 %v541, 16
      %v660 = vor.u32 %v658, %v656
      %v662 = vshrl.u32 %v469, 16
      %v664 = vshll.u32 %v469, 16
      %v666 = vrot.slane %v664, 1
      %v667 = vor.u32 %v662, %v666
      %v669 = vshll.u32 %v542, 16
      %v671 = vrot.slane %v669, 1
      %v672 = vsel %vm555, %v667, %v671
      %v673 = vshrl.u32 %v542, 16
      %v675 = vor.u32 %v673, %v671
      %v677 = vshrl.u32 %v471, 16
      %v679 = vshll.u32 %v471, 16
      %v681 = vrot.slane %v679, 1
      %v682 = vor.u32 %v677, %v681
      %v684 = vshll.u32 %v543, 16
      %v686 = vrot.slane %v684, 1
      %v687 = vsel %vm555, %v682, %v686
      %v688 = vshrl.u32 %v543, 16
      %v690 = vor.u32 %v688, %v686
      %v692 = vshrl.u32 %v473, 16
      %v694 = vshll.u32 %v473, 16
      %v696 = vrot.slane %v694, 1
      %v697 = vor.u32 %v692, %v696
      %v699 = vshll.u32 %v544, 16
      %v701 = vrot.slane %v699, 1
      %v702 = vsel %vm555, %v697, %v701
      %v703 = vshrl.u32 %v544, 16
      %v705 = vor.u32 %v703, %v701
      %v707 = vshrl.u32 %v475, 16
      %v709 = vshll.u32 %v475, 16
      %v711 = vrot.slane %v709, 1
      %v712 = vor.u32 %v707, %v711
      %v714 = vshll.u32 %v545, 16
      %v716 = vrot.slane %v714, 1
      %v717 = vsel %vm555, %v712, %v716
      %v718 = vshrl.u32 %v545, 16
      %v720 = vor.u32 %v718, %v716
      %v722 = vshrl.u32 %v477, 16
      %v724 = vshll.u32 %v477, 16
      %v726 = vrot.slane %v724, 1
      %v727 = vor.u32 %v722, %v726
      %v729 = vshll.u32 %v546, 16
      %v731 = vrot.slane %v729, 1
      %v732 = vsel %vm555, %v727, %v731
      %v733 = vshrl.u32 %v546, 16
      %v735 = vor.u32 %v733, %v731
      %v737 = vshrl.u32 %v479, 16
      %v739 = vshll.u32 %v479, 16
      %v741 = vrot.slane %v739, 1
      %v742 = vor.u32 %v737, %v741
      %v744 = vshll.u32 %v547, 16
      %v746 = vrot.slane %v744, 1
      %v747 = vsel %vm555, %v742, %v746
      %v748 = vshrl.u32 %v547, 16
      %v750 = vor.u32 %v748, %v746
      %v752 = vshrl.u32 %v481, 16
      %v754 = vshll.u32 %v481, 16
      %v756 = vrot.slane %v754, 1
      %v757 = vor.u32 %v752, %v756
      %v759 = vshll.u32 %v548, 16
      %v761 = vrot.slane %v759, 1
      %v762 = vsel %vm555, %v757, %v761
      %v763 = vshrl.u32 %v548, 16
      %v765 = vor.u32 %v763, %v761
      %v767 = vshrl.u32 %v483, 16
      %v769 = vshll.u32 %v483, 16
      %v771 = vrot.slane %v769, 1
      %v772 = vor.u32 %v767, %v771
      %v774 = vshll.u32 %v549, 16
      %v776 = vrot.slane %v774, 1
      %v777 = vsel %vm555, %v772, %v776
      %v778 = vshrl.u32 %v549, 16
      %v780 = vor.u32 %v778, %v776
      %v782 = vshrl.u32 %v485, 16
      %v784 = vshll.u32 %v485, 16
      %v786 = vrot.slane %v784, 1
      %v787 = vor.u32 %v782, %v786
      %v789 = vshll.u32 %v550, 16
      %v791 = vrot.slane %v789, 1
      %v792 = vsel %vm555, %v787, %v791
      %v793 = vshrl.u32 %v550, 16
      %v795 = vor.u32 %v793, %v791
      %v797 = vshrl.u32 %v487, 16
      %v799 = vshll.u32 %v487, 16
      %v801 = vrot.slane %v799, 1
      %v802 = vor.u32 %v797, %v801
      %v804 = vshll.u32 %v551, 16
      %v806 = vrot.slane %v804, 1
      %v807 = vsel %vm555, %v802, %v806
      %v808 = vshrl.u32 %v551, 16
      %v810 = vor.u32 %v808, %v806
      %v812 = vshrl.u32 %v489, 16
      %v814 = vshll.u32 %v489, 16
      %v816 = vrot.slane %v814, 1
      %v817 = vor.u32 %v812, %v816
      %v819 = vshll.u32 %v552, 16
      %v821 = vrot.slane %v819, 1
      %v822 = vsel %vm555, %v817, %v821
      %v823 = vshrl.u32 %v552, 16
      %v825 = vor.u32 %v823, %v821
      %v827 = vshrl.u32 %v491, 16
      %v829 = vshll.u32 %v491, 16
      %v831 = vrot.slane %v829, 1
      %v832 = vor.u32 %v827, %v831
      %v834 = vshll.u32 %v553, 16
      %v836 = vrot.slane %v834, 1
      %v837 = vsel %vm555, %v832, %v836
      %v838 = vshrl.u32 %v553, 16
      %v840 = vor.u32 %v838, %v836
      %v842 = vshrl.u32 %v493, 16
      %v844 = vshll.u32 %v493, 16
      %v846 = vrot.slane %v844, 1
      %v847 = vor.u32 %v842, %v846
      %v849 = vshll.u32 %v554, 16
      %v851 = vrot.slane %v849, 1
      %v852 = vsel %vm555, %v847, %v851
      %v853 = vshrl.u32 %v554, 16
      %v855 = vor.u32 %v853, %v851
      %856 = vrot.lane.b32.xlu0 %v567, 4
      %v857 = vpop.permute.xlu0 %856
      %858 = vrot.lane.b32.xlu0 %v570, 4
      %v859 = vpop.permute.xlu0 %858
      %860 = vrot.lane.b32.xlu0 %v582, 4
      %v861 = vpop.permute.xlu0 %860
      %862 = vrot.lane.b32.xlu0 %v585, 4
      %v863 = vpop.permute.xlu0 %862
      %864 = vrot.lane.b32.xlu0 %v597, 4
      %v865 = vpop.permute.xlu0 %864
      %866 = vrot.lane.b32.xlu0 %v600, 4
      %v867 = vpop.permute.xlu0 %866
      %868 = vrot.lane.b32.xlu0 %v612, 4
      %v869 = vpop.permute.xlu0 %868
      %870 = vrot.lane.b32.xlu0 %v615, 4
      %v871 = vpop.permute.xlu0 %870
      %872 = vrot.lane.b32.xlu0 %v627, 4
      %v873 = vpop.permute.xlu0 %872
      %874 = vrot.lane.b32.xlu0 %v630, 4
      %v875 = vpop.permute.xlu0 %874
      %876 = vrot.lane.b32.xlu0 %v642, 4
      %v877 = vpop.permute.xlu0 %876
      %878 = vrot.lane.b32.xlu0 %v645, 4
      %v879 = vpop.permute.xlu0 %878
      %880 = vrot.lane.b32.xlu0 %v657, 4
      %v881 = vpop.permute.xlu0 %880
      %882 = vrot.lane.b32.xlu0 %v660, 4
      %v883 = vpop.permute.xlu0 %882
      %884 = vrot.lane.b32.xlu0 %v672, 4
      %v885 = vpop.permute.xlu0 %884
      %886 = vrot.lane.b32.xlu0 %v675, 4
      %v887 = vpop.permute.xlu0 %886
      %888 = vrot.lane.b32.xlu0 %v687, 4
      %v889 = vpop.permute.xlu0 %888
      %890 = vrot.lane.b32.xlu0 %v690, 4
      %v891 = vpop.permute.xlu0 %890
      %892 = vrot.lane.b32.xlu0 %v702, 4
      %v893 = vpop.permute.xlu0 %892
      %894 = vrot.lane.b32.xlu0 %v705, 4
      %v895 = vpop.permute.xlu0 %894
      %896 = vrot.lane.b32.xlu0 %v717, 4
      %v897 = vpop.permute.xlu0 %896
      %898 = vrot.lane.b32.xlu0 %v720, 4
      %v899 = vpop.permute.xlu0 %898
      %900 = vrot.lane.b32.xlu0 %v732, 4
      %v901 = vpop.permute.xlu0 %900
      %902 = vrot.lane.b32.xlu0 %v735, 4
      %v903 = vpop.permute.xlu0 %902
      %904 = vrot.lane.b32.xlu0 %v747, 4
      %v905 = vpop.permute.xlu0 %904
      %906 = vrot.lane.b32.xlu0 %v750, 4
      %v907 = vpop.permute.xlu0 %906
      %908 = vrot.lane.b32.xlu0 %v762, 4
      %v909 = vpop.permute.xlu0 %908
      %910 = vrot.lane.b32.xlu0 %v765, 4
      %v911 = vpop.permute.xlu0 %910
      %912 = vrot.lane.b32.xlu0 %v777, 4
      %v913 = vpop.permute.xlu0 %912
      %914 = vrot.lane.b32.xlu0 %v780, 4
      %v915 = vpop.permute.xlu0 %914
      %916 = vrot.lane.b32.xlu0 %v792, 4
      %v917 = vpop.permute.xlu0 %916
      %918 = vrot.lane.b32.xlu0 %v795, 4
      %v919 = vpop.permute.xlu0 %918
      %920 = vrot.lane.b32.xlu0 %v807, 4
      %v921 = vpop.permute.xlu0 %920
      %922 = vrot.lane.b32.xlu0 %v810, 4
      %v923 = vpop.permute.xlu0 %922
      %924 = vrot.lane.b32.xlu0 %v822, 4
      %v925 = vpop.permute.xlu0 %924
      %926 = vrot.lane.b32.xlu0 %v825, 4
      %v927 = vpop.permute.xlu0 %926
      %928 = vrot.lane.b32.xlu0 %v837, 4
      %v929 = vpop.permute.xlu0 %928
      %930 = vrot.lane.b32.xlu0 %v840, 4
      %v931 = vpop.permute.xlu0 %930
      %932 = vrot.lane.b32.xlu0 %v852, 4
      %v933 = vpop.permute.xlu0 %932
      %934 = vrot.lane.b32.xlu0 %v855, 4
      %v935 = vpop.permute.xlu0 %934
      %vm936 = vcmask 1046528
      %v937 = vrot.slane %v455, 1
      %v938 = vrot.slane %v535, 1
      %v939 = vsel %vm936, %v937, %v938
      %v940 = vrot.slane %v457, 1
      %v941 = vrot.slane %v536, 1
      %v942 = vsel %vm936, %v940, %v941
      %v943 = vrot.slane %v459, 1
      %v944 = vrot.slane %v537, 1
      %v945 = vsel %vm936, %v943, %v944
      %v946 = vrot.slane %v461, 1
      %v947 = vrot.slane %v538, 1
      %v948 = vsel %vm936, %v946, %v947
      %v949 = vrot.slane %v463, 1
      %v950 = vrot.slane %v539, 1
      %v951 = vsel %vm936, %v949, %v950
      %v952 = vrot.slane %v465, 1
      %v953 = vrot.slane %v540, 1
      %v954 = vsel %vm936, %v952, %v953
      %v955 = vrot.slane %v467, 1
      %v956 = vrot.slane %v541, 1
      %v957 = vsel %vm936, %v955, %v956
      %v958 = vrot.slane %v469, 1
      %v959 = vrot.slane %v542, 1
      %v960 = vsel %vm936, %v958, %v959
      %v961 = vrot.slane %v471, 1
      %v962 = vrot.slane %v543, 1
      %v963 = vsel %vm936, %v961, %v962
      %v964 = vrot.slane %v473, 1
      %v965 = vrot.slane %v544, 1
      %v966 = vsel %vm936, %v964, %v965
      %v967 = vrot.slane %v475, 1
      %v968 = vrot.slane %v545, 1
      %v969 = vsel %vm936, %v967, %v968
      %v970 = vrot.slane %v477, 1
      %v971 = vrot.slane %v546, 1
      %v972 = vsel %vm936, %v970, %v971
      %v973 = vrot.slane %v479, 1
      %v974 = vrot.slane %v547, 1
      %v975 = vsel %vm936, %v973, %v974
      %v976 = vrot.slane %v481, 1
      %v977 = vrot.slane %v548, 1
      %v978 = vsel %vm936, %v976, %v977
      %v979 = vrot.slane %v483, 1
      %v980 = vrot.slane %v549, 1
      %v981 = vsel %vm936, %v979, %v980
      %v982 = vrot.slane %v485, 1
      %v983 = vrot.slane %v550, 1
      %v984 = vsel %vm936, %v982, %v983
      %v985 = vrot.slane %v487, 1
      %v986 = vrot.slane %v551, 1
      %v987 = vsel %vm936, %v985, %v986
      %v988 = vrot.slane %v489, 1
      %v989 = vrot.slane %v552, 1
      %v990 = vsel %vm936, %v988, %v989
      %v991 = vrot.slane %v491, 1
      %v992 = vrot.slane %v553, 1
      %v993 = vsel %vm936, %v991, %v992
      %v994 = vrot.slane %v493, 1
      %v995 = vrot.slane %v554, 1
      %v996 = vsel %vm936, %v994, %v995
      %997 = vrot.lane.b32.xlu0 %v939, 8
      %v998 = vpop.permute.xlu0 %997
      %999 = vrot.lane.b32.xlu0 %v938, 8
      %v1000 = vpop.permute.xlu0 %999
      %1001 = vrot.lane.b32.xlu0 %v942, 8
      %v1002 = vpop.permute.xlu0 %1001
      %1003 = vrot.lane.b32.xlu0 %v941, 8
      %v1004 = vpop.permute.xlu0 %1003
      %1005 = vrot.lane.b32.xlu0 %v945, 8
      %v1006 = vpop.permute.xlu0 %1005
      %1007 = vrot.lane.b32.xlu0 %v944, 8
      %v1008 = vpop.permute.xlu0 %1007
      %1009 = vrot.lane.b32.xlu0 %v948, 8
      %v1010 = vpop.permute.xlu0 %1009
      %1011 = vrot.lane.b32.xlu0 %v947, 8
      %v1012 = vpop.permute.xlu0 %1011
      %1013 = vrot.lane.b32.xlu0 %v951, 8
      %v1014 = vpop.permute.xlu0 %1013
      %1015 = vrot.lane.b32.xlu0 %v950, 8
      %v1016 = vpop.permute.xlu0 %1015
      %1017 = vrot.lane.b32.xlu0 %v954, 8
      %v1018 = vpop.permute.xlu0 %1017
      %1019 = vrot.lane.b32.xlu0 %v953, 8
      %v1020 = vpop.permute.xlu0 %1019
      %1021 = vrot.lane.b32.xlu0 %v957, 8
      %v1022 = vpop.permute.xlu0 %1021
      %1023 = vrot.lane.b32.xlu0 %v956, 8
      %v1024 = vpop.permute.xlu0 %1023
      %1025 = vrot.lane.b32.xlu0 %v960, 8
      %v1026 = vpop.permute.xlu0 %1025
      %1027 = vrot.lane.b32.xlu0 %v959, 8
      %v1028 = vpop.permute.xlu0 %1027
      %1029 = vrot.lane.b32.xlu0 %v963, 8
      %v1030 = vpop.permute.xlu0 %1029
      %1031 = vrot.lane.b32.xlu0 %v962, 8
      %v1032 = vpop.permute.xlu0 %1031
      %1033 = vrot.lane.b32.xlu0 %v966, 8
      %v1034 = vpop.permute.xlu0 %1033
      %1035 = vrot.lane.b32.xlu0 %v965, 8
      %v1036 = vpop.permute.xlu0 %1035
      %1037 = vrot.lane.b32.xlu0 %v969, 8
      %v1038 = vpop.permute.xlu0 %1037
      %1039 = vrot.lane.b32.xlu0 %v968, 8
      %v1040 = vpop.permute.xlu0 %1039
      %1041 = vrot.lane.b32.xlu0 %v972, 8
      %v1042 = vpop.permute.xlu0 %1041
      %1043 = vrot.lane.b32.xlu0 %v971, 8
      %v1044 = vpop.permute.xlu0 %1043
      %1045 = vrot.lane.b32.xlu0 %v975, 8
      %v1046 = vpop.permute.xlu0 %1045
      %1047 = vrot.lane.b32.xlu0 %v974, 8
      %v1048 = vpop.permute.xlu0 %1047
      %1049 = vrot.lane.b32.xlu0 %v978, 8
      %v1050 = vpop.permute.xlu0 %1049
      %1051 = vrot.lane.b32.xlu0 %v977, 8
      %v1052 = vpop.permute.xlu0 %1051
      %1053 = vrot.lane.b32.xlu0 %v981, 8
      %v1054 = vpop.permute.xlu0 %1053
      %1055 = vrot.lane.b32.xlu0 %v980, 8
      %v1056 = vpop.permute.xlu0 %1055
      %1057 = vrot.lane.b32.xlu0 %v984, 8
      %v1058 = vpop.permute.xlu0 %1057
      %1059 = vrot.lane.b32.xlu0 %v983, 8
      %v1060 = vpop.permute.xlu0 %1059
      %1061 = vrot.lane.b32.xlu0 %v987, 8
      %v1062 = vpop.permute.xlu0 %1061
      %1063 = vrot.lane.b32.xlu0 %v986, 8
      %v1064 = vpop.permute.xlu0 %1063
      %1065 = vrot.lane.b32.xlu0 %v990, 8
      %v1066 = vpop.permute.xlu0 %1065
      %1067 = vrot.lane.b32.xlu0 %v989, 8
      %v1068 = vpop.permute.xlu0 %1067
      %1069 = vrot.lane.b32.xlu0 %v993, 8
      %v1070 = vpop.permute.xlu0 %1069
      %1071 = vrot.lane.b32.xlu0 %v992, 8
      %v1072 = vpop.permute.xlu0 %1071
      %1073 = vrot.lane.b32.xlu0 %v996, 8
      %v1074 = vpop.permute.xlu0 %1073
      %1075 = vrot.lane.b32.xlu0 %v995, 8
      %v1076 = vpop.permute.xlu0 %1075
      %vm1077 = vcmask 31744
      %v1079 = vsel %vm1077, %v455, %v857
      %v1082 = vsel %vm1077, %v456, %v859
      %v1084 = vsel %vm1077, %v457, %v861
      %v1087 = vsel %vm1077, %v458, %v863
      %v1089 = vsel %vm1077, %v459, %v865
      %v1092 = vsel %vm1077, %v460, %v867
      %v1094 = vsel %vm1077, %v461, %v869
      %v1097 = vsel %vm1077, %v462, %v871
      %v1099 = vsel %vm1077, %v463, %v873
      %v1102 = vsel %vm1077, %v464, %v875
      %v1104 = vsel %vm1077, %v465, %v877
      %v1107 = vsel %vm1077, %v466, %v879
      %v1109 = vsel %vm1077, %v467, %v881
      %v1112 = vsel %vm1077, %v468, %v883
      %v1114 = vsel %vm1077, %v469, %v885
      %v1117 = vsel %vm1077, %v470, %v887
      %v1119 = vsel %vm1077, %v471, %v889
      %v1122 = vsel %vm1077, %v472, %v891
      %v1124 = vsel %vm1077, %v473, %v893
      %v1127 = vsel %vm1077, %v474, %v895
      %v1129 = vsel %vm1077, %v475, %v897
      %v1132 = vsel %vm1077, %v476, %v899
      %v1134 = vsel %vm1077, %v477, %v901
      %v1137 = vsel %vm1077, %v478, %v903
      %v1139 = vsel %vm1077, %v479, %v905
      %v1142 = vsel %vm1077, %v480, %v907
      %v1144 = vsel %vm1077, %v481, %v909
      %v1147 = vsel %vm1077, %v482, %v911
      %v1149 = vsel %vm1077, %v483, %v913
      %v1152 = vsel %vm1077, %v484, %v915
      %v1154 = vsel %vm1077, %v485, %v917
      %v1157 = vsel %vm1077, %v486, %v919
      %v1159 = vsel %vm1077, %v487, %v921
      %v1162 = vsel %vm1077, %v488, %v923
      %v1164 = vsel %vm1077, %v489, %v925
      %v1167 = vsel %vm1077, %v490, %v927
      %v1169 = vsel %vm1077, %v491, %v929
      %v1172 = vsel %vm1077, %v492, %v931
      %v1174 = vsel %vm1077, %v493, %v933
      %v1177 = vsel %vm1077, %v494, %v935
      %vm1178 = vcmask 64512
      %v1180 = vsel %vm1178, %v1079, %v998
      %v1182 = vsel %vm1178, %v1082, %v1000
      %v1184 = vsel %vm1178, %v1084, %v1002
      %v1186 = vsel %vm1178, %v1087, %v1004
      %v1188 = vsel %vm1178, %v1089, %v1006
      %v1190 = vsel %vm1178, %v1092, %v1008
      %v1192 = vsel %vm1178, %v1094, %v1010
      %v1194 = vsel %vm1178, %v1097, %v1012
      %v1196 = vsel %vm1178, %v1099, %v1014
      %v1198 = vsel %vm1178, %v1102, %v1016
      %v1200 = vsel %vm1178, %v1104, %v1018
      %v1202 = vsel %vm1178, %v1107, %v1020
      %v1204 = vsel %vm1178, %v1109, %v1022
      %v1206 = vsel %vm1178, %v1112, %v1024
      %v1208 = vsel %vm1178, %v1114, %v1026
      %v1210 = vsel %vm1178, %v1117, %v1028
      %v1212 = vsel %vm1178, %v1119, %v1030
      %v1214 = vsel %vm1178, %v1122, %v1032
      %v1216 = vsel %vm1178, %v1124, %v1034
      %v1218 = vsel %vm1178, %v1127, %v1036
      %v1220 = vsel %vm1178, %v1129, %v1038
      %v1222 = vsel %vm1178, %v1132, %v1040
      %v1224 = vsel %vm1178, %v1134, %v1042
      %v1226 = vsel %vm1178, %v1137, %v1044
      %v1228 = vsel %vm1178, %v1139, %v1046
      %v1230 = vsel %vm1178, %v1142, %v1048
      %v1232 = vsel %vm1178, %v1144, %v1050
      %v1234 = vsel %vm1178, %v1147, %v1052
      %v1236 = vsel %vm1178, %v1149, %v1054
      %v1238 = vsel %vm1178, %v1152, %v1056
      %v1240 = vsel %vm1178, %v1154, %v1058
      %v1242 = vsel %vm1178, %v1157, %v1060
      %v1244 = vsel %vm1178, %v1159, %v1062
      %v1246 = vsel %vm1178, %v1162, %v1064
      %v1248 = vsel %vm1178, %v1164, %v1066
      %v1250 = vsel %vm1178, %v1167, %v1068
      %v1252 = vsel %vm1178, %v1169, %v1070
      %v1254 = vsel %vm1178, %v1172, %v1072
      %v1256 = vsel %vm1178, %v1174, %v1074
      %v1258 = vsel %vm1178, %v1177, %v1076
      %v1295 = vunpack.c.l.b16 %v1180
      %v1296 = vunpack.c.h.b16 %v1180
      %v1297 = vunpack.c.l.b16 %v1182
      %v1298 = vunpack.c.l.b16 %v1184
      %v1299 = vunpack.c.h.b16 %v1184
      %v1300 = vunpack.c.l.b16 %v1186
      %v1301 = vunpack.c.l.b16 %v1188
      %v1302 = vunpack.c.h.b16 %v1188
      %v1303 = vunpack.c.l.b16 %v1190
      %v1304 = vunpack.c.l.b16 %v1192
      %v1305 = vunpack.c.h.b16 %v1192
      %v1306 = vunpack.c.l.b16 %v1194
      %v1307 = vunpack.c.l.b16 %v1196
      %v1308 = vunpack.c.h.b16 %v1196
      %v1309 = vunpack.c.l.b16 %v1198
      %v1310 = vunpack.c.l.b16 %v1200
      %v1311 = vunpack.c.h.b16 %v1200
      %v1312 = vunpack.c.l.b16 %v1202
      %v1313 = vunpack.c.l.b16 %v1204
      %v1314 = vunpack.c.h.b16 %v1204
      %v1315 = vunpack.c.l.b16 %v1206
      %v1316 = vunpack.c.l.b16 %v1208
      %v1317 = vunpack.c.h.b16 %v1208
      %v1318 = vunpack.c.l.b16 %v1210
      %v1319 = vunpack.c.l.b16 %v1212
      %v1320 = vunpack.c.h.b16 %v1212
      %v1321 = vunpack.c.l.b16 %v1214
      %v1322 = vunpack.c.l.b16 %v1216
      %v1323 = vunpack.c.h.b16 %v1216
      %v1324 = vunpack.c.l.b16 %v1218
      %v1325 = vunpack.c.l.b16 %v1220
      %v1326 = vunpack.c.h.b16 %v1220
      %v1327 = vunpack.c.l.b16 %v1222
      %v1328 = vunpack.c.l.b16 %v1224
      %v1329 = vunpack.c.h.b16 %v1224
      %v1330 = vunpack.c.l.b16 %v1226
      %v1331 = vunpack.c.l.b16 %v1228
      %v1332 = vunpack.c.h.b16 %v1228
      %v1333 = vunpack.c.l.b16 %v1230
      %v1334 = vunpack.c.l.b16 %v1232
      %v1335 = vunpack.c.h.b16 %v1232
      %v1336 = vunpack.c.l.b16 %v1234
      %v1337 = vunpack.c.l.b16 %v1236
      %v1338 = vunpack.c.h.b16 %v1236
      %v1339 = vunpack.c.l.b16 %v1238
      %v1340 = vunpack.c.l.b16 %v1240
      %v1341 = vunpack.c.h.b16 %v1240
      %v1342 = vunpack.c.l.b16 %v1242
      %v1343 = vunpack.c.l.b16 %v1244
      %v1344 = vunpack.c.h.b16 %v1244
      %v1345 = vunpack.c.l.b16 %v1246
      %v1346 = vunpack.c.l.b16 %v1248
      %v1347 = vunpack.c.h.b16 %v1248
      %v1348 = vunpack.c.l.b16 %v1250
      %v1349 = vld [vmem:[%s1] sm:$0xf]
      %v1350 = vld [vmem:[%s1 + $0x4] sm:$0x3]
      %v1353 = vunpack.c.l.b16 %v1252
      %v1354 = vunpack.c.h.b16 %v1252
      %v1355 = vunpack.c.l.b16 %v1254
      %s1356 = scalar_lea.vmem %s1, 8
      %v1357 = vld [vmem:[%s1356] sm:$0xf]
      %v1358 = vld [vmem:[%s1356 + $0x4] sm:$0x3]
      %v1359 = vpack.c.b16 %v1299, %v1298
      %v1360 = vpack.c.b16 %v1301, %v1300
      %v1361 = vpack.c.b16 %v1303, %v1302
      %v1362 = vpack.c.b16 %v1305, %v1304
      %v1363 = vpack.c.b16 %v1307, %v1306
      %v1364 = vpack.c.b16 %v1309, %v1308
      %v1365 = vpack.c.b16 %v1311, %v1310
      %v1366 = vpack.c.b16 %v1313, %v1312
      %v1367 = vpack.c.b16 %v1315, %v1314
      %v1368 = vpack.c.b16 %v1317, %v1316
      %v1369 = vpack.c.b16 %v1319, %v1318
      %v1370 = vpack.c.b16 %v1321, %v1320
      %v1371 = vpack.c.b16 %v1323, %v1322
      %v1372 = vpack.c.b16 %v1325, %v1324
      %v1373 = vpack.c.b16 %v1327, %v1326
      %v1374 = vpack.c.b16 %v1329, %v1328
      %v1375 = vpack.c.b16 %v1331, %v1330
      %v1376 = vpack.c.b16 %v1333, %v1332
      %v1377 = vpack.c.b16 %v1335, %v1334
      %v1378 = vpack.c.b16 %v1337, %v1336
      %v1379 = vpack.c.b16 %v1339, %v1338
      %v1380 = vpack.c.b16 %v1341, %v1340
      %v1381 = vpack.c.b16 %v1343, %v1342
      %v1382 = vpack.c.b16 %v1345, %v1344
      %v1383 = vpack.c.b16 %v1347, %v1346
      %v1384 = vpack.c.b16 %v1353, %v1348
      %v1385 = vpack.c.b16 %v1355, %v1354
      %v1388 = vunpack.c.l.b16 %v1357
      %v1389 = vunpack.c.l.b16 %v1358
      %v1390 = vpack.c.b16 %v1389, %v1388
      %vm1391 = vcmask 97280
      %v1393 = vsel %vm1391, %v1359, 0
      %v1396 = vsel %vm1391, %v1360, 0
      %v1399 = vsel %vm1391, %v1361, 0
      %v1402 = vsel %vm1391, %v1362, 0
      %v1405 = vsel %vm1391, %v1363, 0
      %v1408 = vsel %vm1391, %v1364, 0
      %v1411 = vsel %vm1391, %v1365, 0
      %v1414 = vsel %vm1391, %v1366, 0
      %v1417 = vsel %vm1391, %v1367, 0
      %v1420 = vsel %vm1391, %v1368, 0
      %v1423 = vsel %vm1391, %v1369, 0
      %v1426 = vsel %vm1391, %v1370, 0
      %v1429 = vsel %vm1391, %v1371, 0
      %v1432 = vsel %vm1391, %v1372, 0
      %v1435 = vsel %vm1391, %v1373, 0
      %v1438 = vsel %vm1391, %v1374, 0
      %v1441 = vsel %vm1391, %v1375, 0
      %v1444 = vsel %vm1391, %v1376, 0
      %v1447 = vsel %vm1391, %v1377, 0
      %v1450 = vsel %vm1391, %v1378, 0
      %v1453 = vsel %vm1391, %v1379, 0
      %v1456 = vsel %vm1391, %v1380, 0
      %v1459 = vsel %vm1391, %v1381, 0
      %v1462 = vsel %vm1391, %v1382, 0
      %v1465 = vsel %vm1391, %v1383, 0
      %v1468 = vsel %vm1391, %v1384, 0
      %v1471 = vsel %vm1391, %v1385, 0
      %vm1473 = vcmask 1045504
      %v1475 = vsel %vm1473, %v1390, 0
      %1477 = vmatprep.subr.bf16.mxu0 0
      %1478 = vmatpush1.bf16.msra.mxu0 0
      %1479 = vmatprep.subr.bf16.mxu0 0
      %1480 = vmatpush1.bf16.msra.mxu0 0
      %1481 = vmatprep.subr.bf16.mxu0 0
      %1482 = vmatpush1.bf16.msra.mxu0 0
      %1483 = vmatprep.subr.bf16.mxu0 0
      %1484 = vmatpush1.bf16.msra.mxu0 0
      %1485 = vmatprep.subr.bf16.mxu0 0
      %1486 = vmatpush1.bf16.msra.mxu0 0
      %1487 = vmatprep.subr.bf16.mxu0 0
      %1488 = vmatpush1.bf16.msra.mxu0 0
      %1489 = vmatprep.subr.bf16.mxu0 0
      %1490 = vmatpush1.bf16.msra.mxu0 0
      %1491 = vmatprep.subr.bf16.mxu0 0
      %1492 = vmatpush1.bf16.msra.mxu0 %v1475
      %1493 = vmatprep.subr.bf16.mxu0 0
      %1494 = vmatpush2.bf16.msra.mxu0 0
      %1495 = vmatprep.subr.bf16.mxu0 0
      %1496 = vmatpush2.bf16.msra.mxu0 0
      %1497 = vmatprep.subr.bf16.mxu0 0
      %1498 = vmatpush2.bf16.msra.mxu0 0
      %1499 = vmatprep.subr.bf16.mxu0 0
      %1500 = vmatpush2.bf16.msra.mxu0 0
      %1501 = vmatprep.subr.bf16.mxu0 0
      %1502 = vmatpush2.bf16.msra.mxu0 0
      %1503 = vmatprep.subr.bf16.mxu0 0
      %1504 = vmatpush2.bf16.msra.mxu0 0
      %1505 = vmatprep.subr.bf16.mxu0 0
      %1506 = vmatpush2.bf16.msra.mxu0 0
      %1507 = vmatprep.subr.bf16.mxu0 0
      %1508 = vmatpush2.bf16.msra.mxu0 0
      %1509 = vmatprep.mubr.bf16.mxu0 0
      %1510 = vmatmul.mubr.bf16.gmra.mxu0 %v1393
      %v1511 = vpop.f32.mrf.mxu0
      %v1512 = vadd.f32 0.0, %v1511
      %v1513 = vpop.f32.mrf.mxu0
      %v1514 = vpop.f32.mrf.mxu0
      %v1515 = vadd.f32 0.0, %v1514
      %v1516 = vpop.f32.mrf.mxu0
      %1517 = vmatprep.mubr.bf16.mxu0 0
      %1518 = vmatmul.mubr.bf16.gmra.mxu0 %v1396
      %v1519 = vpop.f32.mrf.mxu0
      %v1520 = vadd.f32 0.0, %v1519
      %v1521 = vpop.f32.mrf.mxu0
      %v1522 = vpop.f32.mrf.mxu0
      %v1523 = vadd.f32 0.0, %v1522
      %v1524 = vpop.f32.mrf.mxu0
      %1525 = vmatprep.mubr.bf16.mxu0 0
      %1526 = vmatmul.mubr.bf16.gmra.mxu0 %v1399
      %v1527 = vpop.f32.mrf.mxu0
      %v1528 = vadd.f32 0.0, %v1527
      %v1529 = vpop.f32.mrf.mxu0
      %v1530 = vpop.f32.mrf.mxu0
      %v1531 = vadd.f32 0.0, %v1530
      %v1532 = vpop.f32.mrf.mxu0
      %1533 = vmatprep.mubr.bf16.mxu0 0
      %1534 = vmatmul.mubr.bf16.gmra.mxu0 %v1402
      %v1535 = vpop.f32.mrf.mxu0
      %v1536 = vadd.f32 0.0, %v1535
      %v1537 = vpop.f32.mrf.mxu0
      %v1538 = vpop.f32.mrf.mxu0
      %v1539 = vadd.f32 0.0, %v1538
      %v1540 = vpop.f32.mrf.mxu0
      %1541 = vmatprep.mubr.bf16.mxu0 0
      %1542 = vmatmul.mubr.bf16.gmra.mxu0 %v1405
      %v1543 = vpop.f32.mrf.mxu0
      %v1544 = vadd.f32 0.0, %v1543
      %v1545 = vpop.f32.mrf.mxu0
      %v1546 = vpop.f32.mrf.mxu0
      %v1547 = vadd.f32 0.0, %v1546
      %v1548 = vpop.f32.mrf.mxu0
      %1549 = vmatprep.mubr.bf16.mxu0 0
      %1550 = vmatmul.mubr.bf16.gmra.mxu0 %v1408
      %v1551 = vpop.f32.mrf.mxu0
      %v1552 = vadd.f32 0.0, %v1551
      %v1553 = vpop.f32.mrf.mxu0
      %v1554 = vpop.f32.mrf.mxu0
      %v1555 = vadd.f32 0.0, %v1554
      %v1556 = vpop.f32.mrf.mxu0
      %1557 = vmatprep.mubr.bf16.mxu0 0
      %1558 = vmatmul.mubr.bf16.gmra.mxu0 %v1411
      %v1559 = vpop.f32.mrf.mxu0
      %v1560 = vadd.f32 0.0, %v1559
      %v1561 = vpop.f32.mrf.mxu0
      %v1562 = vpop.f32.mrf.mxu0
      %v1563 = vadd.f32 0.0, %v1562
      %v1564 = vpop.f32.mrf.mxu0
      %1565 = vmatprep.mubr.bf16.mxu0 0
      %1566 = vmatmul.mubr.bf16.gmra.mxu0 %v1414
      %v1567 = vpop.f32.mrf.mxu0
      %v1568 = vadd.f32 0.0, %v1567
      %v1569 = vpop.f32.mrf.mxu0
      %v1570 = vpop.f32.mrf.mxu0
      %v1571 = vadd.f32 0.0, %v1570
      %v1572 = vpop.f32.mrf.mxu0
      %1573 = vmatprep.mubr.bf16.mxu0 0
      %1574 = vmatmul.mubr.bf16.gmra.mxu0 %v1417
      %v1575 = vpop.f32.mrf.mxu0
      %v1576 = vadd.f32 0.0, %v1575
      %v1577 = vpop.f32.mrf.mxu0
      %v1578 = vpop.f32.mrf.mxu0
      %v1579 = vadd.f32 0.0, %v1578
      %v1580 = vpop.f32.mrf.mxu0
      %1581 = vmatprep.mubr.bf16.mxu0 0
      %1582 = vmatmul.mubr.bf16.gmra.mxu0 %v1420
      %v1583 = vpop.f32.mrf.mxu0
      %v1584 = vadd.f32 0.0, %v1583
      %v1585 = vpop.f32.mrf.mxu0
      %v1586 = vpop.f32.mrf.mxu0
      %v1587 = vadd.f32 0.0, %v1586
      %v1588 = vpop.f32.mrf.mxu0
      %1589 = vmatprep.mubr.bf16.mxu0 0
      %1590 = vmatmul.mubr.bf16.gmra.mxu0 %v1423
      %v1591 = vpop.f32.mrf.mxu0
      %v1592 = vadd.f32 0.0, %v1591
      %v1593 = vpop.f32.mrf.mxu0
      %v1594 = vpop.f32.mrf.mxu0
      %v1595 = vadd.f32 0.0, %v1594
      %v1596 = vpop.f32.mrf.mxu0
      %1597 = vmatprep.mubr.bf16.mxu0 0
      %1598 = vmatmul.mubr.bf16.gmra.mxu0 %v1426
      %v1599 = vpop.f32.mrf.mxu0
      %v1600 = vadd.f32 0.0, %v1599
      %v1601 = vpop.f32.mrf.mxu0
      %v1602 = vpop.f32.mrf.mxu0
      %v1603 = vadd.f32 0.0, %v1602
      %v1604 = vpop.f32.mrf.mxu0
      %1605 = vmatprep.mubr.bf16.mxu0 0
      %1606 = vmatmul.mubr.bf16.gmra.mxu0 %v1429
      %v1607 = vpop.f32.mrf.mxu0
      %v1608 = vadd.f32 0.0, %v1607
      %v1609 = vpop.f32.mrf.mxu0
      %v1610 = vpop.f32.mrf.mxu0
      %v1611 = vadd.f32 0.0, %v1610
      %v1612 = vpop.f32.mrf.mxu0
      %1613 = vmatprep.mubr.bf16.mxu0 0
      %1614 = vmatmul.mubr.bf16.gmra.mxu0 %v1432
      %v1615 = vpop.f32.mrf.mxu0
      %v1616 = vadd.f32 0.0, %v1615
      %v1617 = vpop.f32.mrf.mxu0
      %v1618 = vpop.f32.mrf.mxu0
      %v1619 = vadd.f32 0.0, %v1618
      %v1620 = vpop.f32.mrf.mxu0
      %1621 = vmatprep.mubr.bf16.mxu0 0
      %1622 = vmatmul.mubr.bf16.gmra.mxu0 %v1435
      %v1623 = vpop.f32.mrf.mxu0
      %v1624 = vadd.f32 0.0, %v1623
      %v1625 = vpop.f32.mrf.mxu0
      %v1626 = vpop.f32.mrf.mxu0
      %v1627 = vadd.f32 0.0, %v1626
      %v1628 = vpop.f32.mrf.mxu0
      %1629 = vmatprep.mubr.bf16.mxu0 0
      %1630 = vmatmul.mubr.bf16.gmra.mxu0 %v1438
      %v1631 = vpop.f32.mrf.mxu0
      %v1632 = vadd.f32 0.0, %v1631
      %v1633 = vpop.f32.mrf.mxu0
      %v1634 = vpop.f32.mrf.mxu0
      %v1635 = vadd.f32 0.0, %v1634
      %v1636 = vpop.f32.mrf.mxu0
      %1637 = vmatprep.mubr.bf16.mxu0 0
      %1638 = vmatmul.mubr.bf16.gmra.mxu0 %v1441
      %v1639 = vpop.f32.mrf.mxu0
      %v1640 = vadd.f32 0.0, %v1639
      %v1641 = vpop.f32.mrf.mxu0
      %v1642 = vpop.f32.mrf.mxu0
      %v1643 = vadd.f32 0.0, %v1642
      %v1644 = vpop.f32.mrf.mxu0
      %1645 = vmatprep.mubr.bf16.mxu0 0
      %1646 = vmatmul.mubr.bf16.gmra.mxu0 %v1444
      %v1647 = vpop.f32.mrf.mxu0
      %v1648 = vadd.f32 0.0, %v1647
      %v1649 = vpop.f32.mrf.mxu0
      %v1650 = vpop.f32.mrf.mxu0
      %v1651 = vadd.f32 0.0, %v1650
      %v1652 = vpop.f32.mrf.mxu0
      %1653 = vmatprep.mubr.bf16.mxu0 0
      %1654 = vmatmul.mubr.bf16.gmra.mxu0 %v1447
      %v1655 = vpop.f32.mrf.mxu0
      %v1656 = vadd.f32 0.0, %v1655
      %v1657 = vpop.f32.mrf.mxu0
      %v1658 = vpop.f32.mrf.mxu0
      %v1659 = vadd.f32 0.0, %v1658
      %v1660 = vpop.f32.mrf.mxu0
      %1661 = vmatprep.mubr.bf16.mxu0 0
      %1662 = vmatmul.mubr.bf16.gmra.mxu0 %v1450
      %v1663 = vpop.f32.mrf.mxu0
      %v1664 = vadd.f32 0.0, %v1663
      %v1665 = vpop.f32.mrf.mxu0
      %v1666 = vpop.f32.mrf.mxu0
      %v1667 = vadd.f32 0.0, %v1666
      %v1668 = vpop.f32.mrf.mxu0
      %1669 = vmatprep.mubr.bf16.mxu0 0
      %1670 = vmatmul.mubr.bf16.gmra.mxu0 %v1453
      %v1671 = vpop.f32.mrf.mxu0
      %v1672 = vadd.f32 0.0, %v1671
      %v1673 = vpop.f32.mrf.mxu0
      %v1674 = vpop.f32.mrf.mxu0
      %v1675 = vadd.f32 0.0, %v1674
      %v1676 = vpop.f32.mrf.mxu0
      %1677 = vmatprep.mubr.bf16.mxu0 0
      %1678 = vmatmul.mubr.bf16.gmra.mxu0 %v1456
      %v1679 = vpop.f32.mrf.mxu0
      %v1680 = vadd.f32 0.0, %v1679
      %v1681 = vpop.f32.mrf.mxu0
      %v1682 = vpop.f32.mrf.mxu0
      %v1683 = vadd.f32 0.0, %v1682
      %v1684 = vpop.f32.mrf.mxu0
      %1685 = vmatprep.mubr.bf16.mxu0 0
      %1686 = vmatmul.mubr.bf16.gmra.mxu0 %v1459
      %v1687 = vpop.f32.mrf.mxu0
      %v1688 = vadd.f32 0.0, %v1687
      %v1689 = vpop.f32.mrf.mxu0
      %v1690 = vpop.f32.mrf.mxu0
      %v1691 = vadd.f32 0.0, %v1690
      %v1692 = vpop.f32.mrf.mxu0
      %1693 = vmatprep.mubr.bf16.mxu0 0
      %1694 = vmatmul.mubr.bf16.gmra.mxu0 %v1462
      %v1695 = vpop.f32.mrf.mxu0
      %v1696 = vadd.f32 0.0, %v1695
      %v1697 = vpop.f32.mrf.mxu0
      %v1698 = vpop.f32.mrf.mxu0
      %v1699 = vadd.f32 0.0, %v1698
      %v1700 = vpop.f32.mrf.mxu0
      %1701 = vmatprep.mubr.bf16.mxu0 0
      %1702 = vmatmul.mubr.bf16.gmra.mxu0 %v1465
      %v1703 = vpop.f32.mrf.mxu0
      %v1704 = vadd.f32 0.0, %v1703
      %v1705 = vpop.f32.mrf.mxu0
      %v1706 = vpop.f32.mrf.mxu0
      %v1707 = vadd.f32 0.0, %v1706
      %v1708 = vpop.f32.mrf.mxu0
      %1709 = vmatprep.mubr.bf16.mxu0 0
      %1710 = vmatmul.mubr.bf16.gmra.mxu0 %v1468
      %v1711 = vpop.f32.mrf.mxu0
      %v1712 = vadd.f32 0.0, %v1711
      %v1713 = vpop.f32.mrf.mxu0
      %v1714 = vpop.f32.mrf.mxu0
      %v1715 = vadd.f32 0.0, %v1714
      %v1716 = vpop.f32.mrf.mxu0
      %1717 = vmatprep.mubr.bf16.mxu0 0
      %1718 = vmatmul.mubr.bf16.gmra.mxu0 %v1471
      %v1719 = vpop.f32.mrf.mxu0
      %v1720 = vadd.f32 0.0, %v1719
      %v1721 = vpop.f32.mrf.mxu0
      %v1722 = vpop.f32.mrf.mxu0
      %v1723 = vadd.f32 0.0, %v1722
      %v1724 = vpop.f32.mrf.mxu0
      %1725 = vdwg.mxu0
      %v1726 = vpack.c.b16 %v1296, %v1295
      %v1727 = vpack.c.b16 %v1298, %v1297
      %v1728 = vpack.c.b16 %v1300, %v1299
      %v1729 = vpack.c.b16 %v1302, %v1301
      %v1730 = vpack.c.b16 %v1304, %v1303
      %v1731 = vpack.c.b16 %v1306, %v1305
      %v1732 = vpack.c.b16 %v1308, %v1307
      %v1733 = vpack.c.b16 %v1310, %v1309
      %v1734 = vpack.c.b16 %v1312, %v1311
      %v1735 = vpack.c.b16 %v1314, %v1313
      %v1736 = vpack.c.b16 %v1316, %v1315
      %v1737 = vpack.c.b16 %v1318, %v1317
      %v1738 = vpack.c.b16 %v1320, %v1319
      %v1739 = vpack.c.b16 %v1322, %v1321
      %v1740 = vpack.c.b16 %v1324, %v1323
      %v1741 = vpack.c.b16 %v1326, %v1325
      %v1742 = vpack.c.b16 %v1328, %v1327
      %v1743 = vpack.c.b16 %v1330, %v1329
      %v1744 = vpack.c.b16 %v1332, %v1331
      %v1745 = vpack.c.b16 %v1334, %v1333
      %v1746 = vpack.c.b16 %v1336, %v1335
      %v1747 = vpack.c.b16 %v1338, %v1337
      %v1748 = vpack.c.b16 %v1340, %v1339
      %v1749 = vpack.c.b16 %v1342, %v1341
      %v1750 = vpack.c.b16 %v1344, %v1343
      %v1751 = vpack.c.b16 %v1346, %v1345
      %v1752 = vpack.c.b16 %v1348, %v1347
      %v1755 = vunpack.c.l.b16 %v1349
      %v1756 = vunpack.c.l.b16 %v1350
      %v1757 = vpack.c.b16 %v1756, %v1755
      %v1759 = vsel %vm1391, %v1726, 0
      %v1762 = vsel %vm1391, %v1727, 0
      %v1765 = vsel %vm1391, %v1728, 0
      %v1768 = vsel %vm1391, %v1729, 0
      %v1771 = vsel %vm1391, %v1730, 0
      %v1774 = vsel %vm1391, %v1731, 0
      %v1777 = vsel %vm1391, %v1732, 0
      %v1780 = vsel %vm1391, %v1733, 0
      %v1783 = vsel %vm1391, %v1734, 0
      %v1786 = vsel %vm1391, %v1735, 0
      %v1789 = vsel %vm1391, %v1736, 0
      %v1792 = vsel %vm1391, %v1737, 0
      %v1795 = vsel %vm1391, %v1738, 0
      %v1798 = vsel %vm1391, %v1739, 0
      %v1801 = vsel %vm1391, %v1740, 0
      %v1804 = vsel %vm1391, %v1741, 0
      %v1807 = vsel %vm1391, %v1742, 0
      %v1810 = vsel %vm1391, %v1743, 0
      %v1813 = vsel %vm1391, %v1744, 0
      %v1816 = vsel %vm1391, %v1745, 0
      %v1819 = vsel %vm1391, %v1746, 0
      %v1822 = vsel %vm1391, %v1747, 0
      %v1825 = vsel %vm1391, %v1748, 0
      %v1828 = vsel %vm1391, %v1749, 0
      %v1831 = vsel %vm1391, %v1750, 0
      %v1834 = vsel %vm1391, %v1751, 0
      %v1837 = vsel %vm1391, %v1752, 0
      %v1840 = vsel %vm1473, %v1757, 0
      %1842 = vmatprep.subr.bf16.mxu0 0
      %1843 = vmatpush1.bf16.msra.mxu0 0
      %1844 = vmatprep.subr.bf16.mxu0 0
      %1845 = vmatpush1.bf16.msra.mxu0 0
      %1846 = vmatprep.subr.bf16.mxu0 0
      %1847 = vmatpush1.bf16.msra.mxu0 0
      %1848 = vmatprep.subr.bf16.mxu0 0
      %1849 = vmatpush1.bf16.msra.mxu0 0
      %1850 = vmatprep.subr.bf16.mxu0 0
      %1851 = vmatpush1.bf16.msra.mxu0 0
      %1852 = vmatprep.subr.bf16.mxu0 0
      %1853 = vmatpush1.bf16.msra.mxu0 0
      %1854 = vmatprep.subr.bf16.mxu0 0
      %1855 = vmatpush1.bf16.msra.mxu0 0
      %1856 = vmatprep.subr.bf16.mxu0 0
      %1857 = vmatpush1.bf16.msra.mxu0 %v1840
      %1858 = vmatprep.subr.bf16.mxu0 0
      %1859 = vmatpush2.bf16.msra.mxu0 0
      %1860 = vmatprep.subr.bf16.mxu0 0
      %1861 = vmatpush2.bf16.msra.mxu0 0
      %1862 = vmatprep.subr.bf16.mxu0 0
      %1863 = vmatpush2.bf16.msra.mxu0 0
      %1864 = vmatprep.subr.bf16.mxu0 0
      %1865 = vmatpush2.bf16.msra.mxu0 0
      %1866 = vmatprep.subr.bf16.mxu0 0
      %1867 = vmatpush2.bf16.msra.mxu0 0
      %1868 = vmatprep.subr.bf16.mxu0 0
      %1869 = vmatpush2.bf16.msra.mxu0 0
      %1870 = vmatprep.subr.bf16.mxu0 0
      %1871 = vmatpush2.bf16.msra.mxu0 0
      %1872 = vmatprep.subr.bf16.mxu0 0
      %1873 = vmatpush2.bf16.msra.mxu0 0
      %1874 = vmatprep.mubr.bf16.mxu0 0
      %1875 = vmatmul.mubr.bf16.gmra.mxu0 %v1759
      %v1876 = vpop.f32.mrf.mxu0
      %v1877 = vadd.f32 %v1512, %v1876
      %v1878 = vpop.f32.mrf.mxu0
      %v1879 = vpop.f32.mrf.mxu0
      %v1880 = vadd.f32 %v1515, %v1879
      %v1881 = vpop.f32.mrf.mxu0
      %1882 = vmatprep.mubr.bf16.mxu0 0
      %1883 = vmatmul.mubr.bf16.gmra.mxu0 %v1762
      %v1884 = vpop.f32.mrf.mxu0
      %v1885 = vadd.f32 %v1520, %v1884
      %v1886 = vpop.f32.mrf.mxu0
      %v1887 = vpop.f32.mrf.mxu0
      %v1888 = vadd.f32 %v1523, %v1887
      %v1889 = vpop.f32.mrf.mxu0
      %1890 = vmatprep.mubr.bf16.mxu0 0
      %1891 = vmatmul.mubr.bf16.gmra.mxu0 %v1765
      %v1892 = vpop.f32.mrf.mxu0
      %v1893 = vadd.f32 %v1528, %v1892
      %v1894 = vpop.f32.mrf.mxu0
      %v1895 = vpop.f32.mrf.mxu0
      %v1896 = vadd.f32 %v1531, %v1895
      %v1897 = vpop.f32.mrf.mxu0
      %1898 = vmatprep.mubr.bf16.mxu0 0
      %1899 = vmatmul.mubr.bf16.gmra.mxu0 %v1768
      %v1900 = vpop.f32.mrf.mxu0
      %v1901 = vadd.f32 %v1536, %v1900
      %v1902 = vpop.f32.mrf.mxu0
      %v1903 = vpop.f32.mrf.mxu0
      %v1904 = vadd.f32 %v1539, %v1903
      %v1905 = vpop.f32.mrf.mxu0
      %1906 = vmatprep.mubr.bf16.mxu0 0
      %1907 = vmatmul.mubr.bf16.gmra.mxu0 %v1771
      %v1908 = vpop.f32.mrf.mxu0
      %v1909 = vadd.f32 %v1544, %v1908
      %v1910 = vpop.f32.mrf.mxu0
      %v1911 = vpop.f32.mrf.mxu0
      %v1912 = vadd.f32 %v1547, %v1911
      %v1913 = vpop.f32.mrf.mxu0
      %1914 = vmatprep.mubr.bf16.mxu0 0
      %1915 = vmatmul.mubr.bf16.gmra.mxu0 %v1774
      %v1916 = vpop.f32.mrf.mxu0
      %v1917 = vadd.f32 %v1552, %v1916
      %v1918 = vpop.f32.mrf.mxu0
      %v1919 = vpop.f32.mrf.mxu0
      %v1920 = vadd.f32 %v1555, %v1919
      %v1921 = vpop.f32.mrf.mxu0
      %1922 = vmatprep.mubr.bf16.mxu0 0
      %1923 = vmatmul.mubr.bf16.gmra.mxu0 %v1777
      %v1924 = vpop.f32.mrf.mxu0
      %v1925 = vadd.f32 %v1560, %v1924
      %v1926 = vpop.f32.mrf.mxu0
      %v1927 = vpop.f32.mrf.mxu0
      %v1928 = vadd.f32 %v1563, %v1927
      %v1929 = vpop.f32.mrf.mxu0
      %1930 = vmatprep.mubr.bf16.mxu0 0
      %1931 = vmatmul.mubr.bf16.gmra.mxu0 %v1780
      %v1932 = vpop.f32.mrf.mxu0
      %v1933 = vadd.f32 %v1568, %v1932
      %v1934 = vpop.f32.mrf.mxu0
      %v1935 = vpop.f32.mrf.mxu0
      %v1936 = vadd.f32 %v1571, %v1935
      %v1937 = vpop.f32.mrf.mxu0
      %1938 = vmatprep.mubr.bf16.mxu0 0
      %1939 = vmatmul.mubr.bf16.gmra.mxu0 %v1783
      %v1940 = vpop.f32.mrf.mxu0
      %v1941 = vadd.f32 %v1576, %v1940
      %v1942 = vpop.f32.mrf.mxu0
      %v1943 = vpop.f32.mrf.mxu0
      %v1944 = vadd.f32 %v1579, %v1943
      %v1945 = vpop.f32.mrf.mxu0
      %1946 = vmatprep.mubr.bf16.mxu0 0
      %1947 = vmatmul.mubr.bf16.gmra.mxu0 %v1786
      %v1948 = vpop.f32.mrf.mxu0
      %v1949 = vadd.f32 %v1584, %v1948
      %v1950 = vpop.f32.mrf.mxu0
      %v1951 = vpop.f32.mrf.mxu0
      %v1952 = vadd.f32 %v1587, %v1951
      %v1953 = vpop.f32.mrf.mxu0
      %1954 = vmatprep.mubr.bf16.mxu0 0
      %1955 = vmatmul.mubr.bf16.gmra.mxu0 %v1789
      %v1956 = vpop.f32.mrf.mxu0
      %v1957 = vadd.f32 %v1592, %v1956
      %v1958 = vpop.f32.mrf.mxu0
      %v1959 = vpop.f32.mrf.mxu0
      %v1960 = vadd.f32 %v1595, %v1959
      %v1961 = vpop.f32.mrf.mxu0
      %1962 = vmatprep.mubr.bf16.mxu0 0
      %1963 = vmatmul.mubr.bf16.gmra.mxu0 %v1792
      %v1964 = vpop.f32.mrf.mxu0
      %v1965 = vadd.f32 %v1600, %v1964
      %v1966 = vpop.f32.mrf.mxu0
      %v1967 = vpop.f32.mrf.mxu0
      %v1968 = vadd.f32 %v1603, %v1967
      %v1969 = vpop.f32.mrf.mxu0
      %1970 = vmatprep.mubr.bf16.mxu0 0
      %1971 = vmatmul.mubr.bf16.gmra.mxu0 %v1795
      %v1972 = vpop.f32.mrf.mxu0
      %v1973 = vadd.f32 %v1608, %v1972
      %v1974 = vpop.f32.mrf.mxu0
      %v1975 = vpop.f32.mrf.mxu0
      %v1976 = vadd.f32 %v1611, %v1975
      %v1977 = vpop.f32.mrf.mxu0
      %1978 = vmatprep.mubr.bf16.mxu0 0
      %1979 = vmatmul.mubr.bf16.gmra.mxu0 %v1798
      %v1980 = vpop.f32.mrf.mxu0
      %v1981 = vadd.f32 %v1616, %v1980
      %v1982 = vpop.f32.mrf.mxu0
      %v1983 = vpop.f32.mrf.mxu0
      %v1984 = vadd.f32 %v1619, %v1983
      %v1985 = vpop.f32.mrf.mxu0
      %1986 = vmatprep.mubr.bf16.mxu0 0
      %1987 = vmatmul.mubr.bf16.gmra.mxu0 %v1801
      %v1988 = vpop.f32.mrf.mxu0
      %v1989 = vadd.f32 %v1624, %v1988
      %v1990 = vpop.f32.mrf.mxu0
      %v1991 = vpop.f32.mrf.mxu0
      %v1992 = vadd.f32 %v1627, %v1991
      %v1993 = vpop.f32.mrf.mxu0
      %1994 = vmatprep.mubr.bf16.mxu0 0
      %1995 = vmatmul.mubr.bf16.gmra.mxu0 %v1804
      %v1996 = vpop.f32.mrf.mxu0
      %v1997 = vadd.f32 %v1632, %v1996
      %v1998 = vpop.f32.mrf.mxu0
      %v1999 = vpop.f32.mrf.mxu0
      %v2000 = vadd.f32 %v1635, %v1999
      %v2001 = vpop.f32.mrf.mxu0
      %2002 = vmatprep.mubr.bf16.mxu0 0
      %2003 = vmatmul.mubr.bf16.gmra.mxu0 %v1807
      %v2004 = vpop.f32.mrf.mxu0
      %v2005 = vadd.f32 %v1640, %v2004
      %v2006 = vpop.f32.mrf.mxu0
      %v2007 = vpop.f32.mrf.mxu0
      %v2008 = vadd.f32 %v1643, %v2007
      %v2009 = vpop.f32.mrf.mxu0
      %2010 = vmatprep.mubr.bf16.mxu0 0
      %2011 = vmatmul.mubr.bf16.gmra.mxu0 %v1810
      %v2012 = vpop.f32.mrf.mxu0
      %v2013 = vadd.f32 %v1648, %v2012
      %v2014 = vpop.f32.mrf.mxu0
      %v2015 = vpop.f32.mrf.mxu0
      %v2016 = vadd.f32 %v1651, %v2015
      %v2017 = vpop.f32.mrf.mxu0
      %2018 = vmatprep.mubr.bf16.mxu0 0
      %2019 = vmatmul.mubr.bf16.gmra.mxu0 %v1813
      %v2020 = vpop.f32.mrf.mxu0
      %v2021 = vadd.f32 %v1656, %v2020
      %v2022 = vpop.f32.mrf.mxu0
      %v2023 = vpop.f32.mrf.mxu0
      %v2024 = vadd.f32 %v1659, %v2023
      %v2025 = vpop.f32.mrf.mxu0
      %2026 = vmatprep.mubr.bf16.mxu0 0
      %2027 = vmatmul.mubr.bf16.gmra.mxu0 %v1816
      %v2028 = vpop.f32.mrf.mxu0
      %v2029 = vadd.f32 %v1664, %v2028
      %v2030 = vpop.f32.mrf.mxu0
      %v2031 = vpop.f32.mrf.mxu0
      %v2032 = vadd.f32 %v1667, %v2031
      %v2033 = vpop.f32.mrf.mxu0
      %2034 = vmatprep.mubr.bf16.mxu0 0
      %2035 = vmatmul.mubr.bf16.gmra.mxu0 %v1819
      %v2036 = vpop.f32.mrf.mxu0
      %v2037 = vadd.f32 %v1672, %v2036
      %v2038 = vpop.f32.mrf.mxu0
      %v2039 = vpop.f32.mrf.mxu0
      %v2040 = vadd.f32 %v1675, %v2039
      %v2041 = vpop.f32.mrf.mxu0
      %2042 = vmatprep.mubr.bf16.mxu0 0
      %2043 = vmatmul.mubr.bf16.gmra.mxu0 %v1822
      %v2044 = vpop.f32.mrf.mxu0
      %v2045 = vadd.f32 %v1680, %v2044
      %v2046 = vpop.f32.mrf.mxu0
      %v2047 = vpop.f32.mrf.mxu0
      %v2048 = vadd.f32 %v1683, %v2047
      %v2049 = vpop.f32.mrf.mxu0
      %2050 = vmatprep.mubr.bf16.mxu0 0
      %2051 = vmatmul.mubr.bf16.gmra.mxu0 %v1825
      %v2052 = vpop.f32.mrf.mxu0
      %v2053 = vadd.f32 %v1688, %v2052
      %v2054 = vpop.f32.mrf.mxu0
      %v2055 = vpop.f32.mrf.mxu0
      %v2056 = vadd.f32 %v1691, %v2055
      %v2057 = vpop.f32.mrf.mxu0
      %2058 = vmatprep.mubr.bf16.mxu0 0
      %2059 = vmatmul.mubr.bf16.gmra.mxu0 %v1828
      %v2060 = vpop.f32.mrf.mxu0
      %v2061 = vadd.f32 %v1696, %v2060
      %v2062 = vpop.f32.mrf.mxu0
      %v2063 = vpop.f32.mrf.mxu0
      %v2064 = vadd.f32 %v1699, %v2063
      %v2065 = vpop.f32.mrf.mxu0
      %2066 = vmatprep.mubr.bf16.mxu0 0
      %2067 = vmatmul.mubr.bf16.gmra.mxu0 %v1831
      %v2068 = vpop.f32.mrf.mxu0
      %v2069 = vadd.f32 %v1704, %v2068
      %v2070 = vpop.f32.mrf.mxu0
      %v2071 = vpop.f32.mrf.mxu0
      %v2072 = vadd.f32 %v1707, %v2071
      %v2073 = vpop.f32.mrf.mxu0
      %2074 = vmatprep.mubr.bf16.mxu0 0
      %2075 = vmatmul.mubr.bf16.gmra.mxu0 %v1834
      %v2076 = vpop.f32.mrf.mxu0
      %v2077 = vadd.f32 %v1712, %v2076
      %v2078 = vpop.f32.mrf.mxu0
      %v2079 = vpop.f32.mrf.mxu0
      %v2080 = vadd.f32 %v1715, %v2079
      %v2081 = vpop.f32.mrf.mxu0
      %2082 = vmatprep.mubr.bf16.mxu0 0
      %2083 = vmatmul.mubr.bf16.gmra.mxu0 %v1837
      %v2084 = vpop.f32.mrf.mxu0
      %v2085 = vadd.f32 %v1720, %v2084
      %v2086 = vpop.f32.mrf.mxu0
      %v2087 = vpop.f32.mrf.mxu0
      %v2088 = vadd.f32 %v1723, %v2087
      %v2089 = vpop.f32.mrf.mxu0
      %2090 = vdwg.mxu0
      %v2093 = vunpack.c.l.b16 %v1256
      %v2094 = vunpack.c.h.b16 %v1256
      %v2095 = vunpack.c.l.b16 %v1258
      %s2096 = scalar_lea.vmem %s1, 16
      %v2097 = vld [vmem:[%s2096] sm:$0xf]
      %v2098 = vld [vmem:[%s2096 + $0x4] sm:$0x3]
      %v2099 = vpack.c.b16 %v1354, %v1353
      %v2100 = vpack.c.b16 %v2093, %v1355
      %v2101 = vpack.c.b16 %v2095, %v2094
      %v2104 = vunpack.c.l.b16 %v2097
      %v2105 = vunpack.c.l.b16 %v2098
      %v2106 = vpack.c.b16 %v2105, %v2104
      %v2108 = vsel %vm1391, %v2099, 0
      %v2111 = vsel %vm1391, %v2100, 0
      %v2114 = vsel %vm1391, %v2101, 0
      %v2117 = vsel %vm1473, %v2106, 0
      %2119 = vmatprep.subr.bf16.mxu0 0
      %2120 = vmatpush1.bf16.msra.mxu0 0
      %2121 = vmatprep.subr.bf16.mxu0 0
      %2122 = vmatpush1.bf16.msra.mxu0 0
      %2123 = vmatprep.subr.bf16.mxu0 0
      %2124 = vmatpush1.bf16.msra.mxu0 0
      %2125 = vmatprep.subr.bf16.mxu0 0
      %2126 = vmatpush1.bf16.msra.mxu0 0
      %2127 = vmatprep.subr.bf16.mxu0 0
      %2128 = vmatpush1.bf16.msra.mxu0 0
      %2129 = vmatprep.subr.bf16.mxu0 0
      %2130 = vmatpush1.bf16.msra.mxu0 0
      %2131 = vmatprep.subr.bf16.mxu0 0
      %2132 = vmatpush1.bf16.msra.mxu0 0
      %2133 = vmatprep.subr.bf16.mxu0 0
      %2134 = vmatpush1.bf16.msra.mxu0 %v2117
      %2135 = vmatprep.subr.bf16.mxu0 0
      %2136 = vmatpush2.bf16.msra.mxu0 0
      %2137 = vmatprep.subr.bf16.mxu0 0
      %2138 = vmatpush2.bf16.msra.mxu0 0
      %2139 = vmatprep.subr.bf16.mxu0 0
      %2140 = vmatpush2.bf16.msra.mxu0 0
      %2141 = vmatprep.subr.bf16.mxu0 0
      %2142 = vmatpush2.bf16.msra.mxu0 0
      %2143 = vmatprep.subr.bf16.mxu0 0
      %2144 = vmatpush2.bf16.msra.mxu0 0
      %2145 = vmatprep.subr.bf16.mxu0 0
      %2146 = vmatpush2.bf16.msra.mxu0 0
      %2147 = vmatprep.subr.bf16.mxu0 0
      %2148 = vmatpush2.bf16.msra.mxu0 0
      %2149 = vmatprep.subr.bf16.mxu0 0
      %2150 = vmatpush2.bf16.msra.mxu0 0
      %2151 = vmatprep.mubr.bf16.mxu0 0
      %2152 = vmatmul.mubr.bf16.gmra.mxu0 %v1768
      %v2153 = vpop.f32.mrf.mxu0
      %v2154 = vadd.f32 0.0, %v2153
      %v2155 = vpop.f32.mrf.mxu0
      %v2156 = vpop.f32.mrf.mxu0
      %v2157 = vadd.f32 0.0, %v2156
      %v2158 = vpop.f32.mrf.mxu0
      %2159 = vmatprep.mubr.bf16.mxu0 0
      %2160 = vmatmul.mubr.bf16.gmra.mxu0 %v1771
      %v2161 = vpop.f32.mrf.mxu0
      %v2162 = vadd.f32 0.0, %v2161
      %v2163 = vpop.f32.mrf.mxu0
      %v2164 = vpop.f32.mrf.mxu0
      %v2165 = vadd.f32 0.0, %v2164
      %v2166 = vpop.f32.mrf.mxu0
      %2167 = vmatprep.mubr.bf16.mxu0 0
      %2168 = vmatmul.mubr.bf16.gmra.mxu0 %v1774
      %v2169 = vpop.f32.mrf.mxu0
      %v2170 = vadd.f32 0.0, %v2169
      %v2171 = vpop.f32.mrf.mxu0
      %v2172 = vpop.f32.mrf.mxu0
      %v2173 = vadd.f32 0.0, %v2172
      %v2174 = vpop.f32.mrf.mxu0
      %2175 = vmatprep.mubr.bf16.mxu0 0
      %2176 = vmatmul.mubr.bf16.gmra.mxu0 %v1777
      %v2177 = vpop.f32.mrf.mxu0
      %v2178 = vadd.f32 0.0, %v2177
      %v2179 = vpop.f32.mrf.mxu0
      %v2180 = vpop.f32.mrf.mxu0
      %v2181 = vadd.f32 0.0, %v2180
      %v2182 = vpop.f32.mrf.mxu0
      %2183 = vmatprep.mubr.bf16.mxu0 0
      %2184 = vmatmul.mubr.bf16.gmra.mxu0 %v1780
      %v2185 = vpop.f32.mrf.mxu0
      %v2186 = vadd.f32 0.0, %v2185
      %v2187 = vpop.f32.mrf.mxu0
      %v2188 = vpop.f32.mrf.mxu0
      %v2189 = vadd.f32 0.0, %v2188
      %v2190 = vpop.f32.mrf.mxu0
      %2191 = vmatprep.mubr.bf16.mxu0 0
      %2192 = vmatmul.mubr.bf16.gmra.mxu0 %v1783
      %v2193 = vpop.f32.mrf.mxu0
      %v2194 = vadd.f32 0.0, %v2193
      %v2195 = vpop.f32.mrf.mxu0
      %v2196 = vpop.f32.mrf.mxu0
      %v2197 = vadd.f32 0.0, %v2196
      %v2198 = vpop.f32.mrf.mxu0
      %2199 = vmatprep.mubr.bf16.mxu0 0
      %2200 = vmatmul.mubr.bf16.gmra.mxu0 %v1786
      %v2201 = vpop.f32.mrf.mxu0
      %v2202 = vadd.f32 0.0, %v2201
      %v2203 = vpop.f32.mrf.mxu0
      %v2204 = vpop.f32.mrf.mxu0
      %v2205 = vadd.f32 0.0, %v2204
      %v2206 = vpop.f32.mrf.mxu0
      %2207 = vmatprep.mubr.bf16.mxu0 0
      %2208 = vmatmul.mubr.bf16.gmra.mxu0 %v1789
      %v2209 = vpop.f32.mrf.mxu0
      %v2210 = vadd.f32 0.0, %v2209
      %v2211 = vpop.f32.mrf.mxu0
      %v2212 = vpop.f32.mrf.mxu0
      %v2213 = vadd.f32 0.0, %v2212
      %v2214 = vpop.f32.mrf.mxu0
      %2215 = vmatprep.mubr.bf16.mxu0 0
      %2216 = vmatmul.mubr.bf16.gmra.mxu0 %v1792
      %v2217 = vpop.f32.mrf.mxu0
      %v2218 = vadd.f32 0.0, %v2217
      %v2219 = vpop.f32.mrf.mxu0
      %v2220 = vpop.f32.mrf.mxu0
      %v2221 = vadd.f32 0.0, %v2220
      %v2222 = vpop.f32.mrf.mxu0
      %2223 = vmatprep.mubr.bf16.mxu0 0
      %2224 = vmatmul.mubr.bf16.gmra.mxu0 %v1795
      %v2225 = vpop.f32.mrf.mxu0
      %v2226 = vadd.f32 0.0, %v2225
      %v2227 = vpop.f32.mrf.mxu0
      %v2228 = vpop.f32.mrf.mxu0
      %v2229 = vadd.f32 0.0, %v2228
      %v2230 = vpop.f32.mrf.mxu0
      %2231 = vmatprep.mubr.bf16.mxu0 0
      %2232 = vmatmul.mubr.bf16.gmra.mxu0 %v1798
      %v2233 = vpop.f32.mrf.mxu0
      %v2234 = vadd.f32 0.0, %v2233
      %v2235 = vpop.f32.mrf.mxu0
      %v2236 = vpop.f32.mrf.mxu0
      %v2237 = vadd.f32 0.0, %v2236
      %v2238 = vpop.f32.mrf.mxu0
      %2239 = vmatprep.mubr.bf16.mxu0 0
      %2240 = vmatmul.mubr.bf16.gmra.mxu0 %v1801
      %v2241 = vpop.f32.mrf.mxu0
      %v2242 = vadd.f32 0.0, %v2241
      %v2243 = vpop.f32.mrf.mxu0
      %v2244 = vpop.f32.mrf.mxu0
      %v2245 = vadd.f32 0.0, %v2244
      %v2246 = vpop.f32.mrf.mxu0
      %2247 = vmatprep.mubr.bf16.mxu0 0
      %2248 = vmatmul.mubr.bf16.gmra.mxu0 %v1804
      %v2249 = vpop.f32.mrf.mxu0
      %v2250 = vadd.f32 0.0, %v2249
      %v2251 = vpop.f32.mrf.mxu0
      %v2252 = vpop.f32.mrf.mxu0
      %v2253 = vadd.f32 0.0, %v2252
      %v2254 = vpop.f32.mrf.mxu0
      %2255 = vmatprep.mubr.bf16.mxu0 0
      %2256 = vmatmul.mubr.bf16.gmra.mxu0 %v1807
      %v2257 = vpop.f32.mrf.mxu0
      %v2258 = vadd.f32 0.0, %v2257
      %v2259 = vpop.f32.mrf.mxu0
      %v2260 = vpop.f32.mrf.mxu0
      %v2261 = vadd.f32 0.0, %v2260
      %v2262 = vpop.f32.mrf.mxu0
      %2263 = vmatprep.mubr.bf16.mxu0 0
      %2264 = vmatmul.mubr.bf16.gmra.mxu0 %v1810
      %v2265 = vpop.f32.mrf.mxu0
      %v2266 = vadd.f32 0.0, %v2265
      %v2267 = vpop.f32.mrf.mxu0
      %v2268 = vpop.f32.mrf.mxu0
      %v2269 = vadd.f32 0.0, %v2268
      %v2270 = vpop.f32.mrf.mxu0
      %2271 = vmatprep.mubr.bf16.mxu0 0
      %2272 = vmatmul.mubr.bf16.gmra.mxu0 %v1813
      %v2273 = vpop.f32.mrf.mxu0
      %v2274 = vadd.f32 0.0, %v2273
      %v2275 = vpop.f32.mrf.mxu0
      %v2276 = vpop.f32.mrf.mxu0
      %v2277 = vadd.f32 0.0, %v2276
      %v2278 = vpop.f32.mrf.mxu0
      %2279 = vmatprep.mubr.bf16.mxu0 0
      %2280 = vmatmul.mubr.bf16.gmra.mxu0 %v1816
      %v2281 = vpop.f32.mrf.mxu0
      %v2282 = vadd.f32 0.0, %v2281
      %v2283 = vpop.f32.mrf.mxu0
      %v2284 = vpop.f32.mrf.mxu0
      %v2285 = vadd.f32 0.0, %v2284
      %v2286 = vpop.f32.mrf.mxu0
      %2287 = vmatprep.mubr.bf16.mxu0 0
      %2288 = vmatmul.mubr.bf16.gmra.mxu0 %v1819
      %v2289 = vpop.f32.mrf.mxu0
      %v2290 = vadd.f32 0.0, %v2289
      %v2291 = vpop.f32.mrf.mxu0
      %v2292 = vpop.f32.mrf.mxu0
      %v2293 = vadd.f32 0.0, %v2292
      %v2294 = vpop.f32.mrf.mxu0
      %2295 = vmatprep.mubr.bf16.mxu0 0
      %2296 = vmatmul.mubr.bf16.gmra.mxu0 %v1822
      %v2297 = vpop.f32.mrf.mxu0
      %v2298 = vadd.f32 0.0, %v2297
      %v2299 = vpop.f32.mrf.mxu0
      %v2300 = vpop.f32.mrf.mxu0
      %v2301 = vadd.f32 0.0, %v2300
      %v2302 = vpop.f32.mrf.mxu0
      %2303 = vmatprep.mubr.bf16.mxu0 0
      %2304 = vmatmul.mubr.bf16.gmra.mxu0 %v1825
      %v2305 = vpop.f32.mrf.mxu0
      %v2306 = vadd.f32 0.0, %v2305
      %v2307 = vpop.f32.mrf.mxu0
      %v2308 = vpop.f32.mrf.mxu0
      %v2309 = vadd.f32 0.0, %v2308
      %v2310 = vpop.f32.mrf.mxu0
      %2311 = vmatprep.mubr.bf16.mxu0 0
      %2312 = vmatmul.mubr.bf16.gmra.mxu0 %v1828
      %v2313 = vpop.f32.mrf.mxu0
      %v2314 = vadd.f32 0.0, %v2313
      %v2315 = vpop.f32.mrf.mxu0
      %v2316 = vpop.f32.mrf.mxu0
      %v2317 = vadd.f32 0.0, %v2316
      %v2318 = vpop.f32.mrf.mxu0
      %2319 = vmatprep.mubr.bf16.mxu0 0
      %2320 = vmatmul.mubr.bf16.gmra.mxu0 %v1831
      %v2321 = vpop.f32.mrf.mxu0
      %v2322 = vadd.f32 0.0, %v2321
      %v2323 = vpop.f32.mrf.mxu0
      %v2324 = vpop.f32.mrf.mxu0
      %v2325 = vadd.f32 0.0, %v2324
      %v2326 = vpop.f32.mrf.mxu0
      %2327 = vmatprep.mubr.bf16.mxu0 0
      %2328 = vmatmul.mubr.bf16.gmra.mxu0 %v1834
      %v2329 = vpop.f32.mrf.mxu0
      %v2330 = vadd.f32 0.0, %v2329
      %v2331 = vpop.f32.mrf.mxu0
      %v2332 = vpop.f32.mrf.mxu0
      %v2333 = vadd.f32 0.0, %v2332
      %v2334 = vpop.f32.mrf.mxu0
      %2335 = vmatprep.mubr.bf16.mxu0 0
      %2336 = vmatmul.mubr.bf16.gmra.mxu0 %v1837
      %v2337 = vpop.f32.mrf.mxu0
      %v2338 = vadd.f32 0.0, %v2337
      %v2339 = vpop.f32.mrf.mxu0
      %v2340 = vpop.f32.mrf.mxu0
      %v2341 = vadd.f32 0.0, %v2340
      %v2342 = vpop.f32.mrf.mxu0
      %2343 = vmatprep.mubr.bf16.mxu0 0
      %2344 = vmatmul.mubr.bf16.gmra.mxu0 %v2108
      %v2345 = vpop.f32.mrf.mxu0
      %v2346 = vadd.f32 0.0, %v2345
      %v2347 = vpop.f32.mrf.mxu0
      %v2348 = vpop.f32.mrf.mxu0
      %v2349 = vadd.f32 0.0, %v2348
      %v2350 = vpop.f32.mrf.mxu0
      %2351 = vmatprep.mubr.bf16.mxu0 0
      %2352 = vmatmul.mubr.bf16.gmra.mxu0 %v2111
      %v2353 = vpop.f32.mrf.mxu0
      %v2354 = vadd.f32 0.0, %v2353
      %v2355 = vpop.f32.mrf.mxu0
      %v2356 = vpop.f32.mrf.mxu0
      %v2357 = vadd.f32 0.0, %v2356
      %v2358 = vpop.f32.mrf.mxu0
      %2359 = vmatprep.mubr.bf16.mxu0 0
      %2360 = vmatmul.mubr.bf16.gmra.mxu0 %v2114
      %v2361 = vpop.f32.mrf.mxu0
      %v2362 = vadd.f32 0.0, %v2361
      %v2363 = vpop.f32.mrf.mxu0
      %v2364 = vpop.f32.mrf.mxu0
      %v2365 = vadd.f32 0.0, %v2364
      %v2366 = vpop.f32.mrf.mxu0
      %2367 = vdwg.mxu0
      %v2368 = vadd.f32 %v1877, %v2154
      %v2369 = vadd.f32 %v1880, %v2157
      %v2370 = vadd.f32 %v1885, %v2162
      %v2371 = vadd.f32 %v1888, %v2165
      %v2372 = vadd.f32 %v1893, %v2170
      %v2373 = vadd.f32 %v1896, %v2173
      %v2374 = vadd.f32 %v1901, %v2178
      %v2375 = vadd.f32 %v1904, %v2181
      %v2376 = vadd.f32 %v1909, %v2186
      %v2377 = vadd.f32 %v1912, %v2189
      %v2378 = vadd.f32 %v1917, %v2194
      %v2379 = vadd.f32 %v1920, %v2197
      %v2380 = vadd.f32 %v1925, %v2202
      %v2381 = vadd.f32 %v1928, %v2205
      %v2382 = vadd.f32 %v1933, %v2210
      %v2383 = vadd.f32 %v1936, %v2213
      %v2384 = vadd.f32 %v1941, %v2218
      %v2385 = vadd.f32 %v1944, %v2221
      %v2386 = vadd.f32 %v1949, %v2226
      %v2387 = vadd.f32 %v1952, %v2229
      %v2388 = vadd.f32 %v1957, %v2234
      %v2389 = vadd.f32 %v1960, %v2237
      %v2390 = vadd.f32 %v1965, %v2242
      %v2391 = vadd.f32 %v1968, %v2245
      %v2392 = vadd.f32 %v1973, %v2250
      %v2393 = vadd.f32 %v1976, %v2253
      %v2394 = vadd.f32 %v1981, %v2258
      %v2395 = vadd.f32 %v1984, %v2261
      %v2396 = vadd.f32 %v1989, %v2266
      %v2397 = vadd.f32 %v1992, %v2269
      %v2398 = vadd.f32 %v1997, %v2274
      %v2399 = vadd.f32 %v2000, %v2277
      %v2400 = vadd.f32 %v2005, %v2282
      %v2401 = vadd.f32 %v2008, %v2285
      %v2402 = vadd.f32 %v2013, %v2290
      %v2403 = vadd.f32 %v2016, %v2293
      %v2404 = vadd.f32 %v2021, %v2298
      %v2405 = vadd.f32 %v2024, %v2301
      %v2406 = vadd.f32 %v2029, %v2306
      %v2407 = vadd.f32 %v2032, %v2309
      %v2408 = vadd.f32 %v2037, %v2314
      %v2409 = vadd.f32 %v2040, %v2317
      %v2410 = vadd.f32 %v2045, %v2322
      %v2411 = vadd.f32 %v2048, %v2325
      %v2412 = vadd.f32 %v2053, %v2330
      %v2413 = vadd.f32 %v2056, %v2333
      %v2414 = vadd.f32 %v2061, %v2338
      %v2415 = vadd.f32 %v2064, %v2341
      %v2416 = vadd.f32 %v2069, %v2346
      %v2417 = vadd.f32 %v2072, %v2349
      %v2418 = vadd.f32 %v2077, %v2354
      %v2419 = vadd.f32 %v2080, %v2357
      %v2420 = vadd.f32 %v2085, %v2362
      %v2421 = vadd.f32 %v2088, %v2365
      %v2422 = vld [vmem:[%s3] sm:$0x1]
      %v2424 = vlaneseq
      %v2425 = vshrl.u32 %v2424, 7
      %v2426 = vsub.s32 0, %v2425
      %v2427 = vrot.slane %v2422, %v2426
      %v2429 = vadd.f32 %v2368, %v2427
      %v2430 = vadd.f32 %v2369, %v2427
      %v2431 = vadd.f32 %v2370, %v2427
      %v2432 = vadd.f32 %v2371, %v2427
      %v2433 = vadd.f32 %v2372, %v2427
      %v2434 = vadd.f32 %v2373, %v2427
      %v2435 = vadd.f32 %v2374, %v2427
      %v2436 = vadd.f32 %v2375, %v2427
      %v2437 = vadd.f32 %v2376, %v2427
      %v2438 = vadd.f32 %v2377, %v2427
      %v2439 = vadd.f32 %v2378, %v2427
      %v2440 = vadd.f32 %v2379, %v2427
      %v2441 = vadd.f32 %v2380, %v2427
      %v2442 = vadd.f32 %v2381, %v2427
      %v2443 = vadd.f32 %v2382, %v2427
      %v2444 = vadd.f32 %v2383, %v2427
      %v2445 = vadd.f32 %v2384, %v2427
      %v2446 = vadd.f32 %v2385, %v2427
      %v2447 = vadd.f32 %v2386, %v2427
      %v2448 = vadd.f32 %v2387, %v2427
      %v2449 = vadd.f32 %v2388, %v2427
      %v2450 = vadd.f32 %v2389, %v2427
      %v2451 = vadd.f32 %v2390, %v2427
      %v2452 = vadd.f32 %v2391, %v2427
      %v2453 = vadd.f32 %v2392, %v2427
      %v2454 = vadd.f32 %v2393, %v2427
      %v2455 = vadd.f32 %v2394, %v2427
      %v2456 = vadd.f32 %v2395, %v2427
      %v2457 = vadd.f32 %v2396, %v2427
      %v2458 = vadd.f32 %v2397, %v2427
      %v2459 = vadd.f32 %v2398, %v2427
      %v2460 = vadd.f32 %v2399, %v2427
      %v2461 = vadd.f32 %v2400, %v2427
      %v2462 = vadd.f32 %v2401, %v2427
      %v2463 = vadd.f32 %v2402, %v2427
      %v2464 = vadd.f32 %v2403, %v2427
      %v2465 = vadd.f32 %v2404, %v2427
      %v2466 = vadd.f32 %v2405, %v2427
      %v2467 = vadd.f32 %v2406, %v2427
      %v2468 = vadd.f32 %v2407, %v2427
      %v2469 = vadd.f32 %v2408, %v2427
      %v2470 = vadd.f32 %v2409, %v2427
      %v2471 = vadd.f32 %v2410, %v2427
      %v2472 = vadd.f32 %v2411, %v2427
      %v2473 = vadd.f32 %v2412, %v2427
      %v2474 = vadd.f32 %v2413, %v2427
      %v2475 = vadd.f32 %v2414, %v2427
      %v2476 = vadd.f32 %v2415, %v2427
      %v2477 = vadd.f32 %v2416, %v2427
      %v2478 = vadd.f32 %v2417, %v2427
      %v2479 = vadd.f32 %v2418, %v2427
      %v2480 = vadd.f32 %v2419, %v2427
      %v2481 = vadd.f32 %v2420, %v2427
      %v2482 = vadd.f32 %v2421, %v2427
      %v2483 = vxor.u32 %v2429, 2147483648
      %v2484 = vxor.u32 %v2430, 2147483648
      %v2485 = vxor.u32 %v2431, 2147483648
      %v2486 = vxor.u32 %v2432, 2147483648
      %v2487 = vxor.u32 %v2433, 2147483648
      %v2488 = vxor.u32 %v2434, 2147483648
      %v2489 = vxor.u32 %v2435, 2147483648
      %v2490 = vxor.u32 %v2436, 2147483648
      %v2491 = vxor.u32 %v2437, 2147483648
      %v2492 = vxor.u32 %v2438, 2147483648
      %v2493 = vxor.u32 %v2439, 2147483648
      %v2494 = vxor.u32 %v2440, 2147483648
      %v2495 = vxor.u32 %v2441, 2147483648
      %v2496 = vxor.u32 %v2442, 2147483648
      %v2497 = vxor.u32 %v2443, 2147483648
      %v2498 = vxor.u32 %v2444, 2147483648
      %v2499 = vxor.u32 %v2445, 2147483648
      %v2500 = vxor.u32 %v2446, 2147483648
      %v2501 = vxor.u32 %v2447, 2147483648
      %v2502 = vxor.u32 %v2448, 2147483648
      %v2503 = vxor.u32 %v2449, 2147483648
      %v2504 = vxor.u32 %v2450, 2147483648
      %v2505 = vxor.u32 %v2451, 2147483648
      %v2506 = vxor.u32 %v2452, 2147483648
      %v2507 = vxor.u32 %v2453, 2147483648
      %v2508 = vxor.u32 %v2454, 2147483648
      %v2509 = vxor.u32 %v2455, 2147483648
      %v2510 = vxor.u32 %v2456, 2147483648
      %v2511 = vxor.u32 %v2457, 2147483648
      %v2512 = vxor.u32 %v2458, 2147483648
      %v2513 = vxor.u32 %v2459, 2147483648
      %v2514 = vxor.u32 %v2460, 2147483648
      %v2515 = vxor.u32 %v2461, 2147483648
      %v2516 = vxor.u32 %v2462, 2147483648
      %v2517 = vxor.u32 %v2463, 2147483648
      %v2518 = vxor.u32 %v2464, 2147483648
      %v2519 = vxor.u32 %v2465, 2147483648
      %v2520 = vxor.u32 %v2466, 2147483648
      %v2521 = vxor.u32 %v2467, 2147483648
      %v2522 = vxor.u32 %v2468, 2147483648
      %v2523 = vxor.u32 %v2469, 2147483648
      %v2524 = vxor.u32 %v2470, 2147483648
      %v2525 = vxor.u32 %v2471, 2147483648
      %v2526 = vxor.u32 %v2472, 2147483648
      %v2527 = vxor.u32 %v2473, 2147483648
      %v2528 = vxor.u32 %v2474, 2147483648
      %v2529 = vxor.u32 %v2475, 2147483648
      %v2530 = vxor.u32 %v2476, 2147483648
      %v2531 = vxor.u32 %v2477, 2147483648
      %v2532 = vxor.u32 %v2478, 2147483648
      %v2533 = vxor.u32 %v2479, 2147483648
      %v2534 = vxor.u32 %v2480, 2147483648
      %v2535 = vxor.u32 %v2481, 2147483648
      %v2536 = vxor.u32 %v2482, 2147483648
      %v2537 = vmul.f32 %v2483, 1.442695
      %v2538 = vpow.pop %v2537
      %v2539 = vmul.f32 %v2484, 1.442695
      %v2540 = vpow.pop %v2539
      %v2541 = vmul.f32 %v2485, 1.442695
      %v2542 = vpow.pop %v2541
      %v2543 = vmul.f32 %v2486, 1.442695
      %v2544 = vpow.pop %v2543
      %v2545 = vmul.f32 %v2487, 1.442695
      %v2546 = vpow.pop %v2545
      %v2547 = vmul.f32 %v2488, 1.442695
      %v2548 = vpow.pop %v2547
      %v2549 = vmul.f32 %v2489, 1.442695
      %v2550 = vpow.pop %v2549
      %v2551 = vmul.f32 %v2490, 1.442695
      %v2552 = vpow.pop %v2551
      %v2553 = vmul.f32 %v2491, 1.442695
      %v2554 = vpow.pop %v2553
      %v2555 = vmul.f32 %v2492, 1.442695
      %v2556 = vpow.pop %v2555
      %v2557 = vmul.f32 %v2493, 1.442695
      %v2558 = vpow.pop %v2557
      %v2559 = vmul.f32 %v2494, 1.442695
      %v2560 = vpow.pop %v2559
      %v2561 = vmul.f32 %v2495, 1.442695
      %v2562 = vpow.pop %v2561
      %v2563 = vmul.f32 %v2496, 1.442695
      %v2564 = vpow.pop %v2563
      %v2565 = vmul.f32 %v2497, 1.442695
      %v2566 = vpow.pop %v2565
      %v2567 = vmul.f32 %v2498, 1.442695
      %v2568 = vpow.pop %v2567
      %v2569 = vmul.f32 %v2499, 1.442695
      %v2570 = vpow.pop %v2569
      %v2571 = vmul.f32 %v2500, 1.442695
      %v2572 = vpow.pop %v2571
      %v2573 = vmul.f32 %v2501, 1.442695
      %v2574 = vpow.pop %v2573
      %v2575 = vmul.f32 %v2502, 1.442695
      %v2576 = vpow.pop %v2575
      %v2577 = vmul.f32 %v2503, 1.442695
      %v2578 = vpow.pop %v2577
      %v2579 = vmul.f32 %v2504, 1.442695
      %v2580 = vpow.pop %v2579
      %v2581 = vmul.f32 %v2505, 1.442695
      %v2582 = vpow.pop %v2581
      %v2583 = vmul.f32 %v2506, 1.442695
      %v2584 = vpow.pop %v2583
      %v2585 = vmul.f32 %v2507, 1.442695
      %v2586 = vpow.pop %v2585
      %v2587 = vmul.f32 %v2508, 1.442695
      %v2588 = vpow.pop %v2587
      %v2589 = vmul.f32 %v2509, 1.442695
      %v2590 = vpow.pop %v2589
      %v2591 = vmul.f32 %v2510, 1.442695
      %v2592 = vpow.pop %v2591
      %v2593 = vmul.f32 %v2511, 1.442695
      %v2594 = vpow.pop %v2593
      %v2595 = vmul.f32 %v2512, 1.442695
      %v2596 = vpow.pop %v2595
      %v2597 = vmul.f32 %v2513, 1.442695
      %v2598 = vpow.pop %v2597
      %v2599 = vmul.f32 %v2514, 1.442695
      %v2600 = vpow.pop %v2599
      %v2601 = vmul.f32 %v2515, 1.442695
      %v2602 = vpow.pop %v2601
      %v2603 = vmul.f32 %v2516, 1.442695
      %v2604 = vpow.pop %v2603
      %v2605 = vmul.f32 %v2517, 1.442695
      %v2606 = vpow.pop %v2605
      %v2607 = vmul.f32 %v2518, 1.442695
      %v2608 = vpow.pop %v2607
      %v2609 = vmul.f32 %v2519, 1.442695
      %v2610 = vpow.pop %v2609
      %v2611 = vmul.f32 %v2520, 1.442695
      %v2612 = vpow.pop %v2611
      %v2613 = vmul.f32 %v2521, 1.442695
      %v2614 = vpow.pop %v2613
      %v2615 = vmul.f32 %v2522, 1.442695
      %v2616 = vpow.pop %v2615
      %v2617 = vmul.f32 %v2523, 1.442695
      %v2618 = vpow.pop %v2617
      %v2619 = vmul.f32 %v2524, 1.442695
      %v2620 = vpow.pop %v2619
      %v2621 = vmul.f32 %v2525, 1.442695
      %v2622 = vpow.pop %v2621
      %v2623 = vmul.f32 %v2526, 1.442695
      %v2624 = vpow.pop %v2623
      %v2625 = vmul.f32 %v2527, 1.442695
      %v2626 = vpow.pop %v2625
      %v2627 = vmul.f32 %v2528, 1.442695
      %v2628 = vpow.pop %v2627
      %v2629 = vmul.f32 %v2529, 1.442695
      %v2630 = vpow.pop %v2629
      %v2631 = vmul.f32 %v2530, 1.442695
      %v2632 = vpow.pop %v2631
      %v2633 = vmul.f32 %v2531, 1.442695
      %v2634 = vpow.pop %v2633
      %v2635 = vmul.f32 %v2532, 1.442695
      %v2636 = vpow.pop %v2635
      %v2637 = vmul.f32 %v2533, 1.442695
      %v2638 = vpow.pop %v2637
      %v2639 = vmul.f32 %v2534, 1.442695
      %v2640 = vpow.pop %v2639
      %v2641 = vmul.f32 %v2535, 1.442695
      %v2642 = vpow.pop %v2641
      %v2643 = vmul.f32 %v2536, 1.442695
      %v2644 = vpow.pop %v2643
      %v2645 = vadd.f32 %v2538, 1.0
      %v2646 = vadd.f32 %v2540, 1.0
      %v2647 = vadd.f32 %v2542, 1.0
      %v2648 = vadd.f32 %v2544, 1.0
      %v2649 = vadd.f32 %v2546, 1.0
      %v2650 = vadd.f32 %v2548, 1.0
      %v2651 = vadd.f32 %v2550, 1.0
      %v2652 = vadd.f32 %v2552, 1.0
      %v2653 = vadd.f32 %v2554, 1.0
      %v2654 = vadd.f32 %v2556, 1.0
      %v2655 = vadd.f32 %v2558, 1.0
      %v2656 = vadd.f32 %v2560, 1.0
      %v2657 = vadd.f32 %v2562, 1.0
      %v2658 = vadd.f32 %v2564, 1.0
      %v2659 = vadd.f32 %v2566, 1.0
      %v2660 = vadd.f32 %v2568, 1.0
      %v2661 = vadd.f32 %v2570, 1.0
      %v2662 = vadd.f32 %v2572, 1.0
      %v2663 = vadd.f32 %v2574, 1.0
      %v2664 = vadd.f32 %v2576, 1.0
      %v2665 = vadd.f32 %v2578, 1.0
      %v2666 = vadd.f32 %v2580, 1.0
      %v2667 = vadd.f32 %v2582, 1.0
      %v2668 = vadd.f32 %v2584, 1.0
      %v2669 = vadd.f32 %v2586, 1.0
      %v2670 = vadd.f32 %v2588, 1.0
      %v2671 = vadd.f32 %v2590, 1.0
      %v2672 = vadd.f32 %v2592, 1.0
      %v2673 = vadd.f32 %v2594, 1.0
      %v2674 = vadd.f32 %v2596, 1.0
      %v2675 = vadd.f32 %v2598, 1.0
      %v2676 = vadd.f32 %v2600, 1.0
      %v2677 = vadd.f32 %v2602, 1.0
      %v2678 = vadd.f32 %v2604, 1.0
      %v2679 = vadd.f32 %v2606, 1.0
      %v2680 = vadd.f32 %v2608, 1.0
      %v2681 = vadd.f32 %v2610, 1.0
      %v2682 = vadd.f32 %v2612, 1.0
      %v2683 = vadd.f32 %v2614, 1.0
      %v2684 = vadd.f32 %v2616, 1.0
      %v2685 = vadd.f32 %v2618, 1.0
      %v2686 = vadd.f32 %v2620, 1.0
      %v2687 = vadd.f32 %v2622, 1.0
      %v2688 = vadd.f32 %v2624, 1.0
      %v2689 = vadd.f32 %v2626, 1.0
      %v2690 = vadd.f32 %v2628, 1.0
      %v2691 = vadd.f32 %v2630, 1.0
      %v2692 = vadd.f32 %v2632, 1.0
      %v2693 = vadd.f32 %v2634, 1.0
      %v2694 = vadd.f32 %v2636, 1.0
      %v2695 = vadd.f32 %v2638, 1.0
      %v2696 = vadd.f32 %v2640, 1.0
      %v2697 = vadd.f32 %v2642, 1.0
      %v2698 = vadd.f32 %v2644, 1.0
      %v2699 = vrcp.pop %v2645
      %v2700 = vmul.f32 1.0, %v2699
      %v2701 = vrcp.pop %v2646
      %v2702 = vmul.f32 1.0, %v2701
      %v2703 = vrcp.pop %v2647
      %v2704 = vmul.f32 1.0, %v2703
      %v2705 = vrcp.pop %v2648
      %v2706 = vmul.f32 1.0, %v2705
      %v2707 = vrcp.pop %v2649
      %v2708 = vmul.f32 1.0, %v2707
      %v2709 = vrcp.pop %v2650
      %v2710 = vmul.f32 1.0, %v2709
      %v2711 = vrcp.pop %v2651
      %v2712 = vmul.f32 1.0, %v2711
      %v2713 = vrcp.pop %v2652
      %v2714 = vmul.f32 1.0, %v2713
      %v2715 = vrcp.pop %v2653
      %v2716 = vmul.f32 1.0, %v2715
      %v2717 = vrcp.pop %v2654
      %v2718 = vmul.f32 1.0, %v2717
      %v2719 = vrcp.pop %v2655
      %v2720 = vmul.f32 1.0, %v2719
      %v2721 = vrcp.pop %v2656
      %v2722 = vmul.f32 1.0, %v2721
      %v2723 = vrcp.pop %v2657
      %v2724 = vmul.f32 1.0, %v2723
      %v2725 = vrcp.pop %v2658
      %v2726 = vmul.f32 1.0, %v2725
      %v2727 = vrcp.pop %v2659
      %v2728 = vmul.f32 1.0, %v2727
      %v2729 = vrcp.pop %v2660
      %v2730 = vmul.f32 1.0, %v2729
      %v2731 = vrcp.pop %v2661
      %v2732 = vmul.f32 1.0, %v2731
      %v2733 = vrcp.pop %v2662
      %v2734 = vmul.f32 1.0, %v2733
      %v2735 = vrcp.pop %v2663
      %v2736 = vmul.f32 1.0, %v2735
      %v2737 = vrcp.pop %v2664
      %v2738 = vmul.f32 1.0, %v2737
      %v2739 = vrcp.pop %v2665
      %v2740 = vmul.f32 1.0, %v2739
      %v2741 = vrcp.pop %v2666
      %v2742 = vmul.f32 1.0, %v2741
      %v2743 = vrcp.pop %v2667
      %v2744 = vmul.f32 1.0, %v2743
      %v2745 = vrcp.pop %v2668
      %v2746 = vmul.f32 1.0, %v2745
      %v2747 = vrcp.pop %v2669
      %v2748 = vmul.f32 1.0, %v2747
      %v2749 = vrcp.pop %v2670
      %v2750 = vmul.f32 1.0, %v2749
      %v2751 = vrcp.pop %v2671
      %v2752 = vmul.f32 1.0, %v2751
      %v2753 = vrcp.pop %v2672
      %v2754 = vmul.f32 1.0, %v2753
      %v2755 = vrcp.pop %v2673
      %v2756 = vmul.f32 1.0, %v2755
      %v2757 = vrcp.pop %v2674
      %v2758 = vmul.f32 1.0, %v2757
      %v2759 = vrcp.pop %v2675
      %v2760 = vmul.f32 1.0, %v2759
      %v2761 = vrcp.pop %v2676
      %v2762 = vmul.f32 1.0, %v2761
      %v2763 = vrcp.pop %v2677
      %v2764 = vmul.f32 1.0, %v2763
      %v2765 = vrcp.pop %v2678
      %v2766 = vmul.f32 1.0, %v2765
      %v2767 = vrcp.pop %v2679
      %v2768 = vmul.f32 1.0, %v2767
      %v2769 = vrcp.pop %v2680
      %v2770 = vmul.f32 1.0, %v2769
      %v2771 = vrcp.pop %v2681
      %v2772 = vmul.f32 1.0, %v2771
      %v2773 = vrcp.pop %v2682
      %v2774 = vmul.f32 1.0, %v2773
      %v2775 = vrcp.pop %v2683
      %v2776 = vmul.f32 1.0, %v2775
      %v2777 = vrcp.pop %v2684
      %v2778 = vmul.f32 1.0, %v2777
      %v2779 = vrcp.pop %v2685
      %v2780 = vmul.f32 1.0, %v2779
      %v2781 = vrcp.pop %v2686
      %v2782 = vmul.f32 1.0, %v2781
      %v2783 = vrcp.pop %v2687
      %v2784 = vmul.f32 1.0, %v2783
      %v2785 = vrcp.pop %v2688
      %v2786 = vmul.f32 1.0, %v2785
      %v2787 = vrcp.pop %v2689
      %v2788 = vmul.f32 1.0, %v2787
      %v2789 = vrcp.pop %v2690
      %v2790 = vmul.f32 1.0, %v2789
      %v2791 = vrcp.pop %v2691
      %v2792 = vmul.f32 1.0, %v2791
      %v2793 = vrcp.pop %v2692
      %v2794 = vmul.f32 1.0, %v2793
      %v2795 = vrcp.pop %v2693
      %v2796 = vmul.f32 1.0, %v2795
      %v2797 = vrcp.pop %v2694
      %v2798 = vmul.f32 1.0, %v2797
      %v2799 = vrcp.pop %v2695
      %v2800 = vmul.f32 1.0, %v2799
      %v2801 = vrcp.pop %v2696
      %v2802 = vmul.f32 1.0, %v2801
      %v2803 = vrcp.pop %v2697
      %v2804 = vmul.f32 1.0, %v2803
      %v2805 = vrcp.pop %v2698
      %v2806 = vmul.f32 1.0, %v2805
      %v2807 = vmul.f32 %v2429, %v2700
      %v2808 = vmul.f32 %v2430, %v2702
      %v2809 = vmul.f32 %v2431, %v2704
      %v2810 = vmul.f32 %v2432, %v2706
      %v2811 = vmul.f32 %v2433, %v2708
      %v2812 = vmul.f32 %v2434, %v2710
      %v2813 = vmul.f32 %v2435, %v2712
      %v2814 = vmul.f32 %v2436, %v2714
      %v2815 = vmul.f32 %v2437, %v2716
      %v2816 = vmul.f32 %v2438, %v2718
      %v2817 = vmul.f32 %v2439, %v2720
      %v2818 = vmul.f32 %v2440, %v2722
      %v2819 = vmul.f32 %v2441, %v2724
      %v2820 = vmul.f32 %v2442, %v2726
      %v2821 = vmul.f32 %v2443, %v2728
      %v2822 = vmul.f32 %v2444, %v2730
      %v2823 = vmul.f32 %v2445, %v2732
      %v2824 = vmul.f32 %v2446, %v2734
      %v2825 = vmul.f32 %v2447, %v2736
      %v2826 = vmul.f32 %v2448, %v2738
      %v2827 = vmul.f32 %v2449, %v2740
      %v2828 = vmul.f32 %v2450, %v2742
      %v2829 = vmul.f32 %v2451, %v2744
      %v2830 = vmul.f32 %v2452, %v2746
      %v2831 = vmul.f32 %v2453, %v2748
      %v2832 = vmul.f32 %v2454, %v2750
      %v2833 = vmul.f32 %v2455, %v2752
      %v2834 = vmul.f32 %v2456, %v2754
      %v2835 = vmul.f32 %v2457, %v2756
      %v2836 = vmul.f32 %v2458, %v2758
      %v2837 = vmul.f32 %v2459, %v2760
      %v2838 = vmul.f32 %v2460, %v2762
      %v2839 = vmul.f32 %v2461, %v2764
      %v2840 = vmul.f32 %v2462, %v2766
      %v2841 = vmul.f32 %v2463, %v2768
      %v2842 = vmul.f32 %v2464, %v2770
      %v2843 = vmul.f32 %v2465, %v2772
      %v2844 = vmul.f32 %v2466, %v2774
      %v2845 = vmul.f32 %v2467, %v2776
      %v2846 = vmul.f32 %v2468, %v2778
      %v2847 = vmul.f32 %v2469, %v2780
      %v2848 = vmul.f32 %v2470, %v2782
      %v2849 = vmul.f32 %v2471, %v2784
      %v2850 = vmul.f32 %v2472, %v2786
      %v2851 = vmul.f32 %v2473, %v2788
      %v2852 = vmul.f32 %v2474, %v2790
      %v2853 = vmul.f32 %v2475, %v2792
      %v2854 = vmul.f32 %v2476, %v2794
      %v2855 = vmul.f32 %v2477, %v2796
      %v2856 = vmul.f32 %v2478, %v2798
      %v2857 = vmul.f32 %v2479, %v2800
      %v2858 = vmul.f32 %v2480, %v2802
      %v2859 = vmul.f32 %v2481, %v2804
      %v2860 = vmul.f32 %v2482, %v2806
      %v2861 = vlaneseq
      %v2862 = vshrl.u32 %v2861, 7
      %v2863 = vadd.s32 %v2862, 8
      %v2864 = vadd.s32 %v2862, 16
      %vm2865 = vcmp.ge.s32.totalorder %v2862, 1
      %vm2866 = vcmp.ge.s32.totalorder %v2863, 1
      %vm2867 = vcmp.ge.s32.totalorder %v2864, 1
      %vm2868 = vcmp.le.s32.totalorder %v2862, 16
      %vm2869 = vcmp.le.s32.totalorder %v2863, 16
      %vm2870 = vcmp.le.s32.totalorder %v2864, 16
      %vm2871 = vmand %vm2865, %vm2868
      %vm2872 = vmand %vm2866, %vm2869
      %vm2873 = vmand %vm2867, %vm2870
      %p2874 = scmp.gt.s32.totalorder %s21, 0
      %s2875 = scalar_select %p2874, 1, 0
      %v2876 = vstv %s2875
      %vm2877 = vcmp.eq.s32.totalorder %v2876, 1
      %vm2878 = vmand %vm2871, %vm2877
      %vm2879 = vmand %vm2872, %vm2877
      %vm2880 = vmand %vm2873, %vm2877
      %vm2881 = vmand %vm2871, 1
      %vm2882 = vmand %vm2872, 1
      %vm2883 = vmand %vm2873, 1
      %p2884 = scmp.lt.s32.totalorder %s21, 0
      %s2885 = scalar_select %p2884, 1, 0
      %v2886 = vstv %s2885
      %vm2887 = vcmp.eq.s32.totalorder %v2886, 1
      %vm2888 = vmand %vm2878, 1
      %vm2889 = vmand %vm2879, 1
      %vm2890 = vmand %vm2880, 1
      %vm2891 = vmand %vm2881, %vm2887
      %vm2892 = vmand %vm2882, %vm2887
      %vm2893 = vmand %vm2883, %vm2887
      %v2894 = vsel %vm2888, 1, 0
      %v2895 = vsel %vm2889, 1, 0
      %v2896 = vsel %vm2890, 1, 0
      %v2897 = vsel %vm2881, 1, 0
      %v2898 = vsel %vm2882, 1, 0
      %v2899 = vsel %vm2883, 1, 0
      %v2900 = vsel %vm2891, 1, 0
      %v2901 = vsel %vm2892, 1, 0
      %v2902 = vsel %vm2893, 1, 0
      %vm2903 = vcmp.eq.s32.totalorder %v2894, 1
      %vm2904 = vcmp.eq.s32.totalorder %v2895, 1
      %vm2905 = vcmp.eq.s32.totalorder %v2896, 1
      %vm2906 = vcmp.eq.s32.totalorder %v2897, 1
      %vm2907 = vcmp.eq.s32.totalorder %v2898, 1
      %vm2908 = vcmp.eq.s32.totalorder %v2899, 1
      %vm2909 = vcmp.eq.s32.totalorder %v2900, 1
      %vm2910 = vcmp.eq.s32.totalorder %v2901, 1
      %vm2911 = vcmp.eq.s32.totalorder %v2902, 1
      %v2912 = vsel %vm2903, %v2807, 0.0
      %v2913 = vsel %vm2904, %v2808, 0.0
      %v2914 = vsel %vm2905, %v2809, 0.0
      %v2915 = vsel %vm2906, %v2810, 0.0
      %v2916 = vsel %vm2907, %v2811, 0.0
      %v2917 = vsel %vm2908, %v2812, 0.0
      %v2918 = vsel %vm2906, %v2813, 0.0
      %v2919 = vsel %vm2907, %v2814, 0.0
      %v2920 = vsel %vm2908, %v2815, 0.0
      %v2921 = vsel %vm2906, %v2816, 0.0
      %v2922 = vsel %vm2907, %v2817, 0.0
      %v2923 = vsel %vm2908, %v2818, 0.0
      %v2924 = vsel %vm2906, %v2819, 0.0
      %v2925 = vsel %vm2907, %v2820, 0.0
      %v2926 = vsel %vm2908, %v2821, 0.0
      %v2927 = vsel %vm2906, %v2822, 0.0
      %v2928 = vsel %vm2907, %v2823, 0.0
      %v2929 = vsel %vm2908, %v2824, 0.0
      %v2930 = vsel %vm2906, %v2825, 0.0
      %v2931 = vsel %vm2907, %v2826, 0.0
      %v2932 = vsel %vm2908, %v2827, 0.0
      %v2933 = vsel %vm2906, %v2828, 0.0
      %v2934 = vsel %vm2907, %v2829, 0.0
      %v2935 = vsel %vm2908, %v2830, 0.0
      %v2936 = vsel %vm2906, %v2831, 0.0
      %v2937 = vsel %vm2907, %v2832, 0.0
      %v2938 = vsel %vm2908, %v2833, 0.0
      %v2939 = vsel %vm2906, %v2834, 0.0
      %v2940 = vsel %vm2907, %v2835, 0.0
      %v2941 = vsel %vm2908, %v2836, 0.0
      %v2942 = vsel %vm2906, %v2837, 0.0
      %v2943 = vsel %vm2907, %v2838, 0.0
      %v2944 = vsel %vm2908, %v2839, 0.0
      %v2945 = vsel %vm2906, %v2840, 0.0
      %v2946 = vsel %vm2907, %v2841, 0.0
      %v2947 = vsel %vm2908, %v2842, 0.0
      %v2948 = vsel %vm2906, %v2843, 0.0
      %v2949 = vsel %vm2907, %v2844, 0.0
      %v2950 = vsel %vm2908, %v2845, 0.0
      %v2951 = vsel %vm2906, %v2846, 0.0
      %v2952 = vsel %vm2907, %v2847, 0.0
      %v2953 = vsel %vm2908, %v2848, 0.0
      %v2954 = vsel %vm2906, %v2849, 0.0
      %v2955 = vsel %vm2907, %v2850, 0.0
      %v2956 = vsel %vm2908, %v2851, 0.0
      %v2957 = vsel %vm2906, %v2852, 0.0
      %v2958 = vsel %vm2907, %v2853, 0.0
      %v2959 = vsel %vm2908, %v2854, 0.0
      %v2960 = vsel %vm2906, %v2855, 0.0
      %v2961 = vsel %vm2907, %v2856, 0.0
      %v2962 = vsel %vm2908, %v2857, 0.0
      %v2963 = vsel %vm2909, %v2858, 0.0
      %v2964 = vsel %vm2910, %v2859, 0.0
      %v2965 = vsel %vm2911, %v2860, 0.0
      %v2966 = vpack.c.bf16 %v2913, %v2912
      %v2967 = vpack.c.bf16 %v2914, %v2914
      %v2968 = vpack.c.bf16 %v2916, %v2915
      %v2969 = vpack.c.bf16 %v2917, %v2917
      %v2970 = vpack.c.bf16 %v2919, %v2918
      %v2971 = vpack.c.bf16 %v2920, %v2920
      %v2972 = vpack.c.bf16 %v2922, %v2921
      %v2973 = vpack.c.bf16 %v2923, %v2923
      %v2974 = vpack.c.bf16 %v2925, %v2924
      %v2975 = vpack.c.bf16 %v2926, %v2926
      %v2976 = vpack.c.bf16 %v2928, %v2927
      %v2977 = vpack.c.bf16 %v2929, %v2929
      %v2978 = vpack.c.bf16 %v2931, %v2930
      %v2979 = vpack.c.bf16 %v2932, %v2932
      %v2980 = vpack.c.bf16 %v2934, %v2933
      %v2981 = vpack.c.bf16 %v2935, %v2935
      %v2982 = vpack.c.bf16 %v2937, %v2936
      %v2983 = vpack.c.bf16 %v2938, %v2938
      %v2984 = vpack.c.bf16 %v2940, %v2939
      %v2985 = vpack.c.bf16 %v2941, %v2941
      %v2986 = vpack.c.bf16 %v2943, %v2942
      %v2987 = vpack.c.bf16 %v2944, %v2944
      %v2988 = vpack.c.bf16 %v2946, %v2945
      %v2989 = vpack.c.bf16 %v2947, %v2947
      %v2990 = vpack.c.bf16 %v2949, %v2948
      %v2991 = vpack.c.bf16 %v2950, %v2950
      %v2992 = vpack.c.bf16 %v2952, %v2951
      %v2993 = vpack.c.bf16 %v2953, %v2953
      %v2994 = vpack.c.bf16 %v2955, %v2954
      %v2995 = vpack.c.bf16 %v2956, %v2956
      %v2996 = vpack.c.bf16 %v2958, %v2957
      %v2997 = vpack.c.bf16 %v2959, %v2959
      %v2998 = vpack.c.bf16 %v2961, %v2960
      %v2999 = vpack.c.bf16 %v2962, %v2962
      %v3000 = vpack.c.bf16 %v2964, %v2963
      %v3001 = vpack.c.bf16 %v2965, %v2965
      %v3003 = vshrl.u32 %v2966, 16
      %v3005 = vshll.u32 %v2966, 16
      %v3007 = vrot.slane %v3005, 1
      %v3008 = vor.u32 %v3003, %v3007
      %v3010 = vshll.u32 %v2967, 16
      %v3012 = vrot.slane %v3010, 1
      %v3013 = vsel %vm555, %v3008, %v3012
      %v3015 = vshrl.u32 %v2968, 16
      %v3017 = vshll.u32 %v2968, 16
      %v3019 = vrot.slane %v3017, 1
      %v3020 = vor.u32 %v3015, %v3019
      %v3022 = vshll.u32 %v2969, 16
      %v3024 = vrot.slane %v3022, 1
      %v3025 = vsel %vm555, %v3020, %v3024
      %v3027 = vshrl.u32 %v2970, 16
      %v3029 = vshll.u32 %v2970, 16
      %v3031 = vrot.slane %v3029, 1
      %v3032 = vor.u32 %v3027, %v3031
      %v3034 = vshll.u32 %v2971, 16
      %v3036 = vrot.slane %v3034, 1
      %v3037 = vsel %vm555, %v3032, %v3036
      %v3039 = vshrl.u32 %v2972, 16
      %v3041 = vshll.u32 %v2972, 16
      %v3043 = vrot.slane %v3041, 1
      %v3044 = vor.u32 %v3039, %v3043
      %v3046 = vshll.u32 %v2973, 16
      %v3048 = vrot.slane %v3046, 1
      %v3049 = vsel %vm555, %v3044, %v3048
      %v3051 = vshrl.u32 %v2974, 16
      %v3053 = vshll.u32 %v2974, 16
      %v3055 = vrot.slane %v3053, 1
      %v3056 = vor.u32 %v3051, %v3055
      %v3058 = vshll.u32 %v2975, 16
      %v3060 = vrot.slane %v3058, 1
      %v3061 = vsel %vm555, %v3056, %v3060
      %v3063 = vshrl.u32 %v2976, 16
      %v3065 = vshll.u32 %v2976, 16
      %v3067 = vrot.slane %v3065, 1
      %v3068 = vor.u32 %v3063, %v3067
      %v3070 = vshll.u32 %v2977, 16
      %v3072 = vrot.slane %v3070, 1
      %v3073 = vsel %vm555, %v3068, %v3072
      %v3075 = vshrl.u32 %v2978, 16
      %v3077 = vshll.u32 %v2978, 16
      %v3079 = vrot.slane %v3077, 1
      %v3080 = vor.u32 %v3075, %v3079
      %v3082 = vshll.u32 %v2979, 16
      %v3084 = vrot.slane %v3082, 1
      %v3085 = vsel %vm555, %v3080, %v3084
      %v3087 = vshrl.u32 %v2980, 16
      %v3089 = vshll.u32 %v2980, 16
      %v3091 = vrot.slane %v3089, 1
      %v3092 = vor.u32 %v3087, %v3091
      %v3094 = vshll.u32 %v2981, 16
      %v3096 = vrot.slane %v3094, 1
      %v3097 = vsel %vm555, %v3092, %v3096
      %v3099 = vshrl.u32 %v2982, 16
      %v3101 = vshll.u32 %v2982, 16
      %v3103 = vrot.slane %v3101, 1
      %v3104 = vor.u32 %v3099, %v3103
      %v3106 = vshll.u32 %v2983, 16
      %v3108 = vrot.slane %v3106, 1
      %v3109 = vsel %vm555, %v3104, %v3108
      %v3111 = vshrl.u32 %v2984, 16
      %v3113 = vshll.u32 %v2984, 16
      %v3115 = vrot.slane %v3113, 1
      %v3116 = vor.u32 %v3111, %v3115
      %v3118 = vshll.u32 %v2985, 16
      %v3120 = vrot.slane %v3118, 1
      %v3121 = vsel %vm555, %v3116, %v3120
      %v3123 = vshrl.u32 %v2986, 16
      %v3125 = vshll.u32 %v2986, 16
      %v3127 = vrot.slane %v3125, 1
      %v3128 = vor.u32 %v3123, %v3127
      %v3130 = vshll.u32 %v2987, 16
      %v3132 = vrot.slane %v3130, 1
      %v3133 = vsel %vm555, %v3128, %v3132
      %v3135 = vshrl.u32 %v2988, 16
      %v3137 = vshll.u32 %v2988, 16
      %v3139 = vrot.slane %v3137, 1
      %v3140 = vor.u32 %v3135, %v3139
      %v3142 = vshll.u32 %v2989, 16
      %v3144 = vrot.slane %v3142, 1
      %v3145 = vsel %vm555, %v3140, %v3144
      %v3147 = vshrl.u32 %v2990, 16
      %v3149 = vshll.u32 %v2990, 16
      %v3151 = vrot.slane %v3149, 1
      %v3152 = vor.u32 %v3147, %v3151
      %v3154 = vshll.u32 %v2991, 16
      %v3156 = vrot.slane %v3154, 1
      %v3157 = vsel %vm555, %v3152, %v3156
      %v3159 = vshrl.u32 %v2992, 16
      %v3161 = vshll.u32 %v2992, 16
      %v3163 = vrot.slane %v3161, 1
      %v3164 = vor.u32 %v3159, %v3163
      %v3166 = vshll.u32 %v2993, 16
      %v3168 = vrot.slane %v3166, 1
      %v3169 = vsel %vm555, %v3164, %v3168
      %v3171 = vshrl.u32 %v2994, 16
      %v3173 = vshll.u32 %v2994, 16
      %v3175 = vrot.slane %v3173, 1
      %v3176 = vor.u32 %v3171, %v3175
      %v3178 = vshll.u32 %v2995, 16
      %v3180 = vrot.slane %v3178, 1
      %v3181 = vsel %vm555, %v3176, %v3180
      %v3183 = vshrl.u32 %v2996, 16
      %v3185 = vshll.u32 %v2996, 16
      %v3187 = vrot.slane %v3185, 1
      %v3188 = vor.u32 %v3183, %v3187
      %v3190 = vshll.u32 %v2997, 16
      %v3192 = vrot.slane %v3190, 1
      %v3193 = vsel %vm555, %v3188, %v3192
      %v3195 = vshrl.u32 %v2998, 16
      %v3197 = vshll.u32 %v2998, 16
      %v3199 = vrot.slane %v3197, 1
      %v3200 = vor.u32 %v3195, %v3199
      %v3202 = vshll.u32 %v2999, 16
      %v3204 = vrot.slane %v3202, 1
      %v3205 = vsel %vm555, %v3200, %v3204
      %v3207 = vshrl.u32 %v3000, 16
      %v3209 = vshll.u32 %v3000, 16
      %v3211 = vrot.slane %v3209, 1
      %v3212 = vor.u32 %v3207, %v3211
      %v3214 = vshll.u32 %v3001, 16
      %v3216 = vrot.slane %v3214, 1
      %v3217 = vsel %vm555, %v3212, %v3216
      %3218 = vrot.lane.b32.xlu0 %v3013, 2
      %v3219 = vpop.permute.xlu0 %3218
      %3220 = vrot.lane.b32.xlu0 %v3025, 2
      %v3221 = vpop.permute.xlu0 %3220
      %3222 = vrot.lane.b32.xlu0 %v3037, 2
      %v3223 = vpop.permute.xlu0 %3222
      %3224 = vrot.lane.b32.xlu0 %v3049, 2
      %v3225 = vpop.permute.xlu0 %3224
      %3226 = vrot.lane.b32.xlu0 %v3061, 2
      %v3227 = vpop.permute.xlu0 %3226
      %3228 = vrot.lane.b32.xlu0 %v3073, 2
      %v3229 = vpop.permute.xlu0 %3228
      %3230 = vrot.lane.b32.xlu0 %v3085, 2
      %v3231 = vpop.permute.xlu0 %3230
      %3232 = vrot.lane.b32.xlu0 %v3097, 2
      %v3233 = vpop.permute.xlu0 %3232
      %3234 = vrot.lane.b32.xlu0 %v3109, 2
      %v3235 = vpop.permute.xlu0 %3234
      %3236 = vrot.lane.b32.xlu0 %v3121, 2
      %v3237 = vpop.permute.xlu0 %3236
      %3238 = vrot.lane.b32.xlu0 %v3133, 2
      %v3239 = vpop.permute.xlu0 %3238
      %3240 = vrot.lane.b32.xlu0 %v3145, 2
      %v3241 = vpop.permute.xlu0 %3240
      %3242 = vrot.lane.b32.xlu0 %v3157, 2
      %v3243 = vpop.permute.xlu0 %3242
      %3244 = vrot.lane.b32.xlu0 %v3169, 2
      %v3245 = vpop.permute.xlu0 %3244
      %3246 = vrot.lane.b32.xlu0 %v3181, 2
      %v3247 = vpop.permute.xlu0 %3246
      %3248 = vrot.lane.b32.xlu0 %v3193, 2
      %v3249 = vpop.permute.xlu0 %3248
      %3250 = vrot.lane.b32.xlu0 %v3205, 2
      %v3251 = vpop.permute.xlu0 %3250
      %3252 = vrot.lane.b32.xlu0 %v3217, 2
      %v3253 = vpop.permute.xlu0 %3252
      %v3290 = vrot.slane %v2966, 1
      %v3291 = vrot.slane %v2967, 1
      %v3292 = vsel %vm936, %v3290, %v3291
      %v3293 = vrot.slane %v2968, 1
      %v3294 = vrot.slane %v2969, 1
      %v3295 = vsel %vm936, %v3293, %v3294
      %v3296 = vrot.slane %v2970, 1
      %v3297 = vrot.slane %v2971, 1
      %v3298 = vsel %vm936, %v3296, %v3297
      %v3299 = vrot.slane %v2972, 1
      %v3300 = vrot.slane %v2973, 1
      %v3301 = vsel %vm936, %v3299, %v3300
      %v3302 = vrot.slane %v2974, 1
      %v3303 = vrot.slane %v2975, 1
      %v3304 = vsel %vm936, %v3302, %v3303
      %v3305 = vrot.slane %v2976, 1
      %v3306 = vrot.slane %v2977, 1
      %v3307 = vsel %vm936, %v3305, %v3306
      %v3308 = vrot.slane %v2978, 1
      %v3309 = vrot.slane %v2979, 1
      %v3310 = vsel %vm936, %v3308, %v3309
      %v3311 = vrot.slane %v2980, 1
      %v3312 = vrot.slane %v2981, 1
      %v3313 = vsel %vm936, %v3311, %v3312
      %v3314 = vrot.slane %v2982, 1
      %v3315 = vrot.slane %v2983, 1
      %v3316 = vsel %vm936, %v3314, %v3315
      %v3317 = vrot.slane %v2984, 1
      %v3318 = vrot.slane %v2985, 1
      %v3319 = vsel %vm936, %v3317, %v3318
      %v3320 = vrot.slane %v2986, 1
      %v3321 = vrot.slane %v2987, 1
      %v3322 = vsel %vm936, %v3320, %v3321
      %v3323 = vrot.slane %v2988, 1
      %v3324 = vrot.slane %v2989, 1
      %v3325 = vsel %vm936, %v3323, %v3324
      %v3326 = vrot.slane %v2990, 1
      %v3327 = vrot.slane %v2991, 1
      %v3328 = vsel %vm936, %v3326, %v3327
      %v3329 = vrot.slane %v2992, 1
      %v3330 = vrot.slane %v2993, 1
      %v3331 = vsel %vm936, %v3329, %v3330
      %v3332 = vrot.slane %v2994, 1
      %v3333 = vrot.slane %v2995, 1
      %v3334 = vsel %vm936, %v3332, %v3333
      %v3335 = vrot.slane %v2996, 1
      %v3336 = vrot.slane %v2997, 1
      %v3337 = vsel %vm936, %v3335, %v3336
      %v3338 = vrot.slane %v2998, 1
      %v3339 = vrot.slane %v2999, 1
      %v3340 = vsel %vm936, %v3338, %v3339
      %v3341 = vrot.slane %v3000, 1
      %v3342 = vrot.slane %v3001, 1
      %v3343 = vsel %vm936, %v3341, %v3342
      %3344 = vrot.lane.b32.xlu0 %v3292, 4
      %v3345 = vpop.permute.xlu0 %3344
      %3346 = vrot.lane.b32.xlu0 %v3295, 4
      %v3347 = vpop.permute.xlu0 %3346
      %3348 = vrot.lane.b32.xlu0 %v3298, 4
      %v3349 = vpop.permute.xlu0 %3348
      %3350 = vrot.lane.b32.xlu0 %v3301, 4
      %v3351 = vpop.permute.xlu0 %3350
      %3352 = vrot.lane.b32.xlu0 %v3304, 4
      %v3353 = vpop.permute.xlu0 %3352
      %3354 = vrot.lane.b32.xlu0 %v3307, 4
      %v3355 = vpop.permute.xlu0 %3354
      %3356 = vrot.lane.b32.xlu0 %v3310, 4
      %v3357 = vpop.permute.xlu0 %3356
      %3358 = vrot.lane.b32.xlu0 %v3313, 4
      %v3359 = vpop.permute.xlu0 %3358
      %3360 = vrot.lane.b32.xlu0 %v3316, 4
      %v3361 = vpop.permute.xlu0 %3360
      %3362 = vrot.lane.b32.xlu0 %v3319, 4
      %v3363 = vpop.permute.xlu0 %3362
      %3364 = vrot.lane.b32.xlu0 %v3322, 4
      %v3365 = vpop.permute.xlu0 %3364
      %3366 = vrot.lane.b32.xlu0 %v3325, 4
      %v3367 = vpop.permute.xlu0 %3366
      %3368 = vrot.lane.b32.xlu0 %v3328, 4
      %v3369 = vpop.permute.xlu0 %3368
      %3370 = vrot.lane.b32.xlu0 %v3331, 4
      %v3371 = vpop.permute.xlu0 %3370
      %3372 = vrot.lane.b32.xlu0 %v3334, 4
      %v3373 = vpop.permute.xlu0 %3372
      %3374 = vrot.lane.b32.xlu0 %v3337, 4
      %v3375 = vpop.permute.xlu0 %3374
      %3376 = vrot.lane.b32.xlu0 %v3340, 4
      %v3377 = vpop.permute.xlu0 %3376
      %3378 = vrot.lane.b32.xlu0 %v3343, 4
      %v3379 = vpop.permute.xlu0 %3378
      %vm3380 = vcmask 15360
      %v3382 = vsel %vm3380, %v2966, %v3219
      %v3384 = vsel %vm3380, %v2968, %v3221
      %v3386 = vsel %vm3380, %v2970, %v3223
      %v3388 = vsel %vm3380, %v2972, %v3225
      %v3390 = vsel %vm3380, %v2974, %v3227
      %v3392 = vsel %vm3380, %v2976, %v3229
      %v3394 = vsel %vm3380, %v2978, %v3231
      %v3396 = vsel %vm3380, %v2980, %v3233
      %v3398 = vsel %vm3380, %v2982, %v3235
      %v3400 = vsel %vm3380, %v2984, %v3237
      %v3402 = vsel %vm3380, %v2986, %v3239
      %v3404 = vsel %vm3380, %v2988, %v3241
      %v3406 = vsel %vm3380, %v2990, %v3243
      %v3408 = vsel %vm3380, %v2992, %v3245
      %v3410 = vsel %vm3380, %v2994, %v3247
      %v3412 = vsel %vm3380, %v2996, %v3249
      %v3414 = vsel %vm3380, %v2998, %v3251
      %v3416 = vsel %vm3380, %v3000, %v3253
      %v3418 = vsel %vm1077, %v3382, %v3345
      %v3420 = vsel %vm1077, %v3384, %v3347
      %v3422 = vsel %vm1077, %v3386, %v3349
      %v3424 = vsel %vm1077, %v3388, %v3351
      %v3426 = vsel %vm1077, %v3390, %v3353
      %v3428 = vsel %vm1077, %v3392, %v3355
      %v3430 = vsel %vm1077, %v3394, %v3357
      %v3432 = vsel %vm1077, %v3396, %v3359
      %v3434 = vsel %vm1077, %v3398, %v3361
      %v3436 = vsel %vm1077, %v3400, %v3363
      %v3438 = vsel %vm1077, %v3402, %v3365
      %v3440 = vsel %vm1077, %v3404, %v3367
      %v3442 = vsel %vm1077, %v3406, %v3369
      %v3444 = vsel %vm1077, %v3408, %v3371
      %v3446 = vsel %vm1077, %v3410, %v3373
      %v3448 = vsel %vm1077, %v3412, %v3375
      %v3450 = vsel %vm1077, %v3414, %v3377
      %v3452 = vsel %vm1077, %v3416, %v3379
      %v3453 = vld [vmem:[%s2] sm:$0x7]
      %s3454 = scalar_lea.vmem %s2, 4
      %v3455 = vld [vmem:[%s3454] sm:$0x7]
      %vm3456 = vcmask 48128
      %v3457 = vsel %vm3456, %v3420, 0
      %v3459 = vsel %vm3456, %v3422, 0
      %v3461 = vsel %vm3456, %v3424, 0
      %v3463 = vsel %vm3456, %v3426, 0
      %v3465 = vsel %vm3456, %v3428, 0
      %v3467 = vsel %vm3456, %v3430, 0
      %v3469 = vsel %vm3456, %v3432, 0
      %v3471 = vsel %vm3456, %v3434, 0
      %v3473 = vsel %vm3456, %v3436, 0
      %v3475 = vsel %vm3456, %v3438, 0
      %v3477 = vsel %vm3456, %v3440, 0
      %v3479 = vsel %vm3456, %v3442, 0
      %v3481 = vsel %vm3456, %v3444, 0
      %v3483 = vsel %vm3456, %v3446, 0
      %v3485 = vsel %vm3456, %v3448, 0
      %v3487 = vsel %vm3456, %v3450, 0
      %vm3489 = vcmask 1042432
      %v3491 = vsel %vm3489, %v3455, 0
      %3493 = vmatprep.subr.bf16.mxu0 0
      %3494 = vmatpush1.bf16.msra.mxu0 0
      %3495 = vmatprep.subr.bf16.mxu0 0
      %3496 = vmatpush1.bf16.msra.mxu0 0
      %3497 = vmatprep.subr.bf16.mxu0 0
      %3498 = vmatpush1.bf16.msra.mxu0 0
      %3499 = vmatprep.subr.bf16.mxu0 0
      %3500 = vmatpush1.bf16.msra.mxu0 0
      %3501 = vmatprep.subr.bf16.mxu0 0
      %3502 = vmatpush1.bf16.msra.mxu0 0
      %3503 = vmatprep.subr.bf16.mxu0 0
      %3504 = vmatpush1.bf16.msra.mxu0 0
      %3505 = vmatprep.subr.bf16.mxu0 0
      %3506 = vmatpush1.bf16.msra.mxu0 0
      %3507 = vmatprep.subr.bf16.mxu0 0
      %3508 = vmatpush1.bf16.msra.mxu0 %v3491
      %3509 = vmatprep.subr.bf16.mxu0 0
      %3510 = vmatpush2.bf16.msra.mxu0 0
      %3511 = vmatprep.subr.bf16.mxu0 0
      %3512 = vmatpush2.bf16.msra.mxu0 0
      %3513 = vmatprep.subr.bf16.mxu0 0
      %3514 = vmatpush2.bf16.msra.mxu0 0
      %3515 = vmatprep.subr.bf16.mxu0 0
      %3516 = vmatpush2.bf16.msra.mxu0 0
      %3517 = vmatprep.subr.bf16.mxu0 0
      %3518 = vmatpush2.bf16.msra.mxu0 0
      %3519 = vmatprep.subr.bf16.mxu0 0
      %3520 = vmatpush2.bf16.msra.mxu0 0
      %3521 = vmatprep.subr.bf16.mxu0 0
      %3522 = vmatpush2.bf16.msra.mxu0 0
      %3523 = vmatprep.subr.bf16.mxu0 0
      %3524 = vmatpush2.bf16.msra.mxu0 0
      %3525 = vmatprep.mubr.bf16.mxu0 0
      %3526 = vmatmul.mubr.bf16.gmra.mxu0 %v3457
      %v3527 = vpop.f32.mrf.mxu0
      %v3528 = vadd.f32 0.0, %v3527
      %v3529 = vpop.f32.mrf.mxu0
      %v3530 = vpop.f32.mrf.mxu0
      %v3531 = vadd.f32 0.0, %v3530
      %v3532 = vpop.f32.mrf.mxu0
      %3533 = vmatprep.mubr.bf16.mxu0 0
      %3534 = vmatmul.mubr.bf16.gmra.mxu0 %v3459
      %v3535 = vpop.f32.mrf.mxu0
      %v3536 = vadd.f32 0.0, %v3535
      %v3537 = vpop.f32.mrf.mxu0
      %v3538 = vpop.f32.mrf.mxu0
      %v3539 = vadd.f32 0.0, %v3538
      %v3540 = vpop.f32.mrf.mxu0
      %3541 = vmatprep.mubr.bf16.mxu0 0
      %3542 = vmatmul.mubr.bf16.gmra.mxu0 %v3461
      %v3543 = vpop.f32.mrf.mxu0
      %v3544 = vadd.f32 0.0, %v3543
      %v3545 = vpop.f32.mrf.mxu0
      %v3546 = vpop.f32.mrf.mxu0
      %v3547 = vadd.f32 0.0, %v3546
      %v3548 = vpop.f32.mrf.mxu0
      %3549 = vmatprep.mubr.bf16.mxu0 0
      %3550 = vmatmul.mubr.bf16.gmra.mxu0 %v3463
      %v3551 = vpop.f32.mrf.mxu0
      %v3552 = vadd.f32 0.0, %v3551
      %v3553 = vpop.f32.mrf.mxu0
      %v3554 = vpop.f32.mrf.mxu0
      %v3555 = vadd.f32 0.0, %v3554
      %v3556 = vpop.f32.mrf.mxu0
      %3557 = vmatprep.mubr.bf16.mxu0 0
      %3558 = vmatmul.mubr.bf16.gmra.mxu0 %v3465
      %v3559 = vpop.f32.mrf.mxu0
      %v3560 = vadd.f32 0.0, %v3559
      %v3561 = vpop.f32.mrf.mxu0
      %v3562 = vpop.f32.mrf.mxu0
      %v3563 = vadd.f32 0.0, %v3562
      %v3564 = vpop.f32.mrf.mxu0
      %3565 = vmatprep.mubr.bf16.mxu0 0
      %3566 = vmatmul.mubr.bf16.gmra.mxu0 %v3467
      %v3567 = vpop.f32.mrf.mxu0
      %v3568 = vadd.f32 0.0, %v3567
      %v3569 = vpop.f32.mrf.mxu0
      %v3570 = vpop.f32.mrf.mxu0
      %v3571 = vadd.f32 0.0, %v3570
      %v3572 = vpop.f32.mrf.mxu0
      %3573 = vmatprep.mubr.bf16.mxu0 0
      %3574 = vmatmul.mubr.bf16.gmra.mxu0 %v3469
      %v3575 = vpop.f32.mrf.mxu0
      %v3576 = vadd.f32 0.0, %v3575
      %v3577 = vpop.f32.mrf.mxu0
      %v3578 = vpop.f32.mrf.mxu0
      %v3579 = vadd.f32 0.0, %v3578
      %v3580 = vpop.f32.mrf.mxu0
      %3581 = vmatprep.mubr.bf16.mxu0 0
      %3582 = vmatmul.mubr.bf16.gmra.mxu0 %v3471
      %v3583 = vpop.f32.mrf.mxu0
      %v3584 = vadd.f32 0.0, %v3583
      %v3585 = vpop.f32.mrf.mxu0
      %v3586 = vpop.f32.mrf.mxu0
      %v3587 = vadd.f32 0.0, %v3586
      %v3588 = vpop.f32.mrf.mxu0
      %3589 = vmatprep.mubr.bf16.mxu0 0
      %3590 = vmatmul.mubr.bf16.gmra.mxu0 %v3473
      %v3591 = vpop.f32.mrf.mxu0
      %v3592 = vadd.f32 0.0, %v3591
      %v3593 = vpop.f32.mrf.mxu0
      %v3594 = vpop.f32.mrf.mxu0
      %v3595 = vadd.f32 0.0, %v3594
      %v3596 = vpop.f32.mrf.mxu0
      %3597 = vmatprep.mubr.bf16.mxu0 0
      %3598 = vmatmul.mubr.bf16.gmra.mxu0 %v3475
      %v3599 = vpop.f32.mrf.mxu0
      %v3600 = vadd.f32 0.0, %v3599
      %v3601 = vpop.f32.mrf.mxu0
      %v3602 = vpop.f32.mrf.mxu0
      %v3603 = vadd.f32 0.0, %v3602
      %v3604 = vpop.f32.mrf.mxu0
      %3605 = vmatprep.mubr.bf16.mxu0 0
      %3606 = vmatmul.mubr.bf16.gmra.mxu0 %v3477
      %v3607 = vpop.f32.mrf.mxu0
      %v3608 = vadd.f32 0.0, %v3607
      %v3609 = vpop.f32.mrf.mxu0
      %v3610 = vpop.f32.mrf.mxu0
      %v3611 = vadd.f32 0.0, %v3610
      %v3612 = vpop.f32.mrf.mxu0
      %3613 = vmatprep.mubr.bf16.mxu0 0
      %3614 = vmatmul.mubr.bf16.gmra.mxu0 %v3479
      %v3615 = vpop.f32.mrf.mxu0
      %v3616 = vadd.f32 0.0, %v3615
      %v3617 = vpop.f32.mrf.mxu0
      %v3618 = vpop.f32.mrf.mxu0
      %v3619 = vadd.f32 0.0, %v3618
      %v3620 = vpop.f32.mrf.mxu0
      %3621 = vmatprep.mubr.bf16.mxu0 0
      %3622 = vmatmul.mubr.bf16.gmra.mxu0 %v3481
      %v3623 = vpop.f32.mrf.mxu0
      %v3624 = vadd.f32 0.0, %v3623
      %v3625 = vpop.f32.mrf.mxu0
      %v3626 = vpop.f32.mrf.mxu0
      %v3627 = vadd.f32 0.0, %v3626
      %v3628 = vpop.f32.mrf.mxu0
      %3629 = vmatprep.mubr.bf16.mxu0 0
      %3630 = vmatmul.mubr.bf16.gmra.mxu0 %v3483
      %v3631 = vpop.f32.mrf.mxu0
      %v3632 = vadd.f32 0.0, %v3631
      %v3633 = vpop.f32.mrf.mxu0
      %v3634 = vpop.f32.mrf.mxu0
      %v3635 = vadd.f32 0.0, %v3634
      %v3636 = vpop.f32.mrf.mxu0
      %3637 = vmatprep.mubr.bf16.mxu0 0
      %3638 = vmatmul.mubr.bf16.gmra.mxu0 %v3485
      %v3639 = vpop.f32.mrf.mxu0
      %v3640 = vadd.f32 0.0, %v3639
      %v3641 = vpop.f32.mrf.mxu0
      %v3642 = vpop.f32.mrf.mxu0
      %v3643 = vadd.f32 0.0, %v3642
      %v3644 = vpop.f32.mrf.mxu0
      %3645 = vmatprep.mubr.bf16.mxu0 0
      %3646 = vmatmul.mubr.bf16.gmra.mxu0 %v3487
      %v3647 = vpop.f32.mrf.mxu0
      %v3648 = vadd.f32 0.0, %v3647
      %v3649 = vpop.f32.mrf.mxu0
      %v3650 = vpop.f32.mrf.mxu0
      %v3651 = vadd.f32 0.0, %v3650
      %v3652 = vpop.f32.mrf.mxu0
      %3653 = vdwg.mxu0
      %v3654 = vsel %vm3456, %v3418, 0
      %v3657 = vsel %vm3489, %v3453, 0
      %3659 = vmatprep.subr.bf16.mxu0 0
      %3660 = vmatpush1.bf16.msra.mxu0 0
      %3661 = vmatprep.subr.bf16.mxu0 0
      %3662 = vmatpush1.bf16.msra.mxu0 0
      %3663 = vmatprep.subr.bf16.mxu0 0
      %3664 = vmatpush1.bf16.msra.mxu0 0
      %3665 = vmatprep.subr.bf16.mxu0 0
      %3666 = vmatpush1.bf16.msra.mxu0 0
      %3667 = vmatprep.subr.bf16.mxu0 0
      %3668 = vmatpush1.bf16.msra.mxu0 0
      %3669 = vmatprep.subr.bf16.mxu0 0
      %3670 = vmatpush1.bf16.msra.mxu0 0
      %3671 = vmatprep.subr.bf16.mxu0 0
      %3672 = vmatpush1.bf16.msra.mxu0 0
      %3673 = vmatprep.subr.bf16.mxu0 0
      %3674 = vmatpush1.bf16.msra.mxu0 %v3657
      %3675 = vmatprep.subr.bf16.mxu0 0
      %3676 = vmatpush2.bf16.msra.mxu0 0
      %3677 = vmatprep.subr.bf16.mxu0 0
      %3678 = vmatpush2.bf16.msra.mxu0 0
      %3679 = vmatprep.subr.bf16.mxu0 0
      %3680 = vmatpush2.bf16.msra.mxu0 0
      %3681 = vmatprep.subr.bf16.mxu0 0
      %3682 = vmatpush2.bf16.msra.mxu0 0
      %3683 = vmatprep.subr.bf16.mxu0 0
      %3684 = vmatpush2.bf16.msra.mxu0 0
      %3685 = vmatprep.subr.bf16.mxu0 0
      %3686 = vmatpush2.bf16.msra.mxu0 0
      %3687 = vmatprep.subr.bf16.mxu0 0
      %3688 = vmatpush2.bf16.msra.mxu0 0
      %3689 = vmatprep.subr.bf16.mxu0 0
      %3690 = vmatpush2.bf16.msra.mxu0 0
      %3691 = vmatprep.mubr.bf16.mxu0 0
      %3692 = vmatmul.mubr.bf16.gmra.mxu0 %v3654
      %v3693 = vpop.f32.mrf.mxu0
      %v3694 = vadd.f32 %v3528, %v3693
      %v3695 = vpop.f32.mrf.mxu0
      %v3696 = vpop.f32.mrf.mxu0
      %v3697 = vadd.f32 %v3531, %v3696
      %v3698 = vpop.f32.mrf.mxu0
      %3699 = vmatprep.mubr.bf16.mxu0 0
      %3700 = vmatmul.mubr.bf16.gmra.mxu0 %v3457
      %v3701 = vpop.f32.mrf.mxu0
      %v3702 = vadd.f32 %v3536, %v3701
      %v3703 = vpop.f32.mrf.mxu0
      %v3704 = vpop.f32.mrf.mxu0
      %v3705 = vadd.f32 %v3539, %v3704
      %v3706 = vpop.f32.mrf.mxu0
      %3707 = vmatprep.mubr.bf16.mxu0 0
      %3708 = vmatmul.mubr.bf16.gmra.mxu0 %v3459
      %v3709 = vpop.f32.mrf.mxu0
      %v3710 = vadd.f32 %v3544, %v3709
      %v3711 = vpop.f32.mrf.mxu0
      %v3712 = vpop.f32.mrf.mxu0
      %v3713 = vadd.f32 %v3547, %v3712
      %v3714 = vpop.f32.mrf.mxu0
      %3715 = vmatprep.mubr.bf16.mxu0 0
      %3716 = vmatmul.mubr.bf16.gmra.mxu0 %v3461
      %v3717 = vpop.f32.mrf.mxu0
      %v3718 = vadd.f32 %v3552, %v3717
      %v3719 = vpop.f32.mrf.mxu0
      %v3720 = vpop.f32.mrf.mxu0
      %v3721 = vadd.f32 %v3555, %v3720
      %v3722 = vpop.f32.mrf.mxu0
      %3723 = vmatprep.mubr.bf16.mxu0 0
      %3724 = vmatmul.mubr.bf16.gmra.mxu0 %v3463
      %v3725 = vpop.f32.mrf.mxu0
      %v3726 = vadd.f32 %v3560, %v3725
      %v3727 = vpop.f32.mrf.mxu0
      %v3728 = vpop.f32.mrf.mxu0
      %v3729 = vadd.f32 %v3563, %v3728
      %v3730 = vpop.f32.mrf.mxu0
      %3731 = vmatprep.mubr.bf16.mxu0 0
      %3732 = vmatmul.mubr.bf16.gmra.mxu0 %v3465
      %v3733 = vpop.f32.mrf.mxu0
      %v3734 = vadd.f32 %v3568, %v3733
      %v3735 = vpop.f32.mrf.mxu0
      %v3736 = vpop.f32.mrf.mxu0
      %v3737 = vadd.f32 %v3571, %v3736
      %v3738 = vpop.f32.mrf.mxu0
      %3739 = vmatprep.mubr.bf16.mxu0 0
      %3740 = vmatmul.mubr.bf16.gmra.mxu0 %v3467
      %v3741 = vpop.f32.mrf.mxu0
      %v3742 = vadd.f32 %v3576, %v3741
      %v3743 = vpop.f32.mrf.mxu0
      %v3744 = vpop.f32.mrf.mxu0
      %v3745 = vadd.f32 %v3579, %v3744
      %v3746 = vpop.f32.mrf.mxu0
      %3747 = vmatprep.mubr.bf16.mxu0 0
      %3748 = vmatmul.mubr.bf16.gmra.mxu0 %v3469
      %v3749 = vpop.f32.mrf.mxu0
      %v3750 = vadd.f32 %v3584, %v3749
      %v3751 = vpop.f32.mrf.mxu0
      %v3752 = vpop.f32.mrf.mxu0
      %v3753 = vadd.f32 %v3587, %v3752
      %v3754 = vpop.f32.mrf.mxu0
      %3755 = vmatprep.mubr.bf16.mxu0 0
      %3756 = vmatmul.mubr.bf16.gmra.mxu0 %v3471
      %v3757 = vpop.f32.mrf.mxu0
      %v3758 = vadd.f32 %v3592, %v3757
      %v3759 = vpop.f32.mrf.mxu0
      %v3760 = vpop.f32.mrf.mxu0
      %v3761 = vadd.f32 %v3595, %v3760
      %v3762 = vpop.f32.mrf.mxu0
      %3763 = vmatprep.mubr.bf16.mxu0 0
      %3764 = vmatmul.mubr.bf16.gmra.mxu0 %v3473
      %v3765 = vpop.f32.mrf.mxu0
      %v3766 = vadd.f32 %v3600, %v3765
      %v3767 = vpop.f32.mrf.mxu0
      %v3768 = vpop.f32.mrf.mxu0
      %v3769 = vadd.f32 %v3603, %v3768
      %v3770 = vpop.f32.mrf.mxu0
      %3771 = vmatprep.mubr.bf16.mxu0 0
      %3772 = vmatmul.mubr.bf16.gmra.mxu0 %v3475
      %v3773 = vpop.f32.mrf.mxu0
      %v3774 = vadd.f32 %v3608, %v3773
      %v3775 = vpop.f32.mrf.mxu0
      %v3776 = vpop.f32.mrf.mxu0
      %v3777 = vadd.f32 %v3611, %v3776
      %v3778 = vpop.f32.mrf.mxu0
      %3779 = vmatprep.mubr.bf16.mxu0 0
      %3780 = vmatmul.mubr.bf16.gmra.mxu0 %v3477
      %v3781 = vpop.f32.mrf.mxu0
      %v3782 = vadd.f32 %v3616, %v3781
      %v3783 = vpop.f32.mrf.mxu0
      %v3784 = vpop.f32.mrf.mxu0
      %v3785 = vadd.f32 %v3619, %v3784
      %v3786 = vpop.f32.mrf.mxu0
      %3787 = vmatprep.mubr.bf16.mxu0 0
      %3788 = vmatmul.mubr.bf16.gmra.mxu0 %v3479
      %v3789 = vpop.f32.mrf.mxu0
      %v3790 = vadd.f32 %v3624, %v3789
      %v3791 = vpop.f32.mrf.mxu0
      %v3792 = vpop.f32.mrf.mxu0
      %v3793 = vadd.f32 %v3627, %v3792
      %v3794 = vpop.f32.mrf.mxu0
      %3795 = vmatprep.mubr.bf16.mxu0 0
      %3796 = vmatmul.mubr.bf16.gmra.mxu0 %v3481
      %v3797 = vpop.f32.mrf.mxu0
      %v3798 = vadd.f32 %v3632, %v3797
      %v3799 = vpop.f32.mrf.mxu0
      %v3800 = vpop.f32.mrf.mxu0
      %v3801 = vadd.f32 %v3635, %v3800
      %v3802 = vpop.f32.mrf.mxu0
      %3803 = vmatprep.mubr.bf16.mxu0 0
      %3804 = vmatmul.mubr.bf16.gmra.mxu0 %v3483
      %v3805 = vpop.f32.mrf.mxu0
      %v3806 = vadd.f32 %v3640, %v3805
      %v3807 = vpop.f32.mrf.mxu0
      %v3808 = vpop.f32.mrf.mxu0
      %v3809 = vadd.f32 %v3643, %v3808
      %v3810 = vpop.f32.mrf.mxu0
      %3811 = vmatprep.mubr.bf16.mxu0 0
      %3812 = vmatmul.mubr.bf16.gmra.mxu0 %v3485
      %v3813 = vpop.f32.mrf.mxu0
      %v3814 = vadd.f32 %v3648, %v3813
      %v3815 = vpop.f32.mrf.mxu0
      %v3816 = vpop.f32.mrf.mxu0
      %v3817 = vadd.f32 %v3651, %v3816
      %v3818 = vpop.f32.mrf.mxu0
      %3819 = vdwg.mxu0
      %s3820 = scalar_lea.vmem %s2, 8
      %v3821 = vld [vmem:[%s3820] sm:$0x7]
      %v3822 = vsel %vm3456, %v3452, 0
      %v3825 = vsel %vm3489, %v3821, 0
      %3827 = vmatprep.subr.bf16.mxu0 0
      %3828 = vmatpush1.bf16.msra.mxu0 0
      %3829 = vmatprep.subr.bf16.mxu0 0
      %3830 = vmatpush1.bf16.msra.mxu0 0
      %3831 = vmatprep.subr.bf16.mxu0 0
      %3832 = vmatpush1.bf16.msra.mxu0 0
      %3833 = vmatprep.subr.bf16.mxu0 0
      %3834 = vmatpush1.bf16.msra.mxu0 0
      %3835 = vmatprep.subr.bf16.mxu0 0
      %3836 = vmatpush1.bf16.msra.mxu0 0
      %3837 = vmatprep.subr.bf16.mxu0 0
      %3838 = vmatpush1.bf16.msra.mxu0 0
      %3839 = vmatprep.subr.bf16.mxu0 0
      %3840 = vmatpush1.bf16.msra.mxu0 0
      %3841 = vmatprep.subr.bf16.mxu0 0
      %3842 = vmatpush1.bf16.msra.mxu0 %v3825
      %3843 = vmatprep.subr.bf16.mxu0 0
      %3844 = vmatpush2.bf16.msra.mxu0 0
      %3845 = vmatprep.subr.bf16.mxu0 0
      %3846 = vmatpush2.bf16.msra.mxu0 0
      %3847 = vmatprep.subr.bf16.mxu0 0
      %3848 = vmatpush2.bf16.msra.mxu0 0
      %3849 = vmatprep.subr.bf16.mxu0 0
      %3850 = vmatpush2.bf16.msra.mxu0 0
      %3851 = vmatprep.subr.bf16.mxu0 0
      %3852 = vmatpush2.bf16.msra.mxu0 0
      %3853 = vmatprep.subr.bf16.mxu0 0
      %3854 = vmatpush2.bf16.msra.mxu0 0
      %3855 = vmatprep.subr.bf16.mxu0 0
      %3856 = vmatpush2.bf16.msra.mxu0 0
      %3857 = vmatprep.subr.bf16.mxu0 0
      %3858 = vmatpush2.bf16.msra.mxu0 0
      %3859 = vmatprep.mubr.bf16.mxu0 0
      %3860 = vmatmul.mubr.bf16.gmra.mxu0 %v3459
      %v3861 = vpop.f32.mrf.mxu0
      %v3862 = vadd.f32 0.0, %v3861
      %v3863 = vpop.f32.mrf.mxu0
      %v3864 = vpop.f32.mrf.mxu0
      %v3865 = vadd.f32 0.0, %v3864
      %v3866 = vpop.f32.mrf.mxu0
      %3867 = vmatprep.mubr.bf16.mxu0 0
      %3868 = vmatmul.mubr.bf16.gmra.mxu0 %v3461
      %v3869 = vpop.f32.mrf.mxu0
      %v3870 = vadd.f32 0.0, %v3869
      %v3871 = vpop.f32.mrf.mxu0
      %v3872 = vpop.f32.mrf.mxu0
      %v3873 = vadd.f32 0.0, %v3872
      %v3874 = vpop.f32.mrf.mxu0
      %3875 = vmatprep.mubr.bf16.mxu0 0
      %3876 = vmatmul.mubr.bf16.gmra.mxu0 %v3463
      %v3877 = vpop.f32.mrf.mxu0
      %v3878 = vadd.f32 0.0, %v3877
      %v3879 = vpop.f32.mrf.mxu0
      %v3880 = vpop.f32.mrf.mxu0
      %v3881 = vadd.f32 0.0, %v3880
      %v3882 = vpop.f32.mrf.mxu0
      %3883 = vmatprep.mubr.bf16.mxu0 0
      %3884 = vmatmul.mubr.bf16.gmra.mxu0 %v3465
      %v3885 = vpop.f32.mrf.mxu0
      %v3886 = vadd.f32 0.0, %v3885
      %v3887 = vpop.f32.mrf.mxu0
      %v3888 = vpop.f32.mrf.mxu0
      %v3889 = vadd.f32 0.0, %v3888
      %v3890 = vpop.f32.mrf.mxu0
      %3891 = vmatprep.mubr.bf16.mxu0 0
      %3892 = vmatmul.mubr.bf16.gmra.mxu0 %v3467
      %v3893 = vpop.f32.mrf.mxu0
      %v3894 = vadd.f32 0.0, %v3893
      %v3895 = vpop.f32.mrf.mxu0
      %v3896 = vpop.f32.mrf.mxu0
      %v3897 = vadd.f32 0.0, %v3896
      %v3898 = vpop.f32.mrf.mxu0
      %3899 = vmatprep.mubr.bf16.mxu0 0
      %3900 = vmatmul.mubr.bf16.gmra.mxu0 %v3469
      %v3901 = vpop.f32.mrf.mxu0
      %v3902 = vadd.f32 0.0, %v3901
      %v3903 = vpop.f32.mrf.mxu0
      %v3904 = vpop.f32.mrf.mxu0
      %v3905 = vadd.f32 0.0, %v3904
      %v3906 = vpop.f32.mrf.mxu0
      %3907 = vmatprep.mubr.bf16.mxu0 0
      %3908 = vmatmul.mubr.bf16.gmra.mxu0 %v3471
      %v3909 = vpop.f32.mrf.mxu0
      %v3910 = vadd.f32 0.0, %v3909
      %v3911 = vpop.f32.mrf.mxu0
      %v3912 = vpop.f32.mrf.mxu0
      %v3913 = vadd.f32 0.0, %v3912
      %v3914 = vpop.f32.mrf.mxu0
      %3915 = vmatprep.mubr.bf16.mxu0 0
      %3916 = vmatmul.mubr.bf16.gmra.mxu0 %v3473
      %v3917 = vpop.f32.mrf.mxu0
      %v3918 = vadd.f32 0.0, %v3917
      %v3919 = vpop.f32.mrf.mxu0
      %v3920 = vpop.f32.mrf.mxu0
      %v3921 = vadd.f32 0.0, %v3920
      %v3922 = vpop.f32.mrf.mxu0
      %3923 = vmatprep.mubr.bf16.mxu0 0
      %3924 = vmatmul.mubr.bf16.gmra.mxu0 %v3475
      %v3925 = vpop.f32.mrf.mxu0
      %v3926 = vadd.f32 0.0, %v3925
      %v3927 = vpop.f32.mrf.mxu0
      %v3928 = vpop.f32.mrf.mxu0
      %v3929 = vadd.f32 0.0, %v3928
      %v3930 = vpop.f32.mrf.mxu0
      %3931 = vmatprep.mubr.bf16.mxu0 0
      %3932 = vmatmul.mubr.bf16.gmra.mxu0 %v3477
      %v3933 = vpop.f32.mrf.mxu0
      %v3934 = vadd.f32 0.0, %v3933
      %v3935 = vpop.f32.mrf.mxu0
      %v3936 = vpop.f32.mrf.mxu0
      %v3937 = vadd.f32 0.0, %v3936
      %v3938 = vpop.f32.mrf.mxu0
      %3939 = vmatprep.mubr.bf16.mxu0 0
      %3940 = vmatmul.mubr.bf16.gmra.mxu0 %v3479
      %v3941 = vpop.f32.mrf.mxu0
      %v3942 = vadd.f32 0.0, %v3941
      %v3943 = vpop.f32.mrf.mxu0
      %v3944 = vpop.f32.mrf.mxu0
      %v3945 = vadd.f32 0.0, %v3944
      %v3946 = vpop.f32.mrf.mxu0
      %3947 = vmatprep.mubr.bf16.mxu0 0
      %3948 = vmatmul.mubr.bf16.gmra.mxu0 %v3481
      %v3949 = vpop.f32.mrf.mxu0
      %v3950 = vadd.f32 0.0, %v3949
      %v3951 = vpop.f32.mrf.mxu0
      %v3952 = vpop.f32.mrf.mxu0
      %v3953 = vadd.f32 0.0, %v3952
      %v3954 = vpop.f32.mrf.mxu0
      %3955 = vmatprep.mubr.bf16.mxu0 0
      %3956 = vmatmul.mubr.bf16.gmra.mxu0 %v3483
      %v3957 = vpop.f32.mrf.mxu0
      %v3958 = vadd.f32 0.0, %v3957
      %v3959 = vpop.f32.mrf.mxu0
      %v3960 = vpop.f32.mrf.mxu0
      %v3961 = vadd.f32 0.0, %v3960
      %v3962 = vpop.f32.mrf.mxu0
      %3963 = vmatprep.mubr.bf16.mxu0 0
      %3964 = vmatmul.mubr.bf16.gmra.mxu0 %v3485
      %v3965 = vpop.f32.mrf.mxu0
      %v3966 = vadd.f32 0.0, %v3965
      %v3967 = vpop.f32.mrf.mxu0
      %v3968 = vpop.f32.mrf.mxu0
      %v3969 = vadd.f32 0.0, %v3968
      %v3970 = vpop.f32.mrf.mxu0
      %3971 = vmatprep.mubr.bf16.mxu0 0
      %3972 = vmatmul.mubr.bf16.gmra.mxu0 %v3487
      %v3973 = vpop.f32.mrf.mxu0
      %v3974 = vadd.f32 0.0, %v3973
      %v3975 = vpop.f32.mrf.mxu0
      %v3976 = vpop.f32.mrf.mxu0
      %v3977 = vadd.f32 0.0, %v3976
      %v3978 = vpop.f32.mrf.mxu0
      %3979 = vmatprep.mubr.bf16.mxu0 0
      %3980 = vmatmul.mubr.bf16.gmra.mxu0 %v3822
      %v3981 = vpop.f32.mrf.mxu0
      %v3982 = vadd.f32 0.0, %v3981
      %v3983 = vpop.f32.mrf.mxu0
      %v3984 = vpop.f32.mrf.mxu0
      %v3985 = vadd.f32 0.0, %v3984
      %v3986 = vpop.f32.mrf.mxu0
      %3987 = vdwg.mxu0
      %v3988 = vadd.f32 %v3694, %v3862
      %v3989 = vadd.f32 %v3697, %v3865
      %v3990 = vadd.f32 %v3702, %v3870
      %v3991 = vadd.f32 %v3705, %v3873
      %v3992 = vadd.f32 %v3710, %v3878
      %v3993 = vadd.f32 %v3713, %v3881
      %v3994 = vadd.f32 %v3718, %v3886
      %v3995 = vadd.f32 %v3721, %v3889
      %v3996 = vadd.f32 %v3726, %v3894
      %v3997 = vadd.f32 %v3729, %v3897
      %v3998 = vadd.f32 %v3734, %v3902
      %v3999 = vadd.f32 %v3737, %v3905
      %v4000 = vadd.f32 %v3742, %v3910
      %v4001 = vadd.f32 %v3745, %v3913
      %v4002 = vadd.f32 %v3750, %v3918
      %v4003 = vadd.f32 %v3753, %v3921
      %v4004 = vadd.f32 %v3758, %v3926
      %v4005 = vadd.f32 %v3761, %v3929
      %v4006 = vadd.f32 %v3766, %v3934
      %v4007 = vadd.f32 %v3769, %v3937
      %v4008 = vadd.f32 %v3774, %v3942
      %v4009 = vadd.f32 %v3777, %v3945
      %v4010 = vadd.f32 %v3782, %v3950
      %v4011 = vadd.f32 %v3785, %v3953
      %v4012 = vadd.f32 %v3790, %v3958
      %v4013 = vadd.f32 %v3793, %v3961
      %v4014 = vadd.f32 %v3798, %v3966
      %v4015 = vadd.f32 %v3801, %v3969
      %v4016 = vadd.f32 %v3806, %v3974
      %v4017 = vadd.f32 %v3809, %v3977
      %v4018 = vadd.f32 %v3814, %v3982
      %v4019 = vadd.f32 %v3817, %v3985
      %v4020 = vld [vmem:[%s4] sm:$0x1]
      %v4022 = vlaneseq
      %v4023 = vshrl.u32 %v4022, 7
      %v4024 = vsub.s32 0, %v4023
      %v4025 = vrot.slane %v4020, %v4024
      %v4027 = vadd.f32 %v3988, %v4025
      %v4028 = vadd.f32 %v3989, %v4025
      %v4029 = vadd.f32 %v3990, %v4025
      %v4030 = vadd.f32 %v3991, %v4025
      %v4031 = vadd.f32 %v3992, %v4025
      %v4032 = vadd.f32 %v3993, %v4025
      %v4033 = vadd.f32 %v3994, %v4025
      %v4034 = vadd.f32 %v3995, %v4025
      %v4035 = vadd.f32 %v3996, %v4025
      %v4036 = vadd.f32 %v3997, %v4025
      %v4037 = vadd.f32 %v3998, %v4025
      %v4038 = vadd.f32 %v3999, %v4025
      %v4039 = vadd.f32 %v4000, %v4025
      %v4040 = vadd.f32 %v4001, %v4025
      %v4041 = vadd.f32 %v4002, %v4025
      %v4042 = vadd.f32 %v4003, %v4025
      %v4043 = vadd.f32 %v4004, %v4025
      %v4044 = vadd.f32 %v4005, %v4025
      %v4045 = vadd.f32 %v4006, %v4025
      %v4046 = vadd.f32 %v4007, %v4025
      %v4047 = vadd.f32 %v4008, %v4025
      %v4048 = vadd.f32 %v4009, %v4025
      %v4049 = vadd.f32 %v4010, %v4025
      %v4050 = vadd.f32 %v4011, %v4025
      %v4051 = vadd.f32 %v4012, %v4025
      %v4052 = vadd.f32 %v4013, %v4025
      %v4053 = vadd.f32 %v4014, %v4025
      %v4054 = vadd.f32 %v4015, %v4025
      %v4055 = vadd.f32 %v4016, %v4025
      %v4056 = vadd.f32 %v4017, %v4025
      %v4057 = vadd.f32 %v4018, %v4025
      %v4058 = vadd.f32 %v4019, %v4025
      %v4059 = vxor.u32 %v4027, 2147483648
      %v4060 = vxor.u32 %v4028, 2147483648
      %v4061 = vxor.u32 %v4029, 2147483648
      %v4062 = vxor.u32 %v4030, 2147483648
      %v4063 = vxor.u32 %v4031, 2147483648
      %v4064 = vxor.u32 %v4032, 2147483648
      %v4065 = vxor.u32 %v4033, 2147483648
      %v4066 = vxor.u32 %v4034, 2147483648
      %v4067 = vxor.u32 %v4035, 2147483648
      %v4068 = vxor.u32 %v4036, 2147483648
      %v4069 = vxor.u32 %v4037, 2147483648
      %v4070 = vxor.u32 %v4038, 2147483648
      %v4071 = vxor.u32 %v4039, 2147483648
      %v4072 = vxor.u32 %v4040, 2147483648
      %v4073 = vxor.u32 %v4041, 2147483648
      %v4074 = vxor.u32 %v4042, 2147483648
      %v4075 = vxor.u32 %v4043, 2147483648
      %v4076 = vxor.u32 %v4044, 2147483648
      %v4077 = vxor.u32 %v4045, 2147483648
      %v4078 = vxor.u32 %v4046, 2147483648
      %v4079 = vxor.u32 %v4047, 2147483648
      %v4080 = vxor.u32 %v4048, 2147483648
      %v4081 = vxor.u32 %v4049, 2147483648
      %v4082 = vxor.u32 %v4050, 2147483648
      %v4083 = vxor.u32 %v4051, 2147483648
      %v4084 = vxor.u32 %v4052, 2147483648
      %v4085 = vxor.u32 %v4053, 2147483648
      %v4086 = vxor.u32 %v4054, 2147483648
      %v4087 = vxor.u32 %v4055, 2147483648
      %v4088 = vxor.u32 %v4056, 2147483648
      %v4089 = vxor.u32 %v4057, 2147483648
      %v4090 = vxor.u32 %v4058, 2147483648
      %v4091 = vmul.f32 %v4059, 1.442695
      %v4092 = vpow.pop %v4091
      %v4093 = vmul.f32 %v4060, 1.442695
      %v4094 = vpow.pop %v4093
      %v4095 = vmul.f32 %v4061, 1.442695
      %v4096 = vpow.pop %v4095
      %v4097 = vmul.f32 %v4062, 1.442695
      %v4098 = vpow.pop %v4097
      %v4099 = vmul.f32 %v4063, 1.442695
      %v4100 = vpow.pop %v4099
      %v4101 = vmul.f32 %v4064, 1.442695
      %v4102 = vpow.pop %v4101
      %v4103 = vmul.f32 %v4065, 1.442695
      %v4104 = vpow.pop %v4103
      %v4105 = vmul.f32 %v4066, 1.442695
      %v4106 = vpow.pop %v4105
      %v4107 = vmul.f32 %v4067, 1.442695
      %v4108 = vpow.pop %v4107
      %v4109 = vmul.f32 %v4068, 1.442695
      %v4110 = vpow.pop %v4109
      %v4111 = vmul.f32 %v4069, 1.442695
      %v4112 = vpow.pop %v4111
      %v4113 = vmul.f32 %v4070, 1.442695
      %v4114 = vpow.pop %v4113
      %v4115 = vmul.f32 %v4071, 1.442695
      %v4116 = vpow.pop %v4115
      %v4117 = vmul.f32 %v4072, 1.442695
      %v4118 = vpow.pop %v4117
      %v4119 = vmul.f32 %v4073, 1.442695
      %v4120 = vpow.pop %v4119
      %v4121 = vmul.f32 %v4074, 1.442695
      %v4122 = vpow.pop %v4121
      %v4123 = vmul.f32 %v4075, 1.442695
      %v4124 = vpow.pop %v4123
      %v4125 = vmul.f32 %v4076, 1.442695
      %v4126 = vpow.pop %v4125
      %v4127 = vmul.f32 %v4077, 1.442695
      %v4128 = vpow.pop %v4127
      %v4129 = vmul.f32 %v4078, 1.442695
      %v4130 = vpow.pop %v4129
      %v4131 = vmul.f32 %v4079, 1.442695
      %v4132 = vpow.pop %v4131
      %v4133 = vmul.f32 %v4080, 1.442695
      %v4134 = vpow.pop %v4133
      %v4135 = vmul.f32 %v4081, 1.442695
      %v4136 = vpow.pop %v4135
      %v4137 = vmul.f32 %v4082, 1.442695
      %v4138 = vpow.pop %v4137
      %v4139 = vmul.f32 %v4083, 1.442695
      %v4140 = vpow.pop %v4139
      %v4141 = vmul.f32 %v4084, 1.442695
      %v4142 = vpow.pop %v4141
      %v4143 = vmul.f32 %v4085, 1.442695
      %v4144 = vpow.pop %v4143
      %v4145 = vmul.f32 %v4086, 1.442695
      %v4146 = vpow.pop %v4145
      %v4147 = vmul.f32 %v4087, 1.442695
      %v4148 = vpow.pop %v4147
      %v4149 = vmul.f32 %v4088, 1.442695
      %v4150 = vpow.pop %v4149
      %v4151 = vmul.f32 %v4089, 1.442695
      %v4152 = vpow.pop %v4151
      %v4153 = vmul.f32 %v4090, 1.442695
      %v4154 = vpow.pop %v4153
      %v4155 = vadd.f32 %v4092, 1.0
      %v4156 = vadd.f32 %v4094, 1.0
      %v4157 = vadd.f32 %v4096, 1.0
      %v4158 = vadd.f32 %v4098, 1.0
      %v4159 = vadd.f32 %v4100, 1.0
      %v4160 = vadd.f32 %v4102, 1.0
      %v4161 = vadd.f32 %v4104, 1.0
      %v4162 = vadd.f32 %v4106, 1.0
      %v4163 = vadd.f32 %v4108, 1.0
      %v4164 = vadd.f32 %v4110, 1.0
      %v4165 = vadd.f32 %v4112, 1.0
      %v4166 = vadd.f32 %v4114, 1.0
      %v4167 = vadd.f32 %v4116, 1.0
      %v4168 = vadd.f32 %v4118, 1.0
      %v4169 = vadd.f32 %v4120, 1.0
      %v4170 = vadd.f32 %v4122, 1.0
      %v4171 = vadd.f32 %v4124, 1.0
      %v4172 = vadd.f32 %v4126, 1.0
      %v4173 = vadd.f32 %v4128, 1.0
      %v4174 = vadd.f32 %v4130, 1.0
      %v4175 = vadd.f32 %v4132, 1.0
      %v4176 = vadd.f32 %v4134, 1.0
      %v4177 = vadd.f32 %v4136, 1.0
      %v4178 = vadd.f32 %v4138, 1.0
      %v4179 = vadd.f32 %v4140, 1.0
      %v4180 = vadd.f32 %v4142, 1.0
      %v4181 = vadd.f32 %v4144, 1.0
      %v4182 = vadd.f32 %v4146, 1.0
      %v4183 = vadd.f32 %v4148, 1.0
      %v4184 = vadd.f32 %v4150, 1.0
      %v4185 = vadd.f32 %v4152, 1.0
      %v4186 = vadd.f32 %v4154, 1.0
      %v4187 = vrcp.pop %v4155
      %v4188 = vmul.f32 1.0, %v4187
      %v4189 = vrcp.pop %v4156
      %v4190 = vmul.f32 1.0, %v4189
      %v4191 = vrcp.pop %v4157
      %v4192 = vmul.f32 1.0, %v4191
      %v4193 = vrcp.pop %v4158
      %v4194 = vmul.f32 1.0, %v4193
      %v4195 = vrcp.pop %v4159
      %v4196 = vmul.f32 1.0, %v4195
      %v4197 = vrcp.pop %v4160
      %v4198 = vmul.f32 1.0, %v4197
      %v4199 = vrcp.pop %v4161
      %v4200 = vmul.f32 1.0, %v4199
      %v4201 = vrcp.pop %v4162
      %v4202 = vmul.f32 1.0, %v4201
      %v4203 = vrcp.pop %v4163
      %v4204 = vmul.f32 1.0, %v4203
      %v4205 = vrcp.pop %v4164
      %v4206 = vmul.f32 1.0, %v4205
      %v4207 = vrcp.pop %v4165
      %v4208 = vmul.f32 1.0, %v4207
      %v4209 = vrcp.pop %v4166
      %v4210 = vmul.f32 1.0, %v4209
      %v4211 = vrcp.pop %v4167
      %v4212 = vmul.f32 1.0, %v4211
      %v4213 = vrcp.pop %v4168
      %v4214 = vmul.f32 1.0, %v4213
      %v4215 = vrcp.pop %v4169
      %v4216 = vmul.f32 1.0, %v4215
      %v4217 = vrcp.pop %v4170
      %v4218 = vmul.f32 1.0, %v4217
      %v4219 = vrcp.pop %v4171
      %v4220 = vmul.f32 1.0, %v4219
      %v4221 = vrcp.pop %v4172
      %v4222 = vmul.f32 1.0, %v4221
      %v4223 = vrcp.pop %v4173
      %v4224 = vmul.f32 1.0, %v4223
      %v4225 = vrcp.pop %v4174
      %v4226 = vmul.f32 1.0, %v4225
      %v4227 = vrcp.pop %v4175
      %v4228 = vmul.f32 1.0, %v4227
      %v4229 = vrcp.pop %v4176
      %v4230 = vmul.f32 1.0, %v4229
      %v4231 = vrcp.pop %v4177
      %v4232 = vmul.f32 1.0, %v4231
      %v4233 = vrcp.pop %v4178
      %v4234 = vmul.f32 1.0, %v4233
      %v4235 = vrcp.pop %v4179
      %v4236 = vmul.f32 1.0, %v4235
      %v4237 = vrcp.pop %v4180
      %v4238 = vmul.f32 1.0, %v4237
      %v4239 = vrcp.pop %v4181
      %v4240 = vmul.f32 1.0, %v4239
      %v4241 = vrcp.pop %v4182
      %v4242 = vmul.f32 1.0, %v4241
      %v4243 = vrcp.pop %v4183
      %v4244 = vmul.f32 1.0, %v4243
      %v4245 = vrcp.pop %v4184
      %v4246 = vmul.f32 1.0, %v4245
      %v4247 = vrcp.pop %v4185
      %v4248 = vmul.f32 1.0, %v4247
      %v4249 = vrcp.pop %v4186
      %v4250 = vmul.f32 1.0, %v4249
      %v4251 = vmul.f32 %v4027, %v4188
      %v4252 = vmul.f32 %v4028, %v4190
      %v4253 = vmul.f32 %v4029, %v4192
      %v4254 = vmul.f32 %v4030, %v4194
      %v4255 = vmul.f32 %v4031, %v4196
      %v4256 = vmul.f32 %v4032, %v4198
      %v4257 = vmul.f32 %v4033, %v4200
      %v4258 = vmul.f32 %v4034, %v4202
      %v4259 = vmul.f32 %v4035, %v4204
      %v4260 = vmul.f32 %v4036, %v4206
      %v4261 = vmul.f32 %v4037, %v4208
      %v4262 = vmul.f32 %v4038, %v4210
      %v4263 = vmul.f32 %v4039, %v4212
      %v4264 = vmul.f32 %v4040, %v4214
      %v4265 = vmul.f32 %v4041, %v4216
      %v4266 = vmul.f32 %v4042, %v4218
      %v4267 = vmul.f32 %v4043, %v4220
      %v4268 = vmul.f32 %v4044, %v4222
      %v4269 = vmul.f32 %v4045, %v4224
      %v4270 = vmul.f32 %v4046, %v4226
      %v4271 = vmul.f32 %v4047, %v4228
      %v4272 = vmul.f32 %v4048, %v4230
      %v4273 = vmul.f32 %v4049, %v4232
      %v4274 = vmul.f32 %v4050, %v4234
      %v4275 = vmul.f32 %v4051, %v4236
      %v4276 = vmul.f32 %v4052, %v4238
      %v4277 = vmul.f32 %v4053, %v4240
      %v4278 = vmul.f32 %v4054, %v4242
      %v4279 = vmul.f32 %v4055, %v4244
      %v4280 = vmul.f32 %v4056, %v4246
      %v4281 = vmul.f32 %v4057, %v4248
      %v4282 = vmul.f32 %v4058, %v4250
      %v4283 = vunpack.c.l.bf16 %v263
      %v4284 = vunpack.c.l.bf16 %v264
      %v4285 = vunpack.c.l.bf16 %v265
      %v4286 = vunpack.c.l.bf16 %v267
      %v4287 = vunpack.c.l.bf16 %v268
      %v4288 = vunpack.c.l.bf16 %v269
      %v4289 = vunpack.c.l.bf16 %v271
      %v4290 = vunpack.c.l.bf16 %v272
      %v4291 = vunpack.c.l.bf16 %v273
      %v4292 = vunpack.c.l.bf16 %v275
      %v4293 = vunpack.c.l.bf16 %v276
      %v4294 = vunpack.c.l.bf16 %v277
      %v4295 = vunpack.c.l.bf16 %v279
      %v4296 = vunpack.c.l.bf16 %v280
      %v4297 = vunpack.c.l.bf16 %v281
      %v4298 = vunpack.c.l.bf16 %v283
      %v4299 = vunpack.c.l.bf16 %v284
      %v4300 = vunpack.c.l.bf16 %v285
      %v4301 = vunpack.c.l.bf16 %v287
      %v4302 = vunpack.c.l.bf16 %v288
      %v4303 = vunpack.c.l.bf16 %v289
      %v4304 = vunpack.c.l.bf16 %v291
      %v4305 = vunpack.c.l.bf16 %v292
      %v4306 = vunpack.c.l.bf16 %v293
      %v4307 = vunpack.c.l.bf16 %v295
      %v4308 = vunpack.c.l.bf16 %v296
      %v4309 = vunpack.c.l.bf16 %v297
      %v4310 = vunpack.c.l.bf16 %v299
      %v4311 = vunpack.c.l.bf16 %v300
      %v4312 = vunpack.c.l.bf16 %v301
      %v4313 = vunpack.c.l.bf16 %v303
      %v4314 = vunpack.c.l.bf16 %v304
      %v4315 = vunpack.c.l.bf16 %v305
      %v4316 = vunpack.c.l.bf16 %v307
      %v4317 = vunpack.c.l.bf16 %v308
      %v4318 = vunpack.c.l.bf16 %v309
      %v4319 = vunpack.c.l.bf16 %v311
      %v4320 = vunpack.c.l.bf16 %v312
      %v4321 = vunpack.c.l.bf16 %v313
      %v4322 = vunpack.c.l.bf16 %v315
      %v4323 = vunpack.c.l.bf16 %v316
      %v4324 = vunpack.c.l.bf16 %v317
      %v4325 = vunpack.c.l.bf16 %v319
      %v4326 = vunpack.c.l.bf16 %v320
      %v4327 = vunpack.c.l.bf16 %v321
      %v4328 = vunpack.c.l.bf16 %v323
      %v4329 = vunpack.c.l.bf16 %v324
      %v4330 = vunpack.c.l.bf16 %v325
      %v4379 = vrot.slane %v4283, 2
      %v4380 = vrot.slane %v4284, 2
      %v4381 = vsel %vm1473, %v4379, %v4380
      %v4382 = vrot.slane %v4285, 2
      %v4383 = vsel %vm1473, %v4380, %v4382
      %v4384 = vrot.slane %v4286, 2
      %v4385 = vrot.slane %v4287, 2
      %v4386 = vsel %vm1473, %v4384, %v4385
      %v4387 = vrot.slane %v4288, 2
      %v4388 = vsel %vm1473, %v4385, %v4387
      %v4389 = vrot.slane %v4289, 2
      %v4390 = vrot.slane %v4290, 2
      %v4391 = vsel %vm1473, %v4389, %v4390
      %v4392 = vrot.slane %v4291, 2
      %v4393 = vsel %vm1473, %v4390, %v4392
      %v4394 = vrot.slane %v4292, 2
      %v4395 = vrot.slane %v4293, 2
      %v4396 = vsel %vm1473, %v4394, %v4395
      %v4397 = vrot.slane %v4294, 2
      %v4398 = vsel %vm1473, %v4395, %v4397
      %v4399 = vrot.slane %v4295, 2
      %v4400 = vrot.slane %v4296, 2
      %v4401 = vsel %vm1473, %v4399, %v4400
      %v4402 = vrot.slane %v4297, 2
      %v4403 = vsel %vm1473, %v4400, %v4402
      %v4404 = vrot.slane %v4298, 2
      %v4405 = vrot.slane %v4299, 2
      %v4406 = vsel %vm1473, %v4404, %v4405
      %v4407 = vrot.slane %v4300, 2
      %v4408 = vsel %vm1473, %v4405, %v4407
      %v4409 = vrot.slane %v4301, 2
      %v4410 = vrot.slane %v4302, 2
      %v4411 = vsel %vm1473, %v4409, %v4410
      %v4412 = vrot.slane %v4303, 2
      %v4413 = vsel %vm1473, %v4410, %v4412
      %v4414 = vrot.slane %v4304, 2
      %v4415 = vrot.slane %v4305, 2
      %v4416 = vsel %vm1473, %v4414, %v4415
      %v4417 = vrot.slane %v4306, 2
      %v4418 = vsel %vm1473, %v4415, %v4417
      %v4419 = vrot.slane %v4307, 2
      %v4420 = vrot.slane %v4308, 2
      %v4421 = vsel %vm1473, %v4419, %v4420
      %v4422 = vrot.slane %v4309, 2
      %v4423 = vsel %vm1473, %v4420, %v4422
      %v4424 = vrot.slane %v4310, 2
      %v4425 = vrot.slane %v4311, 2
      %v4426 = vsel %vm1473, %v4424, %v4425
      %v4427 = vrot.slane %v4312, 2
      %v4428 = vsel %vm1473, %v4425, %v4427
      %v4429 = vrot.slane %v4313, 2
      %v4430 = vrot.slane %v4314, 2
      %v4431 = vsel %vm1473, %v4429, %v4430
      %v4432 = vrot.slane %v4315, 2
      %v4433 = vsel %vm1473, %v4430, %v4432
      %v4434 = vrot.slane %v4316, 2
      %v4435 = vrot.slane %v4317, 2
      %v4436 = vsel %vm1473, %v4434, %v4435
      %v4437 = vrot.slane %v4318, 2
      %v4438 = vsel %vm1473, %v4435, %v4437
      %v4439 = vrot.slane %v4319, 2
      %v4440 = vrot.slane %v4320, 2
      %v4441 = vsel %vm1473, %v4439, %v4440
      %v4442 = vrot.slane %v4321, 2
      %v4443 = vsel %vm1473, %v4440, %v4442
      %v4444 = vrot.slane %v4322, 2
      %v4445 = vrot.slane %v4323, 2
      %v4446 = vsel %vm1473, %v4444, %v4445
      %v4447 = vrot.slane %v4324, 2
      %v4448 = vsel %vm1473, %v4445, %v4447
      %v4449 = vrot.slane %v4325, 2
      %v4450 = vrot.slane %v4326, 2
      %v4451 = vsel %vm1473, %v4449, %v4450
      %v4452 = vrot.slane %v4327, 2
      %v4453 = vsel %vm1473, %v4450, %v4452
      %v4454 = vrot.slane %v4328, 2
      %v4455 = vrot.slane %v4329, 2
      %v4456 = vsel %vm1473, %v4454, %v4455
      %v4457 = vrot.slane %v4330, 2
      %v4458 = vsel %vm1473, %v4455, %v4457
      %v4491 = vadd.f32 %v4251, %v4381
      %v4492 = vadd.f32 %v4252, %v4383
      %v4493 = vadd.f32 %v4253, %v4386
      %v4494 = vadd.f32 %v4254, %v4388
      %v4495 = vadd.f32 %v4255, %v4391
      %v4496 = vadd.f32 %v4256, %v4393
      %v4497 = vadd.f32 %v4257, %v4396
      %v4498 = vadd.f32 %v4258, %v4398
      %v4499 = vadd.f32 %v4259, %v4401
      %v4500 = vadd.f32 %v4260, %v4403
      %v4501 = vadd.f32 %v4261, %v4406
      %v4502 = vadd.f32 %v4262, %v4408
      %v4503 = vadd.f32 %v4263, %v4411
      %v4504 = vadd.f32 %v4264, %v4413
      %v4505 = vadd.f32 %v4265, %v4416
      %v4506 = vadd.f32 %v4266, %v4418
      %v4507 = vadd.f32 %v4267, %v4421
      %v4508 = vadd.f32 %v4268, %v4423
      %v4509 = vadd.f32 %v4269, %v4426
      %v4510 = vadd.f32 %v4270, %v4428
      %v4511 = vadd.f32 %v4271, %v4431
      %v4512 = vadd.f32 %v4272, %v4433
      %v4513 = vadd.f32 %v4273, %v4436
      %v4514 = vadd.f32 %v4274, %v4438
      %v4515 = vadd.f32 %v4275, %v4441
      %v4516 = vadd.f32 %v4276, %v4443
      %v4517 = vadd.f32 %v4277, %v4446
      %v4518 = vadd.f32 %v4278, %v4448
      %v4519 = vadd.f32 %v4279, %v4451
      %v4520 = vadd.f32 %v4280, %v4453
      %v4521 = vadd.f32 %v4281, %v4456
      %v4522 = vadd.f32 %v4282, %v4458
      %4523 = vst.msk [vmem:[%s248] sm:$0xff] %vm1077, %v4491
      %4524 = vst.msk [vmem:[%s248 + $0x8] sm:$0xff] %vm1077, %v4492
      %4525 = vst.msk [vmem:[%s248 + $0x10] sm:$0xff] %vm1077, %v4493
      %4526 = vst.msk [vmem:[%s248 + $0x18] sm:$0xff] %vm1077, %v4494
      %4527 = vst.msk [vmem:[%s248 + $0x20] sm:$0xff] %vm1077, %v4495
      %4528 = vst.msk [vmem:[%s248 + $0x28] sm:$0xff] %vm1077, %v4496
      %4529 = vst.msk [vmem:[%s248 + $0x30] sm:$0xff] %vm1077, %v4497
      %4530 = vst.msk [vmem:[%s248 + $0x38] sm:$0xff] %vm1077, %v4498
      %4531 = vst.msk [vmem:[%s248 + $0x40] sm:$0xff] %vm1077, %v4499
      %4532 = vst.msk [vmem:[%s248 + $0x48] sm:$0xff] %vm1077, %v4500
      %4533 = vst.msk [vmem:[%s248 + $0x50] sm:$0xff] %vm1077, %v4501
      %4534 = vst.msk [vmem:[%s248 + $0x58] sm:$0xff] %vm1077, %v4502
      %4535 = vst.msk [vmem:[%s248 + $0x60] sm:$0xff] %vm1077, %v4503
      %4536 = vst.msk [vmem:[%s248 + $0x68] sm:$0xff] %vm1077, %v4504
      %4537 = vst.msk [vmem:[%s248 + $0x70] sm:$0xff] %vm1077, %v4505
      %4538 = vst.msk [vmem:[%s248 + $0x78] sm:$0xff] %vm1077, %v4506
      %4539 = vst.msk [vmem:[%s248 + $0x80] sm:$0xff] %vm1077, %v4507
      %4540 = vst.msk [vmem:[%s248 + $0x88] sm:$0xff] %vm1077, %v4508
      %4541 = vst.msk [vmem:[%s248 + $0x90] sm:$0xff] %vm1077, %v4509
      %4542 = vst.msk [vmem:[%s248 + $0x98] sm:$0xff] %vm1077, %v4510
      %4543 = vst.msk [vmem:[%s248 + $0xa0] sm:$0xff] %vm1077, %v4511
      %4544 = vst.msk [vmem:[%s248 + $0xa8] sm:$0xff] %vm1077, %v4512
      %4545 = vst.msk [vmem:[%s248 + $0xb0] sm:$0xff] %vm1077, %v4513
      %4546 = vst.msk [vmem:[%s248 + $0xb8] sm:$0xff] %vm1077, %v4514
      %4547 = vst.msk [vmem:[%s248 + $0xc0] sm:$0xff] %vm1077, %v4515
      %4548 = vst.msk [vmem:[%s248 + $0xc8] sm:$0xff] %vm1077, %v4516
      %4549 = vst.msk [vmem:[%s248 + $0xd0] sm:$0xff] %vm1077, %v4517
      %4550 = vst.msk [vmem:[%s248 + $0xd8] sm:$0xff] %vm1077, %v4518
      %4551 = vst.msk [vmem:[%s248 + $0xe0] sm:$0xff] %vm1077, %v4519
      %4552 = vst.msk [vmem:[%s248 + $0xe8] sm:$0xff] %vm1077, %v4520
      %4553 = vst.msk [vmem:[%s248 + $0xf0] sm:$0xff] %vm1077, %v4521
      %4554 = vst.msk [vmem:[%s248 + $0xf8] sm:$0xff] %vm1077, %v4522
      %s4555 = smul.u32 16, %s21
      %p4556 = scmp.lt.s32.totalorder %s20, 1
      %s4557 = scalar_select %p4556, %s20, 1
      %p4558 = scmp.lt.s32.totalorder %s4555, 15
      %s4559 = scalar_select %p4558, %s4555, 15
      %s4560 = smul.addr %s4559, 2
      %s4561 = smul.addr %s4557, 32
      %s4562 = sadd.s32 %s4560, %s4561
      %s4563 = smul.addr %s4562, 8
      %s4564 = scalar_lea.vmem %s5, %s4563
      // Predicated region
      $region41: #{bottleneck_c2f_forward.1} parent=39 // pred_check
        %p4565 = pneg %p158
      $region42: #{bottleneck_c2f_forward.1} parent=39 // pred_check_branch
        %4567 = sbr.rel (%p4565) target = $region44
      $region43: #{bottleneck_c2f_forward.1} parent=39 // pred_region
        %s4568 = smul.u32 16, %s21
      $region44: #{bottleneck_c2f_forward.1} parent=39 // pred_fallthru
        _
    $region40: #{bottleneck_c2f_forward.1} parent=5 // pred_fallthru
      _
    %p4569 = scmp.le.s32.totalorder 2, %s11
    // Predicated region
    $region45: #{bottleneck_c2f_forward.1} parent=5 // pred_check
      %p4570 = pneg %p4569
    $region46: #{bottleneck_c2f_forward.1} parent=5 // pred_check_branch
      %4572 = sbr.rel (%p4570) target = $region48
    $region47: #{bottleneck_c2f_forward.1} parent=5 // pred_region
      %s4573 = ssub.s32 %s11, 2
      // Predicated region
      $region49: #{bottleneck_c2f_forward.1} parent=47 // pred_check
        %p4574 = pneg %p164
      $region50: #{bottleneck_c2f_forward.1} parent=47 // pred_check_branch
        %4576 = sbr.rel (%p4574) target = $region52
      $region51: #{bottleneck_c2f_forward.1} parent=47 // pred_region
        %s4577 = smul.u32 16, %s23
        %p4578 = scmp.lt.s32.totalorder %s22, 1
        %s4579 = scalar_select %p4578, %s22, 1
        %p4580 = scmp.lt.s32.totalorder %s4577, 15
        %s4581 = scalar_select %p4580, %s4577, 15
        %s4582 = smul.addr %s4581, 2
        %s4583 = smul.addr %s4579, 32
        %s4584 = sadd.s32 %s4582, %s4583
        %s4585 = smul.addr %s4584, 8
        %s4586 = scalar_lea.vmem %s5, %s4585
      $region52: #{bottleneck_c2f_forward.1} parent=47 // pred_fallthru
        _
    $region48: #{bottleneck_c2f_forward.1} parent=5 // pred_fallthru
      _
  $region6: #{bottleneck_c2f_forward.1} parent=0 // loop_footer
    %s15 = sadd.s32 1, %s11
  $region7: #{bottleneck_c2f_forward.1} parent=0 // loop_footer_branch
    %10 = sbr.rel target = $region3
  $region8: #{bottleneck_c2f_forward.1} parent=0 // loop_exit
    _

</llo_original>
